<compile_context>
chip_gen: v7x
topology: tpu7x:2x2x1
jax: 0.10.0
libtpu: 0.0.40
codegen_flags: <defaults>
</compile_context>

<pallas_src>
import jax
import jax.numpy as jnp
from jax.experimental import pallas as pl
from jax.experimental.pallas import tpu as pltpu


def _round_up(x, m):
    return (x + m - 1) // m * m


_COMPILER_PARAMS = pltpu.CompilerParams(
    dimension_semantics=("parallel",),
    vmem_limit_bytes=40 * 1024 * 1024,
)


# ------------------------------ Pallas kernels ------------------------------

def _conv_pool_kernel(p00, p01, p10, p11, w_ref, b_ref, o_ref):
    """Fused conv(im2col GEMM) + bias + ReLU + 2x2 maxpool.

    p00..p11 hold the patches for the four positions of each 2x2 pooling
    window (all on the pooled output grid), so max over the four GEMM results
    equals maxpool(relu(conv)) (ReLU commutes with max; bias is shared).
    """
    w = w_ref[...]
    z = jnp.dot(p00[...], w, preferred_element_type=jnp.float32)
    z = jnp.maximum(z, jnp.dot(p01[...], w, preferred_element_type=jnp.float32))
    z = jnp.maximum(z, jnp.dot(p10[...], w, preferred_element_type=jnp.float32))
    z = jnp.maximum(z, jnp.dot(p11[...], w, preferred_element_type=jnp.float32))
    o_ref[...] = jnp.maximum(z + b_ref[...], 0.0).astype(o_ref.dtype)


def _mlp_head_kernel(x_ref, w1_ref, b1_ref, w2_ref, b2_ref, o_ref):
    """Fused fc1 + ReLU + fc2 + log_softmax (fc2 output padded to 128 lanes)."""
    h = jnp.dot(x_ref[...], w1_ref[...], preferred_element_type=jnp.float32)
    h = jnp.maximum(h + b1_ref[...], 0.0)
    z = jnp.dot(h.astype(jnp.bfloat16), w2_ref[...],
                preferred_element_type=jnp.float32)
    z = z + b2_ref[...]                 # padded columns carry bias -1e30
    m = jnp.max(z, axis=1, keepdims=True)
    lse = m + jnp.log(jnp.sum(jnp.exp(z - m), axis=1, keepdims=True))
    o_ref[...] = z - lse


# ------------------------------ wrappers ------------------------------------

def conv_relu_pool(p_taps, w2d, bias, *, tile_m=512, out_dtype=jnp.bfloat16):
    """p_taps: 4 x (M, K) bf16 pool-tap patch arrays. w2d: (K, O) bf16.
    bias: (O,) f32.  Returns the pooled conv output, shape (M, O)."""
    M, K = p_taps[0].shape
    O = w2d.shape[1]
    tm = min(tile_m, _round_up(M, 8))
    Mp = _round_up(M, tm)
    if Mp != M:
        p_taps = [jnp.pad(p, ((0, Mp - M), (0, 0))) for p in p_taps]
    b2 = bias.reshape(1, O).astype(jnp.float32)
    m_spec = pl.BlockSpec((tm, K), lambda i: (i, 0))
    out = pl.pallas_call(
        _conv_pool_kernel,
        grid=(Mp // tm,),
        in_specs=[m_spec, m_spec, m_spec, m_spec,
                  pl.BlockSpec((K, O), lambda i: (0, 0)),
                  pl.BlockSpec((1, O), lambda i: (0, 0))],
        out_specs=pl.BlockSpec((tm, O), lambda i: (i, 0)),
        out_shape=jax.ShapeDtypeStruct((Mp, O), out_dtype),
        compiler_params=_COMPILER_PARAMS,
    )(*p_taps, w2d, b2)
    return out[:M]


def mlp_head(x, w1, b1, w2p, b2p, *, tile_b=256):
    """x: (B, 3136) bf16.  Returns (B, 128) f32 log-probs (cols >= 10 padded)."""
    B, K = x.shape
    H = w1.shape[1]
    N = w2p.shape[1]
    if B <= tile_b:
        tb, Bp = B, B
    else:
        tb = tile_b
        Bp = _round_up(B, tb)
    xp = jnp.pad(x, ((0, Bp - B), (0, 0))) if Bp != B else x
    out = pl.pallas_call(
        _mlp_head_kernel,
        grid=(Bp // tb,),
        in_specs=[pl.BlockSpec((tb, K), lambda i: (i, 0)),
                  pl.BlockSpec((K, H), lambda i: (0, 0)),
                  pl.BlockSpec((1, H), lambda i: (0, 0)),
                  pl.BlockSpec((H, N), lambda i: (0, 0)),
                  pl.BlockSpec((1, N), lambda i: (0, 0))],
        out_specs=pl.BlockSpec((tb, N), lambda i: (i, 0)),
        out_shape=jax.ShapeDtypeStruct((Bp, N), jnp.float32),
        compiler_params=_COMPILER_PARAMS,
    )(xp, w1, b1.reshape(1, H).astype(jnp.float32), w2p, b2p)
    return out[:B]


def _pool_tap_patches(x_nhwc, kh, kw, pad):
    """Build the 4 pool-tap im2col patch tensors for a stride-1 'SAME' conv
    followed by a 2x2/2 maxpool.  x_nhwc: (B, H, W, C) with H, W even.
    Returns 4 bf16 arrays of shape (B*(H//2)*(W//2), kh*kw*C)."""
    B, H, W, C = x_nhwc.shape
    P, Q = H // 2, W // 2
    xp = jnp.pad(x_nhwc, ((0, 0), (pad, pad), (pad, pad), (0, 0)))
    taps = []
    for dy in (0, 1):
        for dx in (0, 1):
            cols = []
            for i in range(kh):
                for j in range(kw):
                    cols.append(xp[:, dy + i: dy + i + 2 * P: 2,
                                      dx + j: dx + j + 2 * Q: 2, :])
            t = jnp.stack(cols, axis=3)                    # (B, P, Q, kh*kw, C)
            taps.append(t.reshape(B * P * Q, kh * kw * C).astype(jnp.bfloat16))
    return taps


# ------------------------------ parameters ----------------------------------

def init_params(key):
    """PyTorch-convention parameter shapes (f32)."""
    k = jax.random.split(key, 8)
    s = 0.05
    return {
        "conv1_w": s * jax.random.normal(k[0], (32, 1, 5, 5), jnp.float32),
        "conv1_b": s * jax.random.normal(k[1], (32,), jnp.float32),
        "conv2_w": s * jax.random.normal(k[2], (64, 32, 5, 5), jnp.float32),
        "conv2_b": s * jax.random.normal(k[3], (64,), jnp.float32),
        "fc1_w": s * jax.random.normal(k[4], (512, 7 * 7 * 64), jnp.float32),
        "fc1_b": s * jax.random.normal(k[5], (512,), jnp.float32),
        "fc2_w": s * jax.random.normal(k[6], (10, 512), jnp.float32),
        "fc2_b": s * jax.random.normal(k[7], (10,), jnp.float32),
    }


def _prepare_params(params):
    """One-time layout/dtype transforms into kernel-friendly form."""
    kp = {}
    # conv weights: (O, C, kh, kw) -> (kh*kw*C, O), bf16
    w1 = jnp.transpose(params["conv1_w"], (2, 3, 1, 0)).reshape(25, 32)
    kp["conv1_w"] = jnp.pad(w1, ((0, 7), (0, 0))).astype(jnp.bfloat16)  # K 25->32
    kp["conv1_b"] = params["conv1_b"].astype(jnp.float32)
    kp["conv2_w"] = jnp.transpose(params["conv2_w"],
                                  (2, 3, 1, 0)).reshape(800, 64).astype(jnp.bfloat16)
    kp["conv2_b"] = params["conv2_b"].astype(jnp.float32)
    # fc1: torch flattens NCHW (c,h,w); our activations flatten NHWC (h,w,c).
    fw1 = params["fc1_w"].reshape(512, 64, 7, 7)
    fw1 = jnp.transpose(fw1, (2, 3, 1, 0)).reshape(7 * 7 * 64, 512)
    kp["fc1_w"] = fw1.astype(jnp.bfloat16)
    kp["fc1_b"] = params["fc1_b"].astype(jnp.float32)
    # fc2: transpose to (512, 10), zero-pad N to 128 lanes; pad bias with -1e30
    # so padded logits contribute nothing to the softmax.
    kp["fc2_w"] = jnp.pad(params["fc2_w"].T, ((0, 0), (0, 118))).astype(jnp.bfloat16)
    kp["fc2_b"] = jnp.pad(params["fc2_b"].astype(jnp.float32), (0, 118),
                          constant_values=-1e30).reshape(1, 128)
    return kp


# ------------------------------ model ---------------------------------------

@jax.jit
def cnn_forward(x, params):
    kp = _prepare_params(params)
    B = x.shape[0]
    x = jnp.transpose(x, (0, 2, 3, 1))                      # NCHW -> NHWC (B,28,28,1)

    # conv1 (1->32, 5x5, SAME) + ReLU + maxpool 2x2 — one fused kernel
    taps = _pool_tap_patches(x, 5, 5, pad=2)                # 4 x (B*196, 25)
    taps = [jnp.pad(t, ((0, 0), (0, 7))) for t in taps]     # K 25 -> 32
    h1 = conv_relu_pool(taps, kp["conv1_w"], kp["conv1_b"])  # (B*196, 32) bf16
    h1 = h1.reshape(B, 14, 14, 32)

    # conv2 (32->64, 5x5, SAME) + ReLU + maxpool 2x2 — one fused kernel
    taps = _pool_tap_patches(h1, 5, 5, pad=2)               # 4 x (B*49, 800)
    h2 = conv_relu_pool(taps, kp["conv2_w"], kp["conv2_b"])  # (B*49, 64) bf16
    h2 = h2.reshape(B, 7 * 7 * 64)                          # NHWC flatten == fc1 layout

    # fc1 + ReLU + fc2 + log_softmax — one fused kernel
    logp = mlp_head(h2, kp["fc1_w"], kp["fc1_b"], kp["fc2_w"], kp["fc2_b"])
    return logp[:, :10]


if __name__ == "__main__":
    key = jax.random.PRNGKey(0)
    pkey, xkey = jax.random.split(key)
    params = init_params(pkey)
    # MNIST-shaped input (28x28 required by fc1's 7*7*64 assumption); batch=2.
    x = jax.random.normal(xkey, (2, 1, 28, 28), jnp.float32)
    out = cnn_forward(x, params)
    out = jax.block_until_ready(out)
    assert out.shape == (2, 10)
    # log-softmax rows should exponentiate-and-sum to ~1
    assert bool(jnp.allclose(jnp.sum(jnp.exp(out), axis=1), 1.0, atol=1e-4))
    print("KERNEL_OK")
</pallas_src>

<mosaic_0001>
module attributes {stable_mosaic.version = 11 : i64} {
  func.func @_conv_pool_kernel(%arg0: i32, %arg1: memref<392x32xbf16, #tpu.memory_space<vmem>>, %arg2: memref<392x32xbf16, #tpu.memory_space<vmem>>, %arg3: memref<392x32xbf16, #tpu.memory_space<vmem>>, %arg4: memref<392x32xbf16, #tpu.memory_space<vmem>>, %arg5: memref<32x32xbf16, #tpu.memory_space<vmem>>, %arg6: memref<1x32xf32, #tpu.memory_space<vmem>>, %arg7: memref<392x32xbf16, #tpu.memory_space<vmem>>) attributes {dimension_semantics = [#tpu.dimension_semantics<parallel>], iteration_bounds = array<i64: 1>, scalar_prefetch = 0 : i64, scratch_operands = 0 : i64, tpu.core_type = #tpu.core_type<tc>, window_params = [{transform_indices = @transform_0, window_bounds = array<i64: 392, 32>}, {transform_indices = @transform_1, window_bounds = array<i64: 392, 32>}, {transform_indices = @transform_2, window_bounds = array<i64: 392, 32>}, {transform_indices = @transform_3, window_bounds = array<i64: 392, 32>}, {pipeline_mode = #tpu.pipeline_mode<synchronous>, transform_indices = @transform_4, window_bounds = array<i64: 32, 32>}, {pipeline_mode = #tpu.pipeline_mode<synchronous>, transform_indices = @transform_5, window_bounds = array<i64: 1, 32>}, {transform_indices = @transform_6, window_bounds = array<i64: 392, 32>}]} {
    %c0 = arith.constant 0 : index
    %c0_0 = arith.constant 0 : index
    %0 = vector.load %arg5[%c0, %c0_0] : memref<32x32xbf16, #tpu.memory_space<vmem>>, vector<32x32xbf16>
    %c0_1 = arith.constant 0 : index
    %c0_2 = arith.constant 0 : index
    %1 = vector.load %arg1[%c0_1, %c0_2] : memref<392x32xbf16, #tpu.memory_space<vmem>>, vector<392x32xbf16>
    %cst = arith.constant dense<0.000000e+00> : vector<392x32xf32>
    %2 = tpu.matmul %1, %0, %cst {dimension_numbers = #tpu.dot_dimension_numbers<[1], [0], [0], [1], [0, 0, 1, 1], [], []>} : vector<392x32xbf16>, vector<32x32xbf16>, vector<392x32xf32> -> vector<392x32xf32>
    %c0_3 = arith.constant 0 : index
    %c0_4 = arith.constant 0 : index
    %3 = vector.load %arg2[%c0_3, %c0_4] : memref<392x32xbf16, #tpu.memory_space<vmem>>, vector<392x32xbf16>
    %cst_5 = arith.constant dense<0.000000e+00> : vector<392x32xf32>
    %4 = tpu.matmul %3, %0, %cst_5 {dimension_numbers = #tpu.dot_dimension_numbers<[1], [0], [0], [1], [0, 0, 1, 1], [], []>} : vector<392x32xbf16>, vector<32x32xbf16>, vector<392x32xf32> -> vector<392x32xf32>
    %5 = arith.maximumf %2, %4 : vector<392x32xf32>
    %c0_6 = arith.constant 0 : index
    %c0_7 = arith.constant 0 : index
    %6 = vector.load %arg3[%c0_6, %c0_7] : memref<392x32xbf16, #tpu.memory_space<vmem>>, vector<392x32xbf16>
    %cst_8 = arith.constant dense<0.000000e+00> : vector<392x32xf32>
    %7 = tpu.matmul %6, %0, %cst_8 {dimension_numbers = #tpu.dot_dimension_numbers<[1], [0], [0], [1], [0, 0, 1, 1], [], []>} : vector<392x32xbf16>, vector<32x32xbf16>, vector<392x32xf32> -> vector<392x32xf32>
    %8 = arith.maximumf %5, %7 : vector<392x32xf32>
    %c0_9 = arith.constant 0 : index
    %c0_10 = arith.constant 0 : index
    %9 = vector.load %arg4[%c0_9, %c0_10] : memref<392x32xbf16, #tpu.memory_space<vmem>>, vector<392x32xbf16>
    %cst_11 = arith.constant dense<0.000000e+00> : vector<392x32xf32>
    %10 = tpu.matmul %9, %0, %cst_11 {dimension_numbers = #tpu.dot_dimension_numbers<[1], [0], [0], [1], [0, 0, 1, 1], [], []>} : vector<392x32xbf16>, vector<32x32xbf16>, vector<392x32xf32> -> vector<392x32xf32>
    %11 = arith.maximumf %8, %10 : vector<392x32xf32>
    %c0_12 = arith.constant 0 : index
    %c0_13 = arith.constant 0 : index
    %12 = vector.load %arg6[%c0_12, %c0_13] : memref<1x32xf32, #tpu.memory_space<vmem>>, vector<1x32xf32>
    %13 = vector.broadcast %12 : vector<1x32xf32> to vector<392x32xf32>
    %14 = arith.addf %11, %13 : vector<392x32xf32>
    %cst_14 = arith.constant 0.000000e+00 : f32
    %15 = vector.broadcast %cst_14 : f32 to vector<392x32xf32>
    %16 = arith.maximumf %14, %15 : vector<392x32xf32>
    %17 = arith.truncf %16 : vector<392x32xf32> to vector<392x32xbf16>
    %c0_15 = arith.constant 0 : index
    %c0_16 = arith.constant 0 : index
    %18 = vector.load %arg7[%c0_15, %c0_16] : memref<392x32xbf16, #tpu.memory_space<vmem>>, vector<392x32xbf16>
    tpu.vector_store %arg7[%c0_15, %c0_16], %17 {strides = array<i32>} : memref<392x32xbf16, #tpu.memory_space<vmem>>, vector<392x32xbf16>,
    return
  }
  func.func @transform_0(%arg0: i32) -> (i32, i32) {
    %c0_i32 = arith.constant 0 : i32
    %c0_i32_0 = arith.constant 0 : i32
    return %arg0, %c0_i32 : i32, i32
  }
  func.func @transform_1(%arg0: i32) -> (i32, i32) {
    %c0_i32 = arith.constant 0 : i32
    %c0_i32_0 = arith.constant 0 : i32
    return %arg0, %c0_i32 : i32, i32
  }
  func.func @transform_2(%arg0: i32) -> (i32, i32) {
    %c0_i32 = arith.constant 0 : i32
    %c0_i32_0 = arith.constant 0 : i32
    return %arg0, %c0_i32 : i32, i32
  }
  func.func @transform_3(%arg0: i32) -> (i32, i32) {
    %c0_i32 = arith.constant 0 : i32
    %c0_i32_0 = arith.constant 0 : i32
    return %arg0, %c0_i32 : i32, i32
  }
  func.func @transform_4(%arg0: i32) -> (i32, i32) {
    %c0_i32 = arith.constant 0 : i32
    %c0_i32_0 = arith.constant 0 : i32
    %c0_i32_1 = arith.constant 0 : i32
    return %c0_i32, %c0_i32_0 : i32, i32
  }
  func.func @transform_5(%arg0: i32) -> (i32, i32) {
    %c0_i32 = arith.constant 0 : i32
    %c0_i32_0 = arith.constant 0 : i32
    %c0_i32_1 = arith.constant 0 : i32
    return %c0_i32, %c0_i32_0 : i32, i32
  }
  func.func @transform_6(%arg0: i32) -> (i32, i32) {
    %c0_i32 = arith.constant 0 : i32
    %c0_i32_0 = arith.constant 0 : i32
    return %arg0, %c0_i32 : i32, i32
  }
}

module attributes {stable_mosaic.version = 11 : i64} {
  func.func @_conv_pool_kernel(%arg0: i32, %arg1: memref<104x800xbf16, #tpu.memory_space<vmem>>, %arg2: memref<104x800xbf16, #tpu.memory_space<vmem>>, %arg3: memref<104x800xbf16, #tpu.memory_space<vmem>>, %arg4: memref<104x800xbf16, #tpu.memory_space<vmem>>, %arg5: memref<800x64xbf16, #tpu.memory_space<vmem>>, %arg6: memref<1x64xf32, #tpu.memory_space<vmem>>, %arg7: memref<104x64xbf16, #tpu.memory_space<vmem>>) attributes {dimension_semantics = [#tpu.dimension_semantics<parallel>], iteration_bounds = array<i64: 1>, scalar_prefetch = 0 : i64, scratch_operands = 0 : i64, tpu.core_type = #tpu.core_type<tc>, window_params = [{transform_indices = @transform_0, window_bounds = array<i64: 104, 800>}, {transform_indices = @transform_1, window_bounds = array<i64: 104, 800>}, {transform_indices = @transform_2, window_bounds = array<i64: 104, 800>}, {transform_indices = @transform_3, window_bounds = array<i64: 104, 800>}, {pipeline_mode = #tpu.pipeline_mode<synchronous>, transform_indices = @transform_4, window_bounds = array<i64: 800, 64>}, {pipeline_mode = #tpu.pipeline_mode<synchronous>, transform_indices = @transform_5, window_bounds = array<i64: 1, 64>}, {transform_indices = @transform_6, window_bounds = array<i64: 104, 64>}]} {
    %c0 = arith.constant 0 : index
    %c0_0 = arith.constant 0 : index
    %0 = vector.load %arg5[%c0, %c0_0] : memref<800x64xbf16, #tpu.memory_space<vmem>>, vector<800x64xbf16>
    %c0_1 = arith.constant 0 : index
    %c0_2 = arith.constant 0 : index
    %1 = vector.load %arg1[%c0_1, %c0_2] : memref<104x800xbf16, #tpu.memory_space<vmem>>, vector<104x800xbf16>
    %cst = arith.constant dense<0.000000e+00> : vector<104x64xf32>
    %2 = tpu.matmul %1, %0, %cst {dimension_numbers = #tpu.dot_dimension_numbers<[1], [0], [0], [1], [0, 0, 1, 1], [], []>} : vector<104x800xbf16>, vector<800x64xbf16>, vector<104x64xf32> -> vector<104x64xf32>
    %c0_3 = arith.constant 0 : index
    %c0_4 = arith.constant 0 : index
    %3 = vector.load %arg2[%c0_3, %c0_4] : memref<104x800xbf16, #tpu.memory_space<vmem>>, vector<104x800xbf16>
    %cst_5 = arith.constant dense<0.000000e+00> : vector<104x64xf32>
    %4 = tpu.matmul %3, %0, %cst_5 {dimension_numbers = #tpu.dot_dimension_numbers<[1], [0], [0], [1], [0, 0, 1, 1], [], []>} : vector<104x800xbf16>, vector<800x64xbf16>, vector<104x64xf32> -> vector<104x64xf32>
    %5 = arith.maximumf %2, %4 : vector<104x64xf32>
    %c0_6 = arith.constant 0 : index
    %c0_7 = arith.constant 0 : index
    %6 = vector.load %arg3[%c0_6, %c0_7] : memref<104x800xbf16, #tpu.memory_space<vmem>>, vector<104x800xbf16>
    %cst_8 = arith.constant dense<0.000000e+00> : vector<104x64xf32>
    %7 = tpu.matmul %6, %0, %cst_8 {dimension_numbers = #tpu.dot_dimension_numbers<[1], [0], [0], [1], [0, 0, 1, 1], [], []>} : vector<104x800xbf16>, vector<800x64xbf16>, vector<104x64xf32> -> vector<104x64xf32>
    %8 = arith.maximumf %5, %7 : vector<104x64xf32>
    %c0_9 = arith.constant 0 : index
    %c0_10 = arith.constant 0 : index
    %9 = vector.load %arg4[%c0_9, %c0_10] : memref<104x800xbf16, #tpu.memory_space<vmem>>, vector<104x800xbf16>
    %cst_11 = arith.constant dense<0.000000e+00> : vector<104x64xf32>
    %10 = tpu.matmul %9, %0, %cst_11 {dimension_numbers = #tpu.dot_dimension_numbers<[1], [0], [0], [1], [0, 0, 1, 1], [], []>} : vector<104x800xbf16>, vector<800x64xbf16>, vector<104x64xf32> -> vector<104x64xf32>
    %11 = arith.maximumf %8, %10 : vector<104x64xf32>
    %c0_12 = arith.constant 0 : index
    %c0_13 = arith.constant 0 : index
    %12 = vector.load %arg6[%c0_12, %c0_13] : memref<1x64xf32, #tpu.memory_space<vmem>>, vector<1x64xf32>
    %13 = vector.broadcast %12 : vector<1x64xf32> to vector<104x64xf32>
    %14 = arith.addf %11, %13 : vector<104x64xf32>
    %cst_14 = arith.constant 0.000000e+00 : f32
    %15 = vector.broadcast %cst_14 : f32 to vector<104x64xf32>
    %16 = arith.maximumf %14, %15 : vector<104x64xf32>
    %17 = arith.truncf %16 : vector<104x64xf32> to vector<104x64xbf16>
    %c0_15 = arith.constant 0 : index
    %c0_16 = arith.constant 0 : index
    %18 = vector.load %arg7[%c0_15, %c0_16] : memref<104x64xbf16, #tpu.memory_space<vmem>>, vector<104x64xbf16>
    tpu.vector_store %arg7[%c0_15, %c0_16], %17 {strides = array<i32>} : memref<104x64xbf16, #tpu.memory_space<vmem>>, vector<104x64xbf16>,
    return
  }
  func.func @transform_0(%arg0: i32) -> (i32, i32) {
    %c0_i32 = arith.constant 0 : i32
    %c0_i32_0 = arith.constant 0 : i32
    return %arg0, %c0_i32 : i32, i32
  }
  func.func @transform_1(%arg0: i32) -> (i32, i32) {
    %c0_i32 = arith.constant 0 : i32
    %c0_i32_0 = arith.constant 0 : i32
    return %arg0, %c0_i32 : i32, i32
  }
  func.func @transform_2(%arg0: i32) -> (i32, i32) {
    %c0_i32 = arith.constant 0 : i32
    %c0_i32_0 = arith.constant 0 : i32
    return %arg0, %c0_i32 : i32, i32
  }
  func.func @transform_3(%arg0: i32) -> (i32, i32) {
    %c0_i32 = arith.constant 0 : i32
    %c0_i32_0 = arith.constant 0 : i32
    return %arg0, %c0_i32 : i32, i32
  }
  func.func @transform_4(%arg0: i32) -> (i32, i32) {
    %c0_i32 = arith.constant 0 : i32
    %c0_i32_0 = arith.constant 0 : i32
    %c0_i32_1 = arith.constant 0 : i32
    return %c0_i32, %c0_i32_0 : i32, i32
  }
  func.func @transform_5(%arg0: i32) -> (i32, i32) {
    %c0_i32 = arith.constant 0 : i32
    %c0_i32_0 = arith.constant 0 : i32
    %c0_i32_1 = arith.constant 0 : i32
    return %c0_i32, %c0_i32_0 : i32, i32
  }
  func.func @transform_6(%arg0: i32) -> (i32, i32) {
    %c0_i32 = arith.constant 0 : i32
    %c0_i32_0 = arith.constant 0 : i32
    return %arg0, %c0_i32 : i32, i32
  }
}

module attributes {stable_mosaic.version = 11 : i64} {
  func.func @_mlp_head_kernel(%arg0: i32, %arg1: memref<2x3136xbf16, #tpu.memory_space<vmem>>, %arg2: memref<3136x512xbf16, #tpu.memory_space<vmem>>, %arg3: memref<1x512xf32, #tpu.memory_space<vmem>>, %arg4: memref<512x128xbf16, #tpu.memory_space<vmem>>, %arg5: memref<1x128xf32, #tpu.memory_space<vmem>>, %arg6: memref<2x128xf32, #tpu.memory_space<vmem>>) attributes {dimension_semantics = [#tpu.dimension_semantics<parallel>], iteration_bounds = array<i64: 1>, scalar_prefetch = 0 : i64, scratch_operands = 0 : i64, tpu.core_type = #tpu.core_type<tc>, window_params = [{transform_indices = @transform_0, window_bounds = array<i64: 2, 3136>}, {pipeline_mode = #tpu.pipeline_mode<synchronous>, transform_indices = @transform_1, window_bounds = array<i64: 3136, 512>}, {pipeline_mode = #tpu.pipeline_mode<synchronous>, transform_indices = @transform_2, window_bounds = array<i64: 1, 512>}, {pipeline_mode = #tpu.pipeline_mode<synchronous>, transform_indices = @transform_3, window_bounds = array<i64: 512, 128>}, {pipeline_mode = #tpu.pipeline_mode<synchronous>, transform_indices = @transform_4, window_bounds = array<i64: 1, 128>}, {transform_indices = @transform_5, window_bounds = array<i64: 2, 128>}]} {
    %c0 = arith.constant 0 : index
    %c0_0 = arith.constant 0 : index
    %0 = vector.load %arg1[%c0, %c0_0] : memref<2x3136xbf16, #tpu.memory_space<vmem>>, vector<2x3136xbf16>
    %c0_1 = arith.constant 0 : index
    %c0_2 = arith.constant 0 : index
    %1 = vector.load %arg2[%c0_1, %c0_2] : memref<3136x512xbf16, #tpu.memory_space<vmem>>, vector<3136x512xbf16>
    %cst = arith.constant dense<0.000000e+00> : vector<2x512xf32>
    %2 = tpu.matmul %0, %1, %cst {dimension_numbers = #tpu.dot_dimension_numbers<[1], [0], [0], [1], [0, 0, 1, 1], [], []>} : vector<2x3136xbf16>, vector<3136x512xbf16>, vector<2x512xf32> -> vector<2x512xf32>
    %c0_3 = arith.constant 0 : index
    %c0_4 = arith.constant 0 : index
    %3 = vector.load %arg3[%c0_3, %c0_4] : memref<1x512xf32, #tpu.memory_space<vmem>>, vector<1x512xf32>
    %4 = vector.broadcast %3 : vector<1x512xf32> to vector<2x512xf32>
    %5 = arith.addf %2, %4 : vector<2x512xf32>
    %cst_5 = arith.constant 0.000000e+00 : f32
    %6 = vector.broadcast %cst_5 : f32 to vector<2x512xf32>
    %7 = arith.maximumf %5, %6 : vector<2x512xf32>
    %8 = arith.truncf %7 : vector<2x512xf32> to vector<2x512xbf16>
    %c0_6 = arith.constant 0 : index
    %c0_7 = arith.constant 0 : index
    %9 = vector.load %arg4[%c0_6, %c0_7] : memref<512x128xbf16, #tpu.memory_space<vmem>>, vector<512x128xbf16>
    %cst_8 = arith.constant dense<0.000000e+00> : vector<2x128xf32>
    %10 = tpu.matmul %8, %9, %cst_8 {dimension_numbers = #tpu.dot_dimension_numbers<[1], [0], [0], [1], [0, 0, 1, 1], [], []>} : vector<2x512xbf16>, vector<512x128xbf16>, vector<2x128xf32> -> vector<2x128xf32>
    %c0_9 = arith.constant 0 : index
    %c0_10 = arith.constant 0 : index
    %11 = vector.load %arg5[%c0_9, %c0_10] : memref<1x128xf32, #tpu.memory_space<vmem>>, vector<1x128xf32>
    %12 = vector.broadcast %11 : vector<1x128xf32> to vector<2x128xf32>
    %13 = arith.addf %10, %12 : vector<2x128xf32>
    %cst_11 = arith.constant dense<0xFF800000> : vector<2xf32>
    %14 = vector.multi_reduction <maximumf>, %13, %cst_11 [1] : vector<2x128xf32> to vector<2xf32>
    %15 = vector.shape_cast %14 : vector<2xf32> to vector<2x1xf32>
    %16 = vector.broadcast %15 : vector<2x1xf32> to vector<2x128xf32>
    %17 = arith.subf %13, %16 : vector<2x128xf32>
    %18 = math.exp %17 : vector<2x128xf32>
    %cst_12 = arith.constant dense<0.000000e+00> : vector<2xf32>
    %19 = vector.multi_reduction <add>, %18, %cst_12 [1] : vector<2x128xf32> to vector<2xf32>
    %20 = vector.shape_cast %19 : vector<2xf32> to vector<2x1xf32>
    %21 = math.log %20 : vector<2x1xf32>
    %22 = arith.addf %15, %21 : vector<2x1xf32>
    %23 = vector.broadcast %22 : vector<2x1xf32> to vector<2x128xf32>
    %24 = arith.subf %13, %23 : vector<2x128xf32>
    %c0_13 = arith.constant 0 : index
    %c0_14 = arith.constant 0 : index
    %25 = vector.load %arg6[%c0_13, %c0_14] : memref<2x128xf32, #tpu.memory_space<vmem>>, vector<2x128xf32>
    tpu.vector_store %arg6[%c0_13, %c0_14], %24 {strides = array<i32>} : memref<2x128xf32, #tpu.memory_space<vmem>>, vector<2x128xf32>,
    return
  }
  func.func @transform_0(%arg0: i32) -> (i32, i32) {
    %c0_i32 = arith.constant 0 : i32
    %c0_i32_0 = arith.constant 0 : i32
    return %arg0, %c0_i32 : i32, i32
  }
  func.func @transform_1(%arg0: i32) -> (i32, i32) {
    %c0_i32 = arith.constant 0 : i32
    %c0_i32_0 = arith.constant 0 : i32
    %c0_i32_1 = arith.constant 0 : i32
    return %c0_i32, %c0_i32_0 : i32, i32
  }
  func.func @transform_2(%arg0: i32) -> (i32, i32) {
    %c0_i32 = arith.constant 0 : i32
    %c0_i32_0 = arith.constant 0 : i32
    %c0_i32_1 = arith.constant 0 : i32
    return %c0_i32, %c0_i32_0 : i32, i32
  }
  func.func @transform_3(%arg0: i32) -> (i32, i32) {
    %c0_i32 = arith.constant 0 : i32
    %c0_i32_0 = arith.constant 0 : i32
    %c0_i32_1 = arith.constant 0 : i32
    return %c0_i32, %c0_i32_0 : i32, i32
  }
  func.func @transform_4(%arg0: i32) -> (i32, i32) {
    %c0_i32 = arith.constant 0 : i32
    %c0_i32_0 = arith.constant 0 : i32
    %c0_i32_1 = arith.constant 0 : i32
    return %c0_i32, %c0_i32_0 : i32, i32
  }
  func.func @transform_5(%arg0: i32) -> (i32, i32) {
    %c0_i32 = arith.constant 0 : i32
    %c0_i32_0 = arith.constant 0 : i32
    return %arg0, %c0_i32 : i32, i32
  }
}

</mosaic_0001>

<llo_original>
// kernel: cnn_forward.3
$region0: #{cnn_forward.3}
  #allocation0 [shape = 'u32[]', space=smem, size = 0x4, offset = 0x4, fixed_abs, tag = 'smem constant byte address 0x4 - core index']
  #allocation1 [shape = 'u32[144,128]{1,0:T(1,128)}', space=vmem, size = 0x12000, scoped, tag = 'internal scratch']
  %s0 = inlined_call_operand.vmem [shape: bf16[392,32], index: 0, kind: input, shape index: {}]
  %s1 = inlined_call_operand.vmem [shape: bf16[392,32], index: 1, kind: input, shape index: {}]
  %s2 = inlined_call_operand.vmem [shape: bf16[392,32], index: 2, kind: input, shape index: {}]
  %s3 = inlined_call_operand.vmem [shape: bf16[392,32], index: 3, kind: input, shape index: {}]
  %s4 = inlined_call_operand.vmem [shape: bf16[32,32], index: 4, kind: input, shape index: {}]
  %s5 = inlined_call_operand.vmem [shape: f32[1,32], index: 5, kind: input, shape index: {}]
  %s6 = inlined_call_operand.vmem [shape: bf16[392,32], index: 6, kind: output, shape index: {}]
  %s7 = sld [smem:[#allocation0]]
  $region34: #{cnn_forward.3} parent=0
    _
  %s9 = ssub.s32 1, %s7
  %s10 = scalar_select 0, %s9, %s7
  // Predicated region
  $region2: #{cnn_forward.3} parent=0 // pred_check
    _
  $region3: #{cnn_forward.3} parent=0 // pred_check_branch
    %12 = sbr.rel (0) target = $region5
  $region4: #{cnn_forward.3} parent=0 // pred_region
    _
  $region5: #{cnn_forward.3} parent=0 // pred_fallthru
    _
  // Predicated region
  $region6: #{cnn_forward.3} parent=0 // pred_check
    _
  $region7: #{cnn_forward.3} parent=0 // pred_check_branch
    %14 = sbr.rel (0) target = $region9
  $region8: #{cnn_forward.3} parent=0 // pred_region
    _
  $region9: #{cnn_forward.3} parent=0 // pred_fallthru
    _
  // Predicated region
  $region10: #{cnn_forward.3} parent=0 // pred_check
    _
  $region11: #{cnn_forward.3} parent=0 // pred_check_branch
    %16 = sbr.rel (0) target = $region13
  $region12: #{cnn_forward.3} parent=0 // pred_region
    _
  $region13: #{cnn_forward.3} parent=0 // pred_fallthru
    _
  // Predicated region
  $region14: #{cnn_forward.3} parent=0 // pred_check
    _
  $region15: #{cnn_forward.3} parent=0 // pred_check_branch
    %18 = sbr.rel (0) target = $region17
  $region16: #{cnn_forward.3} parent=0 // pred_region
    _
  $region17: #{cnn_forward.3} parent=0 // pred_fallthru
    _
  // Predicated region
  $region18: #{cnn_forward.3} parent=0 // pred_check
    _
  $region19: #{cnn_forward.3} parent=0 // pred_check_branch
    %20 = sbr.rel (0) target = $region21
  $region20: #{cnn_forward.3} parent=0 // pred_region
    _
  $region21: #{cnn_forward.3} parent=0 // pred_fallthru
    _
  // Predicated region
  $region22: #{cnn_forward.3} parent=0 // pred_check
    _
  $region23: #{cnn_forward.3} parent=0 // pred_check_branch
    %22 = sbr.rel (0) target = $region25
  $region24: #{cnn_forward.3} parent=0 // pred_region
    _
  $region25: #{cnn_forward.3} parent=0 // pred_fallthru
    _
  %v24 = vld [vmem:[%s4] sm:$0xf]
  %v25 = vld [vmem:[%s4 + $0x4] sm:$0xf]
  %v26 = vld [vmem:[%s4 + $0x8] sm:$0xf]
  %v27 = vld [vmem:[%s4 + $0xc] sm:$0xf]
  %v28 = vld [vmem:[%s0] sm:$0xf]
  %v29 = vld [vmem:[%s0 + $0x4] sm:$0xf]
  %v30 = vld [vmem:[%s0 + $0x8] sm:$0xf]
  %v31 = vld [vmem:[%s0 + $0xc] sm:$0xf]
  %v32 = vld [vmem:[%s0 + $0x10] sm:$0xf]
  %v33 = vld [vmem:[%s0 + $0x14] sm:$0xf]
  %v34 = vld [vmem:[%s0 + $0x18] sm:$0xf]
  %v35 = vld [vmem:[%s0 + $0x1c] sm:$0xf]
  %v36 = vld [vmem:[%s0 + $0x20] sm:$0xf]
  %v37 = vld [vmem:[%s0 + $0x24] sm:$0xf]
  %v38 = vld [vmem:[%s0 + $0x28] sm:$0xf]
  %v39 = vld [vmem:[%s0 + $0x2c] sm:$0xf]
  %v40 = vld [vmem:[%s0 + $0x30] sm:$0xf]
  %v41 = vld [vmem:[%s0 + $0x34] sm:$0xf]
  %v42 = vld [vmem:[%s0 + $0x38] sm:$0xf]
  %v43 = vld [vmem:[%s0 + $0x3c] sm:$0xf]
  %v44 = vld [vmem:[%s0 + $0x40] sm:$0xf]
  %v45 = vld [vmem:[%s0 + $0x44] sm:$0xf]
  %v46 = vld [vmem:[%s0 + $0x48] sm:$0xf]
  %v47 = vld [vmem:[%s0 + $0x4c] sm:$0xf]
  %v48 = vld [vmem:[%s0 + $0x50] sm:$0xf]
  %v49 = vld [vmem:[%s0 + $0x54] sm:$0xf]
  %v50 = vld [vmem:[%s0 + $0x58] sm:$0xf]
  %v51 = vld [vmem:[%s0 + $0x5c] sm:$0xf]
  %v52 = vld [vmem:[%s0 + $0x60] sm:$0xf]
  %v53 = vld [vmem:[%s0 + $0x64] sm:$0xf]
  %v54 = vld [vmem:[%s0 + $0x68] sm:$0xf]
  %v55 = vld [vmem:[%s0 + $0x6c] sm:$0xf]
  %v56 = vld [vmem:[%s0 + $0x70] sm:$0xf]
  %v57 = vld [vmem:[%s0 + $0x74] sm:$0xf]
  %v58 = vld [vmem:[%s0 + $0x78] sm:$0xf]
  %v59 = vld [vmem:[%s0 + $0x7c] sm:$0xf]
  %v60 = vld [vmem:[%s0 + $0x80] sm:$0xf]
  %v61 = vld [vmem:[%s0 + $0x84] sm:$0xf]
  %v62 = vld [vmem:[%s0 + $0x88] sm:$0xf]
  %v63 = vld [vmem:[%s0 + $0x8c] sm:$0xf]
  %v64 = vld [vmem:[%s0 + $0x90] sm:$0xf]
  %v65 = vld [vmem:[%s0 + $0x94] sm:$0xf]
  %v66 = vld [vmem:[%s0 + $0x98] sm:$0xf]
  %v67 = vld [vmem:[%s0 + $0x9c] sm:$0xf]
  %v68 = vld [vmem:[%s0 + $0xa0] sm:$0xf]
  %v69 = vld [vmem:[%s0 + $0xa4] sm:$0xf]
  %v70 = vld [vmem:[%s0 + $0xa8] sm:$0xf]
  %v71 = vld [vmem:[%s0 + $0xac] sm:$0xf]
  %v72 = vld [vmem:[%s0 + $0xb0] sm:$0xf]
  %v73 = vld [vmem:[%s0 + $0xb4] sm:$0xf]
  %v74 = vld [vmem:[%s0 + $0xb8] sm:$0xf]
  %v75 = vld [vmem:[%s0 + $0xbc] sm:$0xf]
  %v76 = vld [vmem:[%s0 + $0xc0] sm:$0xf]
  %v126 = vunpack.c.l.b16 %v28
  %v127 = vunpack.c.l.b16 %v29
  %v128 = vunpack.c.l.b16 %v30
  %v129 = vunpack.c.l.b16 %v31
  %v130 = vunpack.c.l.b16 %v32
  %v131 = vunpack.c.l.b16 %v33
  %v132 = vunpack.c.l.b16 %v34
  %v133 = vunpack.c.l.b16 %v35
  %v134 = vunpack.c.l.b16 %v36
  %v135 = vunpack.c.l.b16 %v37
  %v136 = vunpack.c.l.b16 %v38
  %v137 = vunpack.c.l.b16 %v39
  %v138 = vunpack.c.l.b16 %v40
  %v139 = vunpack.c.l.b16 %v41
  %v140 = vunpack.c.l.b16 %v42
  %v141 = vunpack.c.l.b16 %v43
  %v142 = vunpack.c.l.b16 %v44
  %v143 = vunpack.c.l.b16 %v45
  %v144 = vunpack.c.l.b16 %v46
  %v145 = vunpack.c.l.b16 %v47
  %v146 = vunpack.c.l.b16 %v48
  %v147 = vunpack.c.l.b16 %v49
  %v148 = vunpack.c.l.b16 %v50
  %v149 = vunpack.c.l.b16 %v51
  %v150 = vunpack.c.l.b16 %v52
  %v151 = vunpack.c.l.b16 %v53
  %v152 = vunpack.c.l.b16 %v54
  %v153 = vunpack.c.l.b16 %v55
  %v154 = vunpack.c.l.b16 %v56
  %v155 = vunpack.c.l.b16 %v57
  %v156 = vunpack.c.l.b16 %v58
  %v157 = vunpack.c.l.b16 %v59
  %v158 = vunpack.c.l.b16 %v60
  %v159 = vunpack.c.l.b16 %v61
  %v160 = vunpack.c.l.b16 %v62
  %v161 = vunpack.c.l.b16 %v63
  %v162 = vunpack.c.l.b16 %v64
  %v163 = vunpack.c.l.b16 %v65
  %v164 = vunpack.c.l.b16 %v66
  %v165 = vunpack.c.l.b16 %v67
  %v166 = vunpack.c.l.b16 %v68
  %v167 = vunpack.c.l.b16 %v69
  %v168 = vunpack.c.l.b16 %v70
  %v169 = vunpack.c.l.b16 %v71
  %v170 = vunpack.c.l.b16 %v72
  %v171 = vunpack.c.l.b16 %v73
  %v172 = vunpack.c.l.b16 %v74
  %v173 = vunpack.c.l.b16 %v75
  %v174 = vunpack.c.l.b16 %v76
  %v175 = vpack.c.b16 %v127, %v126
  %v176 = vpack.c.b16 %v129, %v128
  %v177 = vpack.c.b16 %v131, %v130
  %v178 = vpack.c.b16 %v133, %v132
  %v179 = vpack.c.b16 %v135, %v134
  %v180 = vpack.c.b16 %v137, %v136
  %v181 = vpack.c.b16 %v139, %v138
  %v182 = vpack.c.b16 %v141, %v140
  %v183 = vpack.c.b16 %v143, %v142
  %v184 = vpack.c.b16 %v145, %v144
  %v185 = vpack.c.b16 %v147, %v146
  %v186 = vpack.c.b16 %v149, %v148
  %v187 = vpack.c.b16 %v151, %v150
  %v188 = vpack.c.b16 %v153, %v152
  %v189 = vpack.c.b16 %v155, %v154
  %v190 = vpack.c.b16 %v157, %v156
  %v191 = vpack.c.b16 %v159, %v158
  %v192 = vpack.c.b16 %v161, %v160
  %v193 = vpack.c.b16 %v163, %v162
  %v194 = vpack.c.b16 %v165, %v164
  %v195 = vpack.c.b16 %v167, %v166
  %v196 = vpack.c.b16 %v169, %v168
  %v197 = vpack.c.b16 %v171, %v170
  %v198 = vpack.c.b16 %v173, %v172
  %v199 = vpack.c.b16 %v174, %v174
  %v204 = vunpack.c.l.b16 %v24
  %v205 = vunpack.c.l.b16 %v25
  %v206 = vunpack.c.l.b16 %v26
  %v207 = vunpack.c.l.b16 %v27
  %v208 = vpack.c.b16 %v205, %v204
  %v209 = vpack.c.b16 %v207, %v206
  %vm212 = vcmask 261120
  %v214 = vsel %vm212, %v175, 0
  %v217 = vsel %vm212, %v176, 0
  %v220 = vsel %vm212, %v177, 0
  %v223 = vsel %vm212, %v178, 0
  %v226 = vsel %vm212, %v179, 0
  %v229 = vsel %vm212, %v180, 0
  %v232 = vsel %vm212, %v181, 0
  %v235 = vsel %vm212, %v182, 0
  %v238 = vsel %vm212, %v183, 0
  %v241 = vsel %vm212, %v184, 0
  %v244 = vsel %vm212, %v185, 0
  %v247 = vsel %vm212, %v186, 0
  %v250 = vsel %vm212, %v187, 0
  %v253 = vsel %vm212, %v188, 0
  %v256 = vsel %vm212, %v189, 0
  %v259 = vsel %vm212, %v190, 0
  %v262 = vsel %vm212, %v191, 0
  %v265 = vsel %vm212, %v192, 0
  %v268 = vsel %vm212, %v193, 0
  %v271 = vsel %vm212, %v194, 0
  %v274 = vsel %vm212, %v195, 0
  %v277 = vsel %vm212, %v196, 0
  %v280 = vsel %vm212, %v197, 0
  %v283 = vsel %vm212, %v198, 0
  %v286 = vsel %vm212, %v199, 0
  %288 = vmatprep.subr.bf16.mxu0 0
  %289 = vmatpush1.bf16.msra.mxu0 %v208
  %290 = vmatprep.subr.bf16.mxu0 0
  %291 = vmatpush1.bf16.msra.mxu0 %v209
  %292 = vmatprep.subr.bf16.mxu0 0
  %293 = vmatpush1.bf16.msra.mxu0 0
  %294 = vmatprep.subr.bf16.mxu0 0
  %295 = vmatpush1.bf16.msra.mxu0 0
  %296 = vmatprep.subr.bf16.mxu0 0
  %297 = vmatpush1.bf16.msra.mxu0 0
  %298 = vmatprep.subr.bf16.mxu0 0
  %299 = vmatpush1.bf16.msra.mxu0 0
  %300 = vmatprep.subr.bf16.mxu0 0
  %301 = vmatpush1.bf16.msra.mxu0 0
  %302 = vmatprep.subr.bf16.mxu0 0
  %303 = vmatpush1.bf16.msra.mxu0 0
  %304 = vmatprep.subr.bf16.mxu0 0
  %305 = vmatpush1.bf16.msra.mxu0 0
  %306 = vmatprep.subr.bf16.mxu0 0
  %307 = vmatpush1.bf16.msra.mxu0 0
  %308 = vmatprep.subr.bf16.mxu0 0
  %309 = vmatpush1.bf16.msra.mxu0 0
  %310 = vmatprep.subr.bf16.mxu0 0
  %311 = vmatpush1.bf16.msra.mxu0 0
  %312 = vmatprep.subr.bf16.mxu0 0
  %313 = vmatpush1.bf16.msra.mxu0 0
  %314 = vmatprep.subr.bf16.mxu0 0
  %315 = vmatpush1.bf16.msra.mxu0 0
  %316 = vmatprep.subr.bf16.mxu0 0
  %317 = vmatpush1.bf16.msra.mxu0 0
  %318 = vmatprep.subr.bf16.mxu0 0
  %319 = vmatpush1.bf16.msra.mxu0 0
  %320 = vmatprep.mubr.bf16.mxu0 0
  %321 = vmatmul.mubr.bf16.gmra.mrb[0].mxu0 %v214
  %v322 = vpop.f32.mrb[0].mxu0
  %v323 = vadd.f32 0.0, %v322
  %v324 = vpop.f32.mrb[0].mxu0
  %v325 = vpop.f32.mrb[0].mxu0
  %v326 = vadd.f32 0.0, %v325
  %v327 = vpop.f32.mrb[0].mxu0
  %328 = vmatprep.mubr.bf16.mxu0 0
  %329 = vmatmul.mubr.bf16.gmra.mrb[0].mxu0 %v217
  %v330 = vpop.f32.mrb[0].mxu0
  %v331 = vadd.f32 0.0, %v330
  %v332 = vpop.f32.mrb[0].mxu0
  %v333 = vpop.f32.mrb[0].mxu0
  %v334 = vadd.f32 0.0, %v333
  %v335 = vpop.f32.mrb[0].mxu0
  %336 = vmatprep.mubr.bf16.mxu0 0
  %337 = vmatmul.mubr.bf16.gmra.mrb[0].mxu0 %v220
  %v338 = vpop.f32.mrb[0].mxu0
  %v339 = vadd.f32 0.0, %v338
  %v340 = vpop.f32.mrb[0].mxu0
  %v341 = vpop.f32.mrb[0].mxu0
  %v342 = vadd.f32 0.0, %v341
  %v343 = vpop.f32.mrb[0].mxu0
  %344 = vmatprep.mubr.bf16.mxu0 0
  %345 = vmatmul.mubr.bf16.gmra.mrb[0].mxu0 %v223
  %v346 = vpop.f32.mrb[0].mxu0
  %v347 = vadd.f32 0.0, %v346
  %v348 = vpop.f32.mrb[0].mxu0
  %v349 = vpop.f32.mrb[0].mxu0
  %v350 = vadd.f32 0.0, %v349
  %v351 = vpop.f32.mrb[0].mxu0
  %352 = vmatprep.mubr.bf16.mxu0 0
  %353 = vmatmul.mubr.bf16.gmra.mrb[0].mxu0 %v226
  %v354 = vpop.f32.mrb[0].mxu0
  %v355 = vadd.f32 0.0, %v354
  %v356 = vpop.f32.mrb[0].mxu0
  %v357 = vpop.f32.mrb[0].mxu0
  %v358 = vadd.f32 0.0, %v357
  %v359 = vpop.f32.mrb[0].mxu0
  %360 = vmatprep.mubr.bf16.mxu0 0
  %361 = vmatmul.mubr.bf16.gmra.mrb[0].mxu0 %v229
  %v362 = vpop.f32.mrb[0].mxu0
  %v363 = vadd.f32 0.0, %v362
  %v364 = vpop.f32.mrb[0].mxu0
  %v365 = vpop.f32.mrb[0].mxu0
  %v366 = vadd.f32 0.0, %v365
  %v367 = vpop.f32.mrb[0].mxu0
  %368 = vmatprep.mubr.bf16.mxu0 0
  %369 = vmatmul.mubr.bf16.gmra.mrb[0].mxu0 %v232
  %v370 = vpop.f32.mrb[0].mxu0
  %v371 = vadd.f32 0.0, %v370
  %v372 = vpop.f32.mrb[0].mxu0
  %v373 = vpop.f32.mrb[0].mxu0
  %v374 = vadd.f32 0.0, %v373
  %v375 = vpop.f32.mrb[0].mxu0
  %376 = vmatprep.mubr.bf16.mxu0 0
  %377 = vmatmul.mubr.bf16.gmra.mrb[0].mxu0 %v235
  %v378 = vpop.f32.mrb[0].mxu0
  %v379 = vadd.f32 0.0, %v378
  %v380 = vpop.f32.mrb[0].mxu0
  %v381 = vpop.f32.mrb[0].mxu0
  %v382 = vadd.f32 0.0, %v381
  %v383 = vpop.f32.mrb[0].mxu0
  %384 = vmatprep.mubr.bf16.mxu0 0
  %385 = vmatmul.mubr.bf16.gmra.mrb[0].mxu0 %v238
  %v386 = vpop.f32.mrb[0].mxu0
  %v387 = vadd.f32 0.0, %v386
  %v388 = vpop.f32.mrb[0].mxu0
  %v389 = vpop.f32.mrb[0].mxu0
  %v390 = vadd.f32 0.0, %v389
  %v391 = vpop.f32.mrb[0].mxu0
  %392 = vmatprep.mubr.bf16.mxu0 0
  %393 = vmatmul.mubr.bf16.gmra.mrb[0].mxu0 %v241
  %v394 = vpop.f32.mrb[0].mxu0
  %v395 = vadd.f32 0.0, %v394
  %v396 = vpop.f32.mrb[0].mxu0
  %v397 = vpop.f32.mrb[0].mxu0
  %v398 = vadd.f32 0.0, %v397
  %v399 = vpop.f32.mrb[0].mxu0
  %400 = vmatprep.mubr.bf16.mxu0 0
  %401 = vmatmul.mubr.bf16.gmra.mrb[0].mxu0 %v244
  %v402 = vpop.f32.mrb[0].mxu0
  %v403 = vadd.f32 0.0, %v402
  %v404 = vpop.f32.mrb[0].mxu0
  %v405 = vpop.f32.mrb[0].mxu0
  %v406 = vadd.f32 0.0, %v405
  %v407 = vpop.f32.mrb[0].mxu0
  %408 = vmatprep.mubr.bf16.mxu0 0
  %409 = vmatmul.mubr.bf16.gmra.mrb[0].mxu0 %v247
  %v410 = vpop.f32.mrb[0].mxu0
  %v411 = vadd.f32 0.0, %v410
  %v412 = vpop.f32.mrb[0].mxu0
  %v413 = vpop.f32.mrb[0].mxu0
  %v414 = vadd.f32 0.0, %v413
  %v415 = vpop.f32.mrb[0].mxu0
  %416 = vmatprep.mubr.bf16.mxu0 0
  %417 = vmatmul.mubr.bf16.gmra.mrb[0].mxu0 %v250
  %v418 = vpop.f32.mrb[0].mxu0
  %v419 = vadd.f32 0.0, %v418
  %v420 = vpop.f32.mrb[0].mxu0
  %v421 = vpop.f32.mrb[0].mxu0
  %v422 = vadd.f32 0.0, %v421
  %v423 = vpop.f32.mrb[0].mxu0
  %424 = vmatprep.mubr.bf16.mxu0 0
  %425 = vmatmul.mubr.bf16.gmra.mrb[0].mxu0 %v253
  %v426 = vpop.f32.mrb[0].mxu0
  %v427 = vadd.f32 0.0, %v426
  %v428 = vpop.f32.mrb[0].mxu0
  %v429 = vpop.f32.mrb[0].mxu0
  %v430 = vadd.f32 0.0, %v429
  %v431 = vpop.f32.mrb[0].mxu0
  %432 = vmatprep.mubr.bf16.mxu0 0
  %433 = vmatmul.mubr.bf16.gmra.mrb[0].mxu0 %v256
  %v434 = vpop.f32.mrb[0].mxu0
  %v435 = vadd.f32 0.0, %v434
  %v436 = vpop.f32.mrb[0].mxu0
  %v437 = vpop.f32.mrb[0].mxu0
  %v438 = vadd.f32 0.0, %v437
  %v439 = vpop.f32.mrb[0].mxu0
  %440 = vmatprep.mubr.bf16.mxu0 0
  %441 = vmatmul.mubr.bf16.gmra.mrb[0].mxu0 %v259
  %v442 = vpop.f32.mrb[0].mxu0
  %v443 = vadd.f32 0.0, %v442
  %v444 = vpop.f32.mrb[0].mxu0
  %v445 = vpop.f32.mrb[0].mxu0
  %v446 = vadd.f32 0.0, %v445
  %v447 = vpop.f32.mrb[0].mxu0
  %448 = vmatprep.mubr.bf16.mxu0 0
  %449 = vmatmul.mubr.bf16.gmra.mrb[0].mxu0 %v262
  %v450 = vpop.f32.mrb[0].mxu0
  %v451 = vadd.f32 0.0, %v450
  %v452 = vpop.f32.mrb[0].mxu0
  %v453 = vpop.f32.mrb[0].mxu0
  %v454 = vadd.f32 0.0, %v453
  %v455 = vpop.f32.mrb[0].mxu0
  %456 = vmatprep.mubr.bf16.mxu0 0
  %457 = vmatmul.mubr.bf16.gmra.mrb[0].mxu0 %v265
  %v458 = vpop.f32.mrb[0].mxu0
  %v459 = vadd.f32 0.0, %v458
  %v460 = vpop.f32.mrb[0].mxu0
  %v461 = vpop.f32.mrb[0].mxu0
  %v462 = vadd.f32 0.0, %v461
  %v463 = vpop.f32.mrb[0].mxu0
  %464 = vmatprep.mubr.bf16.mxu0 0
  %465 = vmatmul.mubr.bf16.gmra.mrb[0].mxu0 %v268
  %v466 = vpop.f32.mrb[0].mxu0
  %v467 = vadd.f32 0.0, %v466
  %v468 = vpop.f32.mrb[0].mxu0
  %v469 = vpop.f32.mrb[0].mxu0
  %v470 = vadd.f32 0.0, %v469
  %v471 = vpop.f32.mrb[0].mxu0
  %472 = vmatprep.mubr.bf16.mxu0 0
  %473 = vmatmul.mubr.bf16.gmra.mrb[0].mxu0 %v271
  %v474 = vpop.f32.mrb[0].mxu0
  %v475 = vadd.f32 0.0, %v474
  %v476 = vpop.f32.mrb[0].mxu0
  %v477 = vpop.f32.mrb[0].mxu0
  %v478 = vadd.f32 0.0, %v477
  %v479 = vpop.f32.mrb[0].mxu0
  %480 = vmatprep.mubr.bf16.mxu0 0
  %481 = vmatmul.mubr.bf16.gmra.mrb[0].mxu0 %v274
  %v482 = vpop.f32.mrb[0].mxu0
  %v483 = vadd.f32 0.0, %v482
  %v484 = vpop.f32.mrb[0].mxu0
  %v485 = vpop.f32.mrb[0].mxu0
  %v486 = vadd.f32 0.0, %v485
  %v487 = vpop.f32.mrb[0].mxu0
  %488 = vmatprep.mubr.bf16.mxu0 0
  %489 = vmatmul.mubr.bf16.gmra.mrb[0].mxu0 %v277
  %v490 = vpop.f32.mrb[0].mxu0
  %v491 = vadd.f32 0.0, %v490
  %v492 = vpop.f32.mrb[0].mxu0
  %v493 = vpop.f32.mrb[0].mxu0
  %v494 = vadd.f32 0.0, %v493
  %v495 = vpop.f32.mrb[0].mxu0
  %496 = vmatprep.mubr.bf16.mxu0 0
  %497 = vmatmul.mubr.bf16.gmra.mrb[0].mxu0 %v280
  %v498 = vpop.f32.mrb[0].mxu0
  %v499 = vadd.f32 0.0, %v498
  %v500 = vpop.f32.mrb[0].mxu0
  %v501 = vpop.f32.mrb[0].mxu0
  %v502 = vadd.f32 0.0, %v501
  %v503 = vpop.f32.mrb[0].mxu0
  %504 = vmatprep.mubr.bf16.mxu0 0
  %505 = vmatmul.mubr.bf16.gmra.mrb[0].mxu0 %v283
  %v506 = vpop.f32.mrb[0].mxu0
  %v507 = vadd.f32 0.0, %v506
  %v508 = vpop.f32.mrb[0].mxu0
  %v509 = vpop.f32.mrb[0].mxu0
  %v510 = vadd.f32 0.0, %v509
  %v511 = vpop.f32.mrb[0].mxu0
  %512 = vmatprep.mubr.bf16.mxu0 0
  %513 = vmatmul.mubr.bf16.gmra.mrb[0].mxu0 %v286
  %v514 = vpop.f32.mrb[0].mxu0
  %v515 = vadd.f32 0.0, %v514
  %v516 = vpop.f32.mrb[0].mxu0
  %v517 = vpop.f32.mrb[0].mxu0
  %v518 = vpop.f32.mrb[0].mxu0
  %519 = vdwg.mxu0
  %v520 = vld [vmem:[%s1] sm:$0xf]
  %v521 = vld [vmem:[%s1 + $0x4] sm:$0xf]
  %v522 = vld [vmem:[%s1 + $0x8] sm:$0xf]
  %v523 = vld [vmem:[%s1 + $0xc] sm:$0xf]
  %v524 = vld [vmem:[%s1 + $0x10] sm:$0xf]
  %v525 = vld [vmem:[%s1 + $0x14] sm:$0xf]
  %v526 = vld [vmem:[%s1 + $0x18] sm:$0xf]
  %v527 = vld [vmem:[%s1 + $0x1c] sm:$0xf]
  %v528 = vld [vmem:[%s1 + $0x20] sm:$0xf]
  %v529 = vld [vmem:[%s1 + $0x24] sm:$0xf]
  %v530 = vld [vmem:[%s1 + $0x28] sm:$0xf]
  %v531 = vld [vmem:[%s1 + $0x2c] sm:$0xf]
  %v532 = vld [vmem:[%s1 + $0x30] sm:$0xf]
  %v533 = vld [vmem:[%s1 + $0x34] sm:$0xf]
  %v534 = vld [vmem:[%s1 + $0x38] sm:$0xf]
  %v535 = vld [vmem:[%s1 + $0x3c] sm:$0xf]
  %v536 = vld [vmem:[%s1 + $0x40] sm:$0xf]
  %v537 = vld [vmem:[%s1 + $0x44] sm:$0xf]
  %v538 = vld [vmem:[%s1 + $0x48] sm:$0xf]
  %v539 = vld [vmem:[%s1 + $0x4c] sm:$0xf]
  %v540 = vld [vmem:[%s1 + $0x50] sm:$0xf]
  %v541 = vld [vmem:[%s1 + $0x54] sm:$0xf]
  %v542 = vld [vmem:[%s1 + $0x58] sm:$0xf]
  %v543 = vld [vmem:[%s1 + $0x5c] sm:$0xf]
  %v544 = vld [vmem:[%s1 + $0x60] sm:$0xf]
  %v545 = vld [vmem:[%s1 + $0x64] sm:$0xf]
  %v546 = vld [vmem:[%s1 + $0x68] sm:$0xf]
  %v547 = vld [vmem:[%s1 + $0x6c] sm:$0xf]
  %v548 = vld [vmem:[%s1 + $0x70] sm:$0xf]
  %v549 = vld [vmem:[%s1 + $0x74] sm:$0xf]
  %v550 = vld [vmem:[%s1 + $0x78] sm:$0xf]
  %v551 = vld [vmem:[%s1 + $0x7c] sm:$0xf]
  %v552 = vld [vmem:[%s1 + $0x80] sm:$0xf]
  %v553 = vld [vmem:[%s1 + $0x84] sm:$0xf]
  %v554 = vld [vmem:[%s1 + $0x88] sm:$0xf]
  %v555 = vld [vmem:[%s1 + $0x8c] sm:$0xf]
  %v556 = vld [vmem:[%s1 + $0x90] sm:$0xf]
  %v557 = vld [vmem:[%s1 + $0x94] sm:$0xf]
  %v558 = vld [vmem:[%s1 + $0x98] sm:$0xf]
  %v559 = vld [vmem:[%s1 + $0x9c] sm:$0xf]
  %v560 = vld [vmem:[%s1 + $0xa0] sm:$0xf]
  %v561 = vld [vmem:[%s1 + $0xa4] sm:$0xf]
  %v562 = vld [vmem:[%s1 + $0xa8] sm:$0xf]
  %v563 = vld [vmem:[%s1 + $0xac] sm:$0xf]
  %v564 = vld [vmem:[%s1 + $0xb0] sm:$0xf]
  %v565 = vld [vmem:[%s1 + $0xb4] sm:$0xf]
  %v566 = vld [vmem:[%s1 + $0xb8] sm:$0xf]
  %v567 = vld [vmem:[%s1 + $0xbc] sm:$0xf]
  %v568 = vld [vmem:[%s1 + $0xc0] sm:$0xf]
  %v618 = vunpack.c.l.b16 %v520
  %v619 = vunpack.c.l.b16 %v521
  %v620 = vunpack.c.l.b16 %v522
  %v621 = vunpack.c.l.b16 %v523
  %v622 = vunpack.c.l.b16 %v524
  %v623 = vunpack.c.l.b16 %v525
  %v624 = vunpack.c.l.b16 %v526
  %v625 = vunpack.c.l.b16 %v527
  %v626 = vunpack.c.l.b16 %v528
  %v627 = vunpack.c.l.b16 %v529
  %v628 = vunpack.c.l.b16 %v530
  %v629 = vunpack.c.l.b16 %v531
  %v630 = vunpack.c.l.b16 %v532
  %v631 = vunpack.c.l.b16 %v533
  %v632 = vunpack.c.l.b16 %v534
  %v633 = vunpack.c.l.b16 %v535
  %v634 = vunpack.c.l.b16 %v536
  %v635 = vunpack.c.l.b16 %v537
  %v636 = vunpack.c.l.b16 %v538
  %v637 = vunpack.c.l.b16 %v539
  %v638 = vunpack.c.l.b16 %v540
  %v639 = vunpack.c.l.b16 %v541
  %v640 = vunpack.c.l.b16 %v542
  %v641 = vunpack.c.l.b16 %v543
  %v642 = vunpack.c.l.b16 %v544
  %v643 = vunpack.c.l.b16 %v545
  %v644 = vunpack.c.l.b16 %v546
  %v645 = vunpack.c.l.b16 %v547
  %v646 = vunpack.c.l.b16 %v548
  %v647 = vunpack.c.l.b16 %v549
  %v648 = vunpack.c.l.b16 %v550
  %v649 = vunpack.c.l.b16 %v551
  %v650 = vunpack.c.l.b16 %v552
  %v651 = vunpack.c.l.b16 %v553
  %v652 = vunpack.c.l.b16 %v554
  %v653 = vunpack.c.l.b16 %v555
  %v654 = vunpack.c.l.b16 %v556
  %v655 = vunpack.c.l.b16 %v557
  %v656 = vunpack.c.l.b16 %v558
  %v657 = vunpack.c.l.b16 %v559
  %v658 = vunpack.c.l.b16 %v560
  %v659 = vunpack.c.l.b16 %v561
  %v660 = vunpack.c.l.b16 %v562
  %v661 = vunpack.c.l.b16 %v563
  %v662 = vunpack.c.l.b16 %v564
  %v663 = vunpack.c.l.b16 %v565
  %v664 = vunpack.c.l.b16 %v566
  %v665 = vunpack.c.l.b16 %v567
  %v666 = vunpack.c.l.b16 %v568
  %v667 = vpack.c.b16 %v619, %v618
  %v668 = vpack.c.b16 %v621, %v620
  %v669 = vpack.c.b16 %v623, %v622
  %v670 = vpack.c.b16 %v625, %v624
  %v671 = vpack.c.b16 %v627, %v626
  %v672 = vpack.c.b16 %v629, %v628
  %v673 = vpack.c.b16 %v631, %v630
  %v674 = vpack.c.b16 %v633, %v632
  %v675 = vpack.c.b16 %v635, %v634
  %v676 = vpack.c.b16 %v637, %v636
  %v677 = vpack.c.b16 %v639, %v638
  %v678 = vpack.c.b16 %v641, %v640
  %v679 = vpack.c.b16 %v643, %v642
  %v680 = vpack.c.b16 %v645, %v644
  %v681 = vpack.c.b16 %v647, %v646
  %v682 = vpack.c.b16 %v649, %v648
  %v683 = vpack.c.b16 %v651, %v650
  %v684 = vpack.c.b16 %v653, %v652
  %v685 = vpack.c.b16 %v655, %v654
  %v686 = vpack.c.b16 %v657, %v656
  %v687 = vpack.c.b16 %v659, %v658
  %v688 = vpack.c.b16 %v661, %v660
  %v689 = vpack.c.b16 %v663, %v662
  %v690 = vpack.c.b16 %v665, %v664
  %v691 = vpack.c.b16 %v666, %v666
  %v693 = vsel %vm212, %v667, 0
  %v696 = vsel %vm212, %v668, 0
  %v699 = vsel %vm212, %v669, 0
  %v702 = vsel %vm212, %v670, 0
  %v705 = vsel %vm212, %v671, 0
  %v708 = vsel %vm212, %v672, 0
  %v711 = vsel %vm212, %v673, 0
  %v714 = vsel %vm212, %v674, 0
  %v717 = vsel %vm212, %v675, 0
  %v720 = vsel %vm212, %v676, 0
  %v723 = vsel %vm212, %v677, 0
  %v726 = vsel %vm212, %v678, 0
  %v729 = vsel %vm212, %v679, 0
  %v732 = vsel %vm212, %v680, 0
  %v735 = vsel %vm212, %v681, 0
  %v738 = vsel %vm212, %v682, 0
  %v741 = vsel %vm212, %v683, 0
  %v744 = vsel %vm212, %v684, 0
  %v747 = vsel %vm212, %v685, 0
  %v750 = vsel %vm212, %v686, 0
  %v753 = vsel %vm212, %v687, 0
  %v756 = vsel %vm212, %v688, 0
  %v759 = vsel %vm212, %v689, 0
  %v762 = vsel %vm212, %v690, 0
  %v765 = vsel %vm212, %v691, 0
  %767 = vmatprep.subr.bf16.mxu0 0
  %768 = vmatpush1.bf16.msra.mxu0 %v208
  %769 = vmatprep.subr.bf16.mxu0 0
  %770 = vmatpush1.bf16.msra.mxu0 %v209
  %771 = vmatprep.subr.bf16.mxu0 0
  %772 = vmatpush1.bf16.msra.mxu0 0
  %773 = vmatprep.subr.bf16.mxu0 0
  %774 = vmatpush1.bf16.msra.mxu0 0
  %775 = vmatprep.subr.bf16.mxu0 0
  %776 = vmatpush1.bf16.msra.mxu0 0
  %777 = vmatprep.subr.bf16.mxu0 0
  %778 = vmatpush1.bf16.msra.mxu0 0
  %779 = vmatprep.subr.bf16.mxu0 0
  %780 = vmatpush1.bf16.msra.mxu0 0
  %781 = vmatprep.subr.bf16.mxu0 0
  %782 = vmatpush1.bf16.msra.mxu0 0
  %783 = vmatprep.subr.bf16.mxu0 0
  %784 = vmatpush1.bf16.msra.mxu0 0
  %785 = vmatprep.subr.bf16.mxu0 0
  %786 = vmatpush1.bf16.msra.mxu0 0
  %787 = vmatprep.subr.bf16.mxu0 0
  %788 = vmatpush1.bf16.msra.mxu0 0
  %789 = vmatprep.subr.bf16.mxu0 0
  %790 = vmatpush1.bf16.msra.mxu0 0
  %791 = vmatprep.subr.bf16.mxu0 0
  %792 = vmatpush1.bf16.msra.mxu0 0
  %793 = vmatprep.subr.bf16.mxu0 0
  %794 = vmatpush1.bf16.msra.mxu0 0
  %795 = vmatprep.subr.bf16.mxu0 0
  %796 = vmatpush1.bf16.msra.mxu0 0
  %797 = vmatprep.subr.bf16.mxu0 0
  %798 = vmatpush1.bf16.msra.mxu0 0
  %799 = vmatprep.mubr.bf16.mxu0 0
  %800 = vmatmul.mubr.bf16.gmra.mrb[0].mxu0 %v693
  %v801 = vpop.f32.mrb[0].mxu0
  %v802 = vadd.f32 0.0, %v801
  %v803 = vpop.f32.mrb[0].mxu0
  %v804 = vpop.f32.mrb[0].mxu0
  %v805 = vadd.f32 0.0, %v804
  %v806 = vpop.f32.mrb[0].mxu0
  %807 = vmatprep.mubr.bf16.mxu0 0
  %808 = vmatmul.mubr.bf16.gmra.mrb[0].mxu0 %v696
  %v809 = vpop.f32.mrb[0].mxu0
  %v810 = vadd.f32 0.0, %v809
  %v811 = vpop.f32.mrb[0].mxu0
  %v812 = vpop.f32.mrb[0].mxu0
  %v813 = vadd.f32 0.0, %v812
  %v814 = vpop.f32.mrb[0].mxu0
  %815 = vmatprep.mubr.bf16.mxu0 0
  %816 = vmatmul.mubr.bf16.gmra.mrb[0].mxu0 %v699
  %v817 = vpop.f32.mrb[0].mxu0
  %v818 = vadd.f32 0.0, %v817
  %v819 = vpop.f32.mrb[0].mxu0
  %v820 = vpop.f32.mrb[0].mxu0
  %v821 = vadd.f32 0.0, %v820
  %v822 = vpop.f32.mrb[0].mxu0
  %823 = vmatprep.mubr.bf16.mxu0 0
  %824 = vmatmul.mubr.bf16.gmra.mrb[0].mxu0 %v702
  %v825 = vpop.f32.mrb[0].mxu0
  %v826 = vadd.f32 0.0, %v825
  %v827 = vpop.f32.mrb[0].mxu0
  %v828 = vpop.f32.mrb[0].mxu0
  %v829 = vadd.f32 0.0, %v828
  %v830 = vpop.f32.mrb[0].mxu0
  %831 = vmatprep.mubr.bf16.mxu0 0
  %832 = vmatmul.mubr.bf16.gmra.mrb[0].mxu0 %v705
  %v833 = vpop.f32.mrb[0].mxu0
  %v834 = vadd.f32 0.0, %v833
  %v835 = vpop.f32.mrb[0].mxu0
  %v836 = vpop.f32.mrb[0].mxu0
  %v837 = vadd.f32 0.0, %v836
  %v838 = vpop.f32.mrb[0].mxu0
  %839 = vmatprep.mubr.bf16.mxu0 0
  %840 = vmatmul.mubr.bf16.gmra.mrb[0].mxu0 %v708
  %v841 = vpop.f32.mrb[0].mxu0
  %v842 = vadd.f32 0.0, %v841
  %v843 = vpop.f32.mrb[0].mxu0
  %v844 = vpop.f32.mrb[0].mxu0
  %v845 = vadd.f32 0.0, %v844
  %v846 = vpop.f32.mrb[0].mxu0
  %847 = vmatprep.mubr.bf16.mxu0 0
  %848 = vmatmul.mubr.bf16.gmra.mrb[0].mxu0 %v711
  %v849 = vpop.f32.mrb[0].mxu0
  %v850 = vadd.f32 0.0, %v849
  %v851 = vpop.f32.mrb[0].mxu0
  %v852 = vpop.f32.mrb[0].mxu0
  %v853 = vadd.f32 0.0, %v852
  %v854 = vpop.f32.mrb[0].mxu0
  %855 = vmatprep.mubr.bf16.mxu0 0
  %856 = vmatmul.mubr.bf16.gmra.mrb[0].mxu0 %v714
  %v857 = vpop.f32.mrb[0].mxu0
  %v858 = vadd.f32 0.0, %v857
  %v859 = vpop.f32.mrb[0].mxu0
  %v860 = vpop.f32.mrb[0].mxu0
  %v861 = vadd.f32 0.0, %v860
  %v862 = vpop.f32.mrb[0].mxu0
  %863 = vmatprep.mubr.bf16.mxu0 0
  %864 = vmatmul.mubr.bf16.gmra.mrb[0].mxu0 %v717
  %v865 = vpop.f32.mrb[0].mxu0
  %v866 = vadd.f32 0.0, %v865
  %v867 = vpop.f32.mrb[0].mxu0
  %v868 = vpop.f32.mrb[0].mxu0
  %v869 = vadd.f32 0.0, %v868
  %v870 = vpop.f32.mrb[0].mxu0
  %871 = vmatprep.mubr.bf16.mxu0 0
  %872 = vmatmul.mubr.bf16.gmra.mrb[0].mxu0 %v720
  %v873 = vpop.f32.mrb[0].mxu0
  %v874 = vadd.f32 0.0, %v873
  %v875 = vpop.f32.mrb[0].mxu0
  %v876 = vpop.f32.mrb[0].mxu0
  %v877 = vadd.f32 0.0, %v876
  %v878 = vpop.f32.mrb[0].mxu0
  %879 = vmatprep.mubr.bf16.mxu0 0
  %880 = vmatmul.mubr.bf16.gmra.mrb[0].mxu0 %v723
  %v881 = vpop.f32.mrb[0].mxu0
  %v882 = vadd.f32 0.0, %v881
  %v883 = vpop.f32.mrb[0].mxu0
  %v884 = vpop.f32.mrb[0].mxu0
  %v885 = vadd.f32 0.0, %v884
  %v886 = vpop.f32.mrb[0].mxu0
  %887 = vmatprep.mubr.bf16.mxu0 0
  %888 = vmatmul.mubr.bf16.gmra.mrb[0].mxu0 %v726
  %v889 = vpop.f32.mrb[0].mxu0
  %v890 = vadd.f32 0.0, %v889
  %v891 = vpop.f32.mrb[0].mxu0
  %v892 = vpop.f32.mrb[0].mxu0
  %v893 = vadd.f32 0.0, %v892
  %v894 = vpop.f32.mrb[0].mxu0
  %895 = vmatprep.mubr.bf16.mxu0 0
  %896 = vmatmul.mubr.bf16.gmra.mrb[0].mxu0 %v729
  %v897 = vpop.f32.mrb[0].mxu0
  %v898 = vadd.f32 0.0, %v897
  %v899 = vpop.f32.mrb[0].mxu0
  %v900 = vpop.f32.mrb[0].mxu0
  %v901 = vadd.f32 0.0, %v900
  %v902 = vpop.f32.mrb[0].mxu0
  %903 = vmatprep.mubr.bf16.mxu0 0
  %904 = vmatmul.mubr.bf16.gmra.mrb[0].mxu0 %v732
  %v905 = vpop.f32.mrb[0].mxu0
  %v906 = vadd.f32 0.0, %v905
  %v907 = vpop.f32.mrb[0].mxu0
  %v908 = vpop.f32.mrb[0].mxu0
  %v909 = vadd.f32 0.0, %v908
  %v910 = vpop.f32.mrb[0].mxu0
  %911 = vmatprep.mubr.bf16.mxu0 0
  %912 = vmatmul.mubr.bf16.gmra.mrb[0].mxu0 %v735
  %v913 = vpop.f32.mrb[0].mxu0
  %v914 = vadd.f32 0.0, %v913
  %v915 = vpop.f32.mrb[0].mxu0
  %v916 = vpop.f32.mrb[0].mxu0
  %v917 = vadd.f32 0.0, %v916
  %v918 = vpop.f32.mrb[0].mxu0
  %919 = vmatprep.mubr.bf16.mxu0 0
  %920 = vmatmul.mubr.bf16.gmra.mrb[0].mxu0 %v738
  %v921 = vpop.f32.mrb[0].mxu0
  %v922 = vadd.f32 0.0, %v921
  %v923 = vpop.f32.mrb[0].mxu0
  %v924 = vpop.f32.mrb[0].mxu0
  %v925 = vadd.f32 0.0, %v924
  %v926 = vpop.f32.mrb[0].mxu0
  %927 = vmatprep.mubr.bf16.mxu0 0
  %928 = vmatmul.mubr.bf16.gmra.mrb[0].mxu0 %v741
  %v929 = vpop.f32.mrb[0].mxu0
  %v930 = vadd.f32 0.0, %v929
  %v931 = vpop.f32.mrb[0].mxu0
  %v932 = vpop.f32.mrb[0].mxu0
  %v933 = vadd.f32 0.0, %v932
  %v934 = vpop.f32.mrb[0].mxu0
  %935 = vmatprep.mubr.bf16.mxu0 0
  %936 = vmatmul.mubr.bf16.gmra.mrb[0].mxu0 %v744
  %v937 = vpop.f32.mrb[0].mxu0
  %v938 = vadd.f32 0.0, %v937
  %v939 = vpop.f32.mrb[0].mxu0
  %v940 = vpop.f32.mrb[0].mxu0
  %v941 = vadd.f32 0.0, %v940
  %v942 = vpop.f32.mrb[0].mxu0
  %943 = vmatprep.mubr.bf16.mxu0 0
  %944 = vmatmul.mubr.bf16.gmra.mrb[0].mxu0 %v747
  %v945 = vpop.f32.mrb[0].mxu0
  %v946 = vadd.f32 0.0, %v945
  %v947 = vpop.f32.mrb[0].mxu0
  %v948 = vpop.f32.mrb[0].mxu0
  %v949 = vadd.f32 0.0, %v948
  %v950 = vpop.f32.mrb[0].mxu0
  %951 = vmatprep.mubr.bf16.mxu0 0
  %952 = vmatmul.mubr.bf16.gmra.mrb[0].mxu0 %v750
  %v953 = vpop.f32.mrb[0].mxu0
  %v954 = vadd.f32 0.0, %v953
  %v955 = vpop.f32.mrb[0].mxu0
  %v956 = vpop.f32.mrb[0].mxu0
  %v957 = vadd.f32 0.0, %v956
  %v958 = vpop.f32.mrb[0].mxu0
  %959 = vmatprep.mubr.bf16.mxu0 0
  %960 = vmatmul.mubr.bf16.gmra.mrb[0].mxu0 %v753
  %v961 = vpop.f32.mrb[0].mxu0
  %v962 = vadd.f32 0.0, %v961
  %v963 = vpop.f32.mrb[0].mxu0
  %v964 = vpop.f32.mrb[0].mxu0
  %v965 = vadd.f32 0.0, %v964
  %v966 = vpop.f32.mrb[0].mxu0
  %967 = vmatprep.mubr.bf16.mxu0 0
  %968 = vmatmul.mubr.bf16.gmra.mrb[0].mxu0 %v756
  %v969 = vpop.f32.mrb[0].mxu0
  %v970 = vadd.f32 0.0, %v969
  %v971 = vpop.f32.mrb[0].mxu0
  %v972 = vpop.f32.mrb[0].mxu0
  %v973 = vadd.f32 0.0, %v972
  %v974 = vpop.f32.mrb[0].mxu0
  %975 = vmatprep.mubr.bf16.mxu0 0
  %976 = vmatmul.mubr.bf16.gmra.mrb[0].mxu0 %v759
  %v977 = vpop.f32.mrb[0].mxu0
  %v978 = vadd.f32 0.0, %v977
  %v979 = vpop.f32.mrb[0].mxu0
  %v980 = vpop.f32.mrb[0].mxu0
  %v981 = vadd.f32 0.0, %v980
  %v982 = vpop.f32.mrb[0].mxu0
  %983 = vmatprep.mubr.bf16.mxu0 0
  %984 = vmatmul.mubr.bf16.gmra.mrb[0].mxu0 %v762
  %v985 = vpop.f32.mrb[0].mxu0
  %v986 = vadd.f32 0.0, %v985
  %v987 = vpop.f32.mrb[0].mxu0
  %v988 = vpop.f32.mrb[0].mxu0
  %v989 = vadd.f32 0.0, %v988
  %v990 = vpop.f32.mrb[0].mxu0
  %991 = vmatprep.mubr.bf16.mxu0 0
  %992 = vmatmul.mubr.bf16.gmra.mrb[0].mxu0 %v765
  %v993 = vpop.f32.mrb[0].mxu0
  %v994 = vadd.f32 0.0, %v993
  %v995 = vpop.f32.mrb[0].mxu0
  %v996 = vpop.f32.mrb[0].mxu0
  %v997 = vpop.f32.mrb[0].mxu0
  %998 = vdwg.mxu0
  %v999 = vmax.f32 %v323, %v802
  %v1000 = vmax.f32 %v326, %v805
  %v1001 = vmax.f32 %v331, %v810
  %v1002 = vmax.f32 %v334, %v813
  %v1003 = vmax.f32 %v339, %v818
  %v1004 = vmax.f32 %v342, %v821
  %v1005 = vmax.f32 %v347, %v826
  %v1006 = vmax.f32 %v350, %v829
  %v1007 = vmax.f32 %v355, %v834
  %v1008 = vmax.f32 %v358, %v837
  %v1009 = vmax.f32 %v363, %v842
  %v1010 = vmax.f32 %v366, %v845
  %v1011 = vmax.f32 %v371, %v850
  %v1012 = vmax.f32 %v374, %v853
  %v1013 = vmax.f32 %v379, %v858
  %v1014 = vmax.f32 %v382, %v861
  %v1015 = vmax.f32 %v387, %v866
  %v1016 = vmax.f32 %v390, %v869
  %v1017 = vmax.f32 %v395, %v874
  %v1018 = vmax.f32 %v398, %v877
  %v1019 = vmax.f32 %v403, %v882
  %v1020 = vmax.f32 %v406, %v885
  %v1021 = vmax.f32 %v411, %v890
  %v1022 = vmax.f32 %v414, %v893
  %v1023 = vmax.f32 %v419, %v898
  %v1024 = vmax.f32 %v422, %v901
  %v1025 = vmax.f32 %v427, %v906
  %v1026 = vmax.f32 %v430, %v909
  %v1027 = vmax.f32 %v435, %v914
  %v1028 = vmax.f32 %v438, %v917
  %v1029 = vmax.f32 %v443, %v922
  %v1030 = vmax.f32 %v446, %v925
  %v1031 = vmax.f32 %v451, %v930
  %v1032 = vmax.f32 %v454, %v933
  %v1033 = vmax.f32 %v459, %v938
  %v1034 = vmax.f32 %v462, %v941
  %v1035 = vmax.f32 %v467, %v946
  %v1036 = vmax.f32 %v470, %v949
  %v1037 = vmax.f32 %v475, %v954
  %v1038 = vmax.f32 %v478, %v957
  %v1039 = vmax.f32 %v483, %v962
  %v1040 = vmax.f32 %v486, %v965
  %v1041 = vmax.f32 %v491, %v970
  %v1042 = vmax.f32 %v494, %v973
  %v1043 = vmax.f32 %v499, %v978
  %v1044 = vmax.f32 %v502, %v981
  %v1045 = vmax.f32 %v507, %v986
  %v1046 = vmax.f32 %v510, %v989
  %v1047 = vmax.f32 %v515, %v994
  %v1048 = vld [vmem:[%s2] sm:$0xf]
  %v1049 = vld [vmem:[%s2 + $0x4] sm:$0xf]
  %v1050 = vld [vmem:[%s2 + $0x8] sm:$0xf]
  %v1051 = vld [vmem:[%s2 + $0xc] sm:$0xf]
  %v1052 = vld [vmem:[%s2 + $0x10] sm:$0xf]
  %v1053 = vld [vmem:[%s2 + $0x14] sm:$0xf]
  %v1054 = vld [vmem:[%s2 + $0x18] sm:$0xf]
  %v1055 = vld [vmem:[%s2 + $0x1c] sm:$0xf]
  %v1056 = vld [vmem:[%s2 + $0x20] sm:$0xf]
  %v1057 = vld [vmem:[%s2 + $0x24] sm:$0xf]
  %v1058 = vld [vmem:[%s2 + $0x28] sm:$0xf]
  %v1059 = vld [vmem:[%s2 + $0x2c] sm:$0xf]
  %v1060 = vld [vmem:[%s2 + $0x30] sm:$0xf]
  %v1061 = vld [vmem:[%s2 + $0x34] sm:$0xf]
  %v1062 = vld [vmem:[%s2 + $0x38] sm:$0xf]
  %v1063 = vld [vmem:[%s2 + $0x3c] sm:$0xf]
  %v1064 = vld [vmem:[%s2 + $0x40] sm:$0xf]
  %v1065 = vld [vmem:[%s2 + $0x44] sm:$0xf]
  %v1066 = vld [vmem:[%s2 + $0x48] sm:$0xf]
  %v1067 = vld [vmem:[%s2 + $0x4c] sm:$0xf]
  %v1068 = vld [vmem:[%s2 + $0x50] sm:$0xf]
  %v1069 = vld [vmem:[%s2 + $0x54] sm:$0xf]
  %v1070 = vld [vmem:[%s2 + $0x58] sm:$0xf]
  %v1071 = vld [vmem:[%s2 + $0x5c] sm:$0xf]
  %v1072 = vld [vmem:[%s2 + $0x60] sm:$0xf]
  %v1073 = vld [vmem:[%s2 + $0x64] sm:$0xf]
  %v1074 = vld [vmem:[%s2 + $0x68] sm:$0xf]
  %v1075 = vld [vmem:[%s2 + $0x6c] sm:$0xf]
  %v1076 = vld [vmem:[%s2 + $0x70] sm:$0xf]
  %v1077 = vld [vmem:[%s2 + $0x74] sm:$0xf]
  %v1078 = vld [vmem:[%s2 + $0x78] sm:$0xf]
  %v1079 = vld [vmem:[%s2 + $0x7c] sm:$0xf]
  %v1080 = vld [vmem:[%s2 + $0x80] sm:$0xf]
  %v1081 = vld [vmem:[%s2 + $0x84] sm:$0xf]
  %v1082 = vld [vmem:[%s2 + $0x88] sm:$0xf]
  %v1083 = vld [vmem:[%s2 + $0x8c] sm:$0xf]
  %v1084 = vld [vmem:[%s2 + $0x90] sm:$0xf]
  %v1085 = vld [vmem:[%s2 + $0x94] sm:$0xf]
  %v1086 = vld [vmem:[%s2 + $0x98] sm:$0xf]
  %v1087 = vld [vmem:[%s2 + $0x9c] sm:$0xf]
  %v1088 = vld [vmem:[%s2 + $0xa0] sm:$0xf]
  %v1089 = vld [vmem:[%s2 + $0xa4] sm:$0xf]
  %v1090 = vld [vmem:[%s2 + $0xa8] sm:$0xf]
  %v1091 = vld [vmem:[%s2 + $0xac] sm:$0xf]
  %v1092 = vld [vmem:[%s2 + $0xb0] sm:$0xf]
  %v1093 = vld [vmem:[%s2 + $0xb4] sm:$0xf]
  %v1094 = vld [vmem:[%s2 + $0xb8] sm:$0xf]
  %v1095 = vld [vmem:[%s2 + $0xbc] sm:$0xf]
  %v1096 = vld [vmem:[%s2 + $0xc0] sm:$0xf]
  %v1146 = vunpack.c.l.b16 %v1048
  %v1147 = vunpack.c.l.b16 %v1049
  %v1148 = vunpack.c.l.b16 %v1050
  %v1149 = vunpack.c.l.b16 %v1051
  %v1150 = vunpack.c.l.b16 %v1052
  %v1151 = vunpack.c.l.b16 %v1053
  %v1152 = vunpack.c.l.b16 %v1054
  %v1153 = vunpack.c.l.b16 %v1055
  %v1154 = vunpack.c.l.b16 %v1056
  %v1155 = vunpack.c.l.b16 %v1057
  %v1156 = vunpack.c.l.b16 %v1058
  %v1157 = vunpack.c.l.b16 %v1059
  %v1158 = vunpack.c.l.b16 %v1060
  %v1159 = vunpack.c.l.b16 %v1061
  %v1160 = vunpack.c.l.b16 %v1062
  %v1161 = vunpack.c.l.b16 %v1063
  %v1162 = vunpack.c.l.b16 %v1064
  %v1163 = vunpack.c.l.b16 %v1065
  %v1164 = vunpack.c.l.b16 %v1066
  %v1165 = vunpack.c.l.b16 %v1067
  %v1166 = vunpack.c.l.b16 %v1068
  %v1167 = vunpack.c.l.b16 %v1069
  %v1168 = vunpack.c.l.b16 %v1070
  %v1169 = vunpack.c.l.b16 %v1071
  %v1170 = vunpack.c.l.b16 %v1072
  %v1171 = vunpack.c.l.b16 %v1073
  %v1172 = vunpack.c.l.b16 %v1074
  %v1173 = vunpack.c.l.b16 %v1075
  %v1174 = vunpack.c.l.b16 %v1076
  %v1175 = vunpack.c.l.b16 %v1077
  %v1176 = vunpack.c.l.b16 %v1078
  %v1177 = vunpack.c.l.b16 %v1079
  %v1178 = vunpack.c.l.b16 %v1080
  %v1179 = vunpack.c.l.b16 %v1081
  %v1180 = vunpack.c.l.b16 %v1082
  %v1181 = vunpack.c.l.b16 %v1083
  %v1182 = vunpack.c.l.b16 %v1084
  %v1183 = vunpack.c.l.b16 %v1085
  %v1184 = vunpack.c.l.b16 %v1086
  %v1185 = vunpack.c.l.b16 %v1087
  %v1186 = vunpack.c.l.b16 %v1088
  %v1187 = vunpack.c.l.b16 %v1089
  %v1188 = vunpack.c.l.b16 %v1090
  %v1189 = vunpack.c.l.b16 %v1091
  %v1190 = vunpack.c.l.b16 %v1092
  %v1191 = vunpack.c.l.b16 %v1093
  %v1192 = vunpack.c.l.b16 %v1094
  %v1193 = vunpack.c.l.b16 %v1095
  %v1194 = vunpack.c.l.b16 %v1096
  %v1195 = vpack.c.b16 %v1147, %v1146
  %v1196 = vpack.c.b16 %v1149, %v1148
  %v1197 = vpack.c.b16 %v1151, %v1150
  %v1198 = vpack.c.b16 %v1153, %v1152
  %v1199 = vpack.c.b16 %v1155, %v1154
  %v1200 = vpack.c.b16 %v1157, %v1156
  %v1201 = vpack.c.b16 %v1159, %v1158
  %v1202 = vpack.c.b16 %v1161, %v1160
  %v1203 = vpack.c.b16 %v1163, %v1162
  %v1204 = vpack.c.b16 %v1165, %v1164
  %v1205 = vpack.c.b16 %v1167, %v1166
  %v1206 = vpack.c.b16 %v1169, %v1168
  %v1207 = vpack.c.b16 %v1171, %v1170
  %v1208 = vpack.c.b16 %v1173, %v1172
  %v1209 = vpack.c.b16 %v1175, %v1174
  %v1210 = vpack.c.b16 %v1177, %v1176
  %v1211 = vpack.c.b16 %v1179, %v1178
  %v1212 = vpack.c.b16 %v1181, %v1180
  %v1213 = vpack.c.b16 %v1183, %v1182
  %v1214 = vpack.c.b16 %v1185, %v1184
  %v1215 = vpack.c.b16 %v1187, %v1186
  %v1216 = vpack.c.b16 %v1189, %v1188
  %v1217 = vpack.c.b16 %v1191, %v1190
  %v1218 = vpack.c.b16 %v1193, %v1192
  %v1219 = vpack.c.b16 %v1194, %v1194
  %v1221 = vsel %vm212, %v1195, 0
  %v1224 = vsel %vm212, %v1196, 0
  %v1227 = vsel %vm212, %v1197, 0
  %v1230 = vsel %vm212, %v1198, 0
  %v1233 = vsel %vm212, %v1199, 0
  %v1236 = vsel %vm212, %v1200, 0
  %v1239 = vsel %vm212, %v1201, 0
  %v1242 = vsel %vm212, %v1202, 0
  %v1245 = vsel %vm212, %v1203, 0
  %v1248 = vsel %vm212, %v1204, 0
  %v1251 = vsel %vm212, %v1205, 0
  %v1254 = vsel %vm212, %v1206, 0
  %v1257 = vsel %vm212, %v1207, 0
  %v1260 = vsel %vm212, %v1208, 0
  %v1263 = vsel %vm212, %v1209, 0
  %v1266 = vsel %vm212, %v1210, 0
  %v1269 = vsel %vm212, %v1211, 0
  %v1272 = vsel %vm212, %v1212, 0
  %v1275 = vsel %vm212, %v1213, 0
  %v1278 = vsel %vm212, %v1214, 0
  %v1281 = vsel %vm212, %v1215, 0
  %v1284 = vsel %vm212, %v1216, 0
  %v1287 = vsel %vm212, %v1217, 0
  %v1290 = vsel %vm212, %v1218, 0
  %v1293 = vsel %vm212, %v1219, 0
  %1295 = vmatprep.subr.bf16.mxu0 0
  %1296 = vmatpush1.bf16.msra.mxu0 %v208
  %1297 = vmatprep.subr.bf16.mxu0 0
  %1298 = vmatpush1.bf16.msra.mxu0 %v209
  %1299 = vmatprep.subr.bf16.mxu0 0
  %1300 = vmatpush1.bf16.msra.mxu0 0
  %1301 = vmatprep.subr.bf16.mxu0 0
  %1302 = vmatpush1.bf16.msra.mxu0 0
  %1303 = vmatprep.subr.bf16.mxu0 0
  %1304 = vmatpush1.bf16.msra.mxu0 0
  %1305 = vmatprep.subr.bf16.mxu0 0
  %1306 = vmatpush1.bf16.msra.mxu0 0
  %1307 = vmatprep.subr.bf16.mxu0 0
  %1308 = vmatpush1.bf16.msra.mxu0 0
  %1309 = vmatprep.subr.bf16.mxu0 0
  %1310 = vmatpush1.bf16.msra.mxu0 0
  %1311 = vmatprep.subr.bf16.mxu0 0
  %1312 = vmatpush1.bf16.msra.mxu0 0
  %1313 = vmatprep.subr.bf16.mxu0 0
  %1314 = vmatpush1.bf16.msra.mxu0 0
  %1315 = vmatprep.subr.bf16.mxu0 0
  %1316 = vmatpush1.bf16.msra.mxu0 0
  %1317 = vmatprep.subr.bf16.mxu0 0
  %1318 = vmatpush1.bf16.msra.mxu0 0
  %1319 = vmatprep.subr.bf16.mxu0 0
  %1320 = vmatpush1.bf16.msra.mxu0 0
  %1321 = vmatprep.subr.bf16.mxu0 0
  %1322 = vmatpush1.bf16.msra.mxu0 0
  %1323 = vmatprep.subr.bf16.mxu0 0
  %1324 = vmatpush1.bf16.msra.mxu0 0
  %1325 = vmatprep.subr.bf16.mxu0 0
  %1326 = vmatpush1.bf16.msra.mxu0 0
  %1327 = vmatprep.mubr.bf16.mxu0 0
  %1328 = vmatmul.mubr.bf16.gmra.mrb[0].mxu0 %v1221
  %v1329 = vpop.f32.mrb[0].mxu0
  %v1330 = vadd.f32 0.0, %v1329
  %v1331 = vpop.f32.mrb[0].mxu0
  %v1332 = vpop.f32.mrb[0].mxu0
  %v1333 = vadd.f32 0.0, %v1332
  %v1334 = vpop.f32.mrb[0].mxu0
  %1335 = vmatprep.mubr.bf16.mxu0 0
  %1336 = vmatmul.mubr.bf16.gmra.mrb[0].mxu0 %v1224
  %v1337 = vpop.f32.mrb[0].mxu0
  %v1338 = vadd.f32 0.0, %v1337
  %v1339 = vpop.f32.mrb[0].mxu0
  %v1340 = vpop.f32.mrb[0].mxu0
  %v1341 = vadd.f32 0.0, %v1340
  %v1342 = vpop.f32.mrb[0].mxu0
  %1343 = vmatprep.mubr.bf16.mxu0 0
  %1344 = vmatmul.mubr.bf16.gmra.mrb[0].mxu0 %v1227
  %v1345 = vpop.f32.mrb[0].mxu0
  %v1346 = vadd.f32 0.0, %v1345
  %v1347 = vpop.f32.mrb[0].mxu0
  %v1348 = vpop.f32.mrb[0].mxu0
  %v1349 = vadd.f32 0.0, %v1348
  %v1350 = vpop.f32.mrb[0].mxu0
  %1351 = vmatprep.mubr.bf16.mxu0 0
  %1352 = vmatmul.mubr.bf16.gmra.mrb[0].mxu0 %v1230
  %v1353 = vpop.f32.mrb[0].mxu0
  %v1354 = vadd.f32 0.0, %v1353
  %v1355 = vpop.f32.mrb[0].mxu0
  %v1356 = vpop.f32.mrb[0].mxu0
  %v1357 = vadd.f32 0.0, %v1356
  %v1358 = vpop.f32.mrb[0].mxu0
  %1359 = vmatprep.mubr.bf16.mxu0 0
  %1360 = vmatmul.mubr.bf16.gmra.mrb[0].mxu0 %v1233
  %v1361 = vpop.f32.mrb[0].mxu0
  %v1362 = vadd.f32 0.0, %v1361
  %v1363 = vpop.f32.mrb[0].mxu0
  %v1364 = vpop.f32.mrb[0].mxu0
  %v1365 = vadd.f32 0.0, %v1364
  %v1366 = vpop.f32.mrb[0].mxu0
  %1367 = vmatprep.mubr.bf16.mxu0 0
  %1368 = vmatmul.mubr.bf16.gmra.mrb[0].mxu0 %v1236
  %v1369 = vpop.f32.mrb[0].mxu0
  %v1370 = vadd.f32 0.0, %v1369
  %v1371 = vpop.f32.mrb[0].mxu0
  %v1372 = vpop.f32.mrb[0].mxu0
  %v1373 = vadd.f32 0.0, %v1372
  %v1374 = vpop.f32.mrb[0].mxu0
  %1375 = vmatprep.mubr.bf16.mxu0 0
  %1376 = vmatmul.mubr.bf16.gmra.mrb[0].mxu0 %v1239
  %v1377 = vpop.f32.mrb[0].mxu0
  %v1378 = vadd.f32 0.0, %v1377
  %v1379 = vpop.f32.mrb[0].mxu0
  %v1380 = vpop.f32.mrb[0].mxu0
  %v1381 = vadd.f32 0.0, %v1380
  %v1382 = vpop.f32.mrb[0].mxu0
  %1383 = vmatprep.mubr.bf16.mxu0 0
  %1384 = vmatmul.mubr.bf16.gmra.mrb[0].mxu0 %v1242
  %v1385 = vpop.f32.mrb[0].mxu0
  %v1386 = vadd.f32 0.0, %v1385
  %v1387 = vpop.f32.mrb[0].mxu0
  %v1388 = vpop.f32.mrb[0].mxu0
  %v1389 = vadd.f32 0.0, %v1388
  %v1390 = vpop.f32.mrb[0].mxu0
  %1391 = vmatprep.mubr.bf16.mxu0 0
  %1392 = vmatmul.mubr.bf16.gmra.mrb[0].mxu0 %v1245
  %v1393 = vpop.f32.mrb[0].mxu0
  %v1394 = vadd.f32 0.0, %v1393
  %v1395 = vpop.f32.mrb[0].mxu0
  %v1396 = vpop.f32.mrb[0].mxu0
  %v1397 = vadd.f32 0.0, %v1396
  %v1398 = vpop.f32.mrb[0].mxu0
  %1399 = vmatprep.mubr.bf16.mxu0 0
  %1400 = vmatmul.mubr.bf16.gmra.mrb[0].mxu0 %v1248
  %v1401 = vpop.f32.mrb[0].mxu0
  %v1402 = vadd.f32 0.0, %v1401
  %v1403 = vpop.f32.mrb[0].mxu0
  %v1404 = vpop.f32.mrb[0].mxu0
  %v1405 = vadd.f32 0.0, %v1404
  %v1406 = vpop.f32.mrb[0].mxu0
  %1407 = vmatprep.mubr.bf16.mxu0 0
  %1408 = vmatmul.mubr.bf16.gmra.mrb[0].mxu0 %v1251
  %v1409 = vpop.f32.mrb[0].mxu0
  %v1410 = vadd.f32 0.0, %v1409
  %v1411 = vpop.f32.mrb[0].mxu0
  %v1412 = vpop.f32.mrb[0].mxu0
  %v1413 = vadd.f32 0.0, %v1412
  %v1414 = vpop.f32.mrb[0].mxu0
  %1415 = vmatprep.mubr.bf16.mxu0 0
  %1416 = vmatmul.mubr.bf16.gmra.mrb[0].mxu0 %v1254
  %v1417 = vpop.f32.mrb[0].mxu0
  %v1418 = vadd.f32 0.0, %v1417
  %v1419 = vpop.f32.mrb[0].mxu0
  %v1420 = vpop.f32.mrb[0].mxu0
  %v1421 = vadd.f32 0.0, %v1420
  %v1422 = vpop.f32.mrb[0].mxu0
  %1423 = vmatprep.mubr.bf16.mxu0 0
  %1424 = vmatmul.mubr.bf16.gmra.mrb[0].mxu0 %v1257
  %v1425 = vpop.f32.mrb[0].mxu0
  %v1426 = vadd.f32 0.0, %v1425
  %v1427 = vpop.f32.mrb[0].mxu0
  %v1428 = vpop.f32.mrb[0].mxu0
  %v1429 = vadd.f32 0.0, %v1428
  %v1430 = vpop.f32.mrb[0].mxu0
  %1431 = vmatprep.mubr.bf16.mxu0 0
  %1432 = vmatmul.mubr.bf16.gmra.mrb[0].mxu0 %v1260
  %v1433 = vpop.f32.mrb[0].mxu0
  %v1434 = vadd.f32 0.0, %v1433
  %v1435 = vpop.f32.mrb[0].mxu0
  %v1436 = vpop.f32.mrb[0].mxu0
  %v1437 = vadd.f32 0.0, %v1436
  %v1438 = vpop.f32.mrb[0].mxu0
  %1439 = vmatprep.mubr.bf16.mxu0 0
  %1440 = vmatmul.mubr.bf16.gmra.mrb[0].mxu0 %v1263
  %v1441 = vpop.f32.mrb[0].mxu0
  %v1442 = vadd.f32 0.0, %v1441
  %v1443 = vpop.f32.mrb[0].mxu0
  %v1444 = vpop.f32.mrb[0].mxu0
  %v1445 = vadd.f32 0.0, %v1444
  %v1446 = vpop.f32.mrb[0].mxu0
  %1447 = vmatprep.mubr.bf16.mxu0 0
  %1448 = vmatmul.mubr.bf16.gmra.mrb[0].mxu0 %v1266
  %v1449 = vpop.f32.mrb[0].mxu0
  %v1450 = vadd.f32 0.0, %v1449
  %v1451 = vpop.f32.mrb[0].mxu0
  %v1452 = vpop.f32.mrb[0].mxu0
  %v1453 = vadd.f32 0.0, %v1452
  %v1454 = vpop.f32.mrb[0].mxu0
  %1455 = vmatprep.mubr.bf16.mxu0 0
  %1456 = vmatmul.mubr.bf16.gmra.mrb[0].mxu0 %v1269
  %v1457 = vpop.f32.mrb[0].mxu0
  %v1458 = vadd.f32 0.0, %v1457
  %v1459 = vpop.f32.mrb[0].mxu0
  %v1460 = vpop.f32.mrb[0].mxu0
  %v1461 = vadd.f32 0.0, %v1460
  %v1462 = vpop.f32.mrb[0].mxu0
  %1463 = vmatprep.mubr.bf16.mxu0 0
  %1464 = vmatmul.mubr.bf16.gmra.mrb[0].mxu0 %v1272
  %v1465 = vpop.f32.mrb[0].mxu0
  %v1466 = vadd.f32 0.0, %v1465
  %v1467 = vpop.f32.mrb[0].mxu0
  %v1468 = vpop.f32.mrb[0].mxu0
  %v1469 = vadd.f32 0.0, %v1468
  %v1470 = vpop.f32.mrb[0].mxu0
  %1471 = vmatprep.mubr.bf16.mxu0 0
  %1472 = vmatmul.mubr.bf16.gmra.mrb[0].mxu0 %v1275
  %v1473 = vpop.f32.mrb[0].mxu0
  %v1474 = vadd.f32 0.0, %v1473
  %v1475 = vpop.f32.mrb[0].mxu0
  %v1476 = vpop.f32.mrb[0].mxu0
  %v1477 = vadd.f32 0.0, %v1476
  %v1478 = vpop.f32.mrb[0].mxu0
  %1479 = vmatprep.mubr.bf16.mxu0 0
  %1480 = vmatmul.mubr.bf16.gmra.mrb[0].mxu0 %v1278
  %v1481 = vpop.f32.mrb[0].mxu0
  %v1482 = vadd.f32 0.0, %v1481
  %v1483 = vpop.f32.mrb[0].mxu0
  %v1484 = vpop.f32.mrb[0].mxu0
  %v1485 = vadd.f32 0.0, %v1484
  %v1486 = vpop.f32.mrb[0].mxu0
  %1487 = vmatprep.mubr.bf16.mxu0 0
  %1488 = vmatmul.mubr.bf16.gmra.mrb[0].mxu0 %v1281
  %v1489 = vpop.f32.mrb[0].mxu0
  %v1490 = vadd.f32 0.0, %v1489
  %v1491 = vpop.f32.mrb[0].mxu0
  %v1492 = vpop.f32.mrb[0].mxu0
  %v1493 = vadd.f32 0.0, %v1492
  %v1494 = vpop.f32.mrb[0].mxu0
  %1495 = vmatprep.mubr.bf16.mxu0 0
  %1496 = vmatmul.mubr.bf16.gmra.mrb[0].mxu0 %v1284
  %v1497 = vpop.f32.mrb[0].mxu0
  %v1498 = vadd.f32 0.0, %v1497
  %v1499 = vpop.f32.mrb[0].mxu0
  %v1500 = vpop.f32.mrb[0].mxu0
  %v1501 = vadd.f32 0.0, %v1500
  %v1502 = vpop.f32.mrb[0].mxu0
  %1503 = vmatprep.mubr.bf16.mxu0 0
  %1504 = vmatmul.mubr.bf16.gmra.mrb[0].mxu0 %v1287
  %v1505 = vpop.f32.mrb[0].mxu0
  %v1506 = vadd.f32 0.0, %v1505
  %v1507 = vpop.f32.mrb[0].mxu0
  %v1508 = vpop.f32.mrb[0].mxu0
  %v1509 = vadd.f32 0.0, %v1508
  %v1510 = vpop.f32.mrb[0].mxu0
  %1511 = vmatprep.mubr.bf16.mxu0 0
  %1512 = vmatmul.mubr.bf16.gmra.mrb[0].mxu0 %v1290
  %v1513 = vpop.f32.mrb[0].mxu0
  %v1514 = vadd.f32 0.0, %v1513
  %v1515 = vpop.f32.mrb[0].mxu0
  %v1516 = vpop.f32.mrb[0].mxu0
  %v1517 = vadd.f32 0.0, %v1516
  %v1518 = vpop.f32.mrb[0].mxu0
  %1519 = vmatprep.mubr.bf16.mxu0 0
  %1520 = vmatmul.mubr.bf16.gmra.mrb[0].mxu0 %v1293
  %v1521 = vpop.f32.mrb[0].mxu0
  %v1522 = vadd.f32 0.0, %v1521
  %v1523 = vpop.f32.mrb[0].mxu0
  %v1524 = vpop.f32.mrb[0].mxu0
  %v1525 = vpop.f32.mrb[0].mxu0
  %1526 = vdwg.mxu0
  %v1527 = vmax.f32 %v999, %v1330
  %v1528 = vmax.f32 %v1000, %v1333
  %v1529 = vmax.f32 %v1001, %v1338
  %v1530 = vmax.f32 %v1002, %v1341
  %v1531 = vmax.f32 %v1003, %v1346
  %v1532 = vmax.f32 %v1004, %v1349
  %v1533 = vmax.f32 %v1005, %v1354
  %v1534 = vmax.f32 %v1006, %v1357
  %v1535 = vmax.f32 %v1007, %v1362
  %v1536 = vmax.f32 %v1008, %v1365
  %v1537 = vmax.f32 %v1009, %v1370
  %v1538 = vmax.f32 %v1010, %v1373
  %v1539 = vmax.f32 %v1011, %v1378
  %v1540 = vmax.f32 %v1012, %v1381
  %v1541 = vmax.f32 %v1013, %v1386
  %v1542 = vmax.f32 %v1014, %v1389
  %v1543 = vmax.f32 %v1015, %v1394
  %v1544 = vmax.f32 %v1016, %v1397
  %v1545 = vmax.f32 %v1017, %v1402
  %v1546 = vmax.f32 %v1018, %v1405
  %v1547 = vmax.f32 %v1019, %v1410
  %v1548 = vmax.f32 %v1020, %v1413
  %v1549 = vmax.f32 %v1021, %v1418
  %v1550 = vmax.f32 %v1022, %v1421
  %v1551 = vmax.f32 %v1023, %v1426
  %v1552 = vmax.f32 %v1024, %v1429
  %v1553 = vmax.f32 %v1025, %v1434
  %v1554 = vmax.f32 %v1026, %v1437
  %v1555 = vmax.f32 %v1027, %v1442
  %v1556 = vmax.f32 %v1028, %v1445
  %v1557 = vmax.f32 %v1029, %v1450
  %v1558 = vmax.f32 %v1030, %v1453
  %v1559 = vmax.f32 %v1031, %v1458
  %v1560 = vmax.f32 %v1032, %v1461
  %v1561 = vmax.f32 %v1033, %v1466
  %v1562 = vmax.f32 %v1034, %v1469
  %v1563 = vmax.f32 %v1035, %v1474
  %v1564 = vmax.f32 %v1036, %v1477
  %v1565 = vmax.f32 %v1037, %v1482
  %v1566 = vmax.f32 %v1038, %v1485
  %v1567 = vmax.f32 %v1039, %v1490
  %v1568 = vmax.f32 %v1040, %v1493
  %v1569 = vmax.f32 %v1041, %v1498
  %v1570 = vmax.f32 %v1042, %v1501
  %v1571 = vmax.f32 %v1043, %v1506
  %v1572 = vmax.f32 %v1044, %v1509
  %v1573 = vmax.f32 %v1045, %v1514
  %v1574 = vmax.f32 %v1046, %v1517
  %v1575 = vmax.f32 %v1047, %v1522
  %v1576 = vld [vmem:[%s3] sm:$0xf]
  %v1577 = vld [vmem:[%s3 + $0x4] sm:$0xf]
  %v1578 = vld [vmem:[%s3 + $0x8] sm:$0xf]
  %v1579 = vld [vmem:[%s3 + $0xc] sm:$0xf]
  %v1580 = vld [vmem:[%s3 + $0x10] sm:$0xf]
  %v1581 = vld [vmem:[%s3 + $0x14] sm:$0xf]
  %v1582 = vld [vmem:[%s3 + $0x18] sm:$0xf]
  %v1583 = vld [vmem:[%s3 + $0x1c] sm:$0xf]
  %v1584 = vld [vmem:[%s3 + $0x20] sm:$0xf]
  %v1585 = vld [vmem:[%s3 + $0x24] sm:$0xf]
  %v1586 = vld [vmem:[%s3 + $0x28] sm:$0xf]
  %v1587 = vld [vmem:[%s3 + $0x2c] sm:$0xf]
  %v1588 = vld [vmem:[%s3 + $0x30] sm:$0xf]
  %v1589 = vld [vmem:[%s3 + $0x34] sm:$0xf]
  %v1590 = vld [vmem:[%s3 + $0x38] sm:$0xf]
  %v1591 = vld [vmem:[%s3 + $0x3c] sm:$0xf]
  %v1592 = vld [vmem:[%s3 + $0x40] sm:$0xf]
  %v1593 = vld [vmem:[%s3 + $0x44] sm:$0xf]
  %v1594 = vld [vmem:[%s3 + $0x48] sm:$0xf]
  %v1595 = vld [vmem:[%s3 + $0x4c] sm:$0xf]
  %v1596 = vld [vmem:[%s3 + $0x50] sm:$0xf]
  %v1597 = vld [vmem:[%s3 + $0x54] sm:$0xf]
  %v1598 = vld [vmem:[%s3 + $0x58] sm:$0xf]
  %v1599 = vld [vmem:[%s3 + $0x5c] sm:$0xf]
  %v1600 = vld [vmem:[%s3 + $0x60] sm:$0xf]
  %v1601 = vld [vmem:[%s3 + $0x64] sm:$0xf]
  %v1602 = vld [vmem:[%s3 + $0x68] sm:$0xf]
  %v1603 = vld [vmem:[%s3 + $0x6c] sm:$0xf]
  %v1604 = vld [vmem:[%s3 + $0x70] sm:$0xf]
  %v1605 = vld [vmem:[%s3 + $0x74] sm:$0xf]
  %v1606 = vld [vmem:[%s3 + $0x78] sm:$0xf]
  %v1607 = vld [vmem:[%s3 + $0x7c] sm:$0xf]
  %v1608 = vld [vmem:[%s3 + $0x80] sm:$0xf]
  %v1609 = vld [vmem:[%s3 + $0x84] sm:$0xf]
  %v1610 = vld [vmem:[%s3 + $0x88] sm:$0xf]
  %v1611 = vld [vmem:[%s3 + $0x8c] sm:$0xf]
  %v1612 = vld [vmem:[%s3 + $0x90] sm:$0xf]
  %v1613 = vld [vmem:[%s3 + $0x94] sm:$0xf]
  %v1614 = vld [vmem:[%s3 + $0x98] sm:$0xf]
  %v1615 = vld [vmem:[%s3 + $0x9c] sm:$0xf]
  %v1616 = vld [vmem:[%s3 + $0xa0] sm:$0xf]
  %v1617 = vld [vmem:[%s3 + $0xa4] sm:$0xf]
  %v1618 = vld [vmem:[%s3 + $0xa8] sm:$0xf]
  %v1619 = vld [vmem:[%s3 + $0xac] sm:$0xf]
  %v1620 = vld [vmem:[%s3 + $0xb0] sm:$0xf]
  %v1621 = vld [vmem:[%s3 + $0xb4] sm:$0xf]
  %v1622 = vld [vmem:[%s3 + $0xb8] sm:$0xf]
  %v1623 = vld [vmem:[%s3 + $0xbc] sm:$0xf]
  %v1624 = vld [vmem:[%s3 + $0xc0] sm:$0xf]
  %v1674 = vunpack.c.l.b16 %v1576
  %v1675 = vunpack.c.l.b16 %v1577
  %v1676 = vunpack.c.l.b16 %v1578
  %v1677 = vunpack.c.l.b16 %v1579
  %v1678 = vunpack.c.l.b16 %v1580
  %v1679 = vunpack.c.l.b16 %v1581
  %v1680 = vunpack.c.l.b16 %v1582
  %v1681 = vunpack.c.l.b16 %v1583
  %v1682 = vunpack.c.l.b16 %v1584
  %v1683 = vunpack.c.l.b16 %v1585
  %v1684 = vunpack.c.l.b16 %v1586
  %v1685 = vunpack.c.l.b16 %v1587
  %v1686 = vunpack.c.l.b16 %v1588
  %v1687 = vunpack.c.l.b16 %v1589
  %v1688 = vunpack.c.l.b16 %v1590
  %v1689 = vunpack.c.l.b16 %v1591
  %v1690 = vunpack.c.l.b16 %v1592
  %v1691 = vunpack.c.l.b16 %v1593
  %v1692 = vunpack.c.l.b16 %v1594
  %v1693 = vunpack.c.l.b16 %v1595
  %v1694 = vunpack.c.l.b16 %v1596
  %v1695 = vunpack.c.l.b16 %v1597
  %v1696 = vunpack.c.l.b16 %v1598
  %v1697 = vunpack.c.l.b16 %v1599
  %v1698 = vunpack.c.l.b16 %v1600
  %v1699 = vunpack.c.l.b16 %v1601
  %v1700 = vunpack.c.l.b16 %v1602
  %v1701 = vunpack.c.l.b16 %v1603
  %v1702 = vunpack.c.l.b16 %v1604
  %v1703 = vunpack.c.l.b16 %v1605
  %v1704 = vunpack.c.l.b16 %v1606
  %v1705 = vunpack.c.l.b16 %v1607
  %v1706 = vunpack.c.l.b16 %v1608
  %v1707 = vunpack.c.l.b16 %v1609
  %v1708 = vunpack.c.l.b16 %v1610
  %v1709 = vunpack.c.l.b16 %v1611
  %v1710 = vunpack.c.l.b16 %v1612
  %v1711 = vunpack.c.l.b16 %v1613
  %v1712 = vunpack.c.l.b16 %v1614
  %v1713 = vunpack.c.l.b16 %v1615
  %v1714 = vunpack.c.l.b16 %v1616
  %v1715 = vunpack.c.l.b16 %v1617
  %v1716 = vunpack.c.l.b16 %v1618
  %v1717 = vunpack.c.l.b16 %v1619
  %v1718 = vunpack.c.l.b16 %v1620
  %v1719 = vunpack.c.l.b16 %v1621
  %v1720 = vunpack.c.l.b16 %v1622
  %v1721 = vunpack.c.l.b16 %v1623
  %v1722 = vunpack.c.l.b16 %v1624
  %v1723 = vpack.c.b16 %v1675, %v1674
  %v1724 = vpack.c.b16 %v1677, %v1676
  %v1725 = vpack.c.b16 %v1679, %v1678
  %v1726 = vpack.c.b16 %v1681, %v1680
  %v1727 = vpack.c.b16 %v1683, %v1682
  %v1728 = vpack.c.b16 %v1685, %v1684
  %v1729 = vpack.c.b16 %v1687, %v1686
  %v1730 = vpack.c.b16 %v1689, %v1688
  %v1731 = vpack.c.b16 %v1691, %v1690
  %v1732 = vpack.c.b16 %v1693, %v1692
  %v1733 = vpack.c.b16 %v1695, %v1694
  %v1734 = vpack.c.b16 %v1697, %v1696
  %v1735 = vpack.c.b16 %v1699, %v1698
  %v1736 = vpack.c.b16 %v1701, %v1700
  %v1737 = vpack.c.b16 %v1703, %v1702
  %v1738 = vpack.c.b16 %v1705, %v1704
  %v1739 = vpack.c.b16 %v1707, %v1706
  %v1740 = vpack.c.b16 %v1709, %v1708
  %v1741 = vpack.c.b16 %v1711, %v1710
  %v1742 = vpack.c.b16 %v1713, %v1712
  %v1743 = vpack.c.b16 %v1715, %v1714
  %v1744 = vpack.c.b16 %v1717, %v1716
  %v1745 = vpack.c.b16 %v1719, %v1718
  %v1746 = vpack.c.b16 %v1721, %v1720
  %v1747 = vpack.c.b16 %v1722, %v1722
  %v1749 = vsel %vm212, %v1723, 0
  %v1752 = vsel %vm212, %v1724, 0
  %v1755 = vsel %vm212, %v1725, 0
  %v1758 = vsel %vm212, %v1726, 0
  %v1761 = vsel %vm212, %v1727, 0
  %v1764 = vsel %vm212, %v1728, 0
  %v1767 = vsel %vm212, %v1729, 0
  %v1770 = vsel %vm212, %v1730, 0
  %v1773 = vsel %vm212, %v1731, 0
  %v1776 = vsel %vm212, %v1732, 0
  %v1779 = vsel %vm212, %v1733, 0
  %v1782 = vsel %vm212, %v1734, 0
  %v1785 = vsel %vm212, %v1735, 0
  %v1788 = vsel %vm212, %v1736, 0
  %v1791 = vsel %vm212, %v1737, 0
  %v1794 = vsel %vm212, %v1738, 0
  %v1797 = vsel %vm212, %v1739, 0
  %v1800 = vsel %vm212, %v1740, 0
  %v1803 = vsel %vm212, %v1741, 0
  %v1806 = vsel %vm212, %v1742, 0
  %v1809 = vsel %vm212, %v1743, 0
  %v1812 = vsel %vm212, %v1744, 0
  %v1815 = vsel %vm212, %v1745, 0
  %v1818 = vsel %vm212, %v1746, 0
  %v1821 = vsel %vm212, %v1747, 0
  %1823 = vmatprep.subr.bf16.mxu0 0
  %1824 = vmatpush1.bf16.msra.mxu0 %v208
  %1825 = vmatprep.subr.bf16.mxu0 0
  %1826 = vmatpush1.bf16.msra.mxu0 %v209
  %1827 = vmatprep.subr.bf16.mxu0 0
  %1828 = vmatpush1.bf16.msra.mxu0 0
  %1829 = vmatprep.subr.bf16.mxu0 0
  %1830 = vmatpush1.bf16.msra.mxu0 0
  %1831 = vmatprep.subr.bf16.mxu0 0
  %1832 = vmatpush1.bf16.msra.mxu0 0
  %1833 = vmatprep.subr.bf16.mxu0 0
  %1834 = vmatpush1.bf16.msra.mxu0 0
  %1835 = vmatprep.subr.bf16.mxu0 0
  %1836 = vmatpush1.bf16.msra.mxu0 0
  %1837 = vmatprep.subr.bf16.mxu0 0
  %1838 = vmatpush1.bf16.msra.mxu0 0
  %1839 = vmatprep.subr.bf16.mxu0 0
  %1840 = vmatpush1.bf16.msra.mxu0 0
  %1841 = vmatprep.subr.bf16.mxu0 0
  %1842 = vmatpush1.bf16.msra.mxu0 0
  %1843 = vmatprep.subr.bf16.mxu0 0
  %1844 = vmatpush1.bf16.msra.mxu0 0
  %1845 = vmatprep.subr.bf16.mxu0 0
  %1846 = vmatpush1.bf16.msra.mxu0 0
  %1847 = vmatprep.subr.bf16.mxu0 0
  %1848 = vmatpush1.bf16.msra.mxu0 0
  %1849 = vmatprep.subr.bf16.mxu0 0
  %1850 = vmatpush1.bf16.msra.mxu0 0
  %1851 = vmatprep.subr.bf16.mxu0 0
  %1852 = vmatpush1.bf16.msra.mxu0 0
  %1853 = vmatprep.subr.bf16.mxu0 0
  %1854 = vmatpush1.bf16.msra.mxu0 0
  %1855 = vmatprep.mubr.bf16.mxu0 0
  %1856 = vmatmul.mubr.bf16.gmra.mrb[0].mxu0 %v1749
  %v1857 = vpop.f32.mrb[0].mxu0
  %v1858 = vadd.f32 0.0, %v1857
  %v1859 = vpop.f32.mrb[0].mxu0
  %v1860 = vpop.f32.mrb[0].mxu0
  %v1861 = vadd.f32 0.0, %v1860
  %v1862 = vpop.f32.mrb[0].mxu0
  %1863 = vmatprep.mubr.bf16.mxu0 0
  %1864 = vmatmul.mubr.bf16.gmra.mrb[0].mxu0 %v1752
  %v1865 = vpop.f32.mrb[0].mxu0
  %v1866 = vadd.f32 0.0, %v1865
  %v1867 = vpop.f32.mrb[0].mxu0
  %v1868 = vpop.f32.mrb[0].mxu0
  %v1869 = vadd.f32 0.0, %v1868
  %v1870 = vpop.f32.mrb[0].mxu0
  %1871 = vmatprep.mubr.bf16.mxu0 0
  %1872 = vmatmul.mubr.bf16.gmra.mrb[0].mxu0 %v1755
  %v1873 = vpop.f32.mrb[0].mxu0
  %v1874 = vadd.f32 0.0, %v1873
  %v1875 = vpop.f32.mrb[0].mxu0
  %v1876 = vpop.f32.mrb[0].mxu0
  %v1877 = vadd.f32 0.0, %v1876
  %v1878 = vpop.f32.mrb[0].mxu0
  %1879 = vmatprep.mubr.bf16.mxu0 0
  %1880 = vmatmul.mubr.bf16.gmra.mrb[0].mxu0 %v1758
  %v1881 = vpop.f32.mrb[0].mxu0
  %v1882 = vadd.f32 0.0, %v1881
  %v1883 = vpop.f32.mrb[0].mxu0
  %v1884 = vpop.f32.mrb[0].mxu0
  %v1885 = vadd.f32 0.0, %v1884
  %v1886 = vpop.f32.mrb[0].mxu0
  %1887 = vmatprep.mubr.bf16.mxu0 0
  %1888 = vmatmul.mubr.bf16.gmra.mrb[0].mxu0 %v1761
  %v1889 = vpop.f32.mrb[0].mxu0
  %v1890 = vadd.f32 0.0, %v1889
  %v1891 = vpop.f32.mrb[0].mxu0
  %v1892 = vpop.f32.mrb[0].mxu0
  %v1893 = vadd.f32 0.0, %v1892
  %v1894 = vpop.f32.mrb[0].mxu0
  %1895 = vmatprep.mubr.bf16.mxu0 0
  %1896 = vmatmul.mubr.bf16.gmra.mrb[0].mxu0 %v1764
  %v1897 = vpop.f32.mrb[0].mxu0
  %v1898 = vadd.f32 0.0, %v1897
  %v1899 = vpop.f32.mrb[0].mxu0
  %v1900 = vpop.f32.mrb[0].mxu0
  %v1901 = vadd.f32 0.0, %v1900
  %v1902 = vpop.f32.mrb[0].mxu0
  %1903 = vmatprep.mubr.bf16.mxu0 0
  %1904 = vmatmul.mubr.bf16.gmra.mrb[0].mxu0 %v1767
  %v1905 = vpop.f32.mrb[0].mxu0
  %v1906 = vadd.f32 0.0, %v1905
  %v1907 = vpop.f32.mrb[0].mxu0
  %v1908 = vpop.f32.mrb[0].mxu0
  %v1909 = vadd.f32 0.0, %v1908
  %v1910 = vpop.f32.mrb[0].mxu0
  %1911 = vmatprep.mubr.bf16.mxu0 0
  %1912 = vmatmul.mubr.bf16.gmra.mrb[0].mxu0 %v1770
  %v1913 = vpop.f32.mrb[0].mxu0
  %v1914 = vadd.f32 0.0, %v1913
  %v1915 = vpop.f32.mrb[0].mxu0
  %v1916 = vpop.f32.mrb[0].mxu0
  %v1917 = vadd.f32 0.0, %v1916
  %v1918 = vpop.f32.mrb[0].mxu0
  %1919 = vmatprep.mubr.bf16.mxu0 0
  %1920 = vmatmul.mubr.bf16.gmra.mrb[0].mxu0 %v1773
  %v1921 = vpop.f32.mrb[0].mxu0
  %v1922 = vadd.f32 0.0, %v1921
  %v1923 = vpop.f32.mrb[0].mxu0
  %v1924 = vpop.f32.mrb[0].mxu0
  %v1925 = vadd.f32 0.0, %v1924
  %v1926 = vpop.f32.mrb[0].mxu0
  %1927 = vmatprep.mubr.bf16.mxu0 0
  %1928 = vmatmul.mubr.bf16.gmra.mrb[0].mxu0 %v1776
  %v1929 = vpop.f32.mrb[0].mxu0
  %v1930 = vadd.f32 0.0, %v1929
  %v1931 = vpop.f32.mrb[0].mxu0
  %v1932 = vpop.f32.mrb[0].mxu0
  %v1933 = vadd.f32 0.0, %v1932
  %v1934 = vpop.f32.mrb[0].mxu0
  %1935 = vmatprep.mubr.bf16.mxu0 0
  %1936 = vmatmul.mubr.bf16.gmra.mrb[0].mxu0 %v1779
  %v1937 = vpop.f32.mrb[0].mxu0
  %v1938 = vadd.f32 0.0, %v1937
  %v1939 = vpop.f32.mrb[0].mxu0
  %v1940 = vpop.f32.mrb[0].mxu0
  %v1941 = vadd.f32 0.0, %v1940
  %v1942 = vpop.f32.mrb[0].mxu0
  %1943 = vmatprep.mubr.bf16.mxu0 0
  %1944 = vmatmul.mubr.bf16.gmra.mrb[0].mxu0 %v1782
  %v1945 = vpop.f32.mrb[0].mxu0
  %v1946 = vadd.f32 0.0, %v1945
  %v1947 = vpop.f32.mrb[0].mxu0
  %v1948 = vpop.f32.mrb[0].mxu0
  %v1949 = vadd.f32 0.0, %v1948
  %v1950 = vpop.f32.mrb[0].mxu0
  %1951 = vmatprep.mubr.bf16.mxu0 0
  %1952 = vmatmul.mubr.bf16.gmra.mrb[0].mxu0 %v1785
  %v1953 = vpop.f32.mrb[0].mxu0
  %v1954 = vadd.f32 0.0, %v1953
  %v1955 = vpop.f32.mrb[0].mxu0
  %v1956 = vpop.f32.mrb[0].mxu0
  %v1957 = vadd.f32 0.0, %v1956
  %v1958 = vpop.f32.mrb[0].mxu0
  %1959 = vmatprep.mubr.bf16.mxu0 0
  %1960 = vmatmul.mubr.bf16.gmra.mrb[0].mxu0 %v1788
  %v1961 = vpop.f32.mrb[0].mxu0
  %v1962 = vadd.f32 0.0, %v1961
  %v1963 = vpop.f32.mrb[0].mxu0
  %v1964 = vpop.f32.mrb[0].mxu0
  %v1965 = vadd.f32 0.0, %v1964
  %v1966 = vpop.f32.mrb[0].mxu0
  %1967 = vmatprep.mubr.bf16.mxu0 0
  %1968 = vmatmul.mubr.bf16.gmra.mrb[0].mxu0 %v1791
  %v1969 = vpop.f32.mrb[0].mxu0
  %v1970 = vadd.f32 0.0, %v1969
  %v1971 = vpop.f32.mrb[0].mxu0
  %v1972 = vpop.f32.mrb[0].mxu0
  %v1973 = vadd.f32 0.0, %v1972
  %v1974 = vpop.f32.mrb[0].mxu0
  %1975 = vmatprep.mubr.bf16.mxu0 0
  %1976 = vmatmul.mubr.bf16.gmra.mrb[0].mxu0 %v1794
  %v1977 = vpop.f32.mrb[0].mxu0
  %v1978 = vadd.f32 0.0, %v1977
  %v1979 = vpop.f32.mrb[0].mxu0
  %v1980 = vpop.f32.mrb[0].mxu0
  %v1981 = vadd.f32 0.0, %v1980
  %v1982 = vpop.f32.mrb[0].mxu0
  %1983 = vmatprep.mubr.bf16.mxu0 0
  %1984 = vmatmul.mubr.bf16.gmra.mrb[0].mxu0 %v1797
  %v1985 = vpop.f32.mrb[0].mxu0
  %v1986 = vadd.f32 0.0, %v1985
  %v1987 = vpop.f32.mrb[0].mxu0
  %v1988 = vpop.f32.mrb[0].mxu0
  %v1989 = vadd.f32 0.0, %v1988
  %v1990 = vpop.f32.mrb[0].mxu0
  %1991 = vmatprep.mubr.bf16.mxu0 0
  %1992 = vmatmul.mubr.bf16.gmra.mrb[0].mxu0 %v1800
  %v1993 = vpop.f32.mrb[0].mxu0
  %v1994 = vadd.f32 0.0, %v1993
  %v1995 = vpop.f32.mrb[0].mxu0
  %v1996 = vpop.f32.mrb[0].mxu0
  %v1997 = vadd.f32 0.0, %v1996
  %v1998 = vpop.f32.mrb[0].mxu0
  %1999 = vmatprep.mubr.bf16.mxu0 0
  %2000 = vmatmul.mubr.bf16.gmra.mrb[0].mxu0 %v1803
  %v2001 = vpop.f32.mrb[0].mxu0
  %v2002 = vadd.f32 0.0, %v2001
  %v2003 = vpop.f32.mrb[0].mxu0
  %v2004 = vpop.f32.mrb[0].mxu0
  %v2005 = vadd.f32 0.0, %v2004
  %v2006 = vpop.f32.mrb[0].mxu0
  %2007 = vmatprep.mubr.bf16.mxu0 0
  %2008 = vmatmul.mubr.bf16.gmra.mrb[0].mxu0 %v1806
  %v2009 = vpop.f32.mrb[0].mxu0
  %v2010 = vadd.f32 0.0, %v2009
  %v2011 = vpop.f32.mrb[0].mxu0
  %v2012 = vpop.f32.mrb[0].mxu0
  %v2013 = vadd.f32 0.0, %v2012
  %v2014 = vpop.f32.mrb[0].mxu0
  %2015 = vmatprep.mubr.bf16.mxu0 0
  %2016 = vmatmul.mubr.bf16.gmra.mrb[0].mxu0 %v1809
  %v2017 = vpop.f32.mrb[0].mxu0
  %v2018 = vadd.f32 0.0, %v2017
  %v2019 = vpop.f32.mrb[0].mxu0
  %v2020 = vpop.f32.mrb[0].mxu0
  %v2021 = vadd.f32 0.0, %v2020
  %v2022 = vpop.f32.mrb[0].mxu0
  %2023 = vmatprep.mubr.bf16.mxu0 0
  %2024 = vmatmul.mubr.bf16.gmra.mrb[0].mxu0 %v1812
  %v2025 = vpop.f32.mrb[0].mxu0
  %v2026 = vadd.f32 0.0, %v2025
  %v2027 = vpop.f32.mrb[0].mxu0
  %v2028 = vpop.f32.mrb[0].mxu0
  %v2029 = vadd.f32 0.0, %v2028
  %v2030 = vpop.f32.mrb[0].mxu0
  %2031 = vmatprep.mubr.bf16.mxu0 0
  %2032 = vmatmul.mubr.bf16.gmra.mrb[0].mxu0 %v1815
  %v2033 = vpop.f32.mrb[0].mxu0
  %v2034 = vadd.f32 0.0, %v2033
  %v2035 = vpop.f32.mrb[0].mxu0
  %v2036 = vpop.f32.mrb[0].mxu0
  %v2037 = vadd.f32 0.0, %v2036
  %v2038 = vpop.f32.mrb[0].mxu0
  %2039 = vmatprep.mubr.bf16.mxu0 0
  %2040 = vmatmul.mubr.bf16.gmra.mrb[0].mxu0 %v1818
  %v2041 = vpop.f32.mrb[0].mxu0
  %v2042 = vadd.f32 0.0, %v2041
  %v2043 = vpop.f32.mrb[0].mxu0
  %v2044 = vpop.f32.mrb[0].mxu0
  %v2045 = vadd.f32 0.0, %v2044
  %v2046 = vpop.f32.mrb[0].mxu0
  %2047 = vmatprep.mubr.bf16.mxu0 0
  %2048 = vmatmul.mubr.bf16.gmra.mrb[0].mxu0 %v1821
  %v2049 = vpop.f32.mrb[0].mxu0
  %v2050 = vadd.f32 0.0, %v2049
  %v2051 = vpop.f32.mrb[0].mxu0
  %v2052 = vpop.f32.mrb[0].mxu0
  %v2053 = vpop.f32.mrb[0].mxu0
  %2054 = vdwg.mxu0
  %v2055 = vmax.f32 %v1527, %v1858
  %v2056 = vmax.f32 %v1528, %v1861
  %v2057 = vmax.f32 %v1529, %v1866
  %v2058 = vmax.f32 %v1530, %v1869
  %v2059 = vmax.f32 %v1531, %v1874
  %v2060 = vmax.f32 %v1532, %v1877
  %v2061 = vmax.f32 %v1533, %v1882
  %v2062 = vmax.f32 %v1534, %v1885
  %v2063 = vmax.f32 %v1535, %v1890
  %v2064 = vmax.f32 %v1536, %v1893
  %v2065 = vmax.f32 %v1537, %v1898
  %v2066 = vmax.f32 %v1538, %v1901
  %v2067 = vmax.f32 %v1539, %v1906
  %v2068 = vmax.f32 %v1540, %v1909
  %v2069 = vmax.f32 %v1541, %v1914
  %v2070 = vmax.f32 %v1542, %v1917
  %v2071 = vmax.f32 %v1543, %v1922
  %v2072 = vmax.f32 %v1544, %v1925
  %v2073 = vmax.f32 %v1545, %v1930
  %v2074 = vmax.f32 %v1546, %v1933
  %v2075 = vmax.f32 %v1547, %v1938
  %v2076 = vmax.f32 %v1548, %v1941
  %v2077 = vmax.f32 %v1549, %v1946
  %v2078 = vmax.f32 %v1550, %v1949
  %v2079 = vmax.f32 %v1551, %v1954
  %v2080 = vmax.f32 %v1552, %v1957
  %v2081 = vmax.f32 %v1553, %v1962
  %v2082 = vmax.f32 %v1554, %v1965
  %v2083 = vmax.f32 %v1555, %v1970
  %v2084 = vmax.f32 %v1556, %v1973
  %v2085 = vmax.f32 %v1557, %v1978
  %v2086 = vmax.f32 %v1558, %v1981
  %v2087 = vmax.f32 %v1559, %v1986
  %v2088 = vmax.f32 %v1560, %v1989
  %v2089 = vmax.f32 %v1561, %v1994
  %v2090 = vmax.f32 %v1562, %v1997
  %v2091 = vmax.f32 %v1563, %v2002
  %v2092 = vmax.f32 %v1564, %v2005
  %v2093 = vmax.f32 %v1565, %v2010
  %v2094 = vmax.f32 %v1566, %v2013
  %v2095 = vmax.f32 %v1567, %v2018
  %v2096 = vmax.f32 %v1568, %v2021
  %v2097 = vmax.f32 %v1569, %v2026
  %v2098 = vmax.f32 %v1570, %v2029
  %v2099 = vmax.f32 %v1571, %v2034
  %v2100 = vmax.f32 %v1572, %v2037
  %v2101 = vmax.f32 %v1573, %v2042
  %v2102 = vmax.f32 %v1574, %v2045
  %v2103 = vmax.f32 %v1575, %v2050
  %v2104 = vld [vmem:[%s5] sm:$0x1]
  %v2106 = vlaneseq
  %v2107 = vshrl.u32 %v2106, 7
  %v2108 = vsub.s32 0, %v2107
  %v2109 = vrot.slane %v2104, %v2108
  %v2111 = vadd.f32 %v2055, %v2109
  %v2112 = vadd.f32 %v2056, %v2109
  %v2113 = vadd.f32 %v2057, %v2109
  %v2114 = vadd.f32 %v2058, %v2109
  %v2115 = vadd.f32 %v2059, %v2109
  %v2116 = vadd.f32 %v2060, %v2109
  %v2117 = vadd.f32 %v2061, %v2109
  %v2118 = vadd.f32 %v2062, %v2109
  %v2119 = vadd.f32 %v2063, %v2109
  %v2120 = vadd.f32 %v2064, %v2109
  %v2121 = vadd.f32 %v2065, %v2109
  %v2122 = vadd.f32 %v2066, %v2109
  %v2123 = vadd.f32 %v2067, %v2109
  %v2124 = vadd.f32 %v2068, %v2109
  %v2125 = vadd.f32 %v2069, %v2109
  %v2126 = vadd.f32 %v2070, %v2109
  %v2127 = vadd.f32 %v2071, %v2109
  %v2128 = vadd.f32 %v2072, %v2109
  %v2129 = vadd.f32 %v2073, %v2109
  %v2130 = vadd.f32 %v2074, %v2109
  %v2131 = vadd.f32 %v2075, %v2109
  %v2132 = vadd.f32 %v2076, %v2109
  %v2133 = vadd.f32 %v2077, %v2109
  %v2134 = vadd.f32 %v2078, %v2109
  %v2135 = vadd.f32 %v2079, %v2109
  %v2136 = vadd.f32 %v2080, %v2109
  %v2137 = vadd.f32 %v2081, %v2109
  %v2138 = vadd.f32 %v2082, %v2109
  %v2139 = vadd.f32 %v2083, %v2109
  %v2140 = vadd.f32 %v2084, %v2109
  %v2141 = vadd.f32 %v2085, %v2109
  %v2142 = vadd.f32 %v2086, %v2109
  %v2143 = vadd.f32 %v2087, %v2109
  %v2144 = vadd.f32 %v2088, %v2109
  %v2145 = vadd.f32 %v2089, %v2109
  %v2146 = vadd.f32 %v2090, %v2109
  %v2147 = vadd.f32 %v2091, %v2109
  %v2148 = vadd.f32 %v2092, %v2109
  %v2149 = vadd.f32 %v2093, %v2109
  %v2150 = vadd.f32 %v2094, %v2109
  %v2151 = vadd.f32 %v2095, %v2109
  %v2152 = vadd.f32 %v2096, %v2109
  %v2153 = vadd.f32 %v2097, %v2109
  %v2154 = vadd.f32 %v2098, %v2109
  %v2155 = vadd.f32 %v2099, %v2109
  %v2156 = vadd.f32 %v2100, %v2109
  %v2157 = vadd.f32 %v2101, %v2109
  %v2158 = vadd.f32 %v2102, %v2109
  %v2159 = vadd.f32 %v2103, %v2109
  %v2160 = vmax.f32 %v2111, 0.0
  %v2161 = vmax.f32 %v2112, 0.0
  %v2162 = vmax.f32 %v2113, 0.0
  %v2163 = vmax.f32 %v2114, 0.0
  %v2164 = vmax.f32 %v2115, 0.0
  %v2165 = vmax.f32 %v2116, 0.0
  %v2166 = vmax.f32 %v2117, 0.0
  %v2167 = vmax.f32 %v2118, 0.0
  %v2168 = vmax.f32 %v2119, 0.0
  %v2169 = vmax.f32 %v2120, 0.0
  %v2170 = vmax.f32 %v2121, 0.0
  %v2171 = vmax.f32 %v2122, 0.0
  %v2172 = vmax.f32 %v2123, 0.0
  %v2173 = vmax.f32 %v2124, 0.0
  %v2174 = vmax.f32 %v2125, 0.0
  %v2175 = vmax.f32 %v2126, 0.0
  %v2176 = vmax.f32 %v2127, 0.0
  %v2177 = vmax.f32 %v2128, 0.0
  %v2178 = vmax.f32 %v2129, 0.0
  %v2179 = vmax.f32 %v2130, 0.0
  %v2180 = vmax.f32 %v2131, 0.0
  %v2181 = vmax.f32 %v2132, 0.0
  %v2182 = vmax.f32 %v2133, 0.0
  %v2183 = vmax.f32 %v2134, 0.0
  %v2184 = vmax.f32 %v2135, 0.0
  %v2185 = vmax.f32 %v2136, 0.0
  %v2186 = vmax.f32 %v2137, 0.0
  %v2187 = vmax.f32 %v2138, 0.0
  %v2188 = vmax.f32 %v2139, 0.0
  %v2189 = vmax.f32 %v2140, 0.0
  %v2190 = vmax.f32 %v2141, 0.0
  %v2191 = vmax.f32 %v2142, 0.0
  %v2192 = vmax.f32 %v2143, 0.0
  %v2193 = vmax.f32 %v2144, 0.0
  %v2194 = vmax.f32 %v2145, 0.0
  %v2195 = vmax.f32 %v2146, 0.0
  %v2196 = vmax.f32 %v2147, 0.0
  %v2197 = vmax.f32 %v2148, 0.0
  %v2198 = vmax.f32 %v2149, 0.0
  %v2199 = vmax.f32 %v2150, 0.0
  %v2200 = vmax.f32 %v2151, 0.0
  %v2201 = vmax.f32 %v2152, 0.0
  %v2202 = vmax.f32 %v2153, 0.0
  %v2203 = vmax.f32 %v2154, 0.0
  %v2204 = vmax.f32 %v2155, 0.0
  %v2205 = vmax.f32 %v2156, 0.0
  %v2206 = vmax.f32 %v2157, 0.0
  %v2207 = vmax.f32 %v2158, 0.0
  %v2208 = vmax.f32 %v2159, 0.0
  %v2209 = vpack.c.bf16 %v2161, %v2160
  %v2210 = vpack.c.bf16 %v2163, %v2162
  %v2211 = vpack.c.bf16 %v2165, %v2164
  %v2212 = vpack.c.bf16 %v2167, %v2166
  %v2213 = vpack.c.bf16 %v2169, %v2168
  %v2214 = vpack.c.bf16 %v2171, %v2170
  %v2215 = vpack.c.bf16 %v2173, %v2172
  %v2216 = vpack.c.bf16 %v2175, %v2174
  %v2217 = vpack.c.bf16 %v2177, %v2176
  %v2218 = vpack.c.bf16 %v2179, %v2178
  %v2219 = vpack.c.bf16 %v2181, %v2180
  %v2220 = vpack.c.bf16 %v2183, %v2182
  %v2221 = vpack.c.bf16 %v2185, %v2184
  %v2222 = vpack.c.bf16 %v2187, %v2186
  %v2223 = vpack.c.bf16 %v2189, %v2188
  %v2224 = vpack.c.bf16 %v2191, %v2190
  %v2225 = vpack.c.bf16 %v2193, %v2192
  %v2226 = vpack.c.bf16 %v2195, %v2194
  %v2227 = vpack.c.bf16 %v2197, %v2196
  %v2228 = vpack.c.bf16 %v2199, %v2198
  %v2229 = vpack.c.bf16 %v2201, %v2200
  %v2230 = vpack.c.bf16 %v2203, %v2202
  %v2231 = vpack.c.bf16 %v2205, %v2204
  %v2232 = vpack.c.bf16 %v2207, %v2206
  %v2233 = vpack.c.bf16 %v2208, %v2208
  %v2259 = vunpack.c.l.b16 %v2209
  %v2260 = vunpack.c.h.b16 %v2209
  %v2261 = vunpack.c.l.b16 %v2210
  %v2262 = vunpack.c.h.b16 %v2210
  %v2263 = vunpack.c.l.b16 %v2211
  %v2264 = vunpack.c.h.b16 %v2211
  %v2265 = vunpack.c.l.b16 %v2212
  %v2266 = vunpack.c.h.b16 %v2212
  %v2267 = vunpack.c.l.b16 %v2213
  %v2268 = vunpack.c.h.b16 %v2213
  %v2269 = vunpack.c.l.b16 %v2214
  %v2270 = vunpack.c.h.b16 %v2214
  %v2271 = vunpack.c.l.b16 %v2215
  %v2272 = vunpack.c.h.b16 %v2215
  %v2273 = vunpack.c.l.b16 %v2216
  %v2274 = vunpack.c.h.b16 %v2216
  %v2275 = vunpack.c.l.b16 %v2217
  %v2276 = vunpack.c.h.b16 %v2217
  %v2277 = vunpack.c.l.b16 %v2218
  %v2278 = vunpack.c.h.b16 %v2218
  %v2279 = vunpack.c.l.b16 %v2219
  %v2280 = vunpack.c.h.b16 %v2219
  %v2281 = vunpack.c.l.b16 %v2220
  %v2282 = vunpack.c.h.b16 %v2220
  %v2283 = vunpack.c.l.b16 %v2221
  %v2284 = vunpack.c.h.b16 %v2221
  %v2285 = vunpack.c.l.b16 %v2222
  %v2286 = vunpack.c.h.b16 %v2222
  %v2287 = vunpack.c.l.b16 %v2223
  %v2288 = vunpack.c.h.b16 %v2223
  %v2289 = vunpack.c.l.b16 %v2224
  %v2290 = vunpack.c.h.b16 %v2224
  %v2291 = vunpack.c.l.b16 %v2225
  %v2292 = vunpack.c.h.b16 %v2225
  %v2293 = vunpack.c.l.b16 %v2226
  %v2294 = vunpack.c.h.b16 %v2226
  %v2295 = vunpack.c.l.b16 %v2227
  %v2296 = vunpack.c.h.b16 %v2227
  %v2297 = vunpack.c.l.b16 %v2228
  %v2298 = vunpack.c.h.b16 %v2228
  %v2299 = vunpack.c.l.b16 %v2229
  %v2300 = vunpack.c.h.b16 %v2229
  %v2301 = vunpack.c.l.b16 %v2230
  %v2302 = vunpack.c.h.b16 %v2230
  %v2303 = vunpack.c.l.b16 %v2231
  %v2304 = vunpack.c.h.b16 %v2231
  %v2305 = vunpack.c.l.b16 %v2232
  %v2306 = vunpack.c.h.b16 %v2232
  %v2307 = vunpack.c.l.b16 %v2233
  %v2308 = vpack.c.b16 %v2259, %v2259
  %v2309 = vpack.c.b16 %v2260, %v2260
  %v2310 = vpack.c.b16 %v2261, %v2261
  %v2311 = vpack.c.b16 %v2262, %v2262
  %v2312 = vpack.c.b16 %v2263, %v2263
  %v2313 = vpack.c.b16 %v2264, %v2264
  %v2314 = vpack.c.b16 %v2265, %v2265
  %v2315 = vpack.c.b16 %v2266, %v2266
  %v2316 = vpack.c.b16 %v2267, %v2267
  %v2317 = vpack.c.b16 %v2268, %v2268
  %v2318 = vpack.c.b16 %v2269, %v2269
  %v2319 = vpack.c.b16 %v2270, %v2270
  %v2320 = vpack.c.b16 %v2271, %v2271
  %v2321 = vpack.c.b16 %v2272, %v2272
  %v2322 = vpack.c.b16 %v2273, %v2273
  %v2323 = vpack.c.b16 %v2274, %v2274
  %v2324 = vpack.c.b16 %v2275, %v2275
  %v2325 = vpack.c.b16 %v2276, %v2276
  %v2326 = vpack.c.b16 %v2277, %v2277
  %v2327 = vpack.c.b16 %v2278, %v2278
  %v2328 = vpack.c.b16 %v2279, %v2279
  %v2329 = vpack.c.b16 %v2280, %v2280
  %v2330 = vpack.c.b16 %v2281, %v2281
  %v2331 = vpack.c.b16 %v2282, %v2282
  %v2332 = vpack.c.b16 %v2283, %v2283
  %v2333 = vpack.c.b16 %v2284, %v2284
  %v2334 = vpack.c.b16 %v2285, %v2285
  %v2335 = vpack.c.b16 %v2286, %v2286
  %v2336 = vpack.c.b16 %v2287, %v2287
  %v2337 = vpack.c.b16 %v2288, %v2288
  %v2338 = vpack.c.b16 %v2289, %v2289
  %v2339 = vpack.c.b16 %v2290, %v2290
  %v2340 = vpack.c.b16 %v2291, %v2291
  %v2341 = vpack.c.b16 %v2292, %v2292
  %v2342 = vpack.c.b16 %v2293, %v2293
  %v2343 = vpack.c.b16 %v2294, %v2294
  %v2344 = vpack.c.b16 %v2295, %v2295
  %v2345 = vpack.c.b16 %v2296, %v2296
  %v2346 = vpack.c.b16 %v2297, %v2297
  %v2347 = vpack.c.b16 %v2298, %v2298
  %v2348 = vpack.c.b16 %v2299, %v2299
  %v2349 = vpack.c.b16 %v2300, %v2300
  %v2350 = vpack.c.b16 %v2301, %v2301
  %v2351 = vpack.c.b16 %v2302, %v2302
  %v2352 = vpack.c.b16 %v2303, %v2303
  %v2353 = vpack.c.b16 %v2304, %v2304
  %v2354 = vpack.c.b16 %v2305, %v2305
  %v2355 = vpack.c.b16 %v2306, %v2306
  %v2356 = vpack.c.b16 %v2307, %v2307
  %vm2406 = vcmask 257024
  %2407 = vst.msk [vmem:[%s6] sm:$0xf] %vm2406, %v2308
  %2408 = vst.msk [vmem:[%s6 + $0x4] sm:$0xf] %vm2406, %v2309
  %2409 = vst.msk [vmem:[%s6 + $0x8] sm:$0xf] %vm2406, %v2310
  %2410 = vst.msk [vmem:[%s6 + $0xc] sm:$0xf] %vm2406, %v2311
  %2411 = vst.msk [vmem:[%s6 + $0x10] sm:$0xf] %vm2406, %v2312
  %2412 = vst.msk [vmem:[%s6 + $0x14] sm:$0xf] %vm2406, %v2313
  %2413 = vst.msk [vmem:[%s6 + $0x18] sm:$0xf] %vm2406, %v2314
  %2414 = vst.msk [vmem:[%s6 + $0x1c] sm:$0xf] %vm2406, %v2315
  %2415 = vst.msk [vmem:[%s6 + $0x20] sm:$0xf] %vm2406, %v2316
  %2416 = vst.msk [vmem:[%s6 + $0x24] sm:$0xf] %vm2406, %v2317
  %2417 = vst.msk [vmem:[%s6 + $0x28] sm:$0xf] %vm2406, %v2318
  %2418 = vst.msk [vmem:[%s6 + $0x2c] sm:$0xf] %vm2406, %v2319
  %2419 = vst.msk [vmem:[%s6 + $0x30] sm:$0xf] %vm2406, %v2320
  %2420 = vst.msk [vmem:[%s6 + $0x34] sm:$0xf] %vm2406, %v2321
  %2421 = vst.msk [vmem:[%s6 + $0x38] sm:$0xf] %vm2406, %v2322
  %2422 = vst.msk [vmem:[%s6 + $0x3c] sm:$0xf] %vm2406, %v2323
  %2423 = vst.msk [vmem:[%s6 + $0x40] sm:$0xf] %vm2406, %v2324
  %2424 = vst.msk [vmem:[%s6 + $0x44] sm:$0xf] %vm2406, %v2325
  %2425 = vst.msk [vmem:[%s6 + $0x48] sm:$0xf] %vm2406, %v2326
  %2426 = vst.msk [vmem:[%s6 + $0x4c] sm:$0xf] %vm2406, %v2327
  %2427 = vst.msk [vmem:[%s6 + $0x50] sm:$0xf] %vm2406, %v2328
  %2428 = vst.msk [vmem:[%s6 + $0x54] sm:$0xf] %vm2406, %v2329
  %2429 = vst.msk [vmem:[%s6 + $0x58] sm:$0xf] %vm2406, %v2330
  %2430 = vst.msk [vmem:[%s6 + $0x5c] sm:$0xf] %vm2406, %v2331
  %2431 = vst.msk [vmem:[%s6 + $0x60] sm:$0xf] %vm2406, %v2332
  %2432 = vst.msk [vmem:[%s6 + $0x64] sm:$0xf] %vm2406, %v2333
  %2433 = vst.msk [vmem:[%s6 + $0x68] sm:$0xf] %vm2406, %v2334
  %2434 = vst.msk [vmem:[%s6 + $0x6c] sm:$0xf] %vm2406, %v2335
  %2435 = vst.msk [vmem:[%s6 + $0x70] sm:$0xf] %vm2406, %v2336
  %2436 = vst.msk [vmem:[%s6 + $0x74] sm:$0xf] %vm2406, %v2337
  %2437 = vst.msk [vmem:[%s6 + $0x78] sm:$0xf] %vm2406, %v2338
  %2438 = vst.msk [vmem:[%s6 + $0x7c] sm:$0xf] %vm2406, %v2339
  %2439 = vst.msk [vmem:[%s6 + $0x80] sm:$0xf] %vm2406, %v2340
  %2440 = vst.msk [vmem:[%s6 + $0x84] sm:$0xf] %vm2406, %v2341
  %2441 = vst.msk [vmem:[%s6 + $0x88] sm:$0xf] %vm2406, %v2342
  %2442 = vst.msk [vmem:[%s6 + $0x8c] sm:$0xf] %vm2406, %v2343
  %2443 = vst.msk [vmem:[%s6 + $0x90] sm:$0xf] %vm2406, %v2344
  %2444 = vst.msk [vmem:[%s6 + $0x94] sm:$0xf] %vm2406, %v2345
  %2445 = vst.msk [vmem:[%s6 + $0x98] sm:$0xf] %vm2406, %v2346
  %2446 = vst.msk [vmem:[%s6 + $0x9c] sm:$0xf] %vm2406, %v2347
  %2447 = vst.msk [vmem:[%s6 + $0xa0] sm:$0xf] %vm2406, %v2348
  %2448 = vst.msk [vmem:[%s6 + $0xa4] sm:$0xf] %vm2406, %v2349
  %2449 = vst.msk [vmem:[%s6 + $0xa8] sm:$0xf] %vm2406, %v2350
  %2450 = vst.msk [vmem:[%s6 + $0xac] sm:$0xf] %vm2406, %v2351
  %2451 = vst.msk [vmem:[%s6 + $0xb0] sm:$0xf] %vm2406, %v2352
  %2452 = vst.msk [vmem:[%s6 + $0xb4] sm:$0xf] %vm2406, %v2353
  %2453 = vst.msk [vmem:[%s6 + $0xb8] sm:$0xf] %vm2406, %v2354
  %2454 = vst.msk [vmem:[%s6 + $0xbc] sm:$0xf] %vm2406, %v2355
  %2455 = vst.msk [vmem:[%s6 + $0xc0] sm:$0xf] %vm2406, %v2356
  // Predicated region
  $region26: #{cnn_forward.3} parent=0 // pred_check
    _
  $region27: #{cnn_forward.3} parent=0 // pred_check_branch
    %2457 = sbr.rel (0) target = $region29
  $region28: #{cnn_forward.3} parent=0 // pred_region
    _
  $region29: #{cnn_forward.3} parent=0 // pred_fallthru
    _
  // Predicated region
  $region30: #{cnn_forward.3} parent=0 // pred_check
    _
  $region31: #{cnn_forward.3} parent=0 // pred_check_branch
    %2459 = sbr.rel (0) target = $region33
  $region32: #{cnn_forward.3} parent=0 // pred_region
    _
  $region33: #{cnn_forward.3} parent=0 // pred_fallthru
    _

// kernel: cnn_forward.4
$region0: #{cnn_forward.4}
  #allocation0 [shape = 'u32[]', space=smem, size = 0x4, offset = 0x4, fixed_abs, tag = 'smem constant byte address 0x4 - core index']
  #allocation1 [shape = 'u32[144,128]{1,0:T(1,128)}', space=vmem, size = 0x12000, scoped, tag = 'internal scratch']
  %s0 = inlined_call_operand.vmem [shape: bf16[104,800], index: 0, kind: input, shape index: {}]
  %s1 = inlined_call_operand.vmem [shape: bf16[104,800], index: 1, kind: input, shape index: {}]
  %s2 = inlined_call_operand.vmem [shape: bf16[104,800], index: 2, kind: input, shape index: {}]
  %s3 = inlined_call_operand.vmem [shape: bf16[104,800], index: 3, kind: input, shape index: {}]
  %s4 = inlined_call_operand.vmem [shape: bf16[800,64], index: 4, kind: input, shape index: {}]
  %s5 = inlined_call_operand.vmem [shape: f32[1,64], index: 5, kind: input, shape index: {}]
  %s6 = inlined_call_operand.vmem [shape: bf16[104,64], index: 6, kind: output, shape index: {}]
  %s7 = sld [smem:[#allocation0]]
  $region34: #{cnn_forward.4} parent=0
    _
  %s9 = ssub.s32 1, %s7
  %s10 = scalar_select 0, %s9, %s7
  // Predicated region
  $region2: #{cnn_forward.4} parent=0 // pred_check
    _
  $region3: #{cnn_forward.4} parent=0 // pred_check_branch
    %12 = sbr.rel (0) target = $region5
  $region4: #{cnn_forward.4} parent=0 // pred_region
    _
  $region5: #{cnn_forward.4} parent=0 // pred_fallthru
    _
  // Predicated region
  $region6: #{cnn_forward.4} parent=0 // pred_check
    _
  $region7: #{cnn_forward.4} parent=0 // pred_check_branch
    %14 = sbr.rel (0) target = $region9
  $region8: #{cnn_forward.4} parent=0 // pred_region
    _
  $region9: #{cnn_forward.4} parent=0 // pred_fallthru
    _
  // Predicated region
  $region10: #{cnn_forward.4} parent=0 // pred_check
    _
  $region11: #{cnn_forward.4} parent=0 // pred_check_branch
    %16 = sbr.rel (0) target = $region13
  $region12: #{cnn_forward.4} parent=0 // pred_region
    _
  $region13: #{cnn_forward.4} parent=0 // pred_fallthru
    _
  // Predicated region
  $region14: #{cnn_forward.4} parent=0 // pred_check
    _
  $region15: #{cnn_forward.4} parent=0 // pred_check_branch
    %18 = sbr.rel (0) target = $region17
  $region16: #{cnn_forward.4} parent=0 // pred_region
    _
  $region17: #{cnn_forward.4} parent=0 // pred_fallthru
    _
  // Predicated region
  $region18: #{cnn_forward.4} parent=0 // pred_check
    _
  $region19: #{cnn_forward.4} parent=0 // pred_check_branch
    %20 = sbr.rel (0) target = $region21
  $region20: #{cnn_forward.4} parent=0 // pred_region
    _
  $region21: #{cnn_forward.4} parent=0 // pred_fallthru
    _
  // Predicated region
  $region22: #{cnn_forward.4} parent=0 // pred_check
    _
  $region23: #{cnn_forward.4} parent=0 // pred_check_branch
    %22 = sbr.rel (0) target = $region25
  $region24: #{cnn_forward.4} parent=0 // pred_region
    _
  $region25: #{cnn_forward.4} parent=0 // pred_fallthru
    _
  %v24 = vld [vmem:[%s4] sm:$0xf]
  %v25 = vld [vmem:[%s4 + $0x4] sm:$0xf]
  %v26 = vld [vmem:[%s4 + $0x8] sm:$0xf]
  %v27 = vld [vmem:[%s4 + $0xc] sm:$0xf]
  %v28 = vld [vmem:[%s4 + $0x10] sm:$0xf]
  %v29 = vld [vmem:[%s4 + $0x14] sm:$0xf]
  %v30 = vld [vmem:[%s4 + $0x18] sm:$0xf]
  %v31 = vld [vmem:[%s4 + $0x1c] sm:$0xf]
  %v32 = vld [vmem:[%s4 + $0x20] sm:$0xf]
  %v33 = vld [vmem:[%s4 + $0x24] sm:$0xf]
  %v34 = vld [vmem:[%s4 + $0x28] sm:$0xf]
  %v35 = vld [vmem:[%s4 + $0x2c] sm:$0xf]
  %v36 = vld [vmem:[%s4 + $0x30] sm:$0xf]
  %v37 = vld [vmem:[%s4 + $0x34] sm:$0xf]
  %v38 = vld [vmem:[%s4 + $0x38] sm:$0xf]
  %v39 = vld [vmem:[%s4 + $0x3c] sm:$0xf]
  %v40 = vld [vmem:[%s4 + $0x40] sm:$0xf]
  %v41 = vld [vmem:[%s4 + $0x44] sm:$0xf]
  %v42 = vld [vmem:[%s4 + $0x48] sm:$0xf]
  %v43 = vld [vmem:[%s4 + $0x4c] sm:$0xf]
  %v44 = vld [vmem:[%s4 + $0x50] sm:$0xf]
  %v45 = vld [vmem:[%s4 + $0x54] sm:$0xf]
  %v46 = vld [vmem:[%s4 + $0x58] sm:$0xf]
  %v47 = vld [vmem:[%s4 + $0x5c] sm:$0xf]
  %v48 = vld [vmem:[%s4 + $0x60] sm:$0xf]
  %v49 = vld [vmem:[%s4 + $0x64] sm:$0xf]
  %v50 = vld [vmem:[%s4 + $0x68] sm:$0xf]
  %v51 = vld [vmem:[%s4 + $0x6c] sm:$0xf]
  %v52 = vld [vmem:[%s4 + $0x70] sm:$0xf]
  %v53 = vld [vmem:[%s4 + $0x74] sm:$0xf]
  %v54 = vld [vmem:[%s4 + $0x78] sm:$0xf]
  %v55 = vld [vmem:[%s4 + $0x7c] sm:$0xf]
  %v56 = vld [vmem:[%s4 + $0x80] sm:$0xf]
  %v57 = vld [vmem:[%s4 + $0x84] sm:$0xf]
  %v58 = vld [vmem:[%s4 + $0x88] sm:$0xf]
  %v59 = vld [vmem:[%s4 + $0x8c] sm:$0xf]
  %v60 = vld [vmem:[%s4 + $0x90] sm:$0xf]
  %v61 = vld [vmem:[%s4 + $0x94] sm:$0xf]
  %v62 = vld [vmem:[%s4 + $0x98] sm:$0xf]
  %v63 = vld [vmem:[%s4 + $0x9c] sm:$0xf]
  %v64 = vld [vmem:[%s4 + $0xa0] sm:$0xf]
  %v65 = vld [vmem:[%s4 + $0xa4] sm:$0xf]
  %v66 = vld [vmem:[%s4 + $0xa8] sm:$0xf]
  %v67 = vld [vmem:[%s4 + $0xac] sm:$0xf]
  %v68 = vld [vmem:[%s4 + $0xb0] sm:$0xf]
  %v69 = vld [vmem:[%s4 + $0xb4] sm:$0xf]
  %v70 = vld [vmem:[%s4 + $0xb8] sm:$0xf]
  %v71 = vld [vmem:[%s4 + $0xbc] sm:$0xf]
  %v72 = vld [vmem:[%s4 + $0xc0] sm:$0xf]
  %v73 = vld [vmem:[%s4 + $0xc4] sm:$0xf]
  %v74 = vld [vmem:[%s4 + $0xc8] sm:$0xf]
  %v75 = vld [vmem:[%s4 + $0xcc] sm:$0xf]
  %v76 = vld [vmem:[%s4 + $0xd0] sm:$0xf]
  %v77 = vld [vmem:[%s4 + $0xd4] sm:$0xf]
  %v78 = vld [vmem:[%s4 + $0xd8] sm:$0xf]
  %v79 = vld [vmem:[%s4 + $0xdc] sm:$0xf]
  %v80 = vld [vmem:[%s4 + $0xe0] sm:$0xf]
  %v81 = vld [vmem:[%s4 + $0xe4] sm:$0xf]
  %v82 = vld [vmem:[%s4 + $0xe8] sm:$0xf]
  %v83 = vld [vmem:[%s4 + $0xec] sm:$0xf]
  %v84 = vld [vmem:[%s4 + $0xf0] sm:$0xf]
  %v85 = vld [vmem:[%s4 + $0xf4] sm:$0xf]
  %v86 = vld [vmem:[%s4 + $0xf8] sm:$0xf]
  %v87 = vld [vmem:[%s4 + $0xfc] sm:$0xf]
  %v88 = vld [vmem:[%s4 + $0x100] sm:$0xf]
  %v89 = vld [vmem:[%s4 + $0x104] sm:$0xf]
  %v90 = vld [vmem:[%s4 + $0x108] sm:$0xf]
  %v91 = vld [vmem:[%s4 + $0x10c] sm:$0xf]
  %v92 = vld [vmem:[%s4 + $0x110] sm:$0xf]
  %v93 = vld [vmem:[%s4 + $0x114] sm:$0xf]
  %v94 = vld [vmem:[%s4 + $0x118] sm:$0xf]
  %v95 = vld [vmem:[%s4 + $0x11c] sm:$0xf]
  %v96 = vld [vmem:[%s4 + $0x120] sm:$0xf]
  %v97 = vld [vmem:[%s4 + $0x124] sm:$0xf]
  %v98 = vld [vmem:[%s4 + $0x128] sm:$0xf]
  %v99 = vld [vmem:[%s4 + $0x12c] sm:$0xf]
  %v100 = vld [vmem:[%s4 + $0x130] sm:$0xf]
  %v101 = vld [vmem:[%s4 + $0x134] sm:$0xf]
  %v102 = vld [vmem:[%s4 + $0x138] sm:$0xf]
  %v103 = vld [vmem:[%s4 + $0x13c] sm:$0xf]
  %v104 = vld [vmem:[%s4 + $0x140] sm:$0xf]
  %v105 = vld [vmem:[%s4 + $0x144] sm:$0xf]
  %v106 = vld [vmem:[%s4 + $0x148] sm:$0xf]
  %v107 = vld [vmem:[%s4 + $0x14c] sm:$0xf]
  %v108 = vld [vmem:[%s4 + $0x150] sm:$0xf]
  %v109 = vld [vmem:[%s4 + $0x154] sm:$0xf]
  %v110 = vld [vmem:[%s4 + $0x158] sm:$0xf]
  %v111 = vld [vmem:[%s4 + $0x15c] sm:$0xf]
  %v112 = vld [vmem:[%s4 + $0x160] sm:$0xf]
  %v113 = vld [vmem:[%s4 + $0x164] sm:$0xf]
  %v114 = vld [vmem:[%s4 + $0x168] sm:$0xf]
  %v115 = vld [vmem:[%s4 + $0x16c] sm:$0xf]
  %v116 = vld [vmem:[%s4 + $0x170] sm:$0xf]
  %v117 = vld [vmem:[%s4 + $0x174] sm:$0xf]
  %v118 = vld [vmem:[%s4 + $0x178] sm:$0xf]
  %v119 = vld [vmem:[%s4 + $0x17c] sm:$0xf]
  %v120 = vld [vmem:[%s4 + $0x180] sm:$0xf]
  %v121 = vld [vmem:[%s4 + $0x184] sm:$0xf]
  %v122 = vld [vmem:[%s4 + $0x188] sm:$0xf]
  %v123 = vld [vmem:[%s4 + $0x18c] sm:$0xf]
  %v124 = vld [vmem:[%s0] sm:$0xff]
  %v125 = vld [vmem:[%s0 + $0x8] sm:$0xff]
  %v126 = vld [vmem:[%s0 + $0x10] sm:$0xff]
  %v127 = vld [vmem:[%s0 + $0x18] sm:$0xf]
  %v128 = vld [vmem:[%s0 + $0x1c] sm:$0xff]
  %v129 = vld [vmem:[%s0 + $0x24] sm:$0xff]
  %v130 = vld [vmem:[%s0 + $0x2c] sm:$0xff]
  %v131 = vld [vmem:[%s0 + $0x34] sm:$0xf]
  %v132 = vld [vmem:[%s0 + $0x38] sm:$0xff]
  %v133 = vld [vmem:[%s0 + $0x40] sm:$0xff]
  %v134 = vld [vmem:[%s0 + $0x48] sm:$0xff]
  %v135 = vld [vmem:[%s0 + $0x50] sm:$0xf]
  %v136 = vld [vmem:[%s0 + $0x54] sm:$0xff]
  %v137 = vld [vmem:[%s0 + $0x5c] sm:$0xff]
  %v138 = vld [vmem:[%s0 + $0x64] sm:$0xff]
  %v139 = vld [vmem:[%s0 + $0x6c] sm:$0xf]
  %v140 = vld [vmem:[%s0 + $0x70] sm:$0xff]
  %v141 = vld [vmem:[%s0 + $0x78] sm:$0xff]
  %v142 = vld [vmem:[%s0 + $0x80] sm:$0xff]
  %v143 = vld [vmem:[%s0 + $0x88] sm:$0xf]
  %v144 = vld [vmem:[%s0 + $0x8c] sm:$0xff]
  %v145 = vld [vmem:[%s0 + $0x94] sm:$0xff]
  %v146 = vld [vmem:[%s0 + $0x9c] sm:$0xff]
  %v147 = vld [vmem:[%s0 + $0xa4] sm:$0xf]
  %v148 = vld [vmem:[%s0 + $0xa8] sm:$0xff]
  %v149 = vld [vmem:[%s0 + $0xb0] sm:$0xff]
  %v150 = vld [vmem:[%s0 + $0xb8] sm:$0xff]
  %v151 = vld [vmem:[%s0 + $0xc0] sm:$0xf]
  %v152 = vld [vmem:[%s0 + $0xc4] sm:$0xff]
  %v153 = vld [vmem:[%s0 + $0xcc] sm:$0xff]
  %v154 = vld [vmem:[%s0 + $0xd4] sm:$0xff]
  %v155 = vld [vmem:[%s0 + $0xdc] sm:$0xf]
  %v156 = vld [vmem:[%s0 + $0xe0] sm:$0xff]
  %v157 = vld [vmem:[%s0 + $0xe8] sm:$0xff]
  %v158 = vld [vmem:[%s0 + $0xf0] sm:$0xff]
  %v159 = vld [vmem:[%s0 + $0xf8] sm:$0xf]
  %v160 = vld [vmem:[%s0 + $0xfc] sm:$0xff]
  %v161 = vld [vmem:[%s0 + $0x104] sm:$0xff]
  %v162 = vld [vmem:[%s0 + $0x10c] sm:$0xff]
  %v163 = vld [vmem:[%s0 + $0x114] sm:$0xf]
  %v164 = vld [vmem:[%s0 + $0x118] sm:$0xff]
  %v165 = vld [vmem:[%s0 + $0x120] sm:$0xff]
  %v166 = vld [vmem:[%s0 + $0x128] sm:$0xff]
  %v167 = vld [vmem:[%s0 + $0x130] sm:$0xf]
  %v168 = vld [vmem:[%s0 + $0x134] sm:$0xff]
  %v169 = vld [vmem:[%s0 + $0x13c] sm:$0xff]
  %v170 = vld [vmem:[%s0 + $0x144] sm:$0xff]
  %v171 = vld [vmem:[%s0 + $0x14c] sm:$0xf]
  %v172 = vld [vmem:[%s0 + $0x150] sm:$0xff]
  %v173 = vld [vmem:[%s0 + $0x158] sm:$0xff]
  %v174 = vld [vmem:[%s0 + $0x160] sm:$0xff]
  %v175 = vld [vmem:[%s0 + $0x168] sm:$0xf]
  %v228 = vunpack.c.l.b16 %v124
  %v229 = vunpack.c.h.b16 %v124
  %v230 = vunpack.c.l.b16 %v125
  %v231 = vunpack.c.h.b16 %v125
  %v232 = vunpack.c.l.b16 %v126
  %v233 = vunpack.c.h.b16 %v126
  %v234 = vunpack.c.l.b16 %v127
  %v235 = vunpack.c.l.b16 %v128
  %v236 = vunpack.c.h.b16 %v128
  %v237 = vunpack.c.l.b16 %v129
  %v238 = vunpack.c.h.b16 %v129
  %v239 = vunpack.c.l.b16 %v130
  %v240 = vunpack.c.h.b16 %v130
  %v241 = vunpack.c.l.b16 %v131
  %v242 = vunpack.c.l.b16 %v132
  %v243 = vunpack.c.h.b16 %v132
  %v244 = vunpack.c.l.b16 %v133
  %v245 = vunpack.c.h.b16 %v133
  %v246 = vunpack.c.l.b16 %v134
  %v247 = vunpack.c.h.b16 %v134
  %v248 = vunpack.c.l.b16 %v135
  %v249 = vunpack.c.l.b16 %v136
  %v250 = vunpack.c.h.b16 %v136
  %v251 = vunpack.c.l.b16 %v137
  %v252 = vunpack.c.h.b16 %v137
  %v253 = vunpack.c.l.b16 %v138
  %v254 = vunpack.c.h.b16 %v138
  %v255 = vunpack.c.l.b16 %v139
  %v256 = vunpack.c.l.b16 %v140
  %v257 = vunpack.c.h.b16 %v140
  %v258 = vunpack.c.l.b16 %v141
  %v259 = vunpack.c.h.b16 %v141
  %v260 = vunpack.c.l.b16 %v142
  %v261 = vunpack.c.h.b16 %v142
  %v262 = vunpack.c.l.b16 %v143
  %v263 = vunpack.c.l.b16 %v144
  %v264 = vunpack.c.h.b16 %v144
  %v265 = vunpack.c.l.b16 %v145
  %v266 = vunpack.c.h.b16 %v145
  %v267 = vunpack.c.l.b16 %v146
  %v268 = vunpack.c.h.b16 %v146
  %v269 = vunpack.c.l.b16 %v147
  %v270 = vunpack.c.l.b16 %v148
  %v271 = vunpack.c.h.b16 %v148
  %v272 = vunpack.c.l.b16 %v149
  %v273 = vunpack.c.h.b16 %v149
  %v274 = vunpack.c.l.b16 %v150
  %v275 = vunpack.c.h.b16 %v150
  %v276 = vunpack.c.l.b16 %v151
  %v277 = vunpack.c.l.b16 %v152
  %v278 = vunpack.c.h.b16 %v152
  %v279 = vunpack.c.l.b16 %v153
  %v280 = vunpack.c.h.b16 %v153
  %v281 = vunpack.c.l.b16 %v154
  %v282 = vunpack.c.h.b16 %v154
  %v283 = vunpack.c.l.b16 %v155
  %v284 = vunpack.c.l.b16 %v156
  %v285 = vunpack.c.h.b16 %v156
  %v286 = vunpack.c.l.b16 %v157
  %v287 = vunpack.c.h.b16 %v157
  %v288 = vunpack.c.l.b16 %v158
  %v289 = vunpack.c.h.b16 %v158
  %v290 = vunpack.c.l.b16 %v159
  %v291 = vunpack.c.l.b16 %v160
  %v292 = vunpack.c.h.b16 %v160
  %v293 = vunpack.c.l.b16 %v161
  %v294 = vunpack.c.h.b16 %v161
  %v295 = vunpack.c.l.b16 %v162
  %v296 = vunpack.c.h.b16 %v162
  %v297 = vunpack.c.l.b16 %v163
  %v298 = vunpack.c.l.b16 %v164
  %v299 = vunpack.c.h.b16 %v164
  %v300 = vunpack.c.l.b16 %v165
  %v301 = vunpack.c.h.b16 %v165
  %v302 = vunpack.c.l.b16 %v166
  %v303 = vunpack.c.h.b16 %v166
  %v304 = vunpack.c.l.b16 %v167
  %v305 = vunpack.c.l.b16 %v168
  %v306 = vunpack.c.h.b16 %v168
  %v307 = vunpack.c.l.b16 %v169
  %v308 = vunpack.c.h.b16 %v169
  %v309 = vunpack.c.l.b16 %v170
  %v310 = vunpack.c.h.b16 %v170
  %v311 = vunpack.c.l.b16 %v171
  %v312 = vunpack.c.l.b16 %v172
  %v313 = vunpack.c.h.b16 %v172
  %v314 = vunpack.c.l.b16 %v173
  %v315 = vunpack.c.h.b16 %v173
  %v316 = vunpack.c.l.b16 %v174
  %v317 = vunpack.c.h.b16 %v174
  %v318 = vunpack.c.l.b16 %v175
  %v319 = vpack.c.b16 %v235, %v228
  %v320 = vpack.c.b16 %v236, %v229
  %v321 = vpack.c.b16 %v237, %v230
  %v322 = vpack.c.b16 %v238, %v231
  %v323 = vpack.c.b16 %v239, %v232
  %v324 = vpack.c.b16 %v240, %v233
  %v325 = vpack.c.b16 %v241, %v234
  %v326 = vpack.c.b16 %v249, %v242
  %v327 = vpack.c.b16 %v250, %v243
  %v328 = vpack.c.b16 %v251, %v244
  %v329 = vpack.c.b16 %v252, %v245
  %v330 = vpack.c.b16 %v253, %v246
  %v331 = vpack.c.b16 %v254, %v247
  %v332 = vpack.c.b16 %v255, %v248
  %v333 = vpack.c.b16 %v263, %v256
  %v334 = vpack.c.b16 %v264, %v257
  %v335 = vpack.c.b16 %v265, %v258
  %v336 = vpack.c.b16 %v266, %v259
  %v337 = vpack.c.b16 %v267, %v260
  %v338 = vpack.c.b16 %v268, %v261
  %v339 = vpack.c.b16 %v269, %v262
  %v340 = vpack.c.b16 %v277, %v270
  %v341 = vpack.c.b16 %v278, %v271
  %v342 = vpack.c.b16 %v279, %v272
  %v343 = vpack.c.b16 %v280, %v273
  %v344 = vpack.c.b16 %v281, %v274
  %v345 = vpack.c.b16 %v282, %v275
  %v346 = vpack.c.b16 %v283, %v276
  %v347 = vpack.c.b16 %v291, %v284
  %v348 = vpack.c.b16 %v292, %v285
  %v349 = vpack.c.b16 %v293, %v286
  %v350 = vpack.c.b16 %v294, %v287
  %v351 = vpack.c.b16 %v295, %v288
  %v352 = vpack.c.b16 %v296, %v289
  %v353 = vpack.c.b16 %v297, %v290
  %v354 = vpack.c.b16 %v305, %v298
  %v355 = vpack.c.b16 %v306, %v299
  %v356 = vpack.c.b16 %v307, %v300
  %v357 = vpack.c.b16 %v308, %v301
  %v358 = vpack.c.b16 %v309, %v302
  %v359 = vpack.c.b16 %v310, %v303
  %v360 = vpack.c.b16 %v311, %v304
  %v361 = vpack.c.b16 %v312, %v312
  %v362 = vpack.c.b16 %v313, %v313
  %v363 = vpack.c.b16 %v314, %v314
  %v364 = vpack.c.b16 %v315, %v315
  %v365 = vpack.c.b16 %v316, %v316
  %v366 = vpack.c.b16 %v317, %v317
  %v367 = vpack.c.b16 %v318, %v318
  %v510 = vunpack.c.l.b16 %v24
  %v511 = vunpack.c.l.b16 %v25
  %v512 = vunpack.c.l.b16 %v26
  %v513 = vunpack.c.l.b16 %v27
  %v514 = vunpack.c.l.b16 %v28
  %v515 = vunpack.c.l.b16 %v29
  %v516 = vunpack.c.l.b16 %v30
  %v517 = vunpack.c.l.b16 %v31
  %v518 = vunpack.c.l.b16 %v32
  %v519 = vunpack.c.l.b16 %v33
  %v520 = vunpack.c.l.b16 %v34
  %v521 = vunpack.c.l.b16 %v35
  %v522 = vunpack.c.l.b16 %v36
  %v523 = vunpack.c.l.b16 %v37
  %v524 = vunpack.c.l.b16 %v38
  %v525 = vunpack.c.l.b16 %v39
  %v526 = vunpack.c.l.b16 %v40
  %v527 = vunpack.c.l.b16 %v41
  %v528 = vunpack.c.l.b16 %v42
  %v529 = vunpack.c.l.b16 %v43
  %v530 = vunpack.c.l.b16 %v44
  %v531 = vunpack.c.l.b16 %v45
  %v532 = vunpack.c.l.b16 %v46
  %v533 = vunpack.c.l.b16 %v47
  %v534 = vunpack.c.l.b16 %v48
  %v535 = vunpack.c.l.b16 %v49
  %v536 = vunpack.c.l.b16 %v50
  %v537 = vunpack.c.l.b16 %v51
  %v538 = vunpack.c.l.b16 %v52
  %v539 = vunpack.c.l.b16 %v53
  %v540 = vunpack.c.l.b16 %v54
  %v541 = vunpack.c.l.b16 %v55
  %v542 = vunpack.c.l.b16 %v56
  %v543 = vunpack.c.l.b16 %v57
  %v544 = vunpack.c.l.b16 %v58
  %v545 = vunpack.c.l.b16 %v59
  %v546 = vunpack.c.l.b16 %v60
  %v547 = vunpack.c.l.b16 %v61
  %v548 = vunpack.c.l.b16 %v62
  %v549 = vunpack.c.l.b16 %v63
  %v550 = vunpack.c.l.b16 %v64
  %v551 = vunpack.c.l.b16 %v65
  %v552 = vunpack.c.l.b16 %v66
  %v553 = vunpack.c.l.b16 %v67
  %v554 = vunpack.c.l.b16 %v68
  %v555 = vunpack.c.l.b16 %v69
  %v556 = vunpack.c.l.b16 %v70
  %v557 = vunpack.c.l.b16 %v71
  %v558 = vunpack.c.l.b16 %v72
  %v559 = vunpack.c.l.b16 %v73
  %v560 = vunpack.c.l.b16 %v74
  %v561 = vunpack.c.l.b16 %v75
  %v562 = vunpack.c.l.b16 %v76
  %v563 = vunpack.c.l.b16 %v77
  %v564 = vunpack.c.l.b16 %v78
  %v565 = vunpack.c.l.b16 %v79
  %v566 = vunpack.c.l.b16 %v80
  %v567 = vunpack.c.l.b16 %v81
  %v568 = vunpack.c.l.b16 %v82
  %v569 = vunpack.c.l.b16 %v83
  %v570 = vunpack.c.l.b16 %v84
  %v571 = vunpack.c.l.b16 %v85
  %v572 = vunpack.c.l.b16 %v86
  %v573 = vunpack.c.l.b16 %v87
  %v574 = vunpack.c.l.b16 %v88
  %v575 = vunpack.c.l.b16 %v89
  %v576 = vunpack.c.l.b16 %v90
  %v577 = vunpack.c.l.b16 %v91
  %v578 = vunpack.c.l.b16 %v92
  %v579 = vunpack.c.l.b16 %v93
  %v580 = vunpack.c.l.b16 %v94
  %v581 = vunpack.c.l.b16 %v95
  %v582 = vunpack.c.l.b16 %v96
  %v583 = vunpack.c.l.b16 %v97
  %v584 = vunpack.c.l.b16 %v98
  %v585 = vunpack.c.l.b16 %v99
  %v586 = vunpack.c.l.b16 %v100
  %v587 = vunpack.c.l.b16 %v101
  %v588 = vunpack.c.l.b16 %v102
  %v589 = vunpack.c.l.b16 %v103
  %v590 = vunpack.c.l.b16 %v104
  %v591 = vunpack.c.l.b16 %v105
  %v592 = vunpack.c.l.b16 %v106
  %v593 = vunpack.c.l.b16 %v107
  %v594 = vunpack.c.l.b16 %v108
  %v595 = vunpack.c.l.b16 %v109
  %v596 = vunpack.c.l.b16 %v110
  %v597 = vunpack.c.l.b16 %v111
  %v598 = vunpack.c.l.b16 %v112
  %v599 = vunpack.c.l.b16 %v113
  %v600 = vunpack.c.l.b16 %v114
  %v601 = vunpack.c.l.b16 %v115
  %v602 = vunpack.c.l.b16 %v116
  %v603 = vunpack.c.l.b16 %v117
  %v604 = vunpack.c.l.b16 %v118
  %v605 = vunpack.c.l.b16 %v119
  %v606 = vunpack.c.l.b16 %v120
  %v607 = vunpack.c.l.b16 %v121
  %v608 = vunpack.c.l.b16 %v122
  %v609 = vunpack.c.l.b16 %v123
  %v610 = vpack.c.b16 %v511, %v510
  %v611 = vpack.c.b16 %v513, %v512
  %v612 = vpack.c.b16 %v515, %v514
  %v613 = vpack.c.b16 %v517, %v516
  %v614 = vpack.c.b16 %v519, %v518
  %v615 = vpack.c.b16 %v521, %v520
  %v616 = vpack.c.b16 %v523, %v522
  %v617 = vpack.c.b16 %v525, %v524
  %v618 = vpack.c.b16 %v527, %v526
  %v619 = vpack.c.b16 %v529, %v528
  %v620 = vpack.c.b16 %v531, %v530
  %v621 = vpack.c.b16 %v533, %v532
  %v622 = vpack.c.b16 %v535, %v534
  %v623 = vpack.c.b16 %v537, %v536
  %v624 = vpack.c.b16 %v539, %v538
  %v625 = vpack.c.b16 %v541, %v540
  %v626 = vpack.c.b16 %v543, %v542
  %v627 = vpack.c.b16 %v545, %v544
  %v628 = vpack.c.b16 %v547, %v546
  %v629 = vpack.c.b16 %v549, %v548
  %v630 = vpack.c.b16 %v551, %v550
  %v631 = vpack.c.b16 %v553, %v552
  %v632 = vpack.c.b16 %v555, %v554
  %v633 = vpack.c.b16 %v557, %v556
  %v634 = vpack.c.b16 %v559, %v558
  %v635 = vpack.c.b16 %v561, %v560
  %v636 = vpack.c.b16 %v563, %v562
  %v637 = vpack.c.b16 %v565, %v564
  %v638 = vpack.c.b16 %v567, %v566
  %v639 = vpack.c.b16 %v569, %v568
  %v640 = vpack.c.b16 %v571, %v570
  %v641 = vpack.c.b16 %v573, %v572
  %v642 = vpack.c.b16 %v575, %v574
  %v643 = vpack.c.b16 %v577, %v576
  %v644 = vpack.c.b16 %v579, %v578
  %v645 = vpack.c.b16 %v581, %v580
  %v646 = vpack.c.b16 %v583, %v582
  %v647 = vpack.c.b16 %v585, %v584
  %v648 = vpack.c.b16 %v587, %v586
  %v649 = vpack.c.b16 %v589, %v588
  %v650 = vpack.c.b16 %v591, %v590
  %v651 = vpack.c.b16 %v593, %v592
  %v652 = vpack.c.b16 %v595, %v594
  %v653 = vpack.c.b16 %v597, %v596
  %v654 = vpack.c.b16 %v599, %v598
  %v655 = vpack.c.b16 %v601, %v600
  %v656 = vpack.c.b16 %v603, %v602
  %v657 = vpack.c.b16 %v605, %v604
  %v658 = vpack.c.b16 %v607, %v606
  %v659 = vpack.c.b16 %v609, %v608
  %vm710 = vcmask 261120
  %v712 = vsel %vm710, %v325, 0
  %v715 = vsel %vm710, %v332, 0
  %v718 = vsel %vm710, %v339, 0
  %v721 = vsel %vm710, %v346, 0
  %v724 = vsel %vm710, %v353, 0
  %v727 = vsel %vm710, %v360, 0
  %v730 = vsel %vm710, %v367, 0
  %732 = vmatprep.subr.bf16.mxu0 0
  %733 = vmatpush1.bf16.msra.mxu0 %v610
  %734 = vmatprep.subr.bf16.mxu0 0
  %735 = vmatpush1.bf16.msra.mxu0 %v611
  %736 = vmatprep.subr.bf16.mxu0 0
  %737 = vmatpush1.bf16.msra.mxu0 %v612
  %738 = vmatprep.subr.bf16.mxu0 0
  %739 = vmatpush1.bf16.msra.mxu0 %v613
  %740 = vmatprep.subr.bf16.mxu0 0
  %741 = vmatpush1.bf16.msra.mxu0 %v614
  %742 = vmatprep.subr.bf16.mxu0 0
  %743 = vmatpush1.bf16.msra.mxu0 %v615
  %744 = vmatprep.subr.bf16.mxu0 0
  %745 = vmatpush1.bf16.msra.mxu0 %v616
  %746 = vmatprep.subr.bf16.mxu0 0
  %747 = vmatpush1.bf16.msra.mxu0 %v617
  %748 = vmatprep.subr.bf16.mxu0 0
  %749 = vmatpush1.bf16.msra.mxu0 %v618
  %750 = vmatprep.subr.bf16.mxu0 0
  %751 = vmatpush1.bf16.msra.mxu0 %v619
  %752 = vmatprep.subr.bf16.mxu0 0
  %753 = vmatpush1.bf16.msra.mxu0 %v620
  %754 = vmatprep.subr.bf16.mxu0 0
  %755 = vmatpush1.bf16.msra.mxu0 %v621
  %756 = vmatprep.subr.bf16.mxu0 0
  %757 = vmatpush1.bf16.msra.mxu0 %v622
  %758 = vmatprep.subr.bf16.mxu0 0
  %759 = vmatpush1.bf16.msra.mxu0 %v623
  %760 = vmatprep.subr.bf16.mxu0 0
  %761 = vmatpush1.bf16.msra.mxu0 %v624
  %762 = vmatprep.subr.bf16.mxu0 0
  %763 = vmatpush1.bf16.msra.mxu0 %v625
  %764 = vmatprep.mubr.bf16.mxu0 %v320
  %765 = vmatmul.mubr.bf16.gmra.mrb[0].mxu0 %v319
  %v766 = vpop.f32.mrb[0].mxu0
  %v767 = vadd.f32 0.0, %v766
  %v768 = vpop.f32.mrb[0].mxu0
  %v769 = vpop.f32.mrb[0].mxu0
  %v770 = vadd.f32 0.0, %v769
  %v771 = vpop.f32.mrb[0].mxu0
  %772 = vmatprep.mubr.bf16.mxu0 %v327
  %773 = vmatmul.mubr.bf16.gmra.mrb[0].mxu0 %v326
  %v774 = vpop.f32.mrb[0].mxu0
  %v775 = vadd.f32 0.0, %v774
  %v776 = vpop.f32.mrb[0].mxu0
  %v777 = vpop.f32.mrb[0].mxu0
  %v778 = vadd.f32 0.0, %v777
  %v779 = vpop.f32.mrb[0].mxu0
  %780 = vmatprep.mubr.bf16.mxu0 %v334
  %781 = vmatmul.mubr.bf16.gmra.mrb[0].mxu0 %v333
  %v782 = vpop.f32.mrb[0].mxu0
  %v783 = vadd.f32 0.0, %v782
  %v784 = vpop.f32.mrb[0].mxu0
  %v785 = vpop.f32.mrb[0].mxu0
  %v786 = vadd.f32 0.0, %v785
  %v787 = vpop.f32.mrb[0].mxu0
  %788 = vmatprep.mubr.bf16.mxu0 %v341
  %789 = vmatmul.mubr.bf16.gmra.mrb[0].mxu0 %v340
  %v790 = vpop.f32.mrb[0].mxu0
  %v791 = vadd.f32 0.0, %v790
  %v792 = vpop.f32.mrb[0].mxu0
  %v793 = vpop.f32.mrb[0].mxu0
  %v794 = vadd.f32 0.0, %v793
  %v795 = vpop.f32.mrb[0].mxu0
  %796 = vmatprep.mubr.bf16.mxu0 %v348
  %797 = vmatmul.mubr.bf16.gmra.mrb[0].mxu0 %v347
  %v798 = vpop.f32.mrb[0].mxu0
  %v799 = vadd.f32 0.0, %v798
  %v800 = vpop.f32.mrb[0].mxu0
  %v801 = vpop.f32.mrb[0].mxu0
  %v802 = vadd.f32 0.0, %v801
  %v803 = vpop.f32.mrb[0].mxu0
  %804 = vmatprep.mubr.bf16.mxu0 %v355
  %805 = vmatmul.mubr.bf16.gmra.mrb[0].mxu0 %v354
  %v806 = vpop.f32.mrb[0].mxu0
  %v807 = vadd.f32 0.0, %v806
  %v808 = vpop.f32.mrb[0].mxu0
  %v809 = vpop.f32.mrb[0].mxu0
  %v810 = vadd.f32 0.0, %v809
  %v811 = vpop.f32.mrb[0].mxu0
  %812 = vmatprep.mubr.bf16.mxu0 %v362
  %813 = vmatmul.mubr.bf16.gmra.mrb[0].mxu0 %v361
  %v814 = vpop.f32.mrb[0].mxu0
  %v815 = vadd.f32 0.0, %v814
  %v816 = vpop.f32.mrb[0].mxu0
  %v817 = vpop.f32.mrb[0].mxu0
  %v818 = vpop.f32.mrb[0].mxu0
  %819 = vdwg.mxu0
  %820 = vmatprep.subr.bf16.mxu0 0
  %821 = vmatpush1.bf16.msra.mxu0 %v626
  %822 = vmatprep.subr.bf16.mxu0 0
  %823 = vmatpush1.bf16.msra.mxu0 %v627
  %824 = vmatprep.subr.bf16.mxu0 0
  %825 = vmatpush1.bf16.msra.mxu0 %v628
  %826 = vmatprep.subr.bf16.mxu0 0
  %827 = vmatpush1.bf16.msra.mxu0 %v629
  %828 = vmatprep.subr.bf16.mxu0 0
  %829 = vmatpush1.bf16.msra.mxu0 %v630
  %830 = vmatprep.subr.bf16.mxu0 0
  %831 = vmatpush1.bf16.msra.mxu0 %v631
  %832 = vmatprep.subr.bf16.mxu0 0
  %833 = vmatpush1.bf16.msra.mxu0 %v632
  %834 = vmatprep.subr.bf16.mxu0 0
  %835 = vmatpush1.bf16.msra.mxu0 %v633
  %836 = vmatprep.subr.bf16.mxu0 0
  %837 = vmatpush1.bf16.msra.mxu0 %v634
  %838 = vmatprep.subr.bf16.mxu0 0
  %839 = vmatpush1.bf16.msra.mxu0 %v635
  %840 = vmatprep.subr.bf16.mxu0 0
  %841 = vmatpush1.bf16.msra.mxu0 %v636
  %842 = vmatprep.subr.bf16.mxu0 0
  %843 = vmatpush1.bf16.msra.mxu0 %v637
  %844 = vmatprep.subr.bf16.mxu0 0
  %845 = vmatpush1.bf16.msra.mxu0 %v638
  %846 = vmatprep.subr.bf16.mxu0 0
  %847 = vmatpush1.bf16.msra.mxu0 %v639
  %848 = vmatprep.subr.bf16.mxu0 0
  %849 = vmatpush1.bf16.msra.mxu0 %v640
  %850 = vmatprep.subr.bf16.mxu0 0
  %851 = vmatpush1.bf16.msra.mxu0 %v641
  %852 = vmatprep.mubr.bf16.mxu0 %v322
  %853 = vmatmul.mubr.bf16.gmra.mrb[0].mxu0 %v321
  %v854 = vpop.f32.mrb[0].mxu0
  %v855 = vadd.f32 %v767, %v854
  %v856 = vpop.f32.mrb[0].mxu0
  %v857 = vpop.f32.mrb[0].mxu0
  %v858 = vadd.f32 %v770, %v857
  %v859 = vpop.f32.mrb[0].mxu0
  %860 = vmatprep.mubr.bf16.mxu0 %v329
  %861 = vmatmul.mubr.bf16.gmra.mrb[0].mxu0 %v328
  %v862 = vpop.f32.mrb[0].mxu0
  %v863 = vadd.f32 %v775, %v862
  %v864 = vpop.f32.mrb[0].mxu0
  %v865 = vpop.f32.mrb[0].mxu0
  %v866 = vadd.f32 %v778, %v865
  %v867 = vpop.f32.mrb[0].mxu0
  %868 = vmatprep.mubr.bf16.mxu0 %v336
  %869 = vmatmul.mubr.bf16.gmra.mrb[0].mxu0 %v335
  %v870 = vpop.f32.mrb[0].mxu0
  %v871 = vadd.f32 %v783, %v870
  %v872 = vpop.f32.mrb[0].mxu0
  %v873 = vpop.f32.mrb[0].mxu0
  %v874 = vadd.f32 %v786, %v873
  %v875 = vpop.f32.mrb[0].mxu0
  %876 = vmatprep.mubr.bf16.mxu0 %v343
  %877 = vmatmul.mubr.bf16.gmra.mrb[0].mxu0 %v342
  %v878 = vpop.f32.mrb[0].mxu0
  %v879 = vadd.f32 %v791, %v878
  %v880 = vpop.f32.mrb[0].mxu0
  %v881 = vpop.f32.mrb[0].mxu0
  %v882 = vadd.f32 %v794, %v881
  %v883 = vpop.f32.mrb[0].mxu0
  %884 = vmatprep.mubr.bf16.mxu0 %v350
  %885 = vmatmul.mubr.bf16.gmra.mrb[0].mxu0 %v349
  %v886 = vpop.f32.mrb[0].mxu0
  %v887 = vadd.f32 %v799, %v886
  %v888 = vpop.f32.mrb[0].mxu0
  %v889 = vpop.f32.mrb[0].mxu0
  %v890 = vadd.f32 %v802, %v889
  %v891 = vpop.f32.mrb[0].mxu0
  %892 = vmatprep.mubr.bf16.mxu0 %v357
  %893 = vmatmul.mubr.bf16.gmra.mrb[0].mxu0 %v356
  %v894 = vpop.f32.mrb[0].mxu0
  %v895 = vadd.f32 %v807, %v894
  %v896 = vpop.f32.mrb[0].mxu0
  %v897 = vpop.f32.mrb[0].mxu0
  %v898 = vadd.f32 %v810, %v897
  %v899 = vpop.f32.mrb[0].mxu0
  %900 = vmatprep.mubr.bf16.mxu0 %v364
  %901 = vmatmul.mubr.bf16.gmra.mrb[0].mxu0 %v363
  %v902 = vpop.f32.mrb[0].mxu0
  %v903 = vadd.f32 %v815, %v902
  %v904 = vpop.f32.mrb[0].mxu0
  %v905 = vpop.f32.mrb[0].mxu0
  %v906 = vpop.f32.mrb[0].mxu0
  %907 = vdwg.mxu0
  %908 = vmatprep.subr.bf16.mxu0 0
  %909 = vmatpush1.bf16.msra.mxu0 %v642
  %910 = vmatprep.subr.bf16.mxu0 0
  %911 = vmatpush1.bf16.msra.mxu0 %v643
  %912 = vmatprep.subr.bf16.mxu0 0
  %913 = vmatpush1.bf16.msra.mxu0 %v644
  %914 = vmatprep.subr.bf16.mxu0 0
  %915 = vmatpush1.bf16.msra.mxu0 %v645
  %916 = vmatprep.subr.bf16.mxu0 0
  %917 = vmatpush1.bf16.msra.mxu0 %v646
  %918 = vmatprep.subr.bf16.mxu0 0
  %919 = vmatpush1.bf16.msra.mxu0 %v647
  %920 = vmatprep.subr.bf16.mxu0 0
  %921 = vmatpush1.bf16.msra.mxu0 %v648
  %922 = vmatprep.subr.bf16.mxu0 0
  %923 = vmatpush1.bf16.msra.mxu0 %v649
  %924 = vmatprep.subr.bf16.mxu0 0
  %925 = vmatpush1.bf16.msra.mxu0 %v650
  %926 = vmatprep.subr.bf16.mxu0 0
  %927 = vmatpush1.bf16.msra.mxu0 %v651
  %928 = vmatprep.subr.bf16.mxu0 0
  %929 = vmatpush1.bf16.msra.mxu0 %v652
  %930 = vmatprep.subr.bf16.mxu0 0
  %931 = vmatpush1.bf16.msra.mxu0 %v653
  %932 = vmatprep.subr.bf16.mxu0 0
  %933 = vmatpush1.bf16.msra.mxu0 %v654
  %934 = vmatprep.subr.bf16.mxu0 0
  %935 = vmatpush1.bf16.msra.mxu0 %v655
  %936 = vmatprep.subr.bf16.mxu0 0
  %937 = vmatpush1.bf16.msra.mxu0 %v656
  %938 = vmatprep.subr.bf16.mxu0 0
  %939 = vmatpush1.bf16.msra.mxu0 %v657
  %940 = vmatprep.mubr.bf16.mxu0 %v324
  %941 = vmatmul.mubr.bf16.gmra.mrb[0].mxu0 %v323
  %v942 = vpop.f32.mrb[0].mxu0
  %v943 = vadd.f32 %v855, %v942
  %v944 = vpop.f32.mrb[0].mxu0
  %v945 = vpop.f32.mrb[0].mxu0
  %v946 = vadd.f32 %v858, %v945
  %v947 = vpop.f32.mrb[0].mxu0
  %948 = vmatprep.mubr.bf16.mxu0 %v331
  %949 = vmatmul.mubr.bf16.gmra.mrb[0].mxu0 %v330
  %v950 = vpop.f32.mrb[0].mxu0
  %v951 = vadd.f32 %v863, %v950
  %v952 = vpop.f32.mrb[0].mxu0
  %v953 = vpop.f32.mrb[0].mxu0
  %v954 = vadd.f32 %v866, %v953
  %v955 = vpop.f32.mrb[0].mxu0
  %956 = vmatprep.mubr.bf16.mxu0 %v338
  %957 = vmatmul.mubr.bf16.gmra.mrb[0].mxu0 %v337
  %v958 = vpop.f32.mrb[0].mxu0
  %v959 = vadd.f32 %v871, %v958
  %v960 = vpop.f32.mrb[0].mxu0
  %v961 = vpop.f32.mrb[0].mxu0
  %v962 = vadd.f32 %v874, %v961
  %v963 = vpop.f32.mrb[0].mxu0
  %964 = vmatprep.mubr.bf16.mxu0 %v345
  %965 = vmatmul.mubr.bf16.gmra.mrb[0].mxu0 %v344
  %v966 = vpop.f32.mrb[0].mxu0
  %v967 = vadd.f32 %v879, %v966
  %v968 = vpop.f32.mrb[0].mxu0
  %v969 = vpop.f32.mrb[0].mxu0
  %v970 = vadd.f32 %v882, %v969
  %v971 = vpop.f32.mrb[0].mxu0
  %972 = vmatprep.mubr.bf16.mxu0 %v352
  %973 = vmatmul.mubr.bf16.gmra.mrb[0].mxu0 %v351
  %v974 = vpop.f32.mrb[0].mxu0
  %v975 = vadd.f32 %v887, %v974
  %v976 = vpop.f32.mrb[0].mxu0
  %v977 = vpop.f32.mrb[0].mxu0
  %v978 = vadd.f32 %v890, %v977
  %v979 = vpop.f32.mrb[0].mxu0
  %980 = vmatprep.mubr.bf16.mxu0 %v359
  %981 = vmatmul.mubr.bf16.gmra.mrb[0].mxu0 %v358
  %v982 = vpop.f32.mrb[0].mxu0
  %v983 = vadd.f32 %v895, %v982
  %v984 = vpop.f32.mrb[0].mxu0
  %v985 = vpop.f32.mrb[0].mxu0
  %v986 = vadd.f32 %v898, %v985
  %v987 = vpop.f32.mrb[0].mxu0
  %988 = vmatprep.mubr.bf16.mxu0 %v366
  %989 = vmatmul.mubr.bf16.gmra.mrb[0].mxu0 %v365
  %v990 = vpop.f32.mrb[0].mxu0
  %v991 = vadd.f32 %v903, %v990
  %v992 = vpop.f32.mrb[0].mxu0
  %v993 = vpop.f32.mrb[0].mxu0
  %v994 = vpop.f32.mrb[0].mxu0
  %995 = vdwg.mxu0
  %996 = vmatprep.subr.bf16.mxu0 0
  %997 = vmatpush1.bf16.msra.mxu0 %v658
  %998 = vmatprep.subr.bf16.mxu0 0
  %999 = vmatpush1.bf16.msra.mxu0 %v659
  %1000 = vmatprep.subr.bf16.mxu0 0
  %1001 = vmatpush1.bf16.msra.mxu0 0
  %1002 = vmatprep.subr.bf16.mxu0 0
  %1003 = vmatpush1.bf16.msra.mxu0 0
  %1004 = vmatprep.subr.bf16.mxu0 0
  %1005 = vmatpush1.bf16.msra.mxu0 0
  %1006 = vmatprep.subr.bf16.mxu0 0
  %1007 = vmatpush1.bf16.msra.mxu0 0
  %1008 = vmatprep.subr.bf16.mxu0 0
  %1009 = vmatpush1.bf16.msra.mxu0 0
  %1010 = vmatprep.subr.bf16.mxu0 0
  %1011 = vmatpush1.bf16.msra.mxu0 0
  %1012 = vmatprep.subr.bf16.mxu0 0
  %1013 = vmatpush1.bf16.msra.mxu0 0
  %1014 = vmatprep.subr.bf16.mxu0 0
  %1015 = vmatpush1.bf16.msra.mxu0 0
  %1016 = vmatprep.subr.bf16.mxu0 0
  %1017 = vmatpush1.bf16.msra.mxu0 0
  %1018 = vmatprep.subr.bf16.mxu0 0
  %1019 = vmatpush1.bf16.msra.mxu0 0
  %1020 = vmatprep.subr.bf16.mxu0 0
  %1021 = vmatpush1.bf16.msra.mxu0 0
  %1022 = vmatprep.subr.bf16.mxu0 0
  %1023 = vmatpush1.bf16.msra.mxu0 0
  %1024 = vmatprep.subr.bf16.mxu0 0
  %1025 = vmatpush1.bf16.msra.mxu0 0
  %1026 = vmatprep.subr.bf16.mxu0 0
  %1027 = vmatpush1.bf16.msra.mxu0 0
  %1028 = vmatprep.mubr.bf16.mxu0 0
  %1029 = vmatmul.mubr.bf16.gmra.mrb[0].mxu0 %v712
  %v1030 = vpop.f32.mrb[0].mxu0
  %v1031 = vadd.f32 %v943, %v1030
  %v1032 = vpop.f32.mrb[0].mxu0
  %v1033 = vpop.f32.mrb[0].mxu0
  %v1034 = vadd.f32 %v946, %v1033
  %v1035 = vpop.f32.mrb[0].mxu0
  %1036 = vmatprep.mubr.bf16.mxu0 0
  %1037 = vmatmul.mubr.bf16.gmra.mrb[0].mxu0 %v715
  %v1038 = vpop.f32.mrb[0].mxu0
  %v1039 = vadd.f32 %v951, %v1038
  %v1040 = vpop.f32.mrb[0].mxu0
  %v1041 = vpop.f32.mrb[0].mxu0
  %v1042 = vadd.f32 %v954, %v1041
  %v1043 = vpop.f32.mrb[0].mxu0
  %1044 = vmatprep.mubr.bf16.mxu0 0
  %1045 = vmatmul.mubr.bf16.gmra.mrb[0].mxu0 %v718
  %v1046 = vpop.f32.mrb[0].mxu0
  %v1047 = vadd.f32 %v959, %v1046
  %v1048 = vpop.f32.mrb[0].mxu0
  %v1049 = vpop.f32.mrb[0].mxu0
  %v1050 = vadd.f32 %v962, %v1049
  %v1051 = vpop.f32.mrb[0].mxu0
  %1052 = vmatprep.mubr.bf16.mxu0 0
  %1053 = vmatmul.mubr.bf16.gmra.mrb[0].mxu0 %v721
  %v1054 = vpop.f32.mrb[0].mxu0
  %v1055 = vadd.f32 %v967, %v1054
  %v1056 = vpop.f32.mrb[0].mxu0
  %v1057 = vpop.f32.mrb[0].mxu0
  %v1058 = vadd.f32 %v970, %v1057
  %v1059 = vpop.f32.mrb[0].mxu0
  %1060 = vmatprep.mubr.bf16.mxu0 0
  %1061 = vmatmul.mubr.bf16.gmra.mrb[0].mxu0 %v724
  %v1062 = vpop.f32.mrb[0].mxu0
  %v1063 = vadd.f32 %v975, %v1062
  %v1064 = vpop.f32.mrb[0].mxu0
  %v1065 = vpop.f32.mrb[0].mxu0
  %v1066 = vadd.f32 %v978, %v1065
  %v1067 = vpop.f32.mrb[0].mxu0
  %1068 = vmatprep.mubr.bf16.mxu0 0
  %1069 = vmatmul.mubr.bf16.gmra.mrb[0].mxu0 %v727
  %v1070 = vpop.f32.mrb[0].mxu0
  %v1071 = vadd.f32 %v983, %v1070
  %v1072 = vpop.f32.mrb[0].mxu0
  %v1073 = vpop.f32.mrb[0].mxu0
  %v1074 = vadd.f32 %v986, %v1073
  %v1075 = vpop.f32.mrb[0].mxu0
  %1076 = vmatprep.mubr.bf16.mxu0 0
  %1077 = vmatmul.mubr.bf16.gmra.mrb[0].mxu0 %v730
  %v1078 = vpop.f32.mrb[0].mxu0
  %v1079 = vadd.f32 %v991, %v1078
  %v1080 = vpop.f32.mrb[0].mxu0
  %v1081 = vpop.f32.mrb[0].mxu0
  %v1082 = vpop.f32.mrb[0].mxu0
  %1083 = vdwg.mxu0
  %v1084 = vld [vmem:[%s1] sm:$0xff]
  %v1085 = vld [vmem:[%s1 + $0x8] sm:$0xff]
  %v1086 = vld [vmem:[%s1 + $0x10] sm:$0xff]
  %v1087 = vld [vmem:[%s1 + $0x18] sm:$0xf]
  %v1088 = vld [vmem:[%s1 + $0x1c] sm:$0xff]
  %v1089 = vld [vmem:[%s1 + $0x24] sm:$0xff]
  %v1090 = vld [vmem:[%s1 + $0x2c] sm:$0xff]
  %v1091 = vld [vmem:[%s1 + $0x34] sm:$0xf]
  %v1092 = vld [vmem:[%s1 + $0x38] sm:$0xff]
  %v1093 = vld [vmem:[%s1 + $0x40] sm:$0xff]
  %v1094 = vld [vmem:[%s1 + $0x48] sm:$0xff]
  %v1095 = vld [vmem:[%s1 + $0x50] sm:$0xf]
  %v1096 = vld [vmem:[%s1 + $0x54] sm:$0xff]
  %v1097 = vld [vmem:[%s1 + $0x5c] sm:$0xff]
  %v1098 = vld [vmem:[%s1 + $0x64] sm:$0xff]
  %v1099 = vld [vmem:[%s1 + $0x6c] sm:$0xf]
  %v1100 = vld [vmem:[%s1 + $0x70] sm:$0xff]
  %v1101 = vld [vmem:[%s1 + $0x78] sm:$0xff]
  %v1102 = vld [vmem:[%s1 + $0x80] sm:$0xff]
  %v1103 = vld [vmem:[%s1 + $0x88] sm:$0xf]
  %v1104 = vld [vmem:[%s1 + $0x8c] sm:$0xff]
  %v1105 = vld [vmem:[%s1 + $0x94] sm:$0xff]
  %v1106 = vld [vmem:[%s1 + $0x9c] sm:$0xff]
  %v1107 = vld [vmem:[%s1 + $0xa4] sm:$0xf]
  %v1108 = vld [vmem:[%s1 + $0xa8] sm:$0xff]
  %v1109 = vld [vmem:[%s1 + $0xb0] sm:$0xff]
  %v1110 = vld [vmem:[%s1 + $0xb8] sm:$0xff]
  %v1111 = vld [vmem:[%s1 + $0xc0] sm:$0xf]
  %v1112 = vld [vmem:[%s1 + $0xc4] sm:$0xff]
  %v1113 = vld [vmem:[%s1 + $0xcc] sm:$0xff]
  %v1114 = vld [vmem:[%s1 + $0xd4] sm:$0xff]
  %v1115 = vld [vmem:[%s1 + $0xdc] sm:$0xf]
  %v1116 = vld [vmem:[%s1 + $0xe0] sm:$0xff]
  %v1117 = vld [vmem:[%s1 + $0xe8] sm:$0xff]
  %v1118 = vld [vmem:[%s1 + $0xf0] sm:$0xff]
  %v1119 = vld [vmem:[%s1 + $0xf8] sm:$0xf]
  %v1120 = vld [vmem:[%s1 + $0xfc] sm:$0xff]
  %v1121 = vld [vmem:[%s1 + $0x104] sm:$0xff]
  %v1122 = vld [vmem:[%s1 + $0x10c] sm:$0xff]
  %v1123 = vld [vmem:[%s1 + $0x114] sm:$0xf]
  %v1124 = vld [vmem:[%s1 + $0x118] sm:$0xff]
  %v1125 = vld [vmem:[%s1 + $0x120] sm:$0xff]
  %v1126 = vld [vmem:[%s1 + $0x128] sm:$0xff]
  %v1127 = vld [vmem:[%s1 + $0x130] sm:$0xf]
  %v1128 = vld [vmem:[%s1 + $0x134] sm:$0xff]
  %v1129 = vld [vmem:[%s1 + $0x13c] sm:$0xff]
  %v1130 = vld [vmem:[%s1 + $0x144] sm:$0xff]
  %v1131 = vld [vmem:[%s1 + $0x14c] sm:$0xf]
  %v1132 = vld [vmem:[%s1 + $0x150] sm:$0xff]
  %v1133 = vld [vmem:[%s1 + $0x158] sm:$0xff]
  %v1134 = vld [vmem:[%s1 + $0x160] sm:$0xff]
  %v1135 = vld [vmem:[%s1 + $0x168] sm:$0xf]
  %v1188 = vunpack.c.l.b16 %v1084
  %v1189 = vunpack.c.h.b16 %v1084
  %v1190 = vunpack.c.l.b16 %v1085
  %v1191 = vunpack.c.h.b16 %v1085
  %v1192 = vunpack.c.l.b16 %v1086
  %v1193 = vunpack.c.h.b16 %v1086
  %v1194 = vunpack.c.l.b16 %v1087
  %v1195 = vunpack.c.l.b16 %v1088
  %v1196 = vunpack.c.h.b16 %v1088
  %v1197 = vunpack.c.l.b16 %v1089
  %v1198 = vunpack.c.h.b16 %v1089
  %v1199 = vunpack.c.l.b16 %v1090
  %v1200 = vunpack.c.h.b16 %v1090
  %v1201 = vunpack.c.l.b16 %v1091
  %v1202 = vunpack.c.l.b16 %v1092
  %v1203 = vunpack.c.h.b16 %v1092
  %v1204 = vunpack.c.l.b16 %v1093
  %v1205 = vunpack.c.h.b16 %v1093
  %v1206 = vunpack.c.l.b16 %v1094
  %v1207 = vunpack.c.h.b16 %v1094
  %v1208 = vunpack.c.l.b16 %v1095
  %v1209 = vunpack.c.l.b16 %v1096
  %v1210 = vunpack.c.h.b16 %v1096
  %v1211 = vunpack.c.l.b16 %v1097
  %v1212 = vunpack.c.h.b16 %v1097
  %v1213 = vunpack.c.l.b16 %v1098
  %v1214 = vunpack.c.h.b16 %v1098
  %v1215 = vunpack.c.l.b16 %v1099
  %v1216 = vunpack.c.l.b16 %v1100
  %v1217 = vunpack.c.h.b16 %v1100
  %v1218 = vunpack.c.l.b16 %v1101
  %v1219 = vunpack.c.h.b16 %v1101
  %v1220 = vunpack.c.l.b16 %v1102
  %v1221 = vunpack.c.h.b16 %v1102
  %v1222 = vunpack.c.l.b16 %v1103
  %v1223 = vunpack.c.l.b16 %v1104
  %v1224 = vunpack.c.h.b16 %v1104
  %v1225 = vunpack.c.l.b16 %v1105
  %v1226 = vunpack.c.h.b16 %v1105
  %v1227 = vunpack.c.l.b16 %v1106
  %v1228 = vunpack.c.h.b16 %v1106
  %v1229 = vunpack.c.l.b16 %v1107
  %v1230 = vunpack.c.l.b16 %v1108
  %v1231 = vunpack.c.h.b16 %v1108
  %v1232 = vunpack.c.l.b16 %v1109
  %v1233 = vunpack.c.h.b16 %v1109
  %v1234 = vunpack.c.l.b16 %v1110
  %v1235 = vunpack.c.h.b16 %v1110
  %v1236 = vunpack.c.l.b16 %v1111
  %v1237 = vunpack.c.l.b16 %v1112
  %v1238 = vunpack.c.h.b16 %v1112
  %v1239 = vunpack.c.l.b16 %v1113
  %v1240 = vunpack.c.h.b16 %v1113
  %v1241 = vunpack.c.l.b16 %v1114
  %v1242 = vunpack.c.h.b16 %v1114
  %v1243 = vunpack.c.l.b16 %v1115
  %v1244 = vunpack.c.l.b16 %v1116
  %v1245 = vunpack.c.h.b16 %v1116
  %v1246 = vunpack.c.l.b16 %v1117
  %v1247 = vunpack.c.h.b16 %v1117
  %v1248 = vunpack.c.l.b16 %v1118
  %v1249 = vunpack.c.h.b16 %v1118
  %v1250 = vunpack.c.l.b16 %v1119
  %v1251 = vunpack.c.l.b16 %v1120
  %v1252 = vunpack.c.h.b16 %v1120
  %v1253 = vunpack.c.l.b16 %v1121
  %v1254 = vunpack.c.h.b16 %v1121
  %v1255 = vunpack.c.l.b16 %v1122
  %v1256 = vunpack.c.h.b16 %v1122
  %v1257 = vunpack.c.l.b16 %v1123
  %v1258 = vunpack.c.l.b16 %v1124
  %v1259 = vunpack.c.h.b16 %v1124
  %v1260 = vunpack.c.l.b16 %v1125
  %v1261 = vunpack.c.h.b16 %v1125
  %v1262 = vunpack.c.l.b16 %v1126
  %v1263 = vunpack.c.h.b16 %v1126
  %v1264 = vunpack.c.l.b16 %v1127
  %v1265 = vunpack.c.l.b16 %v1128
  %v1266 = vunpack.c.h.b16 %v1128
  %v1267 = vunpack.c.l.b16 %v1129
  %v1268 = vunpack.c.h.b16 %v1129
  %v1269 = vunpack.c.l.b16 %v1130
  %v1270 = vunpack.c.h.b16 %v1130
  %v1271 = vunpack.c.l.b16 %v1131
  %v1272 = vunpack.c.l.b16 %v1132
  %v1273 = vunpack.c.h.b16 %v1132
  %v1274 = vunpack.c.l.b16 %v1133
  %v1275 = vunpack.c.h.b16 %v1133
  %v1276 = vunpack.c.l.b16 %v1134
  %v1277 = vunpack.c.h.b16 %v1134
  %v1278 = vunpack.c.l.b16 %v1135
  %v1279 = vpack.c.b16 %v1195, %v1188
  %v1280 = vpack.c.b16 %v1196, %v1189
  %v1281 = vpack.c.b16 %v1197, %v1190
  %v1282 = vpack.c.b16 %v1198, %v1191
  %v1283 = vpack.c.b16 %v1199, %v1192
  %v1284 = vpack.c.b16 %v1200, %v1193
  %v1285 = vpack.c.b16 %v1201, %v1194
  %v1286 = vpack.c.b16 %v1209, %v1202
  %v1287 = vpack.c.b16 %v1210, %v1203
  %v1288 = vpack.c.b16 %v1211, %v1204
  %v1289 = vpack.c.b16 %v1212, %v1205
  %v1290 = vpack.c.b16 %v1213, %v1206
  %v1291 = vpack.c.b16 %v1214, %v1207
  %v1292 = vpack.c.b16 %v1215, %v1208
  %v1293 = vpack.c.b16 %v1223, %v1216
  %v1294 = vpack.c.b16 %v1224, %v1217
  %v1295 = vpack.c.b16 %v1225, %v1218
  %v1296 = vpack.c.b16 %v1226, %v1219
  %v1297 = vpack.c.b16 %v1227, %v1220
  %v1298 = vpack.c.b16 %v1228, %v1221
  %v1299 = vpack.c.b16 %v1229, %v1222
  %v1300 = vpack.c.b16 %v1237, %v1230
  %v1301 = vpack.c.b16 %v1238, %v1231
  %v1302 = vpack.c.b16 %v1239, %v1232
  %v1303 = vpack.c.b16 %v1240, %v1233
  %v1304 = vpack.c.b16 %v1241, %v1234
  %v1305 = vpack.c.b16 %v1242, %v1235
  %v1306 = vpack.c.b16 %v1243, %v1236
  %v1307 = vpack.c.b16 %v1251, %v1244
  %v1308 = vpack.c.b16 %v1252, %v1245
  %v1309 = vpack.c.b16 %v1253, %v1246
  %v1310 = vpack.c.b16 %v1254, %v1247
  %v1311 = vpack.c.b16 %v1255, %v1248
  %v1312 = vpack.c.b16 %v1256, %v1249
  %v1313 = vpack.c.b16 %v1257, %v1250
  %v1314 = vpack.c.b16 %v1265, %v1258
  %v1315 = vpack.c.b16 %v1266, %v1259
  %v1316 = vpack.c.b16 %v1267, %v1260
  %v1317 = vpack.c.b16 %v1268, %v1261
  %v1318 = vpack.c.b16 %v1269, %v1262
  %v1319 = vpack.c.b16 %v1270, %v1263
  %v1320 = vpack.c.b16 %v1271, %v1264
  %v1321 = vpack.c.b16 %v1272, %v1272
  %v1322 = vpack.c.b16 %v1273, %v1273
  %v1323 = vpack.c.b16 %v1274, %v1274
  %v1324 = vpack.c.b16 %v1275, %v1275
  %v1325 = vpack.c.b16 %v1276, %v1276
  %v1326 = vpack.c.b16 %v1277, %v1277
  %v1327 = vpack.c.b16 %v1278, %v1278
  %v1371 = vsel %vm710, %v1285, 0
  %v1374 = vsel %vm710, %v1292, 0
  %v1377 = vsel %vm710, %v1299, 0
  %v1380 = vsel %vm710, %v1306, 0
  %v1383 = vsel %vm710, %v1313, 0
  %v1386 = vsel %vm710, %v1320, 0
  %v1389 = vsel %vm710, %v1327, 0
  %1391 = vmatprep.subr.bf16.mxu0 0
  %1392 = vmatpush1.bf16.msra.mxu0 %v610
  %1393 = vmatprep.subr.bf16.mxu0 0
  %1394 = vmatpush1.bf16.msra.mxu0 %v611
  %1395 = vmatprep.subr.bf16.mxu0 0
  %1396 = vmatpush1.bf16.msra.mxu0 %v612
  %1397 = vmatprep.subr.bf16.mxu0 0
  %1398 = vmatpush1.bf16.msra.mxu0 %v613
  %1399 = vmatprep.subr.bf16.mxu0 0
  %1400 = vmatpush1.bf16.msra.mxu0 %v614
  %1401 = vmatprep.subr.bf16.mxu0 0
  %1402 = vmatpush1.bf16.msra.mxu0 %v615
  %1403 = vmatprep.subr.bf16.mxu0 0
  %1404 = vmatpush1.bf16.msra.mxu0 %v616
  %1405 = vmatprep.subr.bf16.mxu0 0
  %1406 = vmatpush1.bf16.msra.mxu0 %v617
  %1407 = vmatprep.subr.bf16.mxu0 0
  %1408 = vmatpush1.bf16.msra.mxu0 %v618
  %1409 = vmatprep.subr.bf16.mxu0 0
  %1410 = vmatpush1.bf16.msra.mxu0 %v619
  %1411 = vmatprep.subr.bf16.mxu0 0
  %1412 = vmatpush1.bf16.msra.mxu0 %v620
  %1413 = vmatprep.subr.bf16.mxu0 0
  %1414 = vmatpush1.bf16.msra.mxu0 %v621
  %1415 = vmatprep.subr.bf16.mxu0 0
  %1416 = vmatpush1.bf16.msra.mxu0 %v622
  %1417 = vmatprep.subr.bf16.mxu0 0
  %1418 = vmatpush1.bf16.msra.mxu0 %v623
  %1419 = vmatprep.subr.bf16.mxu0 0
  %1420 = vmatpush1.bf16.msra.mxu0 %v624
  %1421 = vmatprep.subr.bf16.mxu0 0
  %1422 = vmatpush1.bf16.msra.mxu0 %v625
  %1423 = vmatprep.mubr.bf16.mxu0 %v1280
  %1424 = vmatmul.mubr.bf16.gmra.mrb[0].mxu0 %v1279
  %v1425 = vpop.f32.mrb[0].mxu0
  %v1426 = vadd.f32 0.0, %v1425
  %v1427 = vpop.f32.mrb[0].mxu0
  %v1428 = vpop.f32.mrb[0].mxu0
  %v1429 = vadd.f32 0.0, %v1428
  %v1430 = vpop.f32.mrb[0].mxu0
  %1431 = vmatprep.mubr.bf16.mxu0 %v1287
  %1432 = vmatmul.mubr.bf16.gmra.mrb[0].mxu0 %v1286
  %v1433 = vpop.f32.mrb[0].mxu0
  %v1434 = vadd.f32 0.0, %v1433
  %v1435 = vpop.f32.mrb[0].mxu0
  %v1436 = vpop.f32.mrb[0].mxu0
  %v1437 = vadd.f32 0.0, %v1436
  %v1438 = vpop.f32.mrb[0].mxu0
  %1439 = vmatprep.mubr.bf16.mxu0 %v1294
  %1440 = vmatmul.mubr.bf16.gmra.mrb[0].mxu0 %v1293
  %v1441 = vpop.f32.mrb[0].mxu0
  %v1442 = vadd.f32 0.0, %v1441
  %v1443 = vpop.f32.mrb[0].mxu0
  %v1444 = vpop.f32.mrb[0].mxu0
  %v1445 = vadd.f32 0.0, %v1444
  %v1446 = vpop.f32.mrb[0].mxu0
  %1447 = vmatprep.mubr.bf16.mxu0 %v1301
  %1448 = vmatmul.mubr.bf16.gmra.mrb[0].mxu0 %v1300
  %v1449 = vpop.f32.mrb[0].mxu0
  %v1450 = vadd.f32 0.0, %v1449
  %v1451 = vpop.f32.mrb[0].mxu0
  %v1452 = vpop.f32.mrb[0].mxu0
  %v1453 = vadd.f32 0.0, %v1452
  %v1454 = vpop.f32.mrb[0].mxu0
  %1455 = vmatprep.mubr.bf16.mxu0 %v1308
  %1456 = vmatmul.mubr.bf16.gmra.mrb[0].mxu0 %v1307
  %v1457 = vpop.f32.mrb[0].mxu0
  %v1458 = vadd.f32 0.0, %v1457
  %v1459 = vpop.f32.mrb[0].mxu0
  %v1460 = vpop.f32.mrb[0].mxu0
  %v1461 = vadd.f32 0.0, %v1460
  %v1462 = vpop.f32.mrb[0].mxu0
  %1463 = vmatprep.mubr.bf16.mxu0 %v1315
  %1464 = vmatmul.mubr.bf16.gmra.mrb[0].mxu0 %v1314
  %v1465 = vpop.f32.mrb[0].mxu0
  %v1466 = vadd.f32 0.0, %v1465
  %v1467 = vpop.f32.mrb[0].mxu0
  %v1468 = vpop.f32.mrb[0].mxu0
  %v1469 = vadd.f32 0.0, %v1468
  %v1470 = vpop.f32.mrb[0].mxu0
  %1471 = vmatprep.mubr.bf16.mxu0 %v1322
  %1472 = vmatmul.mubr.bf16.gmra.mrb[0].mxu0 %v1321
  %v1473 = vpop.f32.mrb[0].mxu0
  %v1474 = vadd.f32 0.0, %v1473
  %v1475 = vpop.f32.mrb[0].mxu0
  %v1476 = vpop.f32.mrb[0].mxu0
  %v1477 = vpop.f32.mrb[0].mxu0
  %1478 = vdwg.mxu0
  %1479 = vmatprep.subr.bf16.mxu0 0
  %1480 = vmatpush1.bf16.msra.mxu0 %v626
  %1481 = vmatprep.subr.bf16.mxu0 0
  %1482 = vmatpush1.bf16.msra.mxu0 %v627
  %1483 = vmatprep.subr.bf16.mxu0 0
  %1484 = vmatpush1.bf16.msra.mxu0 %v628
  %1485 = vmatprep.subr.bf16.mxu0 0
  %1486 = vmatpush1.bf16.msra.mxu0 %v629
  %1487 = vmatprep.subr.bf16.mxu0 0
  %1488 = vmatpush1.bf16.msra.mxu0 %v630
  %1489 = vmatprep.subr.bf16.mxu0 0
  %1490 = vmatpush1.bf16.msra.mxu0 %v631
  %1491 = vmatprep.subr.bf16.mxu0 0
  %1492 = vmatpush1.bf16.msra.mxu0 %v632
  %1493 = vmatprep.subr.bf16.mxu0 0
  %1494 = vmatpush1.bf16.msra.mxu0 %v633
  %1495 = vmatprep.subr.bf16.mxu0 0
  %1496 = vmatpush1.bf16.msra.mxu0 %v634
  %1497 = vmatprep.subr.bf16.mxu0 0
  %1498 = vmatpush1.bf16.msra.mxu0 %v635
  %1499 = vmatprep.subr.bf16.mxu0 0
  %1500 = vmatpush1.bf16.msra.mxu0 %v636
  %1501 = vmatprep.subr.bf16.mxu0 0
  %1502 = vmatpush1.bf16.msra.mxu0 %v637
  %1503 = vmatprep.subr.bf16.mxu0 0
  %1504 = vmatpush1.bf16.msra.mxu0 %v638
  %1505 = vmatprep.subr.bf16.mxu0 0
  %1506 = vmatpush1.bf16.msra.mxu0 %v639
  %1507 = vmatprep.subr.bf16.mxu0 0
  %1508 = vmatpush1.bf16.msra.mxu0 %v640
  %1509 = vmatprep.subr.bf16.mxu0 0
  %1510 = vmatpush1.bf16.msra.mxu0 %v641
  %1511 = vmatprep.mubr.bf16.mxu0 %v1282
  %1512 = vmatmul.mubr.bf16.gmra.mrb[0].mxu0 %v1281
  %v1513 = vpop.f32.mrb[0].mxu0
  %v1514 = vadd.f32 %v1426, %v1513
  %v1515 = vpop.f32.mrb[0].mxu0
  %v1516 = vpop.f32.mrb[0].mxu0
  %v1517 = vadd.f32 %v1429, %v1516
  %v1518 = vpop.f32.mrb[0].mxu0
  %1519 = vmatprep.mubr.bf16.mxu0 %v1289
  %1520 = vmatmul.mubr.bf16.gmra.mrb[0].mxu0 %v1288
  %v1521 = vpop.f32.mrb[0].mxu0
  %v1522 = vadd.f32 %v1434, %v1521
  %v1523 = vpop.f32.mrb[0].mxu0
  %v1524 = vpop.f32.mrb[0].mxu0
  %v1525 = vadd.f32 %v1437, %v1524
  %v1526 = vpop.f32.mrb[0].mxu0
  %1527 = vmatprep.mubr.bf16.mxu0 %v1296
  %1528 = vmatmul.mubr.bf16.gmra.mrb[0].mxu0 %v1295
  %v1529 = vpop.f32.mrb[0].mxu0
  %v1530 = vadd.f32 %v1442, %v1529
  %v1531 = vpop.f32.mrb[0].mxu0
  %v1532 = vpop.f32.mrb[0].mxu0
  %v1533 = vadd.f32 %v1445, %v1532
  %v1534 = vpop.f32.mrb[0].mxu0
  %1535 = vmatprep.mubr.bf16.mxu0 %v1303
  %1536 = vmatmul.mubr.bf16.gmra.mrb[0].mxu0 %v1302
  %v1537 = vpop.f32.mrb[0].mxu0
  %v1538 = vadd.f32 %v1450, %v1537
  %v1539 = vpop.f32.mrb[0].mxu0
  %v1540 = vpop.f32.mrb[0].mxu0
  %v1541 = vadd.f32 %v1453, %v1540
  %v1542 = vpop.f32.mrb[0].mxu0
  %1543 = vmatprep.mubr.bf16.mxu0 %v1310
  %1544 = vmatmul.mubr.bf16.gmra.mrb[0].mxu0 %v1309
  %v1545 = vpop.f32.mrb[0].mxu0
  %v1546 = vadd.f32 %v1458, %v1545
  %v1547 = vpop.f32.mrb[0].mxu0
  %v1548 = vpop.f32.mrb[0].mxu0
  %v1549 = vadd.f32 %v1461, %v1548
  %v1550 = vpop.f32.mrb[0].mxu0
  %1551 = vmatprep.mubr.bf16.mxu0 %v1317
  %1552 = vmatmul.mubr.bf16.gmra.mrb[0].mxu0 %v1316
  %v1553 = vpop.f32.mrb[0].mxu0
  %v1554 = vadd.f32 %v1466, %v1553
  %v1555 = vpop.f32.mrb[0].mxu0
  %v1556 = vpop.f32.mrb[0].mxu0
  %v1557 = vadd.f32 %v1469, %v1556
  %v1558 = vpop.f32.mrb[0].mxu0
  %1559 = vmatprep.mubr.bf16.mxu0 %v1324
  %1560 = vmatmul.mubr.bf16.gmra.mrb[0].mxu0 %v1323
  %v1561 = vpop.f32.mrb[0].mxu0
  %v1562 = vadd.f32 %v1474, %v1561
  %v1563 = vpop.f32.mrb[0].mxu0
  %v1564 = vpop.f32.mrb[0].mxu0
  %v1565 = vpop.f32.mrb[0].mxu0
  %1566 = vdwg.mxu0
  %1567 = vmatprep.subr.bf16.mxu0 0
  %1568 = vmatpush1.bf16.msra.mxu0 %v642
  %1569 = vmatprep.subr.bf16.mxu0 0
  %1570 = vmatpush1.bf16.msra.mxu0 %v643
  %1571 = vmatprep.subr.bf16.mxu0 0
  %1572 = vmatpush1.bf16.msra.mxu0 %v644
  %1573 = vmatprep.subr.bf16.mxu0 0
  %1574 = vmatpush1.bf16.msra.mxu0 %v645
  %1575 = vmatprep.subr.bf16.mxu0 0
  %1576 = vmatpush1.bf16.msra.mxu0 %v646
  %1577 = vmatprep.subr.bf16.mxu0 0
  %1578 = vmatpush1.bf16.msra.mxu0 %v647
  %1579 = vmatprep.subr.bf16.mxu0 0
  %1580 = vmatpush1.bf16.msra.mxu0 %v648
  %1581 = vmatprep.subr.bf16.mxu0 0
  %1582 = vmatpush1.bf16.msra.mxu0 %v649
  %1583 = vmatprep.subr.bf16.mxu0 0
  %1584 = vmatpush1.bf16.msra.mxu0 %v650
  %1585 = vmatprep.subr.bf16.mxu0 0
  %1586 = vmatpush1.bf16.msra.mxu0 %v651
  %1587 = vmatprep.subr.bf16.mxu0 0
  %1588 = vmatpush1.bf16.msra.mxu0 %v652
  %1589 = vmatprep.subr.bf16.mxu0 0
  %1590 = vmatpush1.bf16.msra.mxu0 %v653
  %1591 = vmatprep.subr.bf16.mxu0 0
  %1592 = vmatpush1.bf16.msra.mxu0 %v654
  %1593 = vmatprep.subr.bf16.mxu0 0
  %1594 = vmatpush1.bf16.msra.mxu0 %v655
  %1595 = vmatprep.subr.bf16.mxu0 0
  %1596 = vmatpush1.bf16.msra.mxu0 %v656
  %1597 = vmatprep.subr.bf16.mxu0 0
  %1598 = vmatpush1.bf16.msra.mxu0 %v657
  %1599 = vmatprep.mubr.bf16.mxu0 %v1284
  %1600 = vmatmul.mubr.bf16.gmra.mrb[0].mxu0 %v1283
  %v1601 = vpop.f32.mrb[0].mxu0
  %v1602 = vadd.f32 %v1514, %v1601
  %v1603 = vpop.f32.mrb[0].mxu0
  %v1604 = vpop.f32.mrb[0].mxu0
  %v1605 = vadd.f32 %v1517, %v1604
  %v1606 = vpop.f32.mrb[0].mxu0
  %1607 = vmatprep.mubr.bf16.mxu0 %v1291
  %1608 = vmatmul.mubr.bf16.gmra.mrb[0].mxu0 %v1290
  %v1609 = vpop.f32.mrb[0].mxu0
  %v1610 = vadd.f32 %v1522, %v1609
  %v1611 = vpop.f32.mrb[0].mxu0
  %v1612 = vpop.f32.mrb[0].mxu0
  %v1613 = vadd.f32 %v1525, %v1612
  %v1614 = vpop.f32.mrb[0].mxu0
  %1615 = vmatprep.mubr.bf16.mxu0 %v1298
  %1616 = vmatmul.mubr.bf16.gmra.mrb[0].mxu0 %v1297
  %v1617 = vpop.f32.mrb[0].mxu0
  %v1618 = vadd.f32 %v1530, %v1617
  %v1619 = vpop.f32.mrb[0].mxu0
  %v1620 = vpop.f32.mrb[0].mxu0
  %v1621 = vadd.f32 %v1533, %v1620
  %v1622 = vpop.f32.mrb[0].mxu0
  %1623 = vmatprep.mubr.bf16.mxu0 %v1305
  %1624 = vmatmul.mubr.bf16.gmra.mrb[0].mxu0 %v1304
  %v1625 = vpop.f32.mrb[0].mxu0
  %v1626 = vadd.f32 %v1538, %v1625
  %v1627 = vpop.f32.mrb[0].mxu0
  %v1628 = vpop.f32.mrb[0].mxu0
  %v1629 = vadd.f32 %v1541, %v1628
  %v1630 = vpop.f32.mrb[0].mxu0
  %1631 = vmatprep.mubr.bf16.mxu0 %v1312
  %1632 = vmatmul.mubr.bf16.gmra.mrb[0].mxu0 %v1311
  %v1633 = vpop.f32.mrb[0].mxu0
  %v1634 = vadd.f32 %v1546, %v1633
  %v1635 = vpop.f32.mrb[0].mxu0
  %v1636 = vpop.f32.mrb[0].mxu0
  %v1637 = vadd.f32 %v1549, %v1636
  %v1638 = vpop.f32.mrb[0].mxu0
  %1639 = vmatprep.mubr.bf16.mxu0 %v1319
  %1640 = vmatmul.mubr.bf16.gmra.mrb[0].mxu0 %v1318
  %v1641 = vpop.f32.mrb[0].mxu0
  %v1642 = vadd.f32 %v1554, %v1641
  %v1643 = vpop.f32.mrb[0].mxu0
  %v1644 = vpop.f32.mrb[0].mxu0
  %v1645 = vadd.f32 %v1557, %v1644
  %v1646 = vpop.f32.mrb[0].mxu0
  %1647 = vmatprep.mubr.bf16.mxu0 %v1326
  %1648 = vmatmul.mubr.bf16.gmra.mrb[0].mxu0 %v1325
  %v1649 = vpop.f32.mrb[0].mxu0
  %v1650 = vadd.f32 %v1562, %v1649
  %v1651 = vpop.f32.mrb[0].mxu0
  %v1652 = vpop.f32.mrb[0].mxu0
  %v1653 = vpop.f32.mrb[0].mxu0
  %1654 = vdwg.mxu0
  %1655 = vmatprep.subr.bf16.mxu0 0
  %1656 = vmatpush1.bf16.msra.mxu0 %v658
  %1657 = vmatprep.subr.bf16.mxu0 0
  %1658 = vmatpush1.bf16.msra.mxu0 %v659
  %1659 = vmatprep.subr.bf16.mxu0 0
  %1660 = vmatpush1.bf16.msra.mxu0 0
  %1661 = vmatprep.subr.bf16.mxu0 0
  %1662 = vmatpush1.bf16.msra.mxu0 0
  %1663 = vmatprep.subr.bf16.mxu0 0
  %1664 = vmatpush1.bf16.msra.mxu0 0
  %1665 = vmatprep.subr.bf16.mxu0 0
  %1666 = vmatpush1.bf16.msra.mxu0 0
  %1667 = vmatprep.subr.bf16.mxu0 0
  %1668 = vmatpush1.bf16.msra.mxu0 0
  %1669 = vmatprep.subr.bf16.mxu0 0
  %1670 = vmatpush1.bf16.msra.mxu0 0
  %1671 = vmatprep.subr.bf16.mxu0 0
  %1672 = vmatpush1.bf16.msra.mxu0 0
  %1673 = vmatprep.subr.bf16.mxu0 0
  %1674 = vmatpush1.bf16.msra.mxu0 0
  %1675 = vmatprep.subr.bf16.mxu0 0
  %1676 = vmatpush1.bf16.msra.mxu0 0
  %1677 = vmatprep.subr.bf16.mxu0 0
  %1678 = vmatpush1.bf16.msra.mxu0 0
  %1679 = vmatprep.subr.bf16.mxu0 0
  %1680 = vmatpush1.bf16.msra.mxu0 0
  %1681 = vmatprep.subr.bf16.mxu0 0
  %1682 = vmatpush1.bf16.msra.mxu0 0
  %1683 = vmatprep.subr.bf16.mxu0 0
  %1684 = vmatpush1.bf16.msra.mxu0 0
  %1685 = vmatprep.subr.bf16.mxu0 0
  %1686 = vmatpush1.bf16.msra.mxu0 0
  %1687 = vmatprep.mubr.bf16.mxu0 0
  %1688 = vmatmul.mubr.bf16.gmra.mrb[0].mxu0 %v1371
  %v1689 = vpop.f32.mrb[0].mxu0
  %v1690 = vadd.f32 %v1602, %v1689
  %v1691 = vpop.f32.mrb[0].mxu0
  %v1692 = vpop.f32.mrb[0].mxu0
  %v1693 = vadd.f32 %v1605, %v1692
  %v1694 = vpop.f32.mrb[0].mxu0
  %1695 = vmatprep.mubr.bf16.mxu0 0
  %1696 = vmatmul.mubr.bf16.gmra.mrb[0].mxu0 %v1374
  %v1697 = vpop.f32.mrb[0].mxu0
  %v1698 = vadd.f32 %v1610, %v1697
  %v1699 = vpop.f32.mrb[0].mxu0
  %v1700 = vpop.f32.mrb[0].mxu0
  %v1701 = vadd.f32 %v1613, %v1700
  %v1702 = vpop.f32.mrb[0].mxu0
  %1703 = vmatprep.mubr.bf16.mxu0 0
  %1704 = vmatmul.mubr.bf16.gmra.mrb[0].mxu0 %v1377
  %v1705 = vpop.f32.mrb[0].mxu0
  %v1706 = vadd.f32 %v1618, %v1705
  %v1707 = vpop.f32.mrb[0].mxu0
  %v1708 = vpop.f32.mrb[0].mxu0
  %v1709 = vadd.f32 %v1621, %v1708
  %v1710 = vpop.f32.mrb[0].mxu0
  %1711 = vmatprep.mubr.bf16.mxu0 0
  %1712 = vmatmul.mubr.bf16.gmra.mrb[0].mxu0 %v1380
  %v1713 = vpop.f32.mrb[0].mxu0
  %v1714 = vadd.f32 %v1626, %v1713
  %v1715 = vpop.f32.mrb[0].mxu0
  %v1716 = vpop.f32.mrb[0].mxu0
  %v1717 = vadd.f32 %v1629, %v1716
  %v1718 = vpop.f32.mrb[0].mxu0
  %1719 = vmatprep.mubr.bf16.mxu0 0
  %1720 = vmatmul.mubr.bf16.gmra.mrb[0].mxu0 %v1383
  %v1721 = vpop.f32.mrb[0].mxu0
  %v1722 = vadd.f32 %v1634, %v1721
  %v1723 = vpop.f32.mrb[0].mxu0
  %v1724 = vpop.f32.mrb[0].mxu0
  %v1725 = vadd.f32 %v1637, %v1724
  %v1726 = vpop.f32.mrb[0].mxu0
  %1727 = vmatprep.mubr.bf16.mxu0 0
  %1728 = vmatmul.mubr.bf16.gmra.mrb[0].mxu0 %v1386
  %v1729 = vpop.f32.mrb[0].mxu0
  %v1730 = vadd.f32 %v1642, %v1729
  %v1731 = vpop.f32.mrb[0].mxu0
  %v1732 = vpop.f32.mrb[0].mxu0
  %v1733 = vadd.f32 %v1645, %v1732
  %v1734 = vpop.f32.mrb[0].mxu0
  %1735 = vmatprep.mubr.bf16.mxu0 0
  %1736 = vmatmul.mubr.bf16.gmra.mrb[0].mxu0 %v1389
  %v1737 = vpop.f32.mrb[0].mxu0
  %v1738 = vadd.f32 %v1650, %v1737
  %v1739 = vpop.f32.mrb[0].mxu0
  %v1740 = vpop.f32.mrb[0].mxu0
  %v1741 = vpop.f32.mrb[0].mxu0
  %1742 = vdwg.mxu0
  %v1743 = vmax.f32 %v1031, %v1690
  %v1744 = vmax.f32 %v1034, %v1693
  %v1745 = vmax.f32 %v1039, %v1698
  %v1746 = vmax.f32 %v1042, %v1701
  %v1747 = vmax.f32 %v1047, %v1706
  %v1748 = vmax.f32 %v1050, %v1709
  %v1749 = vmax.f32 %v1055, %v1714
  %v1750 = vmax.f32 %v1058, %v1717
  %v1751 = vmax.f32 %v1063, %v1722
  %v1752 = vmax.f32 %v1066, %v1725
  %v1753 = vmax.f32 %v1071, %v1730
  %v1754 = vmax.f32 %v1074, %v1733
  %v1755 = vmax.f32 %v1079, %v1738
  %v1756 = vld [vmem:[%s2] sm:$0xff]
  %v1757 = vld [vmem:[%s2 + $0x8] sm:$0xff]
  %v1758 = vld [vmem:[%s2 + $0x10] sm:$0xff]
  %v1759 = vld [vmem:[%s2 + $0x18] sm:$0xf]
  %v1760 = vld [vmem:[%s2 + $0x1c] sm:$0xff]
  %v1761 = vld [vmem:[%s2 + $0x24] sm:$0xff]
  %v1762 = vld [vmem:[%s2 + $0x2c] sm:$0xff]
  %v1763 = vld [vmem:[%s2 + $0x34] sm:$0xf]
  %v1764 = vld [vmem:[%s2 + $0x38] sm:$0xff]
  %v1765 = vld [vmem:[%s2 + $0x40] sm:$0xff]
  %v1766 = vld [vmem:[%s2 + $0x48] sm:$0xff]
  %v1767 = vld [vmem:[%s2 + $0x50] sm:$0xf]
  %v1768 = vld [vmem:[%s2 + $0x54] sm:$0xff]
  %v1769 = vld [vmem:[%s2 + $0x5c] sm:$0xff]
  %v1770 = vld [vmem:[%s2 + $0x64] sm:$0xff]
  %v1771 = vld [vmem:[%s2 + $0x6c] sm:$0xf]
  %v1772 = vld [vmem:[%s2 + $0x70] sm:$0xff]
  %v1773 = vld [vmem:[%s2 + $0x78] sm:$0xff]
  %v1774 = vld [vmem:[%s2 + $0x80] sm:$0xff]
  %v1775 = vld [vmem:[%s2 + $0x88] sm:$0xf]
  %v1776 = vld [vmem:[%s2 + $0x8c] sm:$0xff]
  %v1777 = vld [vmem:[%s2 + $0x94] sm:$0xff]
  %v1778 = vld [vmem:[%s2 + $0x9c] sm:$0xff]
  %v1779 = vld [vmem:[%s2 + $0xa4] sm:$0xf]
  %v1780 = vld [vmem:[%s2 + $0xa8] sm:$0xff]
  %v1781 = vld [vmem:[%s2 + $0xb0] sm:$0xff]
  %v1782 = vld [vmem:[%s2 + $0xb8] sm:$0xff]
  %v1783 = vld [vmem:[%s2 + $0xc0] sm:$0xf]
  %v1784 = vld [vmem:[%s2 + $0xc4] sm:$0xff]
  %v1785 = vld [vmem:[%s2 + $0xcc] sm:$0xff]
  %v1786 = vld [vmem:[%s2 + $0xd4] sm:$0xff]
  %v1787 = vld [vmem:[%s2 + $0xdc] sm:$0xf]
  %v1788 = vld [vmem:[%s2 + $0xe0] sm:$0xff]
  %v1789 = vld [vmem:[%s2 + $0xe8] sm:$0xff]
  %v1790 = vld [vmem:[%s2 + $0xf0] sm:$0xff]
  %v1791 = vld [vmem:[%s2 + $0xf8] sm:$0xf]
  %v1792 = vld [vmem:[%s2 + $0xfc] sm:$0xff]
  %v1793 = vld [vmem:[%s2 + $0x104] sm:$0xff]
  %v1794 = vld [vmem:[%s2 + $0x10c] sm:$0xff]
  %v1795 = vld [vmem:[%s2 + $0x114] sm:$0xf]
  %v1796 = vld [vmem:[%s2 + $0x118] sm:$0xff]
  %v1797 = vld [vmem:[%s2 + $0x120] sm:$0xff]
  %v1798 = vld [vmem:[%s2 + $0x128] sm:$0xff]
  %v1799 = vld [vmem:[%s2 + $0x130] sm:$0xf]
  %v1800 = vld [vmem:[%s2 + $0x134] sm:$0xff]
  %v1801 = vld [vmem:[%s2 + $0x13c] sm:$0xff]
  %v1802 = vld [vmem:[%s2 + $0x144] sm:$0xff]
  %v1803 = vld [vmem:[%s2 + $0x14c] sm:$0xf]
  %v1804 = vld [vmem:[%s2 + $0x150] sm:$0xff]
  %v1805 = vld [vmem:[%s2 + $0x158] sm:$0xff]
  %v1806 = vld [vmem:[%s2 + $0x160] sm:$0xff]
  %v1807 = vld [vmem:[%s2 + $0x168] sm:$0xf]
  %v1860 = vunpack.c.l.b16 %v1756
  %v1861 = vunpack.c.h.b16 %v1756
  %v1862 = vunpack.c.l.b16 %v1757
  %v1863 = vunpack.c.h.b16 %v1757
  %v1864 = vunpack.c.l.b16 %v1758
  %v1865 = vunpack.c.h.b16 %v1758
  %v1866 = vunpack.c.l.b16 %v1759
  %v1867 = vunpack.c.l.b16 %v1760
  %v1868 = vunpack.c.h.b16 %v1760
  %v1869 = vunpack.c.l.b16 %v1761
  %v1870 = vunpack.c.h.b16 %v1761
  %v1871 = vunpack.c.l.b16 %v1762
  %v1872 = vunpack.c.h.b16 %v1762
  %v1873 = vunpack.c.l.b16 %v1763
  %v1874 = vunpack.c.l.b16 %v1764
  %v1875 = vunpack.c.h.b16 %v1764
  %v1876 = vunpack.c.l.b16 %v1765
  %v1877 = vunpack.c.h.b16 %v1765
  %v1878 = vunpack.c.l.b16 %v1766
  %v1879 = vunpack.c.h.b16 %v1766
  %v1880 = vunpack.c.l.b16 %v1767
  %v1881 = vunpack.c.l.b16 %v1768
  %v1882 = vunpack.c.h.b16 %v1768
  %v1883 = vunpack.c.l.b16 %v1769
  %v1884 = vunpack.c.h.b16 %v1769
  %v1885 = vunpack.c.l.b16 %v1770
  %v1886 = vunpack.c.h.b16 %v1770
  %v1887 = vunpack.c.l.b16 %v1771
  %v1888 = vunpack.c.l.b16 %v1772
  %v1889 = vunpack.c.h.b16 %v1772
  %v1890 = vunpack.c.l.b16 %v1773
  %v1891 = vunpack.c.h.b16 %v1773
  %v1892 = vunpack.c.l.b16 %v1774
  %v1893 = vunpack.c.h.b16 %v1774
  %v1894 = vunpack.c.l.b16 %v1775
  %v1895 = vunpack.c.l.b16 %v1776
  %v1896 = vunpack.c.h.b16 %v1776
  %v1897 = vunpack.c.l.b16 %v1777
  %v1898 = vunpack.c.h.b16 %v1777
  %v1899 = vunpack.c.l.b16 %v1778
  %v1900 = vunpack.c.h.b16 %v1778
  %v1901 = vunpack.c.l.b16 %v1779
  %v1902 = vunpack.c.l.b16 %v1780
  %v1903 = vunpack.c.h.b16 %v1780
  %v1904 = vunpack.c.l.b16 %v1781
  %v1905 = vunpack.c.h.b16 %v1781
  %v1906 = vunpack.c.l.b16 %v1782
  %v1907 = vunpack.c.h.b16 %v1782
  %v1908 = vunpack.c.l.b16 %v1783
  %v1909 = vunpack.c.l.b16 %v1784
  %v1910 = vunpack.c.h.b16 %v1784
  %v1911 = vunpack.c.l.b16 %v1785
  %v1912 = vunpack.c.h.b16 %v1785
  %v1913 = vunpack.c.l.b16 %v1786
  %v1914 = vunpack.c.h.b16 %v1786
  %v1915 = vunpack.c.l.b16 %v1787
  %v1916 = vunpack.c.l.b16 %v1788
  %v1917 = vunpack.c.h.b16 %v1788
  %v1918 = vunpack.c.l.b16 %v1789
  %v1919 = vunpack.c.h.b16 %v1789
  %v1920 = vunpack.c.l.b16 %v1790
  %v1921 = vunpack.c.h.b16 %v1790
  %v1922 = vunpack.c.l.b16 %v1791
  %v1923 = vunpack.c.l.b16 %v1792
  %v1924 = vunpack.c.h.b16 %v1792
  %v1925 = vunpack.c.l.b16 %v1793
  %v1926 = vunpack.c.h.b16 %v1793
  %v1927 = vunpack.c.l.b16 %v1794
  %v1928 = vunpack.c.h.b16 %v1794
  %v1929 = vunpack.c.l.b16 %v1795
  %v1930 = vunpack.c.l.b16 %v1796
  %v1931 = vunpack.c.h.b16 %v1796
  %v1932 = vunpack.c.l.b16 %v1797
  %v1933 = vunpack.c.h.b16 %v1797
  %v1934 = vunpack.c.l.b16 %v1798
  %v1935 = vunpack.c.h.b16 %v1798
  %v1936 = vunpack.c.l.b16 %v1799
  %v1937 = vunpack.c.l.b16 %v1800
  %v1938 = vunpack.c.h.b16 %v1800
  %v1939 = vunpack.c.l.b16 %v1801
  %v1940 = vunpack.c.h.b16 %v1801
  %v1941 = vunpack.c.l.b16 %v1802
  %v1942 = vunpack.c.h.b16 %v1802
  %v1943 = vunpack.c.l.b16 %v1803
  %v1944 = vunpack.c.l.b16 %v1804
  %v1945 = vunpack.c.h.b16 %v1804
  %v1946 = vunpack.c.l.b16 %v1805
  %v1947 = vunpack.c.h.b16 %v1805
  %v1948 = vunpack.c.l.b16 %v1806
  %v1949 = vunpack.c.h.b16 %v1806
  %v1950 = vunpack.c.l.b16 %v1807
  %v1951 = vpack.c.b16 %v1867, %v1860
  %v1952 = vpack.c.b16 %v1868, %v1861
  %v1953 = vpack.c.b16 %v1869, %v1862
  %v1954 = vpack.c.b16 %v1870, %v1863
  %v1955 = vpack.c.b16 %v1871, %v1864
  %v1956 = vpack.c.b16 %v1872, %v1865
  %v1957 = vpack.c.b16 %v1873, %v1866
  %v1958 = vpack.c.b16 %v1881, %v1874
  %v1959 = vpack.c.b16 %v1882, %v1875
  %v1960 = vpack.c.b16 %v1883, %v1876
  %v1961 = vpack.c.b16 %v1884, %v1877
  %v1962 = vpack.c.b16 %v1885, %v1878
  %v1963 = vpack.c.b16 %v1886, %v1879
  %v1964 = vpack.c.b16 %v1887, %v1880
  %v1965 = vpack.c.b16 %v1895, %v1888
  %v1966 = vpack.c.b16 %v1896, %v1889
  %v1967 = vpack.c.b16 %v1897, %v1890
  %v1968 = vpack.c.b16 %v1898, %v1891
  %v1969 = vpack.c.b16 %v1899, %v1892
  %v1970 = vpack.c.b16 %v1900, %v1893
  %v1971 = vpack.c.b16 %v1901, %v1894
  %v1972 = vpack.c.b16 %v1909, %v1902
  %v1973 = vpack.c.b16 %v1910, %v1903
  %v1974 = vpack.c.b16 %v1911, %v1904
  %v1975 = vpack.c.b16 %v1912, %v1905
  %v1976 = vpack.c.b16 %v1913, %v1906
  %v1977 = vpack.c.b16 %v1914, %v1907
  %v1978 = vpack.c.b16 %v1915, %v1908
  %v1979 = vpack.c.b16 %v1923, %v1916
  %v1980 = vpack.c.b16 %v1924, %v1917
  %v1981 = vpack.c.b16 %v1925, %v1918
  %v1982 = vpack.c.b16 %v1926, %v1919
  %v1983 = vpack.c.b16 %v1927, %v1920
  %v1984 = vpack.c.b16 %v1928, %v1921
  %v1985 = vpack.c.b16 %v1929, %v1922
  %v1986 = vpack.c.b16 %v1937, %v1930
  %v1987 = vpack.c.b16 %v1938, %v1931
  %v1988 = vpack.c.b16 %v1939, %v1932
  %v1989 = vpack.c.b16 %v1940, %v1933
  %v1990 = vpack.c.b16 %v1941, %v1934
  %v1991 = vpack.c.b16 %v1942, %v1935
  %v1992 = vpack.c.b16 %v1943, %v1936
  %v1993 = vpack.c.b16 %v1944, %v1944
  %v1994 = vpack.c.b16 %v1945, %v1945
  %v1995 = vpack.c.b16 %v1946, %v1946
  %v1996 = vpack.c.b16 %v1947, %v1947
  %v1997 = vpack.c.b16 %v1948, %v1948
  %v1998 = vpack.c.b16 %v1949, %v1949
  %v1999 = vpack.c.b16 %v1950, %v1950
  %v2043 = vsel %vm710, %v1957, 0
  %v2046 = vsel %vm710, %v1964, 0
  %v2049 = vsel %vm710, %v1971, 0
  %v2052 = vsel %vm710, %v1978, 0
  %v2055 = vsel %vm710, %v1985, 0
  %v2058 = vsel %vm710, %v1992, 0
  %v2061 = vsel %vm710, %v1999, 0
  %2063 = vmatprep.subr.bf16.mxu0 0
  %2064 = vmatpush1.bf16.msra.mxu0 %v610
  %2065 = vmatprep.subr.bf16.mxu0 0
  %2066 = vmatpush1.bf16.msra.mxu0 %v611
  %2067 = vmatprep.subr.bf16.mxu0 0
  %2068 = vmatpush1.bf16.msra.mxu0 %v612
  %2069 = vmatprep.subr.bf16.mxu0 0
  %2070 = vmatpush1.bf16.msra.mxu0 %v613
  %2071 = vmatprep.subr.bf16.mxu0 0
  %2072 = vmatpush1.bf16.msra.mxu0 %v614
  %2073 = vmatprep.subr.bf16.mxu0 0
  %2074 = vmatpush1.bf16.msra.mxu0 %v615
  %2075 = vmatprep.subr.bf16.mxu0 0
  %2076 = vmatpush1.bf16.msra.mxu0 %v616
  %2077 = vmatprep.subr.bf16.mxu0 0
  %2078 = vmatpush1.bf16.msra.mxu0 %v617
  %2079 = vmatprep.subr.bf16.mxu0 0
  %2080 = vmatpush1.bf16.msra.mxu0 %v618
  %2081 = vmatprep.subr.bf16.mxu0 0
  %2082 = vmatpush1.bf16.msra.mxu0 %v619
  %2083 = vmatprep.subr.bf16.mxu0 0
  %2084 = vmatpush1.bf16.msra.mxu0 %v620
  %2085 = vmatprep.subr.bf16.mxu0 0
  %2086 = vmatpush1.bf16.msra.mxu0 %v621
  %2087 = vmatprep.subr.bf16.mxu0 0
  %2088 = vmatpush1.bf16.msra.mxu0 %v622
  %2089 = vmatprep.subr.bf16.mxu0 0
  %2090 = vmatpush1.bf16.msra.mxu0 %v623
  %2091 = vmatprep.subr.bf16.mxu0 0
  %2092 = vmatpush1.bf16.msra.mxu0 %v624
  %2093 = vmatprep.subr.bf16.mxu0 0
  %2094 = vmatpush1.bf16.msra.mxu0 %v625
  %2095 = vmatprep.mubr.bf16.mxu0 %v1952
  %2096 = vmatmul.mubr.bf16.gmra.mrb[0].mxu0 %v1951
  %v2097 = vpop.f32.mrb[0].mxu0
  %v2098 = vadd.f32 0.0, %v2097
  %v2099 = vpop.f32.mrb[0].mxu0
  %v2100 = vpop.f32.mrb[0].mxu0
  %v2101 = vadd.f32 0.0, %v2100
  %v2102 = vpop.f32.mrb[0].mxu0
  %2103 = vmatprep.mubr.bf16.mxu0 %v1959
  %2104 = vmatmul.mubr.bf16.gmra.mrb[0].mxu0 %v1958
  %v2105 = vpop.f32.mrb[0].mxu0
  %v2106 = vadd.f32 0.0, %v2105
  %v2107 = vpop.f32.mrb[0].mxu0
  %v2108 = vpop.f32.mrb[0].mxu0
  %v2109 = vadd.f32 0.0, %v2108
  %v2110 = vpop.f32.mrb[0].mxu0
  %2111 = vmatprep.mubr.bf16.mxu0 %v1966
  %2112 = vmatmul.mubr.bf16.gmra.mrb[0].mxu0 %v1965
  %v2113 = vpop.f32.mrb[0].mxu0
  %v2114 = vadd.f32 0.0, %v2113
  %v2115 = vpop.f32.mrb[0].mxu0
  %v2116 = vpop.f32.mrb[0].mxu0
  %v2117 = vadd.f32 0.0, %v2116
  %v2118 = vpop.f32.mrb[0].mxu0
  %2119 = vmatprep.mubr.bf16.mxu0 %v1973
  %2120 = vmatmul.mubr.bf16.gmra.mrb[0].mxu0 %v1972
  %v2121 = vpop.f32.mrb[0].mxu0
  %v2122 = vadd.f32 0.0, %v2121
  %v2123 = vpop.f32.mrb[0].mxu0
  %v2124 = vpop.f32.mrb[0].mxu0
  %v2125 = vadd.f32 0.0, %v2124
  %v2126 = vpop.f32.mrb[0].mxu0
  %2127 = vmatprep.mubr.bf16.mxu0 %v1980
  %2128 = vmatmul.mubr.bf16.gmra.mrb[0].mxu0 %v1979
  %v2129 = vpop.f32.mrb[0].mxu0
  %v2130 = vadd.f32 0.0, %v2129
  %v2131 = vpop.f32.mrb[0].mxu0
  %v2132 = vpop.f32.mrb[0].mxu0
  %v2133 = vadd.f32 0.0, %v2132
  %v2134 = vpop.f32.mrb[0].mxu0
  %2135 = vmatprep.mubr.bf16.mxu0 %v1987
  %2136 = vmatmul.mubr.bf16.gmra.mrb[0].mxu0 %v1986
  %v2137 = vpop.f32.mrb[0].mxu0
  %v2138 = vadd.f32 0.0, %v2137
  %v2139 = vpop.f32.mrb[0].mxu0
  %v2140 = vpop.f32.mrb[0].mxu0
  %v2141 = vadd.f32 0.0, %v2140
  %v2142 = vpop.f32.mrb[0].mxu0
  %2143 = vmatprep.mubr.bf16.mxu0 %v1994
  %2144 = vmatmul.mubr.bf16.gmra.mrb[0].mxu0 %v1993
  %v2145 = vpop.f32.mrb[0].mxu0
  %v2146 = vadd.f32 0.0, %v2145
  %v2147 = vpop.f32.mrb[0].mxu0
  %v2148 = vpop.f32.mrb[0].mxu0
  %v2149 = vpop.f32.mrb[0].mxu0
  %2150 = vdwg.mxu0
  %2151 = vmatprep.subr.bf16.mxu0 0
  %2152 = vmatpush1.bf16.msra.mxu0 %v626
  %2153 = vmatprep.subr.bf16.mxu0 0
  %2154 = vmatpush1.bf16.msra.mxu0 %v627
  %2155 = vmatprep.subr.bf16.mxu0 0
  %2156 = vmatpush1.bf16.msra.mxu0 %v628
  %2157 = vmatprep.subr.bf16.mxu0 0
  %2158 = vmatpush1.bf16.msra.mxu0 %v629
  %2159 = vmatprep.subr.bf16.mxu0 0
  %2160 = vmatpush1.bf16.msra.mxu0 %v630
  %2161 = vmatprep.subr.bf16.mxu0 0
  %2162 = vmatpush1.bf16.msra.mxu0 %v631
  %2163 = vmatprep.subr.bf16.mxu0 0
  %2164 = vmatpush1.bf16.msra.mxu0 %v632
  %2165 = vmatprep.subr.bf16.mxu0 0
  %2166 = vmatpush1.bf16.msra.mxu0 %v633
  %2167 = vmatprep.subr.bf16.mxu0 0
  %2168 = vmatpush1.bf16.msra.mxu0 %v634
  %2169 = vmatprep.subr.bf16.mxu0 0
  %2170 = vmatpush1.bf16.msra.mxu0 %v635
  %2171 = vmatprep.subr.bf16.mxu0 0
  %2172 = vmatpush1.bf16.msra.mxu0 %v636
  %2173 = vmatprep.subr.bf16.mxu0 0
  %2174 = vmatpush1.bf16.msra.mxu0 %v637
  %2175 = vmatprep.subr.bf16.mxu0 0
  %2176 = vmatpush1.bf16.msra.mxu0 %v638
  %2177 = vmatprep.subr.bf16.mxu0 0
  %2178 = vmatpush1.bf16.msra.mxu0 %v639
  %2179 = vmatprep.subr.bf16.mxu0 0
  %2180 = vmatpush1.bf16.msra.mxu0 %v640
  %2181 = vmatprep.subr.bf16.mxu0 0
  %2182 = vmatpush1.bf16.msra.mxu0 %v641
  %2183 = vmatprep.mubr.bf16.mxu0 %v1954
  %2184 = vmatmul.mubr.bf16.gmra.mrb[0].mxu0 %v1953
  %v2185 = vpop.f32.mrb[0].mxu0
  %v2186 = vadd.f32 %v2098, %v2185
  %v2187 = vpop.f32.mrb[0].mxu0
  %v2188 = vpop.f32.mrb[0].mxu0
  %v2189 = vadd.f32 %v2101, %v2188
  %v2190 = vpop.f32.mrb[0].mxu0
  %2191 = vmatprep.mubr.bf16.mxu0 %v1961
  %2192 = vmatmul.mubr.bf16.gmra.mrb[0].mxu0 %v1960
  %v2193 = vpop.f32.mrb[0].mxu0
  %v2194 = vadd.f32 %v2106, %v2193
  %v2195 = vpop.f32.mrb[0].mxu0
  %v2196 = vpop.f32.mrb[0].mxu0
  %v2197 = vadd.f32 %v2109, %v2196
  %v2198 = vpop.f32.mrb[0].mxu0
  %2199 = vmatprep.mubr.bf16.mxu0 %v1968
  %2200 = vmatmul.mubr.bf16.gmra.mrb[0].mxu0 %v1967
  %v2201 = vpop.f32.mrb[0].mxu0
  %v2202 = vadd.f32 %v2114, %v2201
  %v2203 = vpop.f32.mrb[0].mxu0
  %v2204 = vpop.f32.mrb[0].mxu0
  %v2205 = vadd.f32 %v2117, %v2204
  %v2206 = vpop.f32.mrb[0].mxu0
  %2207 = vmatprep.mubr.bf16.mxu0 %v1975
  %2208 = vmatmul.mubr.bf16.gmra.mrb[0].mxu0 %v1974
  %v2209 = vpop.f32.mrb[0].mxu0
  %v2210 = vadd.f32 %v2122, %v2209
  %v2211 = vpop.f32.mrb[0].mxu0
  %v2212 = vpop.f32.mrb[0].mxu0
  %v2213 = vadd.f32 %v2125, %v2212
  %v2214 = vpop.f32.mrb[0].mxu0
  %2215 = vmatprep.mubr.bf16.mxu0 %v1982
  %2216 = vmatmul.mubr.bf16.gmra.mrb[0].mxu0 %v1981
  %v2217 = vpop.f32.mrb[0].mxu0
  %v2218 = vadd.f32 %v2130, %v2217
  %v2219 = vpop.f32.mrb[0].mxu0
  %v2220 = vpop.f32.mrb[0].mxu0
  %v2221 = vadd.f32 %v2133, %v2220
  %v2222 = vpop.f32.mrb[0].mxu0
  %2223 = vmatprep.mubr.bf16.mxu0 %v1989
  %2224 = vmatmul.mubr.bf16.gmra.mrb[0].mxu0 %v1988
  %v2225 = vpop.f32.mrb[0].mxu0
  %v2226 = vadd.f32 %v2138, %v2225
  %v2227 = vpop.f32.mrb[0].mxu0
  %v2228 = vpop.f32.mrb[0].mxu0
  %v2229 = vadd.f32 %v2141, %v2228
  %v2230 = vpop.f32.mrb[0].mxu0
  %2231 = vmatprep.mubr.bf16.mxu0 %v1996
  %2232 = vmatmul.mubr.bf16.gmra.mrb[0].mxu0 %v1995
  %v2233 = vpop.f32.mrb[0].mxu0
  %v2234 = vadd.f32 %v2146, %v2233
  %v2235 = vpop.f32.mrb[0].mxu0
  %v2236 = vpop.f32.mrb[0].mxu0
  %v2237 = vpop.f32.mrb[0].mxu0
  %2238 = vdwg.mxu0
  %2239 = vmatprep.subr.bf16.mxu0 0
  %2240 = vmatpush1.bf16.msra.mxu0 %v642
  %2241 = vmatprep.subr.bf16.mxu0 0
  %2242 = vmatpush1.bf16.msra.mxu0 %v643
  %2243 = vmatprep.subr.bf16.mxu0 0
  %2244 = vmatpush1.bf16.msra.mxu0 %v644
  %2245 = vmatprep.subr.bf16.mxu0 0
  %2246 = vmatpush1.bf16.msra.mxu0 %v645
  %2247 = vmatprep.subr.bf16.mxu0 0
  %2248 = vmatpush1.bf16.msra.mxu0 %v646
  %2249 = vmatprep.subr.bf16.mxu0 0
  %2250 = vmatpush1.bf16.msra.mxu0 %v647
  %2251 = vmatprep.subr.bf16.mxu0 0
  %2252 = vmatpush1.bf16.msra.mxu0 %v648
  %2253 = vmatprep.subr.bf16.mxu0 0
  %2254 = vmatpush1.bf16.msra.mxu0 %v649
  %2255 = vmatprep.subr.bf16.mxu0 0
  %2256 = vmatpush1.bf16.msra.mxu0 %v650
  %2257 = vmatprep.subr.bf16.mxu0 0
  %2258 = vmatpush1.bf16.msra.mxu0 %v651
  %2259 = vmatprep.subr.bf16.mxu0 0
  %2260 = vmatpush1.bf16.msra.mxu0 %v652
  %2261 = vmatprep.subr.bf16.mxu0 0
  %2262 = vmatpush1.bf16.msra.mxu0 %v653
  %2263 = vmatprep.subr.bf16.mxu0 0
  %2264 = vmatpush1.bf16.msra.mxu0 %v654
  %2265 = vmatprep.subr.bf16.mxu0 0
  %2266 = vmatpush1.bf16.msra.mxu0 %v655
  %2267 = vmatprep.subr.bf16.mxu0 0
  %2268 = vmatpush1.bf16.msra.mxu0 %v656
  %2269 = vmatprep.subr.bf16.mxu0 0
  %2270 = vmatpush1.bf16.msra.mxu0 %v657
  %2271 = vmatprep.mubr.bf16.mxu0 %v1956
  %2272 = vmatmul.mubr.bf16.gmra.mrb[0].mxu0 %v1955
  %v2273 = vpop.f32.mrb[0].mxu0
  %v2274 = vadd.f32 %v2186, %v2273
  %v2275 = vpop.f32.mrb[0].mxu0
  %v2276 = vpop.f32.mrb[0].mxu0
  %v2277 = vadd.f32 %v2189, %v2276
  %v2278 = vpop.f32.mrb[0].mxu0
  %2279 = vmatprep.mubr.bf16.mxu0 %v1963
  %2280 = vmatmul.mubr.bf16.gmra.mrb[0].mxu0 %v1962
  %v2281 = vpop.f32.mrb[0].mxu0
  %v2282 = vadd.f32 %v2194, %v2281
  %v2283 = vpop.f32.mrb[0].mxu0
  %v2284 = vpop.f32.mrb[0].mxu0
  %v2285 = vadd.f32 %v2197, %v2284
  %v2286 = vpop.f32.mrb[0].mxu0
  %2287 = vmatprep.mubr.bf16.mxu0 %v1970
  %2288 = vmatmul.mubr.bf16.gmra.mrb[0].mxu0 %v1969
  %v2289 = vpop.f32.mrb[0].mxu0
  %v2290 = vadd.f32 %v2202, %v2289
  %v2291 = vpop.f32.mrb[0].mxu0
  %v2292 = vpop.f32.mrb[0].mxu0
  %v2293 = vadd.f32 %v2205, %v2292
  %v2294 = vpop.f32.mrb[0].mxu0
  %2295 = vmatprep.mubr.bf16.mxu0 %v1977
  %2296 = vmatmul.mubr.bf16.gmra.mrb[0].mxu0 %v1976
  %v2297 = vpop.f32.mrb[0].mxu0
  %v2298 = vadd.f32 %v2210, %v2297
  %v2299 = vpop.f32.mrb[0].mxu0
  %v2300 = vpop.f32.mrb[0].mxu0
  %v2301 = vadd.f32 %v2213, %v2300
  %v2302 = vpop.f32.mrb[0].mxu0
  %2303 = vmatprep.mubr.bf16.mxu0 %v1984
  %2304 = vmatmul.mubr.bf16.gmra.mrb[0].mxu0 %v1983
  %v2305 = vpop.f32.mrb[0].mxu0
  %v2306 = vadd.f32 %v2218, %v2305
  %v2307 = vpop.f32.mrb[0].mxu0
  %v2308 = vpop.f32.mrb[0].mxu0
  %v2309 = vadd.f32 %v2221, %v2308
  %v2310 = vpop.f32.mrb[0].mxu0
  %2311 = vmatprep.mubr.bf16.mxu0 %v1991
  %2312 = vmatmul.mubr.bf16.gmra.mrb[0].mxu0 %v1990
  %v2313 = vpop.f32.mrb[0].mxu0
  %v2314 = vadd.f32 %v2226, %v2313
  %v2315 = vpop.f32.mrb[0].mxu0
  %v2316 = vpop.f32.mrb[0].mxu0
  %v2317 = vadd.f32 %v2229, %v2316
  %v2318 = vpop.f32.mrb[0].mxu0
  %2319 = vmatprep.mubr.bf16.mxu0 %v1998
  %2320 = vmatmul.mubr.bf16.gmra.mrb[0].mxu0 %v1997
  %v2321 = vpop.f32.mrb[0].mxu0
  %v2322 = vadd.f32 %v2234, %v2321
  %v2323 = vpop.f32.mrb[0].mxu0
  %v2324 = vpop.f32.mrb[0].mxu0
  %v2325 = vpop.f32.mrb[0].mxu0
  %2326 = vdwg.mxu0
  %2327 = vmatprep.subr.bf16.mxu0 0
  %2328 = vmatpush1.bf16.msra.mxu0 %v658
  %2329 = vmatprep.subr.bf16.mxu0 0
  %2330 = vmatpush1.bf16.msra.mxu0 %v659
  %2331 = vmatprep.subr.bf16.mxu0 0
  %2332 = vmatpush1.bf16.msra.mxu0 0
  %2333 = vmatprep.subr.bf16.mxu0 0
  %2334 = vmatpush1.bf16.msra.mxu0 0
  %2335 = vmatprep.subr.bf16.mxu0 0
  %2336 = vmatpush1.bf16.msra.mxu0 0
  %2337 = vmatprep.subr.bf16.mxu0 0
  %2338 = vmatpush1.bf16.msra.mxu0 0
  %2339 = vmatprep.subr.bf16.mxu0 0
  %2340 = vmatpush1.bf16.msra.mxu0 0
  %2341 = vmatprep.subr.bf16.mxu0 0
  %2342 = vmatpush1.bf16.msra.mxu0 0
  %2343 = vmatprep.subr.bf16.mxu0 0
  %2344 = vmatpush1.bf16.msra.mxu0 0
  %2345 = vmatprep.subr.bf16.mxu0 0
  %2346 = vmatpush1.bf16.msra.mxu0 0
  %2347 = vmatprep.subr.bf16.mxu0 0
  %2348 = vmatpush1.bf16.msra.mxu0 0
  %2349 = vmatprep.subr.bf16.mxu0 0
  %2350 = vmatpush1.bf16.msra.mxu0 0
  %2351 = vmatprep.subr.bf16.mxu0 0
  %2352 = vmatpush1.bf16.msra.mxu0 0
  %2353 = vmatprep.subr.bf16.mxu0 0
  %2354 = vmatpush1.bf16.msra.mxu0 0
  %2355 = vmatprep.subr.bf16.mxu0 0
  %2356 = vmatpush1.bf16.msra.mxu0 0
  %2357 = vmatprep.subr.bf16.mxu0 0
  %2358 = vmatpush1.bf16.msra.mxu0 0
  %2359 = vmatprep.mubr.bf16.mxu0 0
  %2360 = vmatmul.mubr.bf16.gmra.mrb[0].mxu0 %v2043
  %v2361 = vpop.f32.mrb[0].mxu0
  %v2362 = vadd.f32 %v2274, %v2361
  %v2363 = vpop.f32.mrb[0].mxu0
  %v2364 = vpop.f32.mrb[0].mxu0
  %v2365 = vadd.f32 %v2277, %v2364
  %v2366 = vpop.f32.mrb[0].mxu0
  %2367 = vmatprep.mubr.bf16.mxu0 0
  %2368 = vmatmul.mubr.bf16.gmra.mrb[0].mxu0 %v2046
  %v2369 = vpop.f32.mrb[0].mxu0
  %v2370 = vadd.f32 %v2282, %v2369
  %v2371 = vpop.f32.mrb[0].mxu0
  %v2372 = vpop.f32.mrb[0].mxu0
  %v2373 = vadd.f32 %v2285, %v2372
  %v2374 = vpop.f32.mrb[0].mxu0
  %2375 = vmatprep.mubr.bf16.mxu0 0
  %2376 = vmatmul.mubr.bf16.gmra.mrb[0].mxu0 %v2049
  %v2377 = vpop.f32.mrb[0].mxu0
  %v2378 = vadd.f32 %v2290, %v2377
  %v2379 = vpop.f32.mrb[0].mxu0
  %v2380 = vpop.f32.mrb[0].mxu0
  %v2381 = vadd.f32 %v2293, %v2380
  %v2382 = vpop.f32.mrb[0].mxu0
  %2383 = vmatprep.mubr.bf16.mxu0 0
  %2384 = vmatmul.mubr.bf16.gmra.mrb[0].mxu0 %v2052
  %v2385 = vpop.f32.mrb[0].mxu0
  %v2386 = vadd.f32 %v2298, %v2385
  %v2387 = vpop.f32.mrb[0].mxu0
  %v2388 = vpop.f32.mrb[0].mxu0
  %v2389 = vadd.f32 %v2301, %v2388
  %v2390 = vpop.f32.mrb[0].mxu0
  %2391 = vmatprep.mubr.bf16.mxu0 0
  %2392 = vmatmul.mubr.bf16.gmra.mrb[0].mxu0 %v2055
  %v2393 = vpop.f32.mrb[0].mxu0
  %v2394 = vadd.f32 %v2306, %v2393
  %v2395 = vpop.f32.mrb[0].mxu0
  %v2396 = vpop.f32.mrb[0].mxu0
  %v2397 = vadd.f32 %v2309, %v2396
  %v2398 = vpop.f32.mrb[0].mxu0
  %2399 = vmatprep.mubr.bf16.mxu0 0
  %2400 = vmatmul.mubr.bf16.gmra.mrb[0].mxu0 %v2058
  %v2401 = vpop.f32.mrb[0].mxu0
  %v2402 = vadd.f32 %v2314, %v2401
  %v2403 = vpop.f32.mrb[0].mxu0
  %v2404 = vpop.f32.mrb[0].mxu0
  %v2405 = vadd.f32 %v2317, %v2404
  %v2406 = vpop.f32.mrb[0].mxu0
  %2407 = vmatprep.mubr.bf16.mxu0 0
  %2408 = vmatmul.mubr.bf16.gmra.mrb[0].mxu0 %v2061
  %v2409 = vpop.f32.mrb[0].mxu0
  %v2410 = vadd.f32 %v2322, %v2409
  %v2411 = vpop.f32.mrb[0].mxu0
  %v2412 = vpop.f32.mrb[0].mxu0
  %v2413 = vpop.f32.mrb[0].mxu0
  %2414 = vdwg.mxu0
  %v2415 = vmax.f32 %v1743, %v2362
  %v2416 = vmax.f32 %v1744, %v2365
  %v2417 = vmax.f32 %v1745, %v2370
  %v2418 = vmax.f32 %v1746, %v2373
  %v2419 = vmax.f32 %v1747, %v2378
  %v2420 = vmax.f32 %v1748, %v2381
  %v2421 = vmax.f32 %v1749, %v2386
  %v2422 = vmax.f32 %v1750, %v2389
  %v2423 = vmax.f32 %v1751, %v2394
  %v2424 = vmax.f32 %v1752, %v2397
  %v2425 = vmax.f32 %v1753, %v2402
  %v2426 = vmax.f32 %v1754, %v2405
  %v2427 = vmax.f32 %v1755, %v2410
  %v2428 = vld [vmem:[%s3] sm:$0xff]
  %v2429 = vld [vmem:[%s3 + $0x8] sm:$0xff]
  %v2430 = vld [vmem:[%s3 + $0x10] sm:$0xff]
  %v2431 = vld [vmem:[%s3 + $0x18] sm:$0xf]
  %v2432 = vld [vmem:[%s3 + $0x1c] sm:$0xff]
  %v2433 = vld [vmem:[%s3 + $0x24] sm:$0xff]
  %v2434 = vld [vmem:[%s3 + $0x2c] sm:$0xff]
  %v2435 = vld [vmem:[%s3 + $0x34] sm:$0xf]
  %v2436 = vld [vmem:[%s3 + $0x38] sm:$0xff]
  %v2437 = vld [vmem:[%s3 + $0x40] sm:$0xff]
  %v2438 = vld [vmem:[%s3 + $0x48] sm:$0xff]
  %v2439 = vld [vmem:[%s3 + $0x50] sm:$0xf]
  %v2440 = vld [vmem:[%s3 + $0x54] sm:$0xff]
  %v2441 = vld [vmem:[%s3 + $0x5c] sm:$0xff]
  %v2442 = vld [vmem:[%s3 + $0x64] sm:$0xff]
  %v2443 = vld [vmem:[%s3 + $0x6c] sm:$0xf]
  %v2444 = vld [vmem:[%s3 + $0x70] sm:$0xff]
  %v2445 = vld [vmem:[%s3 + $0x78] sm:$0xff]
  %v2446 = vld [vmem:[%s3 + $0x80] sm:$0xff]
  %v2447 = vld [vmem:[%s3 + $0x88] sm:$0xf]
  %v2448 = vld [vmem:[%s3 + $0x8c] sm:$0xff]
  %v2449 = vld [vmem:[%s3 + $0x94] sm:$0xff]
  %v2450 = vld [vmem:[%s3 + $0x9c] sm:$0xff]
  %v2451 = vld [vmem:[%s3 + $0xa4] sm:$0xf]
  %v2452 = vld [vmem:[%s3 + $0xa8] sm:$0xff]
  %v2453 = vld [vmem:[%s3 + $0xb0] sm:$0xff]
  %v2454 = vld [vmem:[%s3 + $0xb8] sm:$0xff]
  %v2455 = vld [vmem:[%s3 + $0xc0] sm:$0xf]
  %v2456 = vld [vmem:[%s3 + $0xc4] sm:$0xff]
  %v2457 = vld [vmem:[%s3 + $0xcc] sm:$0xff]
  %v2458 = vld [vmem:[%s3 + $0xd4] sm:$0xff]
  %v2459 = vld [vmem:[%s3 + $0xdc] sm:$0xf]
  %v2460 = vld [vmem:[%s3 + $0xe0] sm:$0xff]
  %v2461 = vld [vmem:[%s3 + $0xe8] sm:$0xff]
  %v2462 = vld [vmem:[%s3 + $0xf0] sm:$0xff]
  %v2463 = vld [vmem:[%s3 + $0xf8] sm:$0xf]
  %v2464 = vld [vmem:[%s3 + $0xfc] sm:$0xff]
  %v2465 = vld [vmem:[%s3 + $0x104] sm:$0xff]
  %v2466 = vld [vmem:[%s3 + $0x10c] sm:$0xff]
  %v2467 = vld [vmem:[%s3 + $0x114] sm:$0xf]
  %v2468 = vld [vmem:[%s3 + $0x118] sm:$0xff]
  %v2469 = vld [vmem:[%s3 + $0x120] sm:$0xff]
  %v2470 = vld [vmem:[%s3 + $0x128] sm:$0xff]
  %v2471 = vld [vmem:[%s3 + $0x130] sm:$0xf]
  %v2472 = vld [vmem:[%s3 + $0x134] sm:$0xff]
  %v2473 = vld [vmem:[%s3 + $0x13c] sm:$0xff]
  %v2474 = vld [vmem:[%s3 + $0x144] sm:$0xff]
  %v2475 = vld [vmem:[%s3 + $0x14c] sm:$0xf]
  %v2476 = vld [vmem:[%s3 + $0x150] sm:$0xff]
  %v2477 = vld [vmem:[%s3 + $0x158] sm:$0xff]
  %v2478 = vld [vmem:[%s3 + $0x160] sm:$0xff]
  %v2479 = vld [vmem:[%s3 + $0x168] sm:$0xf]
  %v2532 = vunpack.c.l.b16 %v2428
  %v2533 = vunpack.c.h.b16 %v2428
  %v2534 = vunpack.c.l.b16 %v2429
  %v2535 = vunpack.c.h.b16 %v2429
  %v2536 = vunpack.c.l.b16 %v2430
  %v2537 = vunpack.c.h.b16 %v2430
  %v2538 = vunpack.c.l.b16 %v2431
  %v2539 = vunpack.c.l.b16 %v2432
  %v2540 = vunpack.c.h.b16 %v2432
  %v2541 = vunpack.c.l.b16 %v2433
  %v2542 = vunpack.c.h.b16 %v2433
  %v2543 = vunpack.c.l.b16 %v2434
  %v2544 = vunpack.c.h.b16 %v2434
  %v2545 = vunpack.c.l.b16 %v2435
  %v2546 = vunpack.c.l.b16 %v2436
  %v2547 = vunpack.c.h.b16 %v2436
  %v2548 = vunpack.c.l.b16 %v2437
  %v2549 = vunpack.c.h.b16 %v2437
  %v2550 = vunpack.c.l.b16 %v2438
  %v2551 = vunpack.c.h.b16 %v2438
  %v2552 = vunpack.c.l.b16 %v2439
  %v2553 = vunpack.c.l.b16 %v2440
  %v2554 = vunpack.c.h.b16 %v2440
  %v2555 = vunpack.c.l.b16 %v2441
  %v2556 = vunpack.c.h.b16 %v2441
  %v2557 = vunpack.c.l.b16 %v2442
  %v2558 = vunpack.c.h.b16 %v2442
  %v2559 = vunpack.c.l.b16 %v2443
  %v2560 = vunpack.c.l.b16 %v2444
  %v2561 = vunpack.c.h.b16 %v2444
  %v2562 = vunpack.c.l.b16 %v2445
  %v2563 = vunpack.c.h.b16 %v2445
  %v2564 = vunpack.c.l.b16 %v2446
  %v2565 = vunpack.c.h.b16 %v2446
  %v2566 = vunpack.c.l.b16 %v2447
  %v2567 = vunpack.c.l.b16 %v2448
  %v2568 = vunpack.c.h.b16 %v2448
  %v2569 = vunpack.c.l.b16 %v2449
  %v2570 = vunpack.c.h.b16 %v2449
  %v2571 = vunpack.c.l.b16 %v2450
  %v2572 = vunpack.c.h.b16 %v2450
  %v2573 = vunpack.c.l.b16 %v2451
  %v2574 = vunpack.c.l.b16 %v2452
  %v2575 = vunpack.c.h.b16 %v2452
  %v2576 = vunpack.c.l.b16 %v2453
  %v2577 = vunpack.c.h.b16 %v2453
  %v2578 = vunpack.c.l.b16 %v2454
  %v2579 = vunpack.c.h.b16 %v2454
  %v2580 = vunpack.c.l.b16 %v2455
  %v2581 = vunpack.c.l.b16 %v2456
  %v2582 = vunpack.c.h.b16 %v2456
  %v2583 = vunpack.c.l.b16 %v2457
  %v2584 = vunpack.c.h.b16 %v2457
  %v2585 = vunpack.c.l.b16 %v2458
  %v2586 = vunpack.c.h.b16 %v2458
  %v2587 = vunpack.c.l.b16 %v2459
  %v2588 = vunpack.c.l.b16 %v2460
  %v2589 = vunpack.c.h.b16 %v2460
  %v2590 = vunpack.c.l.b16 %v2461
  %v2591 = vunpack.c.h.b16 %v2461
  %v2592 = vunpack.c.l.b16 %v2462
  %v2593 = vunpack.c.h.b16 %v2462
  %v2594 = vunpack.c.l.b16 %v2463
  %v2595 = vunpack.c.l.b16 %v2464
  %v2596 = vunpack.c.h.b16 %v2464
  %v2597 = vunpack.c.l.b16 %v2465
  %v2598 = vunpack.c.h.b16 %v2465
  %v2599 = vunpack.c.l.b16 %v2466
  %v2600 = vunpack.c.h.b16 %v2466
  %v2601 = vunpack.c.l.b16 %v2467
  %v2602 = vunpack.c.l.b16 %v2468
  %v2603 = vunpack.c.h.b16 %v2468
  %v2604 = vunpack.c.l.b16 %v2469
  %v2605 = vunpack.c.h.b16 %v2469
  %v2606 = vunpack.c.l.b16 %v2470
  %v2607 = vunpack.c.h.b16 %v2470
  %v2608 = vunpack.c.l.b16 %v2471
  %v2609 = vunpack.c.l.b16 %v2472
  %v2610 = vunpack.c.h.b16 %v2472
  %v2611 = vunpack.c.l.b16 %v2473
  %v2612 = vunpack.c.h.b16 %v2473
  %v2613 = vunpack.c.l.b16 %v2474
  %v2614 = vunpack.c.h.b16 %v2474
  %v2615 = vunpack.c.l.b16 %v2475
  %v2616 = vunpack.c.l.b16 %v2476
  %v2617 = vunpack.c.h.b16 %v2476
  %v2618 = vunpack.c.l.b16 %v2477
  %v2619 = vunpack.c.h.b16 %v2477
  %v2620 = vunpack.c.l.b16 %v2478
  %v2621 = vunpack.c.h.b16 %v2478
  %v2622 = vunpack.c.l.b16 %v2479
  %v2623 = vpack.c.b16 %v2539, %v2532
  %v2624 = vpack.c.b16 %v2540, %v2533
  %v2625 = vpack.c.b16 %v2541, %v2534
  %v2626 = vpack.c.b16 %v2542, %v2535
  %v2627 = vpack.c.b16 %v2543, %v2536
  %v2628 = vpack.c.b16 %v2544, %v2537
  %v2629 = vpack.c.b16 %v2545, %v2538
  %v2630 = vpack.c.b16 %v2553, %v2546
  %v2631 = vpack.c.b16 %v2554, %v2547
  %v2632 = vpack.c.b16 %v2555, %v2548
  %v2633 = vpack.c.b16 %v2556, %v2549
  %v2634 = vpack.c.b16 %v2557, %v2550
  %v2635 = vpack.c.b16 %v2558, %v2551
  %v2636 = vpack.c.b16 %v2559, %v2552
  %v2637 = vpack.c.b16 %v2567, %v2560
  %v2638 = vpack.c.b16 %v2568, %v2561
  %v2639 = vpack.c.b16 %v2569, %v2562
  %v2640 = vpack.c.b16 %v2570, %v2563
  %v2641 = vpack.c.b16 %v2571, %v2564
  %v2642 = vpack.c.b16 %v2572, %v2565
  %v2643 = vpack.c.b16 %v2573, %v2566
  %v2644 = vpack.c.b16 %v2581, %v2574
  %v2645 = vpack.c.b16 %v2582, %v2575
  %v2646 = vpack.c.b16 %v2583, %v2576
  %v2647 = vpack.c.b16 %v2584, %v2577
  %v2648 = vpack.c.b16 %v2585, %v2578
  %v2649 = vpack.c.b16 %v2586, %v2579
  %v2650 = vpack.c.b16 %v2587, %v2580
  %v2651 = vpack.c.b16 %v2595, %v2588
  %v2652 = vpack.c.b16 %v2596, %v2589
  %v2653 = vpack.c.b16 %v2597, %v2590
  %v2654 = vpack.c.b16 %v2598, %v2591
  %v2655 = vpack.c.b16 %v2599, %v2592
  %v2656 = vpack.c.b16 %v2600, %v2593
  %v2657 = vpack.c.b16 %v2601, %v2594
  %v2658 = vpack.c.b16 %v2609, %v2602
  %v2659 = vpack.c.b16 %v2610, %v2603
  %v2660 = vpack.c.b16 %v2611, %v2604
  %v2661 = vpack.c.b16 %v2612, %v2605
  %v2662 = vpack.c.b16 %v2613, %v2606
  %v2663 = vpack.c.b16 %v2614, %v2607
  %v2664 = vpack.c.b16 %v2615, %v2608
  %v2665 = vpack.c.b16 %v2616, %v2616
  %v2666 = vpack.c.b16 %v2617, %v2617
  %v2667 = vpack.c.b16 %v2618, %v2618
  %v2668 = vpack.c.b16 %v2619, %v2619
  %v2669 = vpack.c.b16 %v2620, %v2620
  %v2670 = vpack.c.b16 %v2621, %v2621
  %v2671 = vpack.c.b16 %v2622, %v2622
  %v2715 = vsel %vm710, %v2629, 0
  %v2718 = vsel %vm710, %v2636, 0
  %v2721 = vsel %vm710, %v2643, 0
  %v2724 = vsel %vm710, %v2650, 0
  %v2727 = vsel %vm710, %v2657, 0
  %v2730 = vsel %vm710, %v2664, 0
  %v2733 = vsel %vm710, %v2671, 0
  %2735 = vmatprep.subr.bf16.mxu0 0
  %2736 = vmatpush1.bf16.msra.mxu0 %v610
  %2737 = vmatprep.subr.bf16.mxu0 0
  %2738 = vmatpush1.bf16.msra.mxu0 %v611
  %2739 = vmatprep.subr.bf16.mxu0 0
  %2740 = vmatpush1.bf16.msra.mxu0 %v612
  %2741 = vmatprep.subr.bf16.mxu0 0
  %2742 = vmatpush1.bf16.msra.mxu0 %v613
  %2743 = vmatprep.subr.bf16.mxu0 0
  %2744 = vmatpush1.bf16.msra.mxu0 %v614
  %2745 = vmatprep.subr.bf16.mxu0 0
  %2746 = vmatpush1.bf16.msra.mxu0 %v615
  %2747 = vmatprep.subr.bf16.mxu0 0
  %2748 = vmatpush1.bf16.msra.mxu0 %v616
  %2749 = vmatprep.subr.bf16.mxu0 0
  %2750 = vmatpush1.bf16.msra.mxu0 %v617
  %2751 = vmatprep.subr.bf16.mxu0 0
  %2752 = vmatpush1.bf16.msra.mxu0 %v618
  %2753 = vmatprep.subr.bf16.mxu0 0
  %2754 = vmatpush1.bf16.msra.mxu0 %v619
  %2755 = vmatprep.subr.bf16.mxu0 0
  %2756 = vmatpush1.bf16.msra.mxu0 %v620
  %2757 = vmatprep.subr.bf16.mxu0 0
  %2758 = vmatpush1.bf16.msra.mxu0 %v621
  %2759 = vmatprep.subr.bf16.mxu0 0
  %2760 = vmatpush1.bf16.msra.mxu0 %v622
  %2761 = vmatprep.subr.bf16.mxu0 0
  %2762 = vmatpush1.bf16.msra.mxu0 %v623
  %2763 = vmatprep.subr.bf16.mxu0 0
  %2764 = vmatpush1.bf16.msra.mxu0 %v624
  %2765 = vmatprep.subr.bf16.mxu0 0
  %2766 = vmatpush1.bf16.msra.mxu0 %v625
  %2767 = vmatprep.mubr.bf16.mxu0 %v2624
  %2768 = vmatmul.mubr.bf16.gmra.mrb[0].mxu0 %v2623
  %v2769 = vpop.f32.mrb[0].mxu0
  %v2770 = vadd.f32 0.0, %v2769
  %v2771 = vpop.f32.mrb[0].mxu0
  %v2772 = vpop.f32.mrb[0].mxu0
  %v2773 = vadd.f32 0.0, %v2772
  %v2774 = vpop.f32.mrb[0].mxu0
  %2775 = vmatprep.mubr.bf16.mxu0 %v2631
  %2776 = vmatmul.mubr.bf16.gmra.mrb[0].mxu0 %v2630
  %v2777 = vpop.f32.mrb[0].mxu0
  %v2778 = vadd.f32 0.0, %v2777
  %v2779 = vpop.f32.mrb[0].mxu0
  %v2780 = vpop.f32.mrb[0].mxu0
  %v2781 = vadd.f32 0.0, %v2780
  %v2782 = vpop.f32.mrb[0].mxu0
  %2783 = vmatprep.mubr.bf16.mxu0 %v2638
  %2784 = vmatmul.mubr.bf16.gmra.mrb[0].mxu0 %v2637
  %v2785 = vpop.f32.mrb[0].mxu0
  %v2786 = vadd.f32 0.0, %v2785
  %v2787 = vpop.f32.mrb[0].mxu0
  %v2788 = vpop.f32.mrb[0].mxu0
  %v2789 = vadd.f32 0.0, %v2788
  %v2790 = vpop.f32.mrb[0].mxu0
  %2791 = vmatprep.mubr.bf16.mxu0 %v2645
  %2792 = vmatmul.mubr.bf16.gmra.mrb[0].mxu0 %v2644
  %v2793 = vpop.f32.mrb[0].mxu0
  %v2794 = vadd.f32 0.0, %v2793
  %v2795 = vpop.f32.mrb[0].mxu0
  %v2796 = vpop.f32.mrb[0].mxu0
  %v2797 = vadd.f32 0.0, %v2796
  %v2798 = vpop.f32.mrb[0].mxu0
  %2799 = vmatprep.mubr.bf16.mxu0 %v2652
  %2800 = vmatmul.mubr.bf16.gmra.mrb[0].mxu0 %v2651
  %v2801 = vpop.f32.mrb[0].mxu0
  %v2802 = vadd.f32 0.0, %v2801
  %v2803 = vpop.f32.mrb[0].mxu0
  %v2804 = vpop.f32.mrb[0].mxu0
  %v2805 = vadd.f32 0.0, %v2804
  %v2806 = vpop.f32.mrb[0].mxu0
  %2807 = vmatprep.mubr.bf16.mxu0 %v2659
  %2808 = vmatmul.mubr.bf16.gmra.mrb[0].mxu0 %v2658
  %v2809 = vpop.f32.mrb[0].mxu0
  %v2810 = vadd.f32 0.0, %v2809
  %v2811 = vpop.f32.mrb[0].mxu0
  %v2812 = vpop.f32.mrb[0].mxu0
  %v2813 = vadd.f32 0.0, %v2812
  %v2814 = vpop.f32.mrb[0].mxu0
  %2815 = vmatprep.mubr.bf16.mxu0 %v2666
  %2816 = vmatmul.mubr.bf16.gmra.mrb[0].mxu0 %v2665
  %v2817 = vpop.f32.mrb[0].mxu0
  %v2818 = vadd.f32 0.0, %v2817
  %v2819 = vpop.f32.mrb[0].mxu0
  %v2820 = vpop.f32.mrb[0].mxu0
  %v2821 = vpop.f32.mrb[0].mxu0
  %2822 = vdwg.mxu0
  %2823 = vmatprep.subr.bf16.mxu0 0
  %2824 = vmatpush1.bf16.msra.mxu0 %v626
  %2825 = vmatprep.subr.bf16.mxu0 0
  %2826 = vmatpush1.bf16.msra.mxu0 %v627
  %2827 = vmatprep.subr.bf16.mxu0 0
  %2828 = vmatpush1.bf16.msra.mxu0 %v628
  %2829 = vmatprep.subr.bf16.mxu0 0
  %2830 = vmatpush1.bf16.msra.mxu0 %v629
  %2831 = vmatprep.subr.bf16.mxu0 0
  %2832 = vmatpush1.bf16.msra.mxu0 %v630
  %2833 = vmatprep.subr.bf16.mxu0 0
  %2834 = vmatpush1.bf16.msra.mxu0 %v631
  %2835 = vmatprep.subr.bf16.mxu0 0
  %2836 = vmatpush1.bf16.msra.mxu0 %v632
  %2837 = vmatprep.subr.bf16.mxu0 0
  %2838 = vmatpush1.bf16.msra.mxu0 %v633
  %2839 = vmatprep.subr.bf16.mxu0 0
  %2840 = vmatpush1.bf16.msra.mxu0 %v634
  %2841 = vmatprep.subr.bf16.mxu0 0
  %2842 = vmatpush1.bf16.msra.mxu0 %v635
  %2843 = vmatprep.subr.bf16.mxu0 0
  %2844 = vmatpush1.bf16.msra.mxu0 %v636
  %2845 = vmatprep.subr.bf16.mxu0 0
  %2846 = vmatpush1.bf16.msra.mxu0 %v637
  %2847 = vmatprep.subr.bf16.mxu0 0
  %2848 = vmatpush1.bf16.msra.mxu0 %v638
  %2849 = vmatprep.subr.bf16.mxu0 0
  %2850 = vmatpush1.bf16.msra.mxu0 %v639
  %2851 = vmatprep.subr.bf16.mxu0 0
  %2852 = vmatpush1.bf16.msra.mxu0 %v640
  %2853 = vmatprep.subr.bf16.mxu0 0
  %2854 = vmatpush1.bf16.msra.mxu0 %v641
  %2855 = vmatprep.mubr.bf16.mxu0 %v2626
  %2856 = vmatmul.mubr.bf16.gmra.mrb[0].mxu0 %v2625
  %v2857 = vpop.f32.mrb[0].mxu0
  %v2858 = vadd.f32 %v2770, %v2857
  %v2859 = vpop.f32.mrb[0].mxu0
  %v2860 = vpop.f32.mrb[0].mxu0
  %v2861 = vadd.f32 %v2773, %v2860
  %v2862 = vpop.f32.mrb[0].mxu0
  %2863 = vmatprep.mubr.bf16.mxu0 %v2633
  %2864 = vmatmul.mubr.bf16.gmra.mrb[0].mxu0 %v2632
  %v2865 = vpop.f32.mrb[0].mxu0
  %v2866 = vadd.f32 %v2778, %v2865
  %v2867 = vpop.f32.mrb[0].mxu0
  %v2868 = vpop.f32.mrb[0].mxu0
  %v2869 = vadd.f32 %v2781, %v2868
  %v2870 = vpop.f32.mrb[0].mxu0
  %2871 = vmatprep.mubr.bf16.mxu0 %v2640
  %2872 = vmatmul.mubr.bf16.gmra.mrb[0].mxu0 %v2639
  %v2873 = vpop.f32.mrb[0].mxu0
  %v2874 = vadd.f32 %v2786, %v2873
  %v2875 = vpop.f32.mrb[0].mxu0
  %v2876 = vpop.f32.mrb[0].mxu0
  %v2877 = vadd.f32 %v2789, %v2876
  %v2878 = vpop.f32.mrb[0].mxu0
  %2879 = vmatprep.mubr.bf16.mxu0 %v2647
  %2880 = vmatmul.mubr.bf16.gmra.mrb[0].mxu0 %v2646
  %v2881 = vpop.f32.mrb[0].mxu0
  %v2882 = vadd.f32 %v2794, %v2881
  %v2883 = vpop.f32.mrb[0].mxu0
  %v2884 = vpop.f32.mrb[0].mxu0
  %v2885 = vadd.f32 %v2797, %v2884
  %v2886 = vpop.f32.mrb[0].mxu0
  %2887 = vmatprep.mubr.bf16.mxu0 %v2654
  %2888 = vmatmul.mubr.bf16.gmra.mrb[0].mxu0 %v2653
  %v2889 = vpop.f32.mrb[0].mxu0
  %v2890 = vadd.f32 %v2802, %v2889
  %v2891 = vpop.f32.mrb[0].mxu0
  %v2892 = vpop.f32.mrb[0].mxu0
  %v2893 = vadd.f32 %v2805, %v2892
  %v2894 = vpop.f32.mrb[0].mxu0
  %2895 = vmatprep.mubr.bf16.mxu0 %v2661
  %2896 = vmatmul.mubr.bf16.gmra.mrb[0].mxu0 %v2660
  %v2897 = vpop.f32.mrb[0].mxu0
  %v2898 = vadd.f32 %v2810, %v2897
  %v2899 = vpop.f32.mrb[0].mxu0
  %v2900 = vpop.f32.mrb[0].mxu0
  %v2901 = vadd.f32 %v2813, %v2900
  %v2902 = vpop.f32.mrb[0].mxu0
  %2903 = vmatprep.mubr.bf16.mxu0 %v2668
  %2904 = vmatmul.mubr.bf16.gmra.mrb[0].mxu0 %v2667
  %v2905 = vpop.f32.mrb[0].mxu0
  %v2906 = vadd.f32 %v2818, %v2905
  %v2907 = vpop.f32.mrb[0].mxu0
  %v2908 = vpop.f32.mrb[0].mxu0
  %v2909 = vpop.f32.mrb[0].mxu0
  %2910 = vdwg.mxu0
  %2911 = vmatprep.subr.bf16.mxu0 0
  %2912 = vmatpush1.bf16.msra.mxu0 %v642
  %2913 = vmatprep.subr.bf16.mxu0 0
  %2914 = vmatpush1.bf16.msra.mxu0 %v643
  %2915 = vmatprep.subr.bf16.mxu0 0
  %2916 = vmatpush1.bf16.msra.mxu0 %v644
  %2917 = vmatprep.subr.bf16.mxu0 0
  %2918 = vmatpush1.bf16.msra.mxu0 %v645
  %2919 = vmatprep.subr.bf16.mxu0 0
  %2920 = vmatpush1.bf16.msra.mxu0 %v646
  %2921 = vmatprep.subr.bf16.mxu0 0
  %2922 = vmatpush1.bf16.msra.mxu0 %v647
  %2923 = vmatprep.subr.bf16.mxu0 0
  %2924 = vmatpush1.bf16.msra.mxu0 %v648
  %2925 = vmatprep.subr.bf16.mxu0 0
  %2926 = vmatpush1.bf16.msra.mxu0 %v649
  %2927 = vmatprep.subr.bf16.mxu0 0
  %2928 = vmatpush1.bf16.msra.mxu0 %v650
  %2929 = vmatprep.subr.bf16.mxu0 0
  %2930 = vmatpush1.bf16.msra.mxu0 %v651
  %2931 = vmatprep.subr.bf16.mxu0 0
  %2932 = vmatpush1.bf16.msra.mxu0 %v652
  %2933 = vmatprep.subr.bf16.mxu0 0
  %2934 = vmatpush1.bf16.msra.mxu0 %v653
  %2935 = vmatprep.subr.bf16.mxu0 0
  %2936 = vmatpush1.bf16.msra.mxu0 %v654
  %2937 = vmatprep.subr.bf16.mxu0 0
  %2938 = vmatpush1.bf16.msra.mxu0 %v655
  %2939 = vmatprep.subr.bf16.mxu0 0
  %2940 = vmatpush1.bf16.msra.mxu0 %v656
  %2941 = vmatprep.subr.bf16.mxu0 0
  %2942 = vmatpush1.bf16.msra.mxu0 %v657
  %2943 = vmatprep.mubr.bf16.mxu0 %v2628
  %2944 = vmatmul.mubr.bf16.gmra.mrb[0].mxu0 %v2627
  %v2945 = vpop.f32.mrb[0].mxu0
  %v2946 = vadd.f32 %v2858, %v2945
  %v2947 = vpop.f32.mrb[0].mxu0
  %v2948 = vpop.f32.mrb[0].mxu0
  %v2949 = vadd.f32 %v2861, %v2948
  %v2950 = vpop.f32.mrb[0].mxu0
  %2951 = vmatprep.mubr.bf16.mxu0 %v2635
  %2952 = vmatmul.mubr.bf16.gmra.mrb[0].mxu0 %v2634
  %v2953 = vpop.f32.mrb[0].mxu0
  %v2954 = vadd.f32 %v2866, %v2953
  %v2955 = vpop.f32.mrb[0].mxu0
  %v2956 = vpop.f32.mrb[0].mxu0
  %v2957 = vadd.f32 %v2869, %v2956
  %v2958 = vpop.f32.mrb[0].mxu0
  %2959 = vmatprep.mubr.bf16.mxu0 %v2642
  %2960 = vmatmul.mubr.bf16.gmra.mrb[0].mxu0 %v2641
  %v2961 = vpop.f32.mrb[0].mxu0
  %v2962 = vadd.f32 %v2874, %v2961
  %v2963 = vpop.f32.mrb[0].mxu0
  %v2964 = vpop.f32.mrb[0].mxu0
  %v2965 = vadd.f32 %v2877, %v2964
  %v2966 = vpop.f32.mrb[0].mxu0
  %2967 = vmatprep.mubr.bf16.mxu0 %v2649
  %2968 = vmatmul.mubr.bf16.gmra.mrb[0].mxu0 %v2648
  %v2969 = vpop.f32.mrb[0].mxu0
  %v2970 = vadd.f32 %v2882, %v2969
  %v2971 = vpop.f32.mrb[0].mxu0
  %v2972 = vpop.f32.mrb[0].mxu0
  %v2973 = vadd.f32 %v2885, %v2972
  %v2974 = vpop.f32.mrb[0].mxu0
  %2975 = vmatprep.mubr.bf16.mxu0 %v2656
  %2976 = vmatmul.mubr.bf16.gmra.mrb[0].mxu0 %v2655
  %v2977 = vpop.f32.mrb[0].mxu0
  %v2978 = vadd.f32 %v2890, %v2977
  %v2979 = vpop.f32.mrb[0].mxu0
  %v2980 = vpop.f32.mrb[0].mxu0
  %v2981 = vadd.f32 %v2893, %v2980
  %v2982 = vpop.f32.mrb[0].mxu0
  %2983 = vmatprep.mubr.bf16.mxu0 %v2663
  %2984 = vmatmul.mubr.bf16.gmra.mrb[0].mxu0 %v2662
  %v2985 = vpop.f32.mrb[0].mxu0
  %v2986 = vadd.f32 %v2898, %v2985
  %v2987 = vpop.f32.mrb[0].mxu0
  %v2988 = vpop.f32.mrb[0].mxu0
  %v2989 = vadd.f32 %v2901, %v2988
  %v2990 = vpop.f32.mrb[0].mxu0
  %2991 = vmatprep.mubr.bf16.mxu0 %v2670
  %2992 = vmatmul.mubr.bf16.gmra.mrb[0].mxu0 %v2669
  %v2993 = vpop.f32.mrb[0].mxu0
  %v2994 = vadd.f32 %v2906, %v2993
  %v2995 = vpop.f32.mrb[0].mxu0
  %v2996 = vpop.f32.mrb[0].mxu0
  %v2997 = vpop.f32.mrb[0].mxu0
  %2998 = vdwg.mxu0
  %2999 = vmatprep.subr.bf16.mxu0 0
  %3000 = vmatpush1.bf16.msra.mxu0 %v658
  %3001 = vmatprep.subr.bf16.mxu0 0
  %3002 = vmatpush1.bf16.msra.mxu0 %v659
  %3003 = vmatprep.subr.bf16.mxu0 0
  %3004 = vmatpush1.bf16.msra.mxu0 0
  %3005 = vmatprep.subr.bf16.mxu0 0
  %3006 = vmatpush1.bf16.msra.mxu0 0
  %3007 = vmatprep.subr.bf16.mxu0 0
  %3008 = vmatpush1.bf16.msra.mxu0 0
  %3009 = vmatprep.subr.bf16.mxu0 0
  %3010 = vmatpush1.bf16.msra.mxu0 0
  %3011 = vmatprep.subr.bf16.mxu0 0
  %3012 = vmatpush1.bf16.msra.mxu0 0
  %3013 = vmatprep.subr.bf16.mxu0 0
  %3014 = vmatpush1.bf16.msra.mxu0 0
  %3015 = vmatprep.subr.bf16.mxu0 0
  %3016 = vmatpush1.bf16.msra.mxu0 0
  %3017 = vmatprep.subr.bf16.mxu0 0
  %3018 = vmatpush1.bf16.msra.mxu0 0
  %3019 = vmatprep.subr.bf16.mxu0 0
  %3020 = vmatpush1.bf16.msra.mxu0 0
  %3021 = vmatprep.subr.bf16.mxu0 0
  %3022 = vmatpush1.bf16.msra.mxu0 0
  %3023 = vmatprep.subr.bf16.mxu0 0
  %3024 = vmatpush1.bf16.msra.mxu0 0
  %3025 = vmatprep.subr.bf16.mxu0 0
  %3026 = vmatpush1.bf16.msra.mxu0 0
  %3027 = vmatprep.subr.bf16.mxu0 0
  %3028 = vmatpush1.bf16.msra.mxu0 0
  %3029 = vmatprep.subr.bf16.mxu0 0
  %3030 = vmatpush1.bf16.msra.mxu0 0
  %3031 = vmatprep.mubr.bf16.mxu0 0
  %3032 = vmatmul.mubr.bf16.gmra.mrb[0].mxu0 %v2715
  %v3033 = vpop.f32.mrb[0].mxu0
  %v3034 = vadd.f32 %v2946, %v3033
  %v3035 = vpop.f32.mrb[0].mxu0
  %v3036 = vpop.f32.mrb[0].mxu0
  %v3037 = vadd.f32 %v2949, %v3036
  %v3038 = vpop.f32.mrb[0].mxu0
  %3039 = vmatprep.mubr.bf16.mxu0 0
  %3040 = vmatmul.mubr.bf16.gmra.mrb[0].mxu0 %v2718
  %v3041 = vpop.f32.mrb[0].mxu0
  %v3042 = vadd.f32 %v2954, %v3041
  %v3043 = vpop.f32.mrb[0].mxu0
  %v3044 = vpop.f32.mrb[0].mxu0
  %v3045 = vadd.f32 %v2957, %v3044
  %v3046 = vpop.f32.mrb[0].mxu0
  %3047 = vmatprep.mubr.bf16.mxu0 0
  %3048 = vmatmul.mubr.bf16.gmra.mrb[0].mxu0 %v2721
  %v3049 = vpop.f32.mrb[0].mxu0
  %v3050 = vadd.f32 %v2962, %v3049
  %v3051 = vpop.f32.mrb[0].mxu0
  %v3052 = vpop.f32.mrb[0].mxu0
  %v3053 = vadd.f32 %v2965, %v3052
  %v3054 = vpop.f32.mrb[0].mxu0
  %3055 = vmatprep.mubr.bf16.mxu0 0
  %3056 = vmatmul.mubr.bf16.gmra.mrb[0].mxu0 %v2724
  %v3057 = vpop.f32.mrb[0].mxu0
  %v3058 = vadd.f32 %v2970, %v3057
  %v3059 = vpop.f32.mrb[0].mxu0
  %v3060 = vpop.f32.mrb[0].mxu0
  %v3061 = vadd.f32 %v2973, %v3060
  %v3062 = vpop.f32.mrb[0].mxu0
  %3063 = vmatprep.mubr.bf16.mxu0 0
  %3064 = vmatmul.mubr.bf16.gmra.mrb[0].mxu0 %v2727
  %v3065 = vpop.f32.mrb[0].mxu0
  %v3066 = vadd.f32 %v2978, %v3065
  %v3067 = vpop.f32.mrb[0].mxu0
  %v3068 = vpop.f32.mrb[0].mxu0
  %v3069 = vadd.f32 %v2981, %v3068
  %v3070 = vpop.f32.mrb[0].mxu0
  %3071 = vmatprep.mubr.bf16.mxu0 0
  %3072 = vmatmul.mubr.bf16.gmra.mrb[0].mxu0 %v2730
  %v3073 = vpop.f32.mrb[0].mxu0
  %v3074 = vadd.f32 %v2986, %v3073
  %v3075 = vpop.f32.mrb[0].mxu0
  %v3076 = vpop.f32.mrb[0].mxu0
  %v3077 = vadd.f32 %v2989, %v3076
  %v3078 = vpop.f32.mrb[0].mxu0
  %3079 = vmatprep.mubr.bf16.mxu0 0
  %3080 = vmatmul.mubr.bf16.gmra.mrb[0].mxu0 %v2733
  %v3081 = vpop.f32.mrb[0].mxu0
  %v3082 = vadd.f32 %v2994, %v3081
  %v3083 = vpop.f32.mrb[0].mxu0
  %v3084 = vpop.f32.mrb[0].mxu0
  %v3085 = vpop.f32.mrb[0].mxu0
  %3086 = vdwg.mxu0
  %v3087 = vmax.f32 %v2415, %v3034
  %v3088 = vmax.f32 %v2416, %v3037
  %v3089 = vmax.f32 %v2417, %v3042
  %v3090 = vmax.f32 %v2418, %v3045
  %v3091 = vmax.f32 %v2419, %v3050
  %v3092 = vmax.f32 %v2420, %v3053
  %v3093 = vmax.f32 %v2421, %v3058
  %v3094 = vmax.f32 %v2422, %v3061
  %v3095 = vmax.f32 %v2423, %v3066
  %v3096 = vmax.f32 %v2424, %v3069
  %v3097 = vmax.f32 %v2425, %v3074
  %v3098 = vmax.f32 %v2426, %v3077
  %v3099 = vmax.f32 %v2427, %v3082
  %v3100 = vld [vmem:[%s5] sm:$0x1]
  %v3102 = vlaneseq
  %v3103 = vshrl.u32 %v3102, 7
  %v3104 = vsub.s32 0, %v3103
  %v3105 = vrot.slane %v3100, %v3104
  %v3107 = vadd.f32 %v3087, %v3105
  %v3108 = vadd.f32 %v3088, %v3105
  %v3109 = vadd.f32 %v3089, %v3105
  %v3110 = vadd.f32 %v3090, %v3105
  %v3111 = vadd.f32 %v3091, %v3105
  %v3112 = vadd.f32 %v3092, %v3105
  %v3113 = vadd.f32 %v3093, %v3105
  %v3114 = vadd.f32 %v3094, %v3105
  %v3115 = vadd.f32 %v3095, %v3105
  %v3116 = vadd.f32 %v3096, %v3105
  %v3117 = vadd.f32 %v3097, %v3105
  %v3118 = vadd.f32 %v3098, %v3105
  %v3119 = vadd.f32 %v3099, %v3105
  %v3120 = vmax.f32 %v3107, 0.0
  %v3121 = vmax.f32 %v3108, 0.0
  %v3122 = vmax.f32 %v3109, 0.0
  %v3123 = vmax.f32 %v3110, 0.0
  %v3124 = vmax.f32 %v3111, 0.0
  %v3125 = vmax.f32 %v3112, 0.0
  %v3126 = vmax.f32 %v3113, 0.0
  %v3127 = vmax.f32 %v3114, 0.0
  %v3128 = vmax.f32 %v3115, 0.0
  %v3129 = vmax.f32 %v3116, 0.0
  %v3130 = vmax.f32 %v3117, 0.0
  %v3131 = vmax.f32 %v3118, 0.0
  %v3132 = vmax.f32 %v3119, 0.0
  %v3133 = vpack.c.bf16 %v3121, %v3120
  %v3134 = vpack.c.bf16 %v3123, %v3122
  %v3135 = vpack.c.bf16 %v3125, %v3124
  %v3136 = vpack.c.bf16 %v3127, %v3126
  %v3137 = vpack.c.bf16 %v3129, %v3128
  %v3138 = vpack.c.bf16 %v3131, %v3130
  %v3139 = vpack.c.bf16 %v3132, %v3132
  %v3147 = vunpack.c.l.b16 %v3133
  %v3148 = vunpack.c.h.b16 %v3133
  %v3149 = vunpack.c.l.b16 %v3134
  %v3150 = vunpack.c.h.b16 %v3134
  %v3151 = vunpack.c.l.b16 %v3135
  %v3152 = vunpack.c.h.b16 %v3135
  %v3153 = vunpack.c.l.b16 %v3136
  %v3154 = vunpack.c.h.b16 %v3136
  %v3155 = vunpack.c.l.b16 %v3137
  %v3156 = vunpack.c.h.b16 %v3137
  %v3157 = vunpack.c.l.b16 %v3138
  %v3158 = vunpack.c.h.b16 %v3138
  %v3159 = vunpack.c.l.b16 %v3139
  %v3160 = vpack.c.b16 %v3147, %v3147
  %v3161 = vpack.c.b16 %v3148, %v3148
  %v3162 = vpack.c.b16 %v3149, %v3149
  %v3163 = vpack.c.b16 %v3150, %v3150
  %v3164 = vpack.c.b16 %v3151, %v3151
  %v3165 = vpack.c.b16 %v3152, %v3152
  %v3166 = vpack.c.b16 %v3153, %v3153
  %v3167 = vpack.c.b16 %v3154, %v3154
  %v3168 = vpack.c.b16 %v3155, %v3155
  %v3169 = vpack.c.b16 %v3156, %v3156
  %v3170 = vpack.c.b16 %v3157, %v3157
  %v3171 = vpack.c.b16 %v3158, %v3158
  %v3172 = vpack.c.b16 %v3159, %v3159
  %vm3186 = vcmask 519168
  %3187 = vst.msk [vmem:[%s6] sm:$0xf] %vm3186, %v3160
  %3188 = vst.msk [vmem:[%s6 + $0x4] sm:$0xf] %vm3186, %v3161
  %3189 = vst.msk [vmem:[%s6 + $0x8] sm:$0xf] %vm3186, %v3162
  %3190 = vst.msk [vmem:[%s6 + $0xc] sm:$0xf] %vm3186, %v3163
  %3191 = vst.msk [vmem:[%s6 + $0x10] sm:$0xf] %vm3186, %v3164
  %3192 = vst.msk [vmem:[%s6 + $0x14] sm:$0xf] %vm3186, %v3165
  %3193 = vst.msk [vmem:[%s6 + $0x18] sm:$0xf] %vm3186, %v3166
  %3194 = vst.msk [vmem:[%s6 + $0x1c] sm:$0xf] %vm3186, %v3167
  %3195 = vst.msk [vmem:[%s6 + $0x20] sm:$0xf] %vm3186, %v3168
  %3196 = vst.msk [vmem:[%s6 + $0x24] sm:$0xf] %vm3186, %v3169
  %3197 = vst.msk [vmem:[%s6 + $0x28] sm:$0xf] %vm3186, %v3170
  %3198 = vst.msk [vmem:[%s6 + $0x2c] sm:$0xf] %vm3186, %v3171
  %3199 = vst.msk [vmem:[%s6 + $0x30] sm:$0xf] %vm3186, %v3172
  // Predicated region
  $region26: #{cnn_forward.4} parent=0 // pred_check
    _
  $region27: #{cnn_forward.4} parent=0 // pred_check_branch
    %3201 = sbr.rel (0) target = $region29
  $region28: #{cnn_forward.4} parent=0 // pred_region
    _
  $region29: #{cnn_forward.4} parent=0 // pred_fallthru
    _
  // Predicated region
  $region30: #{cnn_forward.4} parent=0 // pred_check
    _
  $region31: #{cnn_forward.4} parent=0 // pred_check_branch
    %3203 = sbr.rel (0) target = $region33
  $region32: #{cnn_forward.4} parent=0 // pred_region
    _
  $region33: #{cnn_forward.4} parent=0 // pred_fallthru
    _

// kernel: cnn_forward.5
$region0: #{cnn_forward.5}
  #allocation0 [shape = 'u32[]', space=smem, size = 0x4, offset = 0x4, fixed_abs, tag = 'smem constant byte address 0x4 - core index']
  #allocation1 [shape = 'u32[144,128]{1,0:T(1,128)}', space=vmem, size = 0x12000, scoped, tag = 'internal scratch']
  %s0 = inlined_call_operand.vmem [shape: bf16[2,3136], index: 0, kind: input, shape index: {}]
  %s1 = inlined_call_operand.vmem [shape: bf16[3136,512], index: 1, kind: input, shape index: {}]
  %s2 = inlined_call_operand.vmem [shape: f32[1,512], index: 2, kind: input, shape index: {}]
  %s3 = inlined_call_operand.vmem [shape: bf16[512,128], index: 3, kind: input, shape index: {}]
  %s4 = inlined_call_operand.vmem [shape: f32[1,128], index: 4, kind: input, shape index: {}]
  %s5 = inlined_call_operand.hbm [shape: f32[2,128], index: 5, kind: output, shape index: {}]
  %s6 = sld [smem:[#allocation0]]
  $region30: #{cnn_forward.5} parent=0
    _
  %s8 = ssub.s32 1, %s6
  %s9 = scalar_select 0, %s8, %s6
  $region1: #{cnn_forward.5} parent=0
    #allocation2 [shape = 'u8[1024]{0}', space=vmem, size = 0x400, scoped, tag = 'output window, operand 0, single buffered']
    #allocation3 [shape = 's32[1]{0}', space=sflag, size = 0x4, scoped, tag = 'scoped memory for cnn_forward.5']
    %10 = vsyncpa [#allocation3], 0
    // Predicated region
    $region2: #{cnn_forward.5} parent=1 // pred_check
      _
    $region3: #{cnn_forward.5} parent=1 // pred_check_branch
      %12 = sbr.rel (0) target = $region5
    $region4: #{cnn_forward.5} parent=1 // pred_region
      _
    $region5: #{cnn_forward.5} parent=1 // pred_fallthru
      _
    // Predicated region
    $region6: #{cnn_forward.5} parent=1 // pred_check
      _
    $region7: #{cnn_forward.5} parent=1 // pred_check_branch
      %14 = sbr.rel (0) target = $region9
    $region8: #{cnn_forward.5} parent=1 // pred_region
      _
    $region9: #{cnn_forward.5} parent=1 // pred_fallthru
      _
    // Predicated region
    $region10: #{cnn_forward.5} parent=1 // pred_check
      _
    $region11: #{cnn_forward.5} parent=1 // pred_check_branch
      %16 = sbr.rel (0) target = $region13
    $region12: #{cnn_forward.5} parent=1 // pred_region
      _
    $region13: #{cnn_forward.5} parent=1 // pred_fallthru
      _
    // Predicated region
    $region14: #{cnn_forward.5} parent=1 // pred_check
      _
    $region15: #{cnn_forward.5} parent=1 // pred_check_branch
      %18 = sbr.rel (0) target = $region17
    $region16: #{cnn_forward.5} parent=1 // pred_region
      _
    $region17: #{cnn_forward.5} parent=1 // pred_fallthru
      _
    // Predicated region
    $region18: #{cnn_forward.5} parent=1 // pred_check
      _
    $region19: #{cnn_forward.5} parent=1 // pred_check_branch
      %20 = sbr.rel (0) target = $region21
    $region20: #{cnn_forward.5} parent=1 // pred_region
      _
    $region21: #{cnn_forward.5} parent=1 // pred_fallthru
      _
    %v22 = vld [vmem:[%s0] sm:$0xff]
    %v23 = vld [vmem:[%s0 + $0x8] sm:$0xff]
    %v24 = vld [vmem:[%s0 + $0x10] sm:$0xff]
    %v25 = vld [vmem:[%s0 + $0x18] sm:$0x1]
    %v26 = vld [vmem:[%s1] sm:$0xff]
    %v27 = vld [vmem:[%s1 + $0x8] sm:$0xff]
    %v28 = vld [vmem:[%s1 + $0x10] sm:$0xff]
    %v29 = vld [vmem:[%s1 + $0x18] sm:$0xff]
    %v30 = vld [vmem:[%s1 + $0x20] sm:$0xff]
    %v31 = vld [vmem:[%s1 + $0x28] sm:$0xff]
    %v32 = vld [vmem:[%s1 + $0x30] sm:$0xff]
    %v33 = vld [vmem:[%s1 + $0x38] sm:$0xff]
    %v34 = vld [vmem:[%s1 + $0x40] sm:$0xff]
    %v35 = vld [vmem:[%s1 + $0x48] sm:$0xff]
    %v36 = vld [vmem:[%s1 + $0x50] sm:$0xff]
    %v37 = vld [vmem:[%s1 + $0x58] sm:$0xff]
    %v38 = vld [vmem:[%s1 + $0x60] sm:$0xff]
    %v39 = vld [vmem:[%s1 + $0x68] sm:$0xff]
    %v40 = vld [vmem:[%s1 + $0x70] sm:$0xff]
    %v41 = vld [vmem:[%s1 + $0x78] sm:$0xff]
    %v42 = vld [vmem:[%s1 + $0x80] sm:$0xff]
    %v43 = vld [vmem:[%s1 + $0x88] sm:$0xff]
    %v44 = vld [vmem:[%s1 + $0x90] sm:$0xff]
    %v45 = vld [vmem:[%s1 + $0x98] sm:$0xff]
    %v46 = vld [vmem:[%s1 + $0xa0] sm:$0xff]
    %v47 = vld [vmem:[%s1 + $0xa8] sm:$0xff]
    %v48 = vld [vmem:[%s1 + $0xb0] sm:$0xff]
    %v49 = vld [vmem:[%s1 + $0xb8] sm:$0xff]
    %v50 = vld [vmem:[%s1 + $0xc0] sm:$0xff]
    %v51 = vld [vmem:[%s1 + $0xc8] sm:$0xff]
    %v52 = vld [vmem:[%s1 + $0xd0] sm:$0xff]
    %v53 = vld [vmem:[%s1 + $0xd8] sm:$0xff]
    %v54 = vld [vmem:[%s1 + $0xe0] sm:$0xff]
    %v55 = vld [vmem:[%s1 + $0xe8] sm:$0xff]
    %v56 = vld [vmem:[%s1 + $0xf0] sm:$0xff]
    %v57 = vld [vmem:[%s1 + $0xf8] sm:$0xff]
    %v58 = vld [vmem:[%s1 + $0x100] sm:$0xff]
    %v59 = vld [vmem:[%s1 + $0x108] sm:$0xff]
    %v60 = vld [vmem:[%s1 + $0x110] sm:$0xff]
    %v61 = vld [vmem:[%s1 + $0x118] sm:$0xff]
    %v62 = vld [vmem:[%s1 + $0x120] sm:$0xff]
    %v63 = vld [vmem:[%s1 + $0x128] sm:$0xff]
    %v64 = vld [vmem:[%s1 + $0x130] sm:$0xff]
    %v65 = vld [vmem:[%s1 + $0x138] sm:$0xff]
    %v66 = vld [vmem:[%s1 + $0x140] sm:$0xff]
    %v67 = vld [vmem:[%s1 + $0x148] sm:$0xff]
    %v68 = vld [vmem:[%s1 + $0x150] sm:$0xff]
    %v69 = vld [vmem:[%s1 + $0x158] sm:$0xff]
    %v70 = vld [vmem:[%s1 + $0x160] sm:$0xff]
    %v71 = vld [vmem:[%s1 + $0x168] sm:$0xff]
    %v72 = vld [vmem:[%s1 + $0x170] sm:$0xff]
    %v73 = vld [vmem:[%s1 + $0x178] sm:$0xff]
    %v74 = vld [vmem:[%s1 + $0x180] sm:$0xff]
    %v75 = vld [vmem:[%s1 + $0x188] sm:$0xff]
    %v76 = vld [vmem:[%s1 + $0x190] sm:$0xff]
    %v77 = vld [vmem:[%s1 + $0x198] sm:$0xff]
    %v78 = vld [vmem:[%s1 + $0x1a0] sm:$0xff]
    %v79 = vld [vmem:[%s1 + $0x1a8] sm:$0xff]
    %v80 = vld [vmem:[%s1 + $0x1b0] sm:$0xff]
    %v81 = vld [vmem:[%s1 + $0x1b8] sm:$0xff]
    %v82 = vld [vmem:[%s1 + $0x1c0] sm:$0xff]
    %v83 = vld [vmem:[%s1 + $0x1c8] sm:$0xff]
    %v84 = vld [vmem:[%s1 + $0x1d0] sm:$0xff]
    %v85 = vld [vmem:[%s1 + $0x1d8] sm:$0xff]
    %v86 = vld [vmem:[%s1 + $0x1e0] sm:$0xff]
    %v87 = vld [vmem:[%s1 + $0x1e8] sm:$0xff]
    %v88 = vld [vmem:[%s1 + $0x1f0] sm:$0xff]
    %v89 = vld [vmem:[%s1 + $0x1f8] sm:$0xff]
    %v90 = vld [vmem:[%s1 + $0x200] sm:$0xff]
    %v91 = vld [vmem:[%s1 + $0x208] sm:$0xff]
    %v92 = vld [vmem:[%s1 + $0x210] sm:$0xff]
    %v93 = vld [vmem:[%s1 + $0x218] sm:$0xff]
    %v94 = vld [vmem:[%s1 + $0x220] sm:$0xff]
    %v95 = vld [vmem:[%s1 + $0x228] sm:$0xff]
    %v96 = vld [vmem:[%s1 + $0x230] sm:$0xff]
    %v97 = vld [vmem:[%s1 + $0x238] sm:$0xff]
    %v98 = vld [vmem:[%s1 + $0x240] sm:$0xff]
    %v99 = vld [vmem:[%s1 + $0x248] sm:$0xff]
    %v100 = vld [vmem:[%s1 + $0x250] sm:$0xff]
    %v101 = vld [vmem:[%s1 + $0x258] sm:$0xff]
    %v102 = vld [vmem:[%s1 + $0x260] sm:$0xff]
    %v103 = vld [vmem:[%s1 + $0x268] sm:$0xff]
    %v104 = vld [vmem:[%s1 + $0x270] sm:$0xff]
    %v105 = vld [vmem:[%s1 + $0x278] sm:$0xff]
    %v106 = vld [vmem:[%s1 + $0x280] sm:$0xff]
    %v107 = vld [vmem:[%s1 + $0x288] sm:$0xff]
    %v108 = vld [vmem:[%s1 + $0x290] sm:$0xff]
    %v109 = vld [vmem:[%s1 + $0x298] sm:$0xff]
    %v110 = vld [vmem:[%s1 + $0x2a0] sm:$0xff]
    %v111 = vld [vmem:[%s1 + $0x2a8] sm:$0xff]
    %v112 = vld [vmem:[%s1 + $0x2b0] sm:$0xff]
    %v113 = vld [vmem:[%s1 + $0x2b8] sm:$0xff]
    %v114 = vld [vmem:[%s1 + $0x2c0] sm:$0xff]
    %v115 = vld [vmem:[%s1 + $0x2c8] sm:$0xff]
    %v116 = vld [vmem:[%s1 + $0x2d0] sm:$0xff]
    %v117 = vld [vmem:[%s1 + $0x2d8] sm:$0xff]
    %v118 = vld [vmem:[%s1 + $0x2e0] sm:$0xff]
    %v119 = vld [vmem:[%s1 + $0x2e8] sm:$0xff]
    %v120 = vld [vmem:[%s1 + $0x2f0] sm:$0xff]
    %v121 = vld [vmem:[%s1 + $0x2f8] sm:$0xff]
    %v122 = vld [vmem:[%s1 + $0x300] sm:$0xff]
    %v123 = vld [vmem:[%s1 + $0x308] sm:$0xff]
    %v124 = vld [vmem:[%s1 + $0x310] sm:$0xff]
    %v125 = vld [vmem:[%s1 + $0x318] sm:$0xff]
    %v126 = vld [vmem:[%s1 + $0x320] sm:$0xff]
    %v127 = vld [vmem:[%s1 + $0x328] sm:$0xff]
    %v128 = vld [vmem:[%s1 + $0x330] sm:$0xff]
    %v129 = vld [vmem:[%s1 + $0x338] sm:$0xff]
    %v130 = vld [vmem:[%s1 + $0x340] sm:$0xff]
    %v131 = vld [vmem:[%s1 + $0x348] sm:$0xff]
    %v132 = vld [vmem:[%s1 + $0x350] sm:$0xff]
    %v133 = vld [vmem:[%s1 + $0x358] sm:$0xff]
    %v134 = vld [vmem:[%s1 + $0x360] sm:$0xff]
    %v135 = vld [vmem:[%s1 + $0x368] sm:$0xff]
    %v136 = vld [vmem:[%s1 + $0x370] sm:$0xff]
    %v137 = vld [vmem:[%s1 + $0x378] sm:$0xff]
    %v138 = vld [vmem:[%s1 + $0x380] sm:$0xff]
    %v139 = vld [vmem:[%s1 + $0x388] sm:$0xff]
    %v140 = vld [vmem:[%s1 + $0x390] sm:$0xff]
    %v141 = vld [vmem:[%s1 + $0x398] sm:$0xff]
    %v142 = vld [vmem:[%s1 + $0x3a0] sm:$0xff]
    %v143 = vld [vmem:[%s1 + $0x3a8] sm:$0xff]
    %v144 = vld [vmem:[%s1 + $0x3b0] sm:$0xff]
    %v145 = vld [vmem:[%s1 + $0x3b8] sm:$0xff]
    %v146 = vld [vmem:[%s1 + $0x3c0] sm:$0xff]
    %v147 = vld [vmem:[%s1 + $0x3c8] sm:$0xff]
    %v148 = vld [vmem:[%s1 + $0x3d0] sm:$0xff]
    %v149 = vld [vmem:[%s1 + $0x3d8] sm:$0xff]
    %v150 = vld [vmem:[%s1 + $0x3e0] sm:$0xff]
    %v151 = vld [vmem:[%s1 + $0x3e8] sm:$0xff]
    %v152 = vld [vmem:[%s1 + $0x3f0] sm:$0xff]
    %v153 = vld [vmem:[%s1 + $0x3f8] sm:$0xff]
    %v154 = vld [vmem:[%s1 + $0x400] sm:$0xff]
    %v155 = vld [vmem:[%s1 + $0x408] sm:$0xff]
    %v156 = vld [vmem:[%s1 + $0x410] sm:$0xff]
    %v157 = vld [vmem:[%s1 + $0x418] sm:$0xff]
    %v158 = vld [vmem:[%s1 + $0x420] sm:$0xff]
    %v159 = vld [vmem:[%s1 + $0x428] sm:$0xff]
    %v160 = vld [vmem:[%s1 + $0x430] sm:$0xff]
    %v161 = vld [vmem:[%s1 + $0x438] sm:$0xff]
    %v162 = vld [vmem:[%s1 + $0x440] sm:$0xff]
    %v163 = vld [vmem:[%s1 + $0x448] sm:$0xff]
    %v164 = vld [vmem:[%s1 + $0x450] sm:$0xff]
    %v165 = vld [vmem:[%s1 + $0x458] sm:$0xff]
    %v166 = vld [vmem:[%s1 + $0x460] sm:$0xff]
    %v167 = vld [vmem:[%s1 + $0x468] sm:$0xff]
    %v168 = vld [vmem:[%s1 + $0x470] sm:$0xff]
    %v169 = vld [vmem:[%s1 + $0x478] sm:$0xff]
    %v170 = vld [vmem:[%s1 + $0x480] sm:$0xff]
    %v171 = vld [vmem:[%s1 + $0x488] sm:$0xff]
    %v172 = vld [vmem:[%s1 + $0x490] sm:$0xff]
    %v173 = vld [vmem:[%s1 + $0x498] sm:$0xff]
    %v174 = vld [vmem:[%s1 + $0x4a0] sm:$0xff]
    %v175 = vld [vmem:[%s1 + $0x4a8] sm:$0xff]
    %v176 = vld [vmem:[%s1 + $0x4b0] sm:$0xff]
    %v177 = vld [vmem:[%s1 + $0x4b8] sm:$0xff]
    %v178 = vld [vmem:[%s1 + $0x4c0] sm:$0xff]
    %v179 = vld [vmem:[%s1 + $0x4c8] sm:$0xff]
    %v180 = vld [vmem:[%s1 + $0x4d0] sm:$0xff]
    %v181 = vld [vmem:[%s1 + $0x4d8] sm:$0xff]
    %v182 = vld [vmem:[%s1 + $0x4e0] sm:$0xff]
    %v183 = vld [vmem:[%s1 + $0x4e8] sm:$0xff]
    %v184 = vld [vmem:[%s1 + $0x4f0] sm:$0xff]
    %v185 = vld [vmem:[%s1 + $0x4f8] sm:$0xff]
    %v186 = vld [vmem:[%s1 + $0x500] sm:$0xff]
    %v187 = vld [vmem:[%s1 + $0x508] sm:$0xff]
    %v188 = vld [vmem:[%s1 + $0x510] sm:$0xff]
    %v189 = vld [vmem:[%s1 + $0x518] sm:$0xff]
    %v190 = vld [vmem:[%s1 + $0x520] sm:$0xff]
    %v191 = vld [vmem:[%s1 + $0x528] sm:$0xff]
    %v192 = vld [vmem:[%s1 + $0x530] sm:$0xff]
    %v193 = vld [vmem:[%s1 + $0x538] sm:$0xff]
    %v194 = vld [vmem:[%s1 + $0x540] sm:$0xff]
    %v195 = vld [vmem:[%s1 + $0x548] sm:$0xff]
    %v196 = vld [vmem:[%s1 + $0x550] sm:$0xff]
    %v197 = vld [vmem:[%s1 + $0x558] sm:$0xff]
    %v198 = vld [vmem:[%s1 + $0x560] sm:$0xff]
    %v199 = vld [vmem:[%s1 + $0x568] sm:$0xff]
    %v200 = vld [vmem:[%s1 + $0x570] sm:$0xff]
    %v201 = vld [vmem:[%s1 + $0x578] sm:$0xff]
    %v202 = vld [vmem:[%s1 + $0x580] sm:$0xff]
    %v203 = vld [vmem:[%s1 + $0x588] sm:$0xff]
    %v204 = vld [vmem:[%s1 + $0x590] sm:$0xff]
    %v205 = vld [vmem:[%s1 + $0x598] sm:$0xff]
    %v206 = vld [vmem:[%s1 + $0x5a0] sm:$0xff]
    %v207 = vld [vmem:[%s1 + $0x5a8] sm:$0xff]
    %v208 = vld [vmem:[%s1 + $0x5b0] sm:$0xff]
    %v209 = vld [vmem:[%s1 + $0x5b8] sm:$0xff]
    %v210 = vld [vmem:[%s1 + $0x5c0] sm:$0xff]
    %v211 = vld [vmem:[%s1 + $0x5c8] sm:$0xff]
    %v212 = vld [vmem:[%s1 + $0x5d0] sm:$0xff]
    %v213 = vld [vmem:[%s1 + $0x5d8] sm:$0xff]
    %v214 = vld [vmem:[%s1 + $0x5e0] sm:$0xff]
    %v215 = vld [vmem:[%s1 + $0x5e8] sm:$0xff]
    %v216 = vld [vmem:[%s1 + $0x5f0] sm:$0xff]
    %v217 = vld [vmem:[%s1 + $0x5f8] sm:$0xff]
    %v218 = vld [vmem:[%s1 + $0x600] sm:$0xff]
    %v219 = vld [vmem:[%s1 + $0x608] sm:$0xff]
    %v220 = vld [vmem:[%s1 + $0x610] sm:$0xff]
    %v221 = vld [vmem:[%s1 + $0x618] sm:$0xff]
    %v222 = vld [vmem:[%s1 + $0x620] sm:$0xff]
    %v223 = vld [vmem:[%s1 + $0x628] sm:$0xff]
    %v224 = vld [vmem:[%s1 + $0x630] sm:$0xff]
    %v225 = vld [vmem:[%s1 + $0x638] sm:$0xff]
    %v226 = vld [vmem:[%s1 + $0x640] sm:$0xff]
    %v227 = vld [vmem:[%s1 + $0x648] sm:$0xff]
    %v228 = vld [vmem:[%s1 + $0x650] sm:$0xff]
    %v229 = vld [vmem:[%s1 + $0x658] sm:$0xff]
    %v230 = vld [vmem:[%s1 + $0x660] sm:$0xff]
    %v231 = vld [vmem:[%s1 + $0x668] sm:$0xff]
    %v232 = vld [vmem:[%s1 + $0x670] sm:$0xff]
    %v233 = vld [vmem:[%s1 + $0x678] sm:$0xff]
    %v234 = vld [vmem:[%s1 + $0x680] sm:$0xff]
    %v235 = vld [vmem:[%s1 + $0x688] sm:$0xff]
    %v236 = vld [vmem:[%s1 + $0x690] sm:$0xff]
    %v237 = vld [vmem:[%s1 + $0x698] sm:$0xff]
    %v238 = vld [vmem:[%s1 + $0x6a0] sm:$0xff]
    %v239 = vld [vmem:[%s1 + $0x6a8] sm:$0xff]
    %v240 = vld [vmem:[%s1 + $0x6b0] sm:$0xff]
    %v241 = vld [vmem:[%s1 + $0x6b8] sm:$0xff]
    %v242 = vld [vmem:[%s1 + $0x6c0] sm:$0xff]
    %v243 = vld [vmem:[%s1 + $0x6c8] sm:$0xff]
    %v244 = vld [vmem:[%s1 + $0x6d0] sm:$0xff]
    %v245 = vld [vmem:[%s1 + $0x6d8] sm:$0xff]
    %v246 = vld [vmem:[%s1 + $0x6e0] sm:$0xff]
    %v247 = vld [vmem:[%s1 + $0x6e8] sm:$0xff]
    %v248 = vld [vmem:[%s1 + $0x6f0] sm:$0xff]
    %v249 = vld [vmem:[%s1 + $0x6f8] sm:$0xff]
    %v250 = vld [vmem:[%s1 + $0x700] sm:$0xff]
    %v251 = vld [vmem:[%s1 + $0x708] sm:$0xff]
    %v252 = vld [vmem:[%s1 + $0x710] sm:$0xff]
    %v253 = vld [vmem:[%s1 + $0x718] sm:$0xff]
    %v254 = vld [vmem:[%s1 + $0x720] sm:$0xff]
    %v255 = vld [vmem:[%s1 + $0x728] sm:$0xff]
    %v256 = vld [vmem:[%s1 + $0x730] sm:$0xff]
    %v257 = vld [vmem:[%s1 + $0x738] sm:$0xff]
    %v258 = vld [vmem:[%s1 + $0x740] sm:$0xff]
    %v259 = vld [vmem:[%s1 + $0x748] sm:$0xff]
    %v260 = vld [vmem:[%s1 + $0x750] sm:$0xff]
    %v261 = vld [vmem:[%s1 + $0x758] sm:$0xff]
    %v262 = vld [vmem:[%s1 + $0x760] sm:$0xff]
    %v263 = vld [vmem:[%s1 + $0x768] sm:$0xff]
    %v264 = vld [vmem:[%s1 + $0x770] sm:$0xff]
    %v265 = vld [vmem:[%s1 + $0x778] sm:$0xff]
    %v266 = vld [vmem:[%s1 + $0x780] sm:$0xff]
    %v267 = vld [vmem:[%s1 + $0x788] sm:$0xff]
    %v268 = vld [vmem:[%s1 + $0x790] sm:$0xff]
    %v269 = vld [vmem:[%s1 + $0x798] sm:$0xff]
    %v270 = vld [vmem:[%s1 + $0x7a0] sm:$0xff]
    %v271 = vld [vmem:[%s1 + $0x7a8] sm:$0xff]
    %v272 = vld [vmem:[%s1 + $0x7b0] sm:$0xff]
    %v273 = vld [vmem:[%s1 + $0x7b8] sm:$0xff]
    %v274 = vld [vmem:[%s1 + $0x7c0] sm:$0xff]
    %v275 = vld [vmem:[%s1 + $0x7c8] sm:$0xff]
    %v276 = vld [vmem:[%s1 + $0x7d0] sm:$0xff]
    %v277 = vld [vmem:[%s1 + $0x7d8] sm:$0xff]
    %v278 = vld [vmem:[%s1 + $0x7e0] sm:$0xff]
    %v279 = vld [vmem:[%s1 + $0x7e8] sm:$0xff]
    %v280 = vld [vmem:[%s1 + $0x7f0] sm:$0xff]
    %v281 = vld [vmem:[%s1 + $0x7f8] sm:$0xff]
    %v282 = vld [vmem:[%s1 + $0x800] sm:$0xff]
    %v283 = vld [vmem:[%s1 + $0x808] sm:$0xff]
    %v284 = vld [vmem:[%s1 + $0x810] sm:$0xff]
    %v285 = vld [vmem:[%s1 + $0x818] sm:$0xff]
    %v286 = vld [vmem:[%s1 + $0x820] sm:$0xff]
    %v287 = vld [vmem:[%s1 + $0x828] sm:$0xff]
    %v288 = vld [vmem:[%s1 + $0x830] sm:$0xff]
    %v289 = vld [vmem:[%s1 + $0x838] sm:$0xff]
    %v290 = vld [vmem:[%s1 + $0x840] sm:$0xff]
    %v291 = vld [vmem:[%s1 + $0x848] sm:$0xff]
    %v292 = vld [vmem:[%s1 + $0x850] sm:$0xff]
    %v293 = vld [vmem:[%s1 + $0x858] sm:$0xff]
    %v294 = vld [vmem:[%s1 + $0x860] sm:$0xff]
    %v295 = vld [vmem:[%s1 + $0x868] sm:$0xff]
    %v296 = vld [vmem:[%s1 + $0x870] sm:$0xff]
    %v297 = vld [vmem:[%s1 + $0x878] sm:$0xff]
    %v298 = vld [vmem:[%s1 + $0x880] sm:$0xff]
    %v299 = vld [vmem:[%s1 + $0x888] sm:$0xff]
    %v300 = vld [vmem:[%s1 + $0x890] sm:$0xff]
    %v301 = vld [vmem:[%s1 + $0x898] sm:$0xff]
    %v302 = vld [vmem:[%s1 + $0x8a0] sm:$0xff]
    %v303 = vld [vmem:[%s1 + $0x8a8] sm:$0xff]
    %v304 = vld [vmem:[%s1 + $0x8b0] sm:$0xff]
    %v305 = vld [vmem:[%s1 + $0x8b8] sm:$0xff]
    %v306 = vld [vmem:[%s1 + $0x8c0] sm:$0xff]
    %v307 = vld [vmem:[%s1 + $0x8c8] sm:$0xff]
    %v308 = vld [vmem:[%s1 + $0x8d0] sm:$0xff]
    %v309 = vld [vmem:[%s1 + $0x8d8] sm:$0xff]
    %v310 = vld [vmem:[%s1 + $0x8e0] sm:$0xff]
    %v311 = vld [vmem:[%s1 + $0x8e8] sm:$0xff]
    %v312 = vld [vmem:[%s1 + $0x8f0] sm:$0xff]
    %v313 = vld [vmem:[%s1 + $0x8f8] sm:$0xff]
    %v314 = vld [vmem:[%s1 + $0x900] sm:$0xff]
    %v315 = vld [vmem:[%s1 + $0x908] sm:$0xff]
    %v316 = vld [vmem:[%s1 + $0x910] sm:$0xff]
    %v317 = vld [vmem:[%s1 + $0x918] sm:$0xff]
    %v318 = vld [vmem:[%s1 + $0x920] sm:$0xff]
    %v319 = vld [vmem:[%s1 + $0x928] sm:$0xff]
    %v320 = vld [vmem:[%s1 + $0x930] sm:$0xff]
    %v321 = vld [vmem:[%s1 + $0x938] sm:$0xff]
    %v322 = vld [vmem:[%s1 + $0x940] sm:$0xff]
    %v323 = vld [vmem:[%s1 + $0x948] sm:$0xff]
    %v324 = vld [vmem:[%s1 + $0x950] sm:$0xff]
    %v325 = vld [vmem:[%s1 + $0x958] sm:$0xff]
    %v326 = vld [vmem:[%s1 + $0x960] sm:$0xff]
    %v327 = vld [vmem:[%s1 + $0x968] sm:$0xff]
    %v328 = vld [vmem:[%s1 + $0x970] sm:$0xff]
    %v329 = vld [vmem:[%s1 + $0x978] sm:$0xff]
    %v330 = vld [vmem:[%s1 + $0x980] sm:$0xff]
    %v331 = vld [vmem:[%s1 + $0x988] sm:$0xff]
    %v332 = vld [vmem:[%s1 + $0x990] sm:$0xff]
    %v333 = vld [vmem:[%s1 + $0x998] sm:$0xff]
    %v334 = vld [vmem:[%s1 + $0x9a0] sm:$0xff]
    %v335 = vld [vmem:[%s1 + $0x9a8] sm:$0xff]
    %v336 = vld [vmem:[%s1 + $0x9b0] sm:$0xff]
    %v337 = vld [vmem:[%s1 + $0x9b8] sm:$0xff]
    %v338 = vld [vmem:[%s1 + $0x9c0] sm:$0xff]
    %v339 = vld [vmem:[%s1 + $0x9c8] sm:$0xff]
    %v340 = vld [vmem:[%s1 + $0x9d0] sm:$0xff]
    %v341 = vld [vmem:[%s1 + $0x9d8] sm:$0xff]
    %v342 = vld [vmem:[%s1 + $0x9e0] sm:$0xff]
    %v343 = vld [vmem:[%s1 + $0x9e8] sm:$0xff]
    %v344 = vld [vmem:[%s1 + $0x9f0] sm:$0xff]
    %v345 = vld [vmem:[%s1 + $0x9f8] sm:$0xff]
    %v346 = vld [vmem:[%s1 + $0xa00] sm:$0xff]
    %v347 = vld [vmem:[%s1 + $0xa08] sm:$0xff]
    %v348 = vld [vmem:[%s1 + $0xa10] sm:$0xff]
    %v349 = vld [vmem:[%s1 + $0xa18] sm:$0xff]
    %v350 = vld [vmem:[%s1 + $0xa20] sm:$0xff]
    %v351 = vld [vmem:[%s1 + $0xa28] sm:$0xff]
    %v352 = vld [vmem:[%s1 + $0xa30] sm:$0xff]
    %v353 = vld [vmem:[%s1 + $0xa38] sm:$0xff]
    %v354 = vld [vmem:[%s1 + $0xa40] sm:$0xff]
    %v355 = vld [vmem:[%s1 + $0xa48] sm:$0xff]
    %v356 = vld [vmem:[%s1 + $0xa50] sm:$0xff]
    %v357 = vld [vmem:[%s1 + $0xa58] sm:$0xff]
    %v358 = vld [vmem:[%s1 + $0xa60] sm:$0xff]
    %v359 = vld [vmem:[%s1 + $0xa68] sm:$0xff]
    %v360 = vld [vmem:[%s1 + $0xa70] sm:$0xff]
    %v361 = vld [vmem:[%s1 + $0xa78] sm:$0xff]
    %v362 = vld [vmem:[%s1 + $0xa80] sm:$0xff]
    %v363 = vld [vmem:[%s1 + $0xa88] sm:$0xff]
    %v364 = vld [vmem:[%s1 + $0xa90] sm:$0xff]
    %v365 = vld [vmem:[%s1 + $0xa98] sm:$0xff]
    %v366 = vld [vmem:[%s1 + $0xaa0] sm:$0xff]
    %v367 = vld [vmem:[%s1 + $0xaa8] sm:$0xff]
    %v368 = vld [vmem:[%s1 + $0xab0] sm:$0xff]
    %v369 = vld [vmem:[%s1 + $0xab8] sm:$0xff]
    %v370 = vld [vmem:[%s1 + $0xac0] sm:$0xff]
    %v371 = vld [vmem:[%s1 + $0xac8] sm:$0xff]
    %v372 = vld [vmem:[%s1 + $0xad0] sm:$0xff]
    %v373 = vld [vmem:[%s1 + $0xad8] sm:$0xff]
    %v374 = vld [vmem:[%s1 + $0xae0] sm:$0xff]
    %v375 = vld [vmem:[%s1 + $0xae8] sm:$0xff]
    %v376 = vld [vmem:[%s1 + $0xaf0] sm:$0xff]
    %v377 = vld [vmem:[%s1 + $0xaf8] sm:$0xff]
    %v378 = vld [vmem:[%s1 + $0xb00] sm:$0xff]
    %v379 = vld [vmem:[%s1 + $0xb08] sm:$0xff]
    %v380 = vld [vmem:[%s1 + $0xb10] sm:$0xff]
    %v381 = vld [vmem:[%s1 + $0xb18] sm:$0xff]
    %v382 = vld [vmem:[%s1 + $0xb20] sm:$0xff]
    %v383 = vld [vmem:[%s1 + $0xb28] sm:$0xff]
    %v384 = vld [vmem:[%s1 + $0xb30] sm:$0xff]
    %v385 = vld [vmem:[%s1 + $0xb38] sm:$0xff]
    %v386 = vld [vmem:[%s1 + $0xb40] sm:$0xff]
    %v387 = vld [vmem:[%s1 + $0xb48] sm:$0xff]
    %v388 = vld [vmem:[%s1 + $0xb50] sm:$0xff]
    %v389 = vld [vmem:[%s1 + $0xb58] sm:$0xff]
    %v390 = vld [vmem:[%s1 + $0xb60] sm:$0xff]
    %v391 = vld [vmem:[%s1 + $0xb68] sm:$0xff]
    %v392 = vld [vmem:[%s1 + $0xb70] sm:$0xff]
    %v393 = vld [vmem:[%s1 + $0xb78] sm:$0xff]
    %v394 = vld [vmem:[%s1 + $0xb80] sm:$0xff]
    %v395 = vld [vmem:[%s1 + $0xb88] sm:$0xff]
    %v396 = vld [vmem:[%s1 + $0xb90] sm:$0xff]
    %v397 = vld [vmem:[%s1 + $0xb98] sm:$0xff]
    %v398 = vld [vmem:[%s1 + $0xba0] sm:$0xff]
    %v399 = vld [vmem:[%s1 + $0xba8] sm:$0xff]
    %v400 = vld [vmem:[%s1 + $0xbb0] sm:$0xff]
    %v401 = vld [vmem:[%s1 + $0xbb8] sm:$0xff]
    %v402 = vld [vmem:[%s1 + $0xbc0] sm:$0xff]
    %v403 = vld [vmem:[%s1 + $0xbc8] sm:$0xff]
    %v404 = vld [vmem:[%s1 + $0xbd0] sm:$0xff]
    %v405 = vld [vmem:[%s1 + $0xbd8] sm:$0xff]
    %v406 = vld [vmem:[%s1 + $0xbe0] sm:$0xff]
    %v407 = vld [vmem:[%s1 + $0xbe8] sm:$0xff]
    %v408 = vld [vmem:[%s1 + $0xbf0] sm:$0xff]
    %v409 = vld [vmem:[%s1 + $0xbf8] sm:$0xff]
    %v410 = vld [vmem:[%s1 + $0xc00] sm:$0xff]
    %v411 = vld [vmem:[%s1 + $0xc08] sm:$0xff]
    %v412 = vld [vmem:[%s1 + $0xc10] sm:$0xff]
    %v413 = vld [vmem:[%s1 + $0xc18] sm:$0xff]
    %v414 = vld [vmem:[%s1 + $0xc20] sm:$0xff]
    %v415 = vld [vmem:[%s1 + $0xc28] sm:$0xff]
    %v416 = vld [vmem:[%s1 + $0xc30] sm:$0xff]
    %v417 = vld [vmem:[%s1 + $0xc38] sm:$0xff]
    %v418 = vld [vmem:[%s1 + $0xc40] sm:$0xff]
    %v419 = vld [vmem:[%s1 + $0xc48] sm:$0xff]
    %v420 = vld [vmem:[%s1 + $0xc50] sm:$0xff]
    %v421 = vld [vmem:[%s1 + $0xc58] sm:$0xff]
    %v422 = vld [vmem:[%s1 + $0xc60] sm:$0xff]
    %v423 = vld [vmem:[%s1 + $0xc68] sm:$0xff]
    %v424 = vld [vmem:[%s1 + $0xc70] sm:$0xff]
    %v425 = vld [vmem:[%s1 + $0xc78] sm:$0xff]
    %v426 = vld [vmem:[%s1 + $0xc80] sm:$0xff]
    %v427 = vld [vmem:[%s1 + $0xc88] sm:$0xff]
    %v428 = vld [vmem:[%s1 + $0xc90] sm:$0xff]
    %v429 = vld [vmem:[%s1 + $0xc98] sm:$0xff]
    %v430 = vld [vmem:[%s1 + $0xca0] sm:$0xff]
    %v431 = vld [vmem:[%s1 + $0xca8] sm:$0xff]
    %v432 = vld [vmem:[%s1 + $0xcb0] sm:$0xff]
    %v433 = vld [vmem:[%s1 + $0xcb8] sm:$0xff]
    %v434 = vld [vmem:[%s1 + $0xcc0] sm:$0xff]
    %v435 = vld [vmem:[%s1 + $0xcc8] sm:$0xff]
    %v436 = vld [vmem:[%s1 + $0xcd0] sm:$0xff]
    %v437 = vld [vmem:[%s1 + $0xcd8] sm:$0xff]
    %v438 = vld [vmem:[%s1 + $0xce0] sm:$0xff]
    %v439 = vld [vmem:[%s1 + $0xce8] sm:$0xff]
    %v440 = vld [vmem:[%s1 + $0xcf0] sm:$0xff]
    %v441 = vld [vmem:[%s1 + $0xcf8] sm:$0xff]
    %v442 = vld [vmem:[%s1 + $0xd00] sm:$0xff]
    %v443 = vld [vmem:[%s1 + $0xd08] sm:$0xff]
    %v444 = vld [vmem:[%s1 + $0xd10] sm:$0xff]
    %v445 = vld [vmem:[%s1 + $0xd18] sm:$0xff]
    %v446 = vld [vmem:[%s1 + $0xd20] sm:$0xff]
    %v447 = vld [vmem:[%s1 + $0xd28] sm:$0xff]
    %v448 = vld [vmem:[%s1 + $0xd30] sm:$0xff]
    %v449 = vld [vmem:[%s1 + $0xd38] sm:$0xff]
    %v450 = vld [vmem:[%s1 + $0xd40] sm:$0xff]
    %v451 = vld [vmem:[%s1 + $0xd48] sm:$0xff]
    %v452 = vld [vmem:[%s1 + $0xd50] sm:$0xff]
    %v453 = vld [vmem:[%s1 + $0xd58] sm:$0xff]
    %v454 = vld [vmem:[%s1 + $0xd60] sm:$0xff]
    %v455 = vld [vmem:[%s1 + $0xd68] sm:$0xff]
    %v456 = vld [vmem:[%s1 + $0xd70] sm:$0xff]
    %v457 = vld [vmem:[%s1 + $0xd78] sm:$0xff]
    %v458 = vld [vmem:[%s1 + $0xd80] sm:$0xff]
    %v459 = vld [vmem:[%s1 + $0xd88] sm:$0xff]
    %v460 = vld [vmem:[%s1 + $0xd90] sm:$0xff]
    %v461 = vld [vmem:[%s1 + $0xd98] sm:$0xff]
    %v462 = vld [vmem:[%s1 + $0xda0] sm:$0xff]
    %v463 = vld [vmem:[%s1 + $0xda8] sm:$0xff]
    %v464 = vld [vmem:[%s1 + $0xdb0] sm:$0xff]
    %v465 = vld [vmem:[%s1 + $0xdb8] sm:$0xff]
    %v466 = vld [vmem:[%s1 + $0xdc0] sm:$0xff]
    %v467 = vld [vmem:[%s1 + $0xdc8] sm:$0xff]
    %v468 = vld [vmem:[%s1 + $0xdd0] sm:$0xff]
    %v469 = vld [vmem:[%s1 + $0xdd8] sm:$0xff]
    %v470 = vld [vmem:[%s1 + $0xde0] sm:$0xff]
    %v471 = vld [vmem:[%s1 + $0xde8] sm:$0xff]
    %v472 = vld [vmem:[%s1 + $0xdf0] sm:$0xff]
    %v473 = vld [vmem:[%s1 + $0xdf8] sm:$0xff]
    %v474 = vld [vmem:[%s1 + $0xe00] sm:$0xff]
    %v475 = vld [vmem:[%s1 + $0xe08] sm:$0xff]
    %v476 = vld [vmem:[%s1 + $0xe10] sm:$0xff]
    %v477 = vld [vmem:[%s1 + $0xe18] sm:$0xff]
    %v478 = vld [vmem:[%s1 + $0xe20] sm:$0xff]
    %v479 = vld [vmem:[%s1 + $0xe28] sm:$0xff]
    %v480 = vld [vmem:[%s1 + $0xe30] sm:$0xff]
    %v481 = vld [vmem:[%s1 + $0xe38] sm:$0xff]
    %v482 = vld [vmem:[%s1 + $0xe40] sm:$0xff]
    %v483 = vld [vmem:[%s1 + $0xe48] sm:$0xff]
    %v484 = vld [vmem:[%s1 + $0xe50] sm:$0xff]
    %v485 = vld [vmem:[%s1 + $0xe58] sm:$0xff]
    %v486 = vld [vmem:[%s1 + $0xe60] sm:$0xff]
    %v487 = vld [vmem:[%s1 + $0xe68] sm:$0xff]
    %v488 = vld [vmem:[%s1 + $0xe70] sm:$0xff]
    %v489 = vld [vmem:[%s1 + $0xe78] sm:$0xff]
    %v490 = vld [vmem:[%s1 + $0xe80] sm:$0xff]
    %v491 = vld [vmem:[%s1 + $0xe88] sm:$0xff]
    %v492 = vld [vmem:[%s1 + $0xe90] sm:$0xff]
    %v493 = vld [vmem:[%s1 + $0xe98] sm:$0xff]
    %v494 = vld [vmem:[%s1 + $0xea0] sm:$0xff]
    %v495 = vld [vmem:[%s1 + $0xea8] sm:$0xff]
    %v496 = vld [vmem:[%s1 + $0xeb0] sm:$0xff]
    %v497 = vld [vmem:[%s1 + $0xeb8] sm:$0xff]
    %v498 = vld [vmem:[%s1 + $0xec0] sm:$0xff]
    %v499 = vld [vmem:[%s1 + $0xec8] sm:$0xff]
    %v500 = vld [vmem:[%s1 + $0xed0] sm:$0xff]
    %v501 = vld [vmem:[%s1 + $0xed8] sm:$0xff]
    %v502 = vld [vmem:[%s1 + $0xee0] sm:$0xff]
    %v503 = vld [vmem:[%s1 + $0xee8] sm:$0xff]
    %v504 = vld [vmem:[%s1 + $0xef0] sm:$0xff]
    %v505 = vld [vmem:[%s1 + $0xef8] sm:$0xff]
    %v506 = vld [vmem:[%s1 + $0xf00] sm:$0xff]
    %v507 = vld [vmem:[%s1 + $0xf08] sm:$0xff]
    %v508 = vld [vmem:[%s1 + $0xf10] sm:$0xff]
    %v509 = vld [vmem:[%s1 + $0xf18] sm:$0xff]
    %v510 = vld [vmem:[%s1 + $0xf20] sm:$0xff]
    %v511 = vld [vmem:[%s1 + $0xf28] sm:$0xff]
    %v512 = vld [vmem:[%s1 + $0xf30] sm:$0xff]
    %v513 = vld [vmem:[%s1 + $0xf38] sm:$0xff]
    %v514 = vld [vmem:[%s1 + $0xf40] sm:$0xff]
    %v515 = vld [vmem:[%s1 + $0xf48] sm:$0xff]
    %v516 = vld [vmem:[%s1 + $0xf50] sm:$0xff]
    %v517 = vld [vmem:[%s1 + $0xf58] sm:$0xff]
    %v518 = vld [vmem:[%s1 + $0xf60] sm:$0xff]
    %v519 = vld [vmem:[%s1 + $0xf68] sm:$0xff]
    %v520 = vld [vmem:[%s1 + $0xf70] sm:$0xff]
    %v521 = vld [vmem:[%s1 + $0xf78] sm:$0xff]
    %v522 = vld [vmem:[%s1 + $0xf80] sm:$0xff]
    %v523 = vld [vmem:[%s1 + $0xf88] sm:$0xff]
    %v524 = vld [vmem:[%s1 + $0xf90] sm:$0xff]
    %v525 = vld [vmem:[%s1 + $0xf98] sm:$0xff]
    %v526 = vld [vmem:[%s1 + $0xfa0] sm:$0xff]
    %v527 = vld [vmem:[%s1 + $0xfa8] sm:$0xff]
    %v528 = vld [vmem:[%s1 + $0xfb0] sm:$0xff]
    %v529 = vld [vmem:[%s1 + $0xfb8] sm:$0xff]
    %v530 = vld [vmem:[%s1 + $0xfc0] sm:$0xff]
    %v531 = vld [vmem:[%s1 + $0xfc8] sm:$0xff]
    %v532 = vld [vmem:[%s1 + $0xfd0] sm:$0xff]
    %v533 = vld [vmem:[%s1 + $0xfd8] sm:$0xff]
    %v534 = vld [vmem:[%s1 + $0xfe0] sm:$0xff]
    %v535 = vld [vmem:[%s1 + $0xfe8] sm:$0xff]
    %v536 = vld [vmem:[%s1 + $0xff0] sm:$0xff]
    %v537 = vld [vmem:[%s1 + $0xff8] sm:$0xff]
    %v538 = vld [vmem:[%s1 + $0x1000] sm:$0xff]
    %v539 = vld [vmem:[%s1 + $0x1008] sm:$0xff]
    %v540 = vld [vmem:[%s1 + $0x1010] sm:$0xff]
    %v541 = vld [vmem:[%s1 + $0x1018] sm:$0xff]
    %v542 = vld [vmem:[%s1 + $0x1020] sm:$0xff]
    %v543 = vld [vmem:[%s1 + $0x1028] sm:$0xff]
    %v544 = vld [vmem:[%s1 + $0x1030] sm:$0xff]
    %v545 = vld [vmem:[%s1 + $0x1038] sm:$0xff]
    %v546 = vld [vmem:[%s1 + $0x1040] sm:$0xff]
    %v547 = vld [vmem:[%s1 + $0x1048] sm:$0xff]
    %v548 = vld [vmem:[%s1 + $0x1050] sm:$0xff]
    %v549 = vld [vmem:[%s1 + $0x1058] sm:$0xff]
    %v550 = vld [vmem:[%s1 + $0x1060] sm:$0xff]
    %v551 = vld [vmem:[%s1 + $0x1068] sm:$0xff]
    %v552 = vld [vmem:[%s1 + $0x1070] sm:$0xff]
    %v553 = vld [vmem:[%s1 + $0x1078] sm:$0xff]
    %v554 = vld [vmem:[%s1 + $0x1080] sm:$0xff]
    %v555 = vld [vmem:[%s1 + $0x1088] sm:$0xff]
    %v556 = vld [vmem:[%s1 + $0x1090] sm:$0xff]
    %v557 = vld [vmem:[%s1 + $0x1098] sm:$0xff]
    %v558 = vld [vmem:[%s1 + $0x10a0] sm:$0xff]
    %v559 = vld [vmem:[%s1 + $0x10a8] sm:$0xff]
    %v560 = vld [vmem:[%s1 + $0x10b0] sm:$0xff]
    %v561 = vld [vmem:[%s1 + $0x10b8] sm:$0xff]
    %v562 = vld [vmem:[%s1 + $0x10c0] sm:$0xff]
    %v563 = vld [vmem:[%s1 + $0x10c8] sm:$0xff]
    %v564 = vld [vmem:[%s1 + $0x10d0] sm:$0xff]
    %v565 = vld [vmem:[%s1 + $0x10d8] sm:$0xff]
    %v566 = vld [vmem:[%s1 + $0x10e0] sm:$0xff]
    %v567 = vld [vmem:[%s1 + $0x10e8] sm:$0xff]
    %v568 = vld [vmem:[%s1 + $0x10f0] sm:$0xff]
    %v569 = vld [vmem:[%s1 + $0x10f8] sm:$0xff]
    %v570 = vld [vmem:[%s1 + $0x1100] sm:$0xff]
    %v571 = vld [vmem:[%s1 + $0x1108] sm:$0xff]
    %v572 = vld [vmem:[%s1 + $0x1110] sm:$0xff]
    %v573 = vld [vmem:[%s1 + $0x1118] sm:$0xff]
    %v574 = vld [vmem:[%s1 + $0x1120] sm:$0xff]
    %v575 = vld [vmem:[%s1 + $0x1128] sm:$0xff]
    %v576 = vld [vmem:[%s1 + $0x1130] sm:$0xff]
    %v577 = vld [vmem:[%s1 + $0x1138] sm:$0xff]
    %v578 = vld [vmem:[%s1 + $0x1140] sm:$0xff]
    %v579 = vld [vmem:[%s1 + $0x1148] sm:$0xff]
    %v580 = vld [vmem:[%s1 + $0x1150] sm:$0xff]
    %v581 = vld [vmem:[%s1 + $0x1158] sm:$0xff]
    %v582 = vld [vmem:[%s1 + $0x1160] sm:$0xff]
    %v583 = vld [vmem:[%s1 + $0x1168] sm:$0xff]
    %v584 = vld [vmem:[%s1 + $0x1170] sm:$0xff]
    %v585 = vld [vmem:[%s1 + $0x1178] sm:$0xff]
    %v586 = vld [vmem:[%s1 + $0x1180] sm:$0xff]
    %v587 = vld [vmem:[%s1 + $0x1188] sm:$0xff]
    %v588 = vld [vmem:[%s1 + $0x1190] sm:$0xff]
    %v589 = vld [vmem:[%s1 + $0x1198] sm:$0xff]
    %v590 = vld [vmem:[%s1 + $0x11a0] sm:$0xff]
    %v591 = vld [vmem:[%s1 + $0x11a8] sm:$0xff]
    %v592 = vld [vmem:[%s1 + $0x11b0] sm:$0xff]
    %v593 = vld [vmem:[%s1 + $0x11b8] sm:$0xff]
    %v594 = vld [vmem:[%s1 + $0x11c0] sm:$0xff]
    %v595 = vld [vmem:[%s1 + $0x11c8] sm:$0xff]
    %v596 = vld [vmem:[%s1 + $0x11d0] sm:$0xff]
    %v597 = vld [vmem:[%s1 + $0x11d8] sm:$0xff]
    %v598 = vld [vmem:[%s1 + $0x11e0] sm:$0xff]
    %v599 = vld [vmem:[%s1 + $0x11e8] sm:$0xff]
    %v600 = vld [vmem:[%s1 + $0x11f0] sm:$0xff]
    %v601 = vld [vmem:[%s1 + $0x11f8] sm:$0xff]
    %v602 = vld [vmem:[%s1 + $0x1200] sm:$0xff]
    %v603 = vld [vmem:[%s1 + $0x1208] sm:$0xff]
    %v604 = vld [vmem:[%s1 + $0x1210] sm:$0xff]
    %v605 = vld [vmem:[%s1 + $0x1218] sm:$0xff]
    %v606 = vld [vmem:[%s1 + $0x1220] sm:$0xff]
    %v607 = vld [vmem:[%s1 + $0x1228] sm:$0xff]
    %v608 = vld [vmem:[%s1 + $0x1230] sm:$0xff]
    %v609 = vld [vmem:[%s1 + $0x1238] sm:$0xff]
    %v610 = vld [vmem:[%s1 + $0x1240] sm:$0xff]
    %v611 = vld [vmem:[%s1 + $0x1248] sm:$0xff]
    %v612 = vld [vmem:[%s1 + $0x1250] sm:$0xff]
    %v613 = vld [vmem:[%s1 + $0x1258] sm:$0xff]
    %v614 = vld [vmem:[%s1 + $0x1260] sm:$0xff]
    %v615 = vld [vmem:[%s1 + $0x1268] sm:$0xff]
    %v616 = vld [vmem:[%s1 + $0x1270] sm:$0xff]
    %v617 = vld [vmem:[%s1 + $0x1278] sm:$0xff]
    %v618 = vld [vmem:[%s1 + $0x1280] sm:$0xff]
    %v619 = vld [vmem:[%s1 + $0x1288] sm:$0xff]
    %v620 = vld [vmem:[%s1 + $0x1290] sm:$0xff]
    %v621 = vld [vmem:[%s1 + $0x1298] sm:$0xff]
    %v622 = vld [vmem:[%s1 + $0x12a0] sm:$0xff]
    %v623 = vld [vmem:[%s1 + $0x12a8] sm:$0xff]
    %v624 = vld [vmem:[%s1 + $0x12b0] sm:$0xff]
    %v625 = vld [vmem:[%s1 + $0x12b8] sm:$0xff]
    %v626 = vld [vmem:[%s1 + $0x12c0] sm:$0xff]
    %v627 = vld [vmem:[%s1 + $0x12c8] sm:$0xff]
    %v628 = vld [vmem:[%s1 + $0x12d0] sm:$0xff]
    %v629 = vld [vmem:[%s1 + $0x12d8] sm:$0xff]
    %v630 = vld [vmem:[%s1 + $0x12e0] sm:$0xff]
    %v631 = vld [vmem:[%s1 + $0x12e8] sm:$0xff]
    %v632 = vld [vmem:[%s1 + $0x12f0] sm:$0xff]
    %v633 = vld [vmem:[%s1 + $0x12f8] sm:$0xff]
    %v634 = vld [vmem:[%s1 + $0x1300] sm:$0xff]
    %v635 = vld [vmem:[%s1 + $0x1308] sm:$0xff]
    %v636 = vld [vmem:[%s1 + $0x1310] sm:$0xff]
    %v637 = vld [vmem:[%s1 + $0x1318] sm:$0xff]
    %v638 = vld [vmem:[%s1 + $0x1320] sm:$0xff]
    %v639 = vld [vmem:[%s1 + $0x1328] sm:$0xff]
    %v640 = vld [vmem:[%s1 + $0x1330] sm:$0xff]
    %v641 = vld [vmem:[%s1 + $0x1338] sm:$0xff]
    %v642 = vld [vmem:[%s1 + $0x1340] sm:$0xff]
    %v643 = vld [vmem:[%s1 + $0x1348] sm:$0xff]
    %v644 = vld [vmem:[%s1 + $0x1350] sm:$0xff]
    %v645 = vld [vmem:[%s1 + $0x1358] sm:$0xff]
    %v646 = vld [vmem:[%s1 + $0x1360] sm:$0xff]
    %v647 = vld [vmem:[%s1 + $0x1368] sm:$0xff]
    %v648 = vld [vmem:[%s1 + $0x1370] sm:$0xff]
    %v649 = vld [vmem:[%s1 + $0x1378] sm:$0xff]
    %v650 = vld [vmem:[%s1 + $0x1380] sm:$0xff]
    %v651 = vld [vmem:[%s1 + $0x1388] sm:$0xff]
    %v652 = vld [vmem:[%s1 + $0x1390] sm:$0xff]
    %v653 = vld [vmem:[%s1 + $0x1398] sm:$0xff]
    %v654 = vld [vmem:[%s1 + $0x13a0] sm:$0xff]
    %v655 = vld [vmem:[%s1 + $0x13a8] sm:$0xff]
    %v656 = vld [vmem:[%s1 + $0x13b0] sm:$0xff]
    %v657 = vld [vmem:[%s1 + $0x13b8] sm:$0xff]
    %v658 = vld [vmem:[%s1 + $0x13c0] sm:$0xff]
    %v659 = vld [vmem:[%s1 + $0x13c8] sm:$0xff]
    %v660 = vld [vmem:[%s1 + $0x13d0] sm:$0xff]
    %v661 = vld [vmem:[%s1 + $0x13d8] sm:$0xff]
    %v662 = vld [vmem:[%s1 + $0x13e0] sm:$0xff]
    %v663 = vld [vmem:[%s1 + $0x13e8] sm:$0xff]
    %v664 = vld [vmem:[%s1 + $0x13f0] sm:$0xff]
    %v665 = vld [vmem:[%s1 + $0x13f8] sm:$0xff]
    %v666 = vld [vmem:[%s1 + $0x1400] sm:$0xff]
    %v667 = vld [vmem:[%s1 + $0x1408] sm:$0xff]
    %v668 = vld [vmem:[%s1 + $0x1410] sm:$0xff]
    %v669 = vld [vmem:[%s1 + $0x1418] sm:$0xff]
    %v670 = vld [vmem:[%s1 + $0x1420] sm:$0xff]
    %v671 = vld [vmem:[%s1 + $0x1428] sm:$0xff]
    %v672 = vld [vmem:[%s1 + $0x1430] sm:$0xff]
    %v673 = vld [vmem:[%s1 + $0x1438] sm:$0xff]
    %v674 = vld [vmem:[%s1 + $0x1440] sm:$0xff]
    %v675 = vld [vmem:[%s1 + $0x1448] sm:$0xff]
    %v676 = vld [vmem:[%s1 + $0x1450] sm:$0xff]
    %v677 = vld [vmem:[%s1 + $0x1458] sm:$0xff]
    %v678 = vld [vmem:[%s1 + $0x1460] sm:$0xff]
    %v679 = vld [vmem:[%s1 + $0x1468] sm:$0xff]
    %v680 = vld [vmem:[%s1 + $0x1470] sm:$0xff]
    %v681 = vld [vmem:[%s1 + $0x1478] sm:$0xff]
    %v682 = vld [vmem:[%s1 + $0x1480] sm:$0xff]
    %v683 = vld [vmem:[%s1 + $0x1488] sm:$0xff]
    %v684 = vld [vmem:[%s1 + $0x1490] sm:$0xff]
    %v685 = vld [vmem:[%s1 + $0x1498] sm:$0xff]
    %v686 = vld [vmem:[%s1 + $0x14a0] sm:$0xff]
    %v687 = vld [vmem:[%s1 + $0x14a8] sm:$0xff]
    %v688 = vld [vmem:[%s1 + $0x14b0] sm:$0xff]
    %v689 = vld [vmem:[%s1 + $0x14b8] sm:$0xff]
    %v690 = vld [vmem:[%s1 + $0x14c0] sm:$0xff]
    %v691 = vld [vmem:[%s1 + $0x14c8] sm:$0xff]
    %v692 = vld [vmem:[%s1 + $0x14d0] sm:$0xff]
    %v693 = vld [vmem:[%s1 + $0x14d8] sm:$0xff]
    %v694 = vld [vmem:[%s1 + $0x14e0] sm:$0xff]
    %v695 = vld [vmem:[%s1 + $0x14e8] sm:$0xff]
    %v696 = vld [vmem:[%s1 + $0x14f0] sm:$0xff]
    %v697 = vld [vmem:[%s1 + $0x14f8] sm:$0xff]
    %v698 = vld [vmem:[%s1 + $0x1500] sm:$0xff]
    %v699 = vld [vmem:[%s1 + $0x1508] sm:$0xff]
    %v700 = vld [vmem:[%s1 + $0x1510] sm:$0xff]
    %v701 = vld [vmem:[%s1 + $0x1518] sm:$0xff]
    %v702 = vld [vmem:[%s1 + $0x1520] sm:$0xff]
    %v703 = vld [vmem:[%s1 + $0x1528] sm:$0xff]
    %v704 = vld [vmem:[%s1 + $0x1530] sm:$0xff]
    %v705 = vld [vmem:[%s1 + $0x1538] sm:$0xff]
    %v706 = vld [vmem:[%s1 + $0x1540] sm:$0xff]
    %v707 = vld [vmem:[%s1 + $0x1548] sm:$0xff]
    %v708 = vld [vmem:[%s1 + $0x1550] sm:$0xff]
    %v709 = vld [vmem:[%s1 + $0x1558] sm:$0xff]
    %v710 = vld [vmem:[%s1 + $0x1560] sm:$0xff]
    %v711 = vld [vmem:[%s1 + $0x1568] sm:$0xff]
    %v712 = vld [vmem:[%s1 + $0x1570] sm:$0xff]
    %v713 = vld [vmem:[%s1 + $0x1578] sm:$0xff]
    %v714 = vld [vmem:[%s1 + $0x1580] sm:$0xff]
    %v715 = vld [vmem:[%s1 + $0x1588] sm:$0xff]
    %v716 = vld [vmem:[%s1 + $0x1590] sm:$0xff]
    %v717 = vld [vmem:[%s1 + $0x1598] sm:$0xff]
    %v718 = vld [vmem:[%s1 + $0x15a0] sm:$0xff]
    %v719 = vld [vmem:[%s1 + $0x15a8] sm:$0xff]
    %v720 = vld [vmem:[%s1 + $0x15b0] sm:$0xff]
    %v721 = vld [vmem:[%s1 + $0x15b8] sm:$0xff]
    %v722 = vld [vmem:[%s1 + $0x15c0] sm:$0xff]
    %v723 = vld [vmem:[%s1 + $0x15c8] sm:$0xff]
    %v724 = vld [vmem:[%s1 + $0x15d0] sm:$0xff]
    %v725 = vld [vmem:[%s1 + $0x15d8] sm:$0xff]
    %v726 = vld [vmem:[%s1 + $0x15e0] sm:$0xff]
    %v727 = vld [vmem:[%s1 + $0x15e8] sm:$0xff]
    %v728 = vld [vmem:[%s1 + $0x15f0] sm:$0xff]
    %v729 = vld [vmem:[%s1 + $0x15f8] sm:$0xff]
    %v730 = vld [vmem:[%s1 + $0x1600] sm:$0xff]
    %v731 = vld [vmem:[%s1 + $0x1608] sm:$0xff]
    %v732 = vld [vmem:[%s1 + $0x1610] sm:$0xff]
    %v733 = vld [vmem:[%s1 + $0x1618] sm:$0xff]
    %v734 = vld [vmem:[%s1 + $0x1620] sm:$0xff]
    %v735 = vld [vmem:[%s1 + $0x1628] sm:$0xff]
    %v736 = vld [vmem:[%s1 + $0x1630] sm:$0xff]
    %v737 = vld [vmem:[%s1 + $0x1638] sm:$0xff]
    %v738 = vld [vmem:[%s1 + $0x1640] sm:$0xff]
    %v739 = vld [vmem:[%s1 + $0x1648] sm:$0xff]
    %v740 = vld [vmem:[%s1 + $0x1650] sm:$0xff]
    %v741 = vld [vmem:[%s1 + $0x1658] sm:$0xff]
    %v742 = vld [vmem:[%s1 + $0x1660] sm:$0xff]
    %v743 = vld [vmem:[%s1 + $0x1668] sm:$0xff]
    %v744 = vld [vmem:[%s1 + $0x1670] sm:$0xff]
    %v745 = vld [vmem:[%s1 + $0x1678] sm:$0xff]
    %v746 = vld [vmem:[%s1 + $0x1680] sm:$0xff]
    %v747 = vld [vmem:[%s1 + $0x1688] sm:$0xff]
    %v748 = vld [vmem:[%s1 + $0x1690] sm:$0xff]
    %v749 = vld [vmem:[%s1 + $0x1698] sm:$0xff]
    %v750 = vld [vmem:[%s1 + $0x16a0] sm:$0xff]
    %v751 = vld [vmem:[%s1 + $0x16a8] sm:$0xff]
    %v752 = vld [vmem:[%s1 + $0x16b0] sm:$0xff]
    %v753 = vld [vmem:[%s1 + $0x16b8] sm:$0xff]
    %v754 = vld [vmem:[%s1 + $0x16c0] sm:$0xff]
    %v755 = vld [vmem:[%s1 + $0x16c8] sm:$0xff]
    %v756 = vld [vmem:[%s1 + $0x16d0] sm:$0xff]
    %v757 = vld [vmem:[%s1 + $0x16d8] sm:$0xff]
    %v758 = vld [vmem:[%s1 + $0x16e0] sm:$0xff]
    %v759 = vld [vmem:[%s1 + $0x16e8] sm:$0xff]
    %v760 = vld [vmem:[%s1 + $0x16f0] sm:$0xff]
    %v761 = vld [vmem:[%s1 + $0x16f8] sm:$0xff]
    %v762 = vld [vmem:[%s1 + $0x1700] sm:$0xff]
    %v763 = vld [vmem:[%s1 + $0x1708] sm:$0xff]
    %v764 = vld [vmem:[%s1 + $0x1710] sm:$0xff]
    %v765 = vld [vmem:[%s1 + $0x1718] sm:$0xff]
    %v766 = vld [vmem:[%s1 + $0x1720] sm:$0xff]
    %v767 = vld [vmem:[%s1 + $0x1728] sm:$0xff]
    %v768 = vld [vmem:[%s1 + $0x1730] sm:$0xff]
    %v769 = vld [vmem:[%s1 + $0x1738] sm:$0xff]
    %v770 = vld [vmem:[%s1 + $0x1740] sm:$0xff]
    %v771 = vld [vmem:[%s1 + $0x1748] sm:$0xff]
    %v772 = vld [vmem:[%s1 + $0x1750] sm:$0xff]
    %v773 = vld [vmem:[%s1 + $0x1758] sm:$0xff]
    %v774 = vld [vmem:[%s1 + $0x1760] sm:$0xff]
    %v775 = vld [vmem:[%s1 + $0x1768] sm:$0xff]
    %v776 = vld [vmem:[%s1 + $0x1770] sm:$0xff]
    %v777 = vld [vmem:[%s1 + $0x1778] sm:$0xff]
    %v778 = vld [vmem:[%s1 + $0x1780] sm:$0xff]
    %v779 = vld [vmem:[%s1 + $0x1788] sm:$0xff]
    %v780 = vld [vmem:[%s1 + $0x1790] sm:$0xff]
    %v781 = vld [vmem:[%s1 + $0x1798] sm:$0xff]
    %v782 = vld [vmem:[%s1 + $0x17a0] sm:$0xff]
    %v783 = vld [vmem:[%s1 + $0x17a8] sm:$0xff]
    %v784 = vld [vmem:[%s1 + $0x17b0] sm:$0xff]
    %v785 = vld [vmem:[%s1 + $0x17b8] sm:$0xff]
    %v786 = vld [vmem:[%s1 + $0x17c0] sm:$0xff]
    %v787 = vld [vmem:[%s1 + $0x17c8] sm:$0xff]
    %v788 = vld [vmem:[%s1 + $0x17d0] sm:$0xff]
    %v789 = vld [vmem:[%s1 + $0x17d8] sm:$0xff]
    %v790 = vld [vmem:[%s1 + $0x17e0] sm:$0xff]
    %v791 = vld [vmem:[%s1 + $0x17e8] sm:$0xff]
    %v792 = vld [vmem:[%s1 + $0x17f0] sm:$0xff]
    %v793 = vld [vmem:[%s1 + $0x17f8] sm:$0xff]
    %v794 = vld [vmem:[%s1 + $0x1800] sm:$0xff]
    %v795 = vld [vmem:[%s1 + $0x1808] sm:$0xff]
    %v796 = vld [vmem:[%s1 + $0x1810] sm:$0xff]
    %v797 = vld [vmem:[%s1 + $0x1818] sm:$0xff]
    %v798 = vld [vmem:[%s1 + $0x1820] sm:$0xff]
    %v799 = vld [vmem:[%s1 + $0x1828] sm:$0xff]
    %v800 = vld [vmem:[%s1 + $0x1830] sm:$0xff]
    %v801 = vld [vmem:[%s1 + $0x1838] sm:$0xff]
    %v802 = vld [vmem:[%s1 + $0x1840] sm:$0xff]
    %v803 = vld [vmem:[%s1 + $0x1848] sm:$0xff]
    %v804 = vld [vmem:[%s1 + $0x1850] sm:$0xff]
    %v805 = vld [vmem:[%s1 + $0x1858] sm:$0xff]
    %v806 = vld [vmem:[%s1 + $0x1860] sm:$0xff]
    %v807 = vld [vmem:[%s1 + $0x1868] sm:$0xff]
    %v808 = vld [vmem:[%s1 + $0x1870] sm:$0xff]
    %v809 = vld [vmem:[%s1 + $0x1878] sm:$0xff]
    %v810 = vld [vmem:[%s2] sm:$0xf]
    %v812 = vlaneseq
    %v813 = vshrl.u32 %v812, 7
    %v814 = vsub.s32 0, %v813
    %v815 = vrot.slane %v810, %v814
    %v816 = vlaneseq
    %v817 = vshrl.u32 %v816, 7
    %v818 = vsub.s32 1, %v817
    %v819 = vrot.slane %v810, %v818
    %v820 = vlaneseq
    %v821 = vshrl.u32 %v820, 7
    %v822 = vsub.s32 2, %v821
    %v823 = vrot.slane %v810, %v822
    %v824 = vlaneseq
    %v825 = vshrl.u32 %v824, 7
    %v826 = vsub.s32 3, %v825
    %v827 = vrot.slane %v810, %v826
    %v836 = vcombine.high %v22, %v22
    %v838 = vunpack.c.l.s4 1966171168
    %v839 = vunpack.c.0.s8 %v838
    %v840 = vlaneseq
    %v841 = vshrl.u32 %v840, 7
    %v842 = vsub.s32 %v839, %v841
    %v843 = vrot.slane %v22, %v842
    %v845 = vunpack.c.l.s4 1966171168
    %v846 = vunpack.c.0.s8 %v845
    %v847 = vlaneseq
    %v848 = vshrl.u32 %v847, 7
    %v849 = vsub.s32 %v846, %v848
    %v850 = vrot.slane %v836, %v849
    %v851 = vcombine.high %v843, %v843
    %v852 = vcombine.high %v850, %v850
    %v854 = vunpack.c.l.s4 1966171168
    %v855 = vunpack.c.0.s8 %v854
    %v856 = vlaneseq
    %v857 = vshrl.u32 %v856, 7
    %v858 = vsub.s32 %v855, %v857
    %v859 = vrot.slane %v843, %v858
    %v861 = vunpack.c.l.s4 1966171168
    %v862 = vunpack.c.0.s8 %v861
    %v863 = vlaneseq
    %v864 = vshrl.u32 %v863, 7
    %v865 = vsub.s32 %v862, %v864
    %v866 = vrot.slane %v850, %v865
    %v868 = vunpack.c.l.s4 1966171168
    %v869 = vunpack.c.0.s8 %v868
    %v870 = vlaneseq
    %v871 = vshrl.u32 %v870, 7
    %v872 = vsub.s32 %v869, %v871
    %v873 = vrot.slane %v851, %v872
    %v875 = vunpack.c.l.s4 1966171168
    %v876 = vunpack.c.0.s8 %v875
    %v877 = vlaneseq
    %v878 = vshrl.u32 %v877, 7
    %v879 = vsub.s32 %v876, %v878
    %v880 = vrot.slane %v852, %v879
    %v881 = vcombine.high %v859, %v859
    %v882 = vcombine.high %v866, %v866
    %v883 = vcombine.high %v873, %v873
    %v884 = vcombine.high %v880, %v880
    %v885 = vcombine.high %v23, %v23
    %v887 = vunpack.c.l.s4 1966171168
    %v888 = vunpack.c.0.s8 %v887
    %v889 = vlaneseq
    %v890 = vshrl.u32 %v889, 7
    %v891 = vsub.s32 %v888, %v890
    %v892 = vrot.slane %v23, %v891
    %v894 = vunpack.c.l.s4 1966171168
    %v895 = vunpack.c.0.s8 %v894
    %v896 = vlaneseq
    %v897 = vshrl.u32 %v896, 7
    %v898 = vsub.s32 %v895, %v897
    %v899 = vrot.slane %v885, %v898
    %v900 = vcombine.high %v892, %v892
    %v901 = vcombine.high %v899, %v899
    %v903 = vunpack.c.l.s4 1966171168
    %v904 = vunpack.c.0.s8 %v903
    %v905 = vlaneseq
    %v906 = vshrl.u32 %v905, 7
    %v907 = vsub.s32 %v904, %v906
    %v908 = vrot.slane %v892, %v907
    %v910 = vunpack.c.l.s4 1966171168
    %v911 = vunpack.c.0.s8 %v910
    %v912 = vlaneseq
    %v913 = vshrl.u32 %v912, 7
    %v914 = vsub.s32 %v911, %v913
    %v915 = vrot.slane %v899, %v914
    %v917 = vunpack.c.l.s4 1966171168
    %v918 = vunpack.c.0.s8 %v917
    %v919 = vlaneseq
    %v920 = vshrl.u32 %v919, 7
    %v921 = vsub.s32 %v918, %v920
    %v922 = vrot.slane %v900, %v921
    %v924 = vunpack.c.l.s4 1966171168
    %v925 = vunpack.c.0.s8 %v924
    %v926 = vlaneseq
    %v927 = vshrl.u32 %v926, 7
    %v928 = vsub.s32 %v925, %v927
    %v929 = vrot.slane %v901, %v928
    %v930 = vcombine.high %v908, %v908
    %v931 = vcombine.high %v915, %v915
    %v932 = vcombine.high %v922, %v922
    %v933 = vcombine.high %v929, %v929
    %v934 = vcombine.high %v24, %v24
    %v936 = vunpack.c.l.s4 1966171168
    %v937 = vunpack.c.0.s8 %v936
    %v938 = vlaneseq
    %v939 = vshrl.u32 %v938, 7
    %v940 = vsub.s32 %v937, %v939
    %v941 = vrot.slane %v24, %v940
    %v943 = vunpack.c.l.s4 1966171168
    %v944 = vunpack.c.0.s8 %v943
    %v945 = vlaneseq
    %v946 = vshrl.u32 %v945, 7
    %v947 = vsub.s32 %v944, %v946
    %v948 = vrot.slane %v934, %v947
    %v949 = vcombine.high %v941, %v941
    %v950 = vcombine.high %v948, %v948
    %v952 = vunpack.c.l.s4 1966171168
    %v953 = vunpack.c.0.s8 %v952
    %v954 = vlaneseq
    %v955 = vshrl.u32 %v954, 7
    %v956 = vsub.s32 %v953, %v955
    %v957 = vrot.slane %v941, %v956
    %v959 = vunpack.c.l.s4 1966171168
    %v960 = vunpack.c.0.s8 %v959
    %v961 = vlaneseq
    %v962 = vshrl.u32 %v961, 7
    %v963 = vsub.s32 %v960, %v962
    %v964 = vrot.slane %v948, %v963
    %v966 = vunpack.c.l.s4 1966171168
    %v967 = vunpack.c.0.s8 %v966
    %v968 = vlaneseq
    %v969 = vshrl.u32 %v968, 7
    %v970 = vsub.s32 %v967, %v969
    %v971 = vrot.slane %v949, %v970
    %v973 = vunpack.c.l.s4 1966171168
    %v974 = vunpack.c.0.s8 %v973
    %v975 = vlaneseq
    %v976 = vshrl.u32 %v975, 7
    %v977 = vsub.s32 %v974, %v976
    %v978 = vrot.slane %v950, %v977
    %v979 = vcombine.high %v957, %v957
    %v980 = vcombine.high %v964, %v964
    %v981 = vcombine.high %v971, %v971
    %v982 = vcombine.high %v978, %v978
    %v984 = vunpack.c.l.s4 1966171168
    %v985 = vunpack.c.0.s8 %v984
    %v986 = vlaneseq
    %v987 = vshrl.u32 %v986, 7
    %v988 = vsub.s32 %v985, %v987
    %v989 = vrot.slane %v25, %v988
    %v991 = vunpack.c.l.s4 1966171168
    %v992 = vunpack.c.0.s8 %v991
    %v993 = vlaneseq
    %v994 = vshrl.u32 %v993, 7
    %v995 = vsub.s32 %v992, %v994
    %v996 = vrot.slane %v989, %v995
    %v1805 = vunpack.c.l.b16 %v26
    %v1806 = vunpack.c.h.b16 %v26
    %v1807 = vunpack.c.l.b16 %v27
    %v1808 = vunpack.c.h.b16 %v27
    %v1809 = vunpack.c.l.b16 %v28
    %v1810 = vunpack.c.h.b16 %v28
    %v1811 = vunpack.c.l.b16 %v29
    %v1812 = vunpack.c.h.b16 %v29
    %v1813 = vunpack.c.l.b16 %v30
    %v1814 = vunpack.c.h.b16 %v30
    %v1815 = vunpack.c.l.b16 %v31
    %v1816 = vunpack.c.h.b16 %v31
    %v1817 = vunpack.c.l.b16 %v32
    %v1818 = vunpack.c.h.b16 %v32
    %v1819 = vunpack.c.l.b16 %v33
    %v1820 = vunpack.c.h.b16 %v33
    %v1821 = vunpack.c.l.b16 %v34
    %v1822 = vunpack.c.h.b16 %v34
    %v1823 = vunpack.c.l.b16 %v35
    %v1824 = vunpack.c.h.b16 %v35
    %v1825 = vunpack.c.l.b16 %v36
    %v1826 = vunpack.c.h.b16 %v36
    %v1827 = vunpack.c.l.b16 %v37
    %v1828 = vunpack.c.h.b16 %v37
    %v1829 = vunpack.c.l.b16 %v38
    %v1830 = vunpack.c.h.b16 %v38
    %v1831 = vunpack.c.l.b16 %v39
    %v1832 = vunpack.c.h.b16 %v39
    %v1833 = vunpack.c.l.b16 %v40
    %v1834 = vunpack.c.h.b16 %v40
    %v1835 = vunpack.c.l.b16 %v41
    %v1836 = vunpack.c.h.b16 %v41
    %v1837 = vunpack.c.l.b16 %v42
    %v1838 = vunpack.c.h.b16 %v42
    %v1839 = vunpack.c.l.b16 %v43
    %v1840 = vunpack.c.h.b16 %v43
    %v1841 = vunpack.c.l.b16 %v44
    %v1842 = vunpack.c.h.b16 %v44
    %v1843 = vunpack.c.l.b16 %v45
    %v1844 = vunpack.c.h.b16 %v45
    %v1845 = vunpack.c.l.b16 %v46
    %v1846 = vunpack.c.h.b16 %v46
    %v1847 = vunpack.c.l.b16 %v47
    %v1848 = vunpack.c.h.b16 %v47
    %v1849 = vunpack.c.l.b16 %v48
    %v1850 = vunpack.c.h.b16 %v48
    %v1851 = vunpack.c.l.b16 %v49
    %v1852 = vunpack.c.h.b16 %v49
    %v1853 = vunpack.c.l.b16 %v50
    %v1854 = vunpack.c.h.b16 %v50
    %v1855 = vunpack.c.l.b16 %v51
    %v1856 = vunpack.c.h.b16 %v51
    %v1857 = vunpack.c.l.b16 %v52
    %v1858 = vunpack.c.h.b16 %v52
    %v1859 = vunpack.c.l.b16 %v53
    %v1860 = vunpack.c.h.b16 %v53
    %v1861 = vunpack.c.l.b16 %v54
    %v1862 = vunpack.c.h.b16 %v54
    %v1863 = vunpack.c.l.b16 %v55
    %v1864 = vunpack.c.h.b16 %v55
    %v1865 = vunpack.c.l.b16 %v56
    %v1866 = vunpack.c.h.b16 %v56
    %v1867 = vunpack.c.l.b16 %v57
    %v1868 = vunpack.c.h.b16 %v57
    %v1869 = vunpack.c.l.b16 %v58
    %v1870 = vunpack.c.h.b16 %v58
    %v1871 = vunpack.c.l.b16 %v59
    %v1872 = vunpack.c.h.b16 %v59
    %v1873 = vunpack.c.l.b16 %v60
    %v1874 = vunpack.c.h.b16 %v60
    %v1875 = vunpack.c.l.b16 %v61
    %v1876 = vunpack.c.h.b16 %v61
    %v1877 = vunpack.c.l.b16 %v62
    %v1878 = vunpack.c.h.b16 %v62
    %v1879 = vunpack.c.l.b16 %v63
    %v1880 = vunpack.c.h.b16 %v63
    %v1881 = vunpack.c.l.b16 %v64
    %v1882 = vunpack.c.h.b16 %v64
    %v1883 = vunpack.c.l.b16 %v65
    %v1884 = vunpack.c.h.b16 %v65
    %v1885 = vunpack.c.l.b16 %v66
    %v1886 = vunpack.c.h.b16 %v66
    %v1887 = vunpack.c.l.b16 %v67
    %v1888 = vunpack.c.h.b16 %v67
    %v1889 = vunpack.c.l.b16 %v68
    %v1890 = vunpack.c.h.b16 %v68
    %v1891 = vunpack.c.l.b16 %v69
    %v1892 = vunpack.c.h.b16 %v69
    %v1893 = vunpack.c.l.b16 %v70
    %v1894 = vunpack.c.h.b16 %v70
    %v1895 = vunpack.c.l.b16 %v71
    %v1896 = vunpack.c.h.b16 %v71
    %v1897 = vunpack.c.l.b16 %v72
    %v1898 = vunpack.c.h.b16 %v72
    %v1899 = vunpack.c.l.b16 %v73
    %v1900 = vunpack.c.h.b16 %v73
    %v1901 = vunpack.c.l.b16 %v74
    %v1902 = vunpack.c.h.b16 %v74
    %v1903 = vunpack.c.l.b16 %v75
    %v1904 = vunpack.c.h.b16 %v75
    %v1905 = vunpack.c.l.b16 %v76
    %v1906 = vunpack.c.h.b16 %v76
    %v1907 = vunpack.c.l.b16 %v77
    %v1908 = vunpack.c.h.b16 %v77
    %v1909 = vunpack.c.l.b16 %v78
    %v1910 = vunpack.c.h.b16 %v78
    %v1911 = vunpack.c.l.b16 %v79
    %v1912 = vunpack.c.h.b16 %v79
    %v1913 = vunpack.c.l.b16 %v80
    %v1914 = vunpack.c.h.b16 %v80
    %v1915 = vunpack.c.l.b16 %v81
    %v1916 = vunpack.c.h.b16 %v81
    %v1917 = vunpack.c.l.b16 %v82
    %v1918 = vunpack.c.h.b16 %v82
    %v1919 = vunpack.c.l.b16 %v83
    %v1920 = vunpack.c.h.b16 %v83
    %v1921 = vunpack.c.l.b16 %v84
    %v1922 = vunpack.c.h.b16 %v84
    %v1923 = vunpack.c.l.b16 %v85
    %v1924 = vunpack.c.h.b16 %v85
    %v1925 = vunpack.c.l.b16 %v86
    %v1926 = vunpack.c.h.b16 %v86
    %v1927 = vunpack.c.l.b16 %v87
    %v1928 = vunpack.c.h.b16 %v87
    %v1929 = vunpack.c.l.b16 %v88
    %v1930 = vunpack.c.h.b16 %v88
    %v1931 = vunpack.c.l.b16 %v89
    %v1932 = vunpack.c.h.b16 %v89
    %v1933 = vunpack.c.l.b16 %v90
    %v1934 = vunpack.c.h.b16 %v90
    %v1935 = vunpack.c.l.b16 %v91
    %v1936 = vunpack.c.h.b16 %v91
    %v1937 = vunpack.c.l.b16 %v92
    %v1938 = vunpack.c.h.b16 %v92
    %v1939 = vunpack.c.l.b16 %v93
    %v1940 = vunpack.c.h.b16 %v93
    %v1941 = vunpack.c.l.b16 %v94
    %v1942 = vunpack.c.h.b16 %v94
    %v1943 = vunpack.c.l.b16 %v95
    %v1944 = vunpack.c.h.b16 %v95
    %v1945 = vunpack.c.l.b16 %v96
    %v1946 = vunpack.c.h.b16 %v96
    %v1947 = vunpack.c.l.b16 %v97
    %v1948 = vunpack.c.h.b16 %v97
    %v1949 = vunpack.c.l.b16 %v98
    %v1950 = vunpack.c.h.b16 %v98
    %v1951 = vunpack.c.l.b16 %v99
    %v1952 = vunpack.c.h.b16 %v99
    %v1953 = vunpack.c.l.b16 %v100
    %v1954 = vunpack.c.h.b16 %v100
    %v1955 = vunpack.c.l.b16 %v101
    %v1956 = vunpack.c.h.b16 %v101
    %v1957 = vunpack.c.l.b16 %v102
    %v1958 = vunpack.c.h.b16 %v102
    %v1959 = vunpack.c.l.b16 %v103
    %v1960 = vunpack.c.h.b16 %v103
    %v1961 = vunpack.c.l.b16 %v104
    %v1962 = vunpack.c.h.b16 %v104
    %v1963 = vunpack.c.l.b16 %v105
    %v1964 = vunpack.c.h.b16 %v105
    %v1965 = vunpack.c.l.b16 %v106
    %v1966 = vunpack.c.h.b16 %v106
    %v1967 = vunpack.c.l.b16 %v107
    %v1968 = vunpack.c.h.b16 %v107
    %v1969 = vunpack.c.l.b16 %v108
    %v1970 = vunpack.c.h.b16 %v108
    %v1971 = vunpack.c.l.b16 %v109
    %v1972 = vunpack.c.h.b16 %v109
    %v1973 = vunpack.c.l.b16 %v110
    %v1974 = vunpack.c.h.b16 %v110
    %v1975 = vunpack.c.l.b16 %v111
    %v1976 = vunpack.c.h.b16 %v111
    %v1977 = vunpack.c.l.b16 %v112
    %v1978 = vunpack.c.h.b16 %v112
    %v1979 = vunpack.c.l.b16 %v113
    %v1980 = vunpack.c.h.b16 %v113
    %v1981 = vunpack.c.l.b16 %v114
    %v1982 = vunpack.c.h.b16 %v114
    %v1983 = vunpack.c.l.b16 %v115
    %v1984 = vunpack.c.h.b16 %v115
    %v1985 = vunpack.c.l.b16 %v116
    %v1986 = vunpack.c.h.b16 %v116
    %v1987 = vunpack.c.l.b16 %v117
    %v1988 = vunpack.c.h.b16 %v117
    %v1989 = vunpack.c.l.b16 %v118
    %v1990 = vunpack.c.h.b16 %v118
    %v1991 = vunpack.c.l.b16 %v119
    %v1992 = vunpack.c.h.b16 %v119
    %v1993 = vunpack.c.l.b16 %v120
    %v1994 = vunpack.c.h.b16 %v120
    %v1995 = vunpack.c.l.b16 %v121
    %v1996 = vunpack.c.h.b16 %v121
    %v1997 = vunpack.c.l.b16 %v122
    %v1998 = vunpack.c.h.b16 %v122
    %v1999 = vunpack.c.l.b16 %v123
    %v2000 = vunpack.c.h.b16 %v123
    %v2001 = vunpack.c.l.b16 %v124
    %v2002 = vunpack.c.h.b16 %v124
    %v2003 = vunpack.c.l.b16 %v125
    %v2004 = vunpack.c.h.b16 %v125
    %v2005 = vunpack.c.l.b16 %v126
    %v2006 = vunpack.c.h.b16 %v126
    %v2007 = vunpack.c.l.b16 %v127
    %v2008 = vunpack.c.h.b16 %v127
    %v2009 = vunpack.c.l.b16 %v128
    %v2010 = vunpack.c.h.b16 %v128
    %v2011 = vunpack.c.l.b16 %v129
    %v2012 = vunpack.c.h.b16 %v129
    %v2013 = vunpack.c.l.b16 %v130
    %v2014 = vunpack.c.h.b16 %v130
    %v2015 = vunpack.c.l.b16 %v131
    %v2016 = vunpack.c.h.b16 %v131
    %v2017 = vunpack.c.l.b16 %v132
    %v2018 = vunpack.c.h.b16 %v132
    %v2019 = vunpack.c.l.b16 %v133
    %v2020 = vunpack.c.h.b16 %v133
    %v2021 = vunpack.c.l.b16 %v134
    %v2022 = vunpack.c.h.b16 %v134
    %v2023 = vunpack.c.l.b16 %v135
    %v2024 = vunpack.c.h.b16 %v135
    %v2025 = vunpack.c.l.b16 %v136
    %v2026 = vunpack.c.h.b16 %v136
    %v2027 = vunpack.c.l.b16 %v137
    %v2028 = vunpack.c.h.b16 %v137
    %v2029 = vunpack.c.l.b16 %v138
    %v2030 = vunpack.c.h.b16 %v138
    %v2031 = vunpack.c.l.b16 %v139
    %v2032 = vunpack.c.h.b16 %v139
    %v2033 = vunpack.c.l.b16 %v140
    %v2034 = vunpack.c.h.b16 %v140
    %v2035 = vunpack.c.l.b16 %v141
    %v2036 = vunpack.c.h.b16 %v141
    %v2037 = vunpack.c.l.b16 %v142
    %v2038 = vunpack.c.h.b16 %v142
    %v2039 = vunpack.c.l.b16 %v143
    %v2040 = vunpack.c.h.b16 %v143
    %v2041 = vunpack.c.l.b16 %v144
    %v2042 = vunpack.c.h.b16 %v144
    %v2043 = vunpack.c.l.b16 %v145
    %v2044 = vunpack.c.h.b16 %v145
    %v2045 = vunpack.c.l.b16 %v146
    %v2046 = vunpack.c.h.b16 %v146
    %v2047 = vunpack.c.l.b16 %v147
    %v2048 = vunpack.c.h.b16 %v147
    %v2049 = vunpack.c.l.b16 %v148
    %v2050 = vunpack.c.h.b16 %v148
    %v2051 = vunpack.c.l.b16 %v149
    %v2052 = vunpack.c.h.b16 %v149
    %v2053 = vunpack.c.l.b16 %v150
    %v2054 = vunpack.c.h.b16 %v150
    %v2055 = vunpack.c.l.b16 %v151
    %v2056 = vunpack.c.h.b16 %v151
    %v2057 = vunpack.c.l.b16 %v152
    %v2058 = vunpack.c.h.b16 %v152
    %v2059 = vunpack.c.l.b16 %v153
    %v2060 = vunpack.c.h.b16 %v153
    %v2061 = vunpack.c.l.b16 %v154
    %v2062 = vunpack.c.h.b16 %v154
    %v2063 = vunpack.c.l.b16 %v155
    %v2064 = vunpack.c.h.b16 %v155
    %v2065 = vunpack.c.l.b16 %v156
    %v2066 = vunpack.c.h.b16 %v156
    %v2067 = vunpack.c.l.b16 %v157
    %v2068 = vunpack.c.h.b16 %v157
    %v2069 = vunpack.c.l.b16 %v158
    %v2070 = vunpack.c.h.b16 %v158
    %v2071 = vunpack.c.l.b16 %v159
    %v2072 = vunpack.c.h.b16 %v159
    %v2073 = vunpack.c.l.b16 %v160
    %v2074 = vunpack.c.h.b16 %v160
    %v2075 = vunpack.c.l.b16 %v161
    %v2076 = vunpack.c.h.b16 %v161
    %v2077 = vunpack.c.l.b16 %v162
    %v2078 = vunpack.c.h.b16 %v162
    %v2079 = vunpack.c.l.b16 %v163
    %v2080 = vunpack.c.h.b16 %v163
    %v2081 = vunpack.c.l.b16 %v164
    %v2082 = vunpack.c.h.b16 %v164
    %v2083 = vunpack.c.l.b16 %v165
    %v2084 = vunpack.c.h.b16 %v165
    %v2085 = vunpack.c.l.b16 %v166
    %v2086 = vunpack.c.h.b16 %v166
    %v2087 = vunpack.c.l.b16 %v167
    %v2088 = vunpack.c.h.b16 %v167
    %v2089 = vunpack.c.l.b16 %v168
    %v2090 = vunpack.c.h.b16 %v168
    %v2091 = vunpack.c.l.b16 %v169
    %v2092 = vunpack.c.h.b16 %v169
    %v2093 = vunpack.c.l.b16 %v170
    %v2094 = vunpack.c.h.b16 %v170
    %v2095 = vunpack.c.l.b16 %v171
    %v2096 = vunpack.c.h.b16 %v171
    %v2097 = vunpack.c.l.b16 %v172
    %v2098 = vunpack.c.h.b16 %v172
    %v2099 = vunpack.c.l.b16 %v173
    %v2100 = vunpack.c.h.b16 %v173
    %v2101 = vunpack.c.l.b16 %v174
    %v2102 = vunpack.c.h.b16 %v174
    %v2103 = vunpack.c.l.b16 %v175
    %v2104 = vunpack.c.h.b16 %v175
    %v2105 = vunpack.c.l.b16 %v176
    %v2106 = vunpack.c.h.b16 %v176
    %v2107 = vunpack.c.l.b16 %v177
    %v2108 = vunpack.c.h.b16 %v177
    %v2109 = vunpack.c.l.b16 %v178
    %v2110 = vunpack.c.h.b16 %v178
    %v2111 = vunpack.c.l.b16 %v179
    %v2112 = vunpack.c.h.b16 %v179
    %v2113 = vunpack.c.l.b16 %v180
    %v2114 = vunpack.c.h.b16 %v180
    %v2115 = vunpack.c.l.b16 %v181
    %v2116 = vunpack.c.h.b16 %v181
    %v2117 = vunpack.c.l.b16 %v182
    %v2118 = vunpack.c.h.b16 %v182
    %v2119 = vunpack.c.l.b16 %v183
    %v2120 = vunpack.c.h.b16 %v183
    %v2121 = vunpack.c.l.b16 %v184
    %v2122 = vunpack.c.h.b16 %v184
    %v2123 = vunpack.c.l.b16 %v185
    %v2124 = vunpack.c.h.b16 %v185
    %v2125 = vunpack.c.l.b16 %v186
    %v2126 = vunpack.c.h.b16 %v186
    %v2127 = vunpack.c.l.b16 %v187
    %v2128 = vunpack.c.h.b16 %v187
    %v2129 = vunpack.c.l.b16 %v188
    %v2130 = vunpack.c.h.b16 %v188
    %v2131 = vunpack.c.l.b16 %v189
    %v2132 = vunpack.c.h.b16 %v189
    %v2133 = vunpack.c.l.b16 %v190
    %v2134 = vunpack.c.h.b16 %v190
    %v2135 = vunpack.c.l.b16 %v191
    %v2136 = vunpack.c.h.b16 %v191
    %v2137 = vunpack.c.l.b16 %v192
    %v2138 = vunpack.c.h.b16 %v192
    %v2139 = vunpack.c.l.b16 %v193
    %v2140 = vunpack.c.h.b16 %v193
    %v2141 = vunpack.c.l.b16 %v194
    %v2142 = vunpack.c.h.b16 %v194
    %v2143 = vunpack.c.l.b16 %v195
    %v2144 = vunpack.c.h.b16 %v195
    %v2145 = vunpack.c.l.b16 %v196
    %v2146 = vunpack.c.h.b16 %v196
    %v2147 = vunpack.c.l.b16 %v197
    %v2148 = vunpack.c.h.b16 %v197
    %v2149 = vunpack.c.l.b16 %v198
    %v2150 = vunpack.c.h.b16 %v198
    %v2151 = vunpack.c.l.b16 %v199
    %v2152 = vunpack.c.h.b16 %v199
    %v2153 = vunpack.c.l.b16 %v200
    %v2154 = vunpack.c.h.b16 %v200
    %v2155 = vunpack.c.l.b16 %v201
    %v2156 = vunpack.c.h.b16 %v201
    %v2157 = vunpack.c.l.b16 %v202
    %v2158 = vunpack.c.h.b16 %v202
    %v2159 = vunpack.c.l.b16 %v203
    %v2160 = vunpack.c.h.b16 %v203
    %v2161 = vunpack.c.l.b16 %v204
    %v2162 = vunpack.c.h.b16 %v204
    %v2163 = vunpack.c.l.b16 %v205
    %v2164 = vunpack.c.h.b16 %v205
    %v2165 = vunpack.c.l.b16 %v206
    %v2166 = vunpack.c.h.b16 %v206
    %v2167 = vunpack.c.l.b16 %v207
    %v2168 = vunpack.c.h.b16 %v207
    %v2169 = vunpack.c.l.b16 %v208
    %v2170 = vunpack.c.h.b16 %v208
    %v2171 = vunpack.c.l.b16 %v209
    %v2172 = vunpack.c.h.b16 %v209
    %v2173 = vunpack.c.l.b16 %v210
    %v2174 = vunpack.c.h.b16 %v210
    %v2175 = vunpack.c.l.b16 %v211
    %v2176 = vunpack.c.h.b16 %v211
    %v2177 = vunpack.c.l.b16 %v212
    %v2178 = vunpack.c.h.b16 %v212
    %v2179 = vunpack.c.l.b16 %v213
    %v2180 = vunpack.c.h.b16 %v213
    %v2181 = vunpack.c.l.b16 %v214
    %v2182 = vunpack.c.h.b16 %v214
    %v2183 = vunpack.c.l.b16 %v215
    %v2184 = vunpack.c.h.b16 %v215
    %v2185 = vunpack.c.l.b16 %v216
    %v2186 = vunpack.c.h.b16 %v216
    %v2187 = vunpack.c.l.b16 %v217
    %v2188 = vunpack.c.h.b16 %v217
    %v2189 = vunpack.c.l.b16 %v218
    %v2190 = vunpack.c.h.b16 %v218
    %v2191 = vunpack.c.l.b16 %v219
    %v2192 = vunpack.c.h.b16 %v219
    %v2193 = vunpack.c.l.b16 %v220
    %v2194 = vunpack.c.h.b16 %v220
    %v2195 = vunpack.c.l.b16 %v221
    %v2196 = vunpack.c.h.b16 %v221
    %v2197 = vunpack.c.l.b16 %v222
    %v2198 = vunpack.c.h.b16 %v222
    %v2199 = vunpack.c.l.b16 %v223
    %v2200 = vunpack.c.h.b16 %v223
    %v2201 = vunpack.c.l.b16 %v224
    %v2202 = vunpack.c.h.b16 %v224
    %v2203 = vunpack.c.l.b16 %v225
    %v2204 = vunpack.c.h.b16 %v225
    %v2205 = vunpack.c.l.b16 %v226
    %v2206 = vunpack.c.h.b16 %v226
    %v2207 = vunpack.c.l.b16 %v227
    %v2208 = vunpack.c.h.b16 %v227
    %v2209 = vunpack.c.l.b16 %v228
    %v2210 = vunpack.c.h.b16 %v228
    %v2211 = vunpack.c.l.b16 %v229
    %v2212 = vunpack.c.h.b16 %v229
    %v2213 = vunpack.c.l.b16 %v230
    %v2214 = vunpack.c.h.b16 %v230
    %v2215 = vunpack.c.l.b16 %v231
    %v2216 = vunpack.c.h.b16 %v231
    %v2217 = vunpack.c.l.b16 %v232
    %v2218 = vunpack.c.h.b16 %v232
    %v2219 = vunpack.c.l.b16 %v233
    %v2220 = vunpack.c.h.b16 %v233
    %v2221 = vunpack.c.l.b16 %v234
    %v2222 = vunpack.c.h.b16 %v234
    %v2223 = vunpack.c.l.b16 %v235
    %v2224 = vunpack.c.h.b16 %v235
    %v2225 = vunpack.c.l.b16 %v236
    %v2226 = vunpack.c.h.b16 %v236
    %v2227 = vunpack.c.l.b16 %v237
    %v2228 = vunpack.c.h.b16 %v237
    %v2229 = vunpack.c.l.b16 %v238
    %v2230 = vunpack.c.h.b16 %v238
    %v2231 = vunpack.c.l.b16 %v239
    %v2232 = vunpack.c.h.b16 %v239
    %v2233 = vunpack.c.l.b16 %v240
    %v2234 = vunpack.c.h.b16 %v240
    %v2235 = vunpack.c.l.b16 %v241
    %v2236 = vunpack.c.h.b16 %v241
    %v2237 = vunpack.c.l.b16 %v242
    %v2238 = vunpack.c.h.b16 %v242
    %v2239 = vunpack.c.l.b16 %v243
    %v2240 = vunpack.c.h.b16 %v243
    %v2241 = vunpack.c.l.b16 %v244
    %v2242 = vunpack.c.h.b16 %v244
    %v2243 = vunpack.c.l.b16 %v245
    %v2244 = vunpack.c.h.b16 %v245
    %v2245 = vunpack.c.l.b16 %v246
    %v2246 = vunpack.c.h.b16 %v246
    %v2247 = vunpack.c.l.b16 %v247
    %v2248 = vunpack.c.h.b16 %v247
    %v2249 = vunpack.c.l.b16 %v248
    %v2250 = vunpack.c.h.b16 %v248
    %v2251 = vunpack.c.l.b16 %v249
    %v2252 = vunpack.c.h.b16 %v249
    %v2253 = vunpack.c.l.b16 %v250
    %v2254 = vunpack.c.h.b16 %v250
    %v2255 = vunpack.c.l.b16 %v251
    %v2256 = vunpack.c.h.b16 %v251
    %v2257 = vunpack.c.l.b16 %v252
    %v2258 = vunpack.c.h.b16 %v252
    %v2259 = vunpack.c.l.b16 %v253
    %v2260 = vunpack.c.h.b16 %v253
    %v2261 = vunpack.c.l.b16 %v254
    %v2262 = vunpack.c.h.b16 %v254
    %v2263 = vunpack.c.l.b16 %v255
    %v2264 = vunpack.c.h.b16 %v255
    %v2265 = vunpack.c.l.b16 %v256
    %v2266 = vunpack.c.h.b16 %v256
    %v2267 = vunpack.c.l.b16 %v257
    %v2268 = vunpack.c.h.b16 %v257
    %v2269 = vunpack.c.l.b16 %v258
    %v2270 = vunpack.c.h.b16 %v258
    %v2271 = vunpack.c.l.b16 %v259
    %v2272 = vunpack.c.h.b16 %v259
    %v2273 = vunpack.c.l.b16 %v260
    %v2274 = vunpack.c.h.b16 %v260
    %v2275 = vunpack.c.l.b16 %v261
    %v2276 = vunpack.c.h.b16 %v261
    %v2277 = vunpack.c.l.b16 %v262
    %v2278 = vunpack.c.h.b16 %v262
    %v2279 = vunpack.c.l.b16 %v263
    %v2280 = vunpack.c.h.b16 %v263
    %v2281 = vunpack.c.l.b16 %v264
    %v2282 = vunpack.c.h.b16 %v264
    %v2283 = vunpack.c.l.b16 %v265
    %v2284 = vunpack.c.h.b16 %v265
    %v2285 = vunpack.c.l.b16 %v266
    %v2286 = vunpack.c.h.b16 %v266
    %v2287 = vunpack.c.l.b16 %v267
    %v2288 = vunpack.c.h.b16 %v267
    %v2289 = vunpack.c.l.b16 %v268
    %v2290 = vunpack.c.h.b16 %v268
    %v2291 = vunpack.c.l.b16 %v269
    %v2292 = vunpack.c.h.b16 %v269
    %v2293 = vunpack.c.l.b16 %v270
    %v2294 = vunpack.c.h.b16 %v270
    %v2295 = vunpack.c.l.b16 %v271
    %v2296 = vunpack.c.h.b16 %v271
    %v2297 = vunpack.c.l.b16 %v272
    %v2298 = vunpack.c.h.b16 %v272
    %v2299 = vunpack.c.l.b16 %v273
    %v2300 = vunpack.c.h.b16 %v273
    %v2301 = vunpack.c.l.b16 %v274
    %v2302 = vunpack.c.h.b16 %v274
    %v2303 = vunpack.c.l.b16 %v275
    %v2304 = vunpack.c.h.b16 %v275
    %v2305 = vunpack.c.l.b16 %v276
    %v2306 = vunpack.c.h.b16 %v276
    %v2307 = vunpack.c.l.b16 %v277
    %v2308 = vunpack.c.h.b16 %v277
    %v2309 = vunpack.c.l.b16 %v278
    %v2310 = vunpack.c.h.b16 %v278
    %v2311 = vunpack.c.l.b16 %v279
    %v2312 = vunpack.c.h.b16 %v279
    %v2313 = vunpack.c.l.b16 %v280
    %v2314 = vunpack.c.h.b16 %v280
    %v2315 = vunpack.c.l.b16 %v281
    %v2316 = vunpack.c.h.b16 %v281
    %v2317 = vunpack.c.l.b16 %v282
    %v2318 = vunpack.c.h.b16 %v282
    %v2319 = vunpack.c.l.b16 %v283
    %v2320 = vunpack.c.h.b16 %v283
    %v2321 = vunpack.c.l.b16 %v284
    %v2322 = vunpack.c.h.b16 %v284
    %v2323 = vunpack.c.l.b16 %v285
    %v2324 = vunpack.c.h.b16 %v285
    %v2325 = vunpack.c.l.b16 %v286
    %v2326 = vunpack.c.h.b16 %v286
    %v2327 = vunpack.c.l.b16 %v287
    %v2328 = vunpack.c.h.b16 %v287
    %v2329 = vunpack.c.l.b16 %v288
    %v2330 = vunpack.c.h.b16 %v288
    %v2331 = vunpack.c.l.b16 %v289
    %v2332 = vunpack.c.h.b16 %v289
    %v2333 = vunpack.c.l.b16 %v290
    %v2334 = vunpack.c.h.b16 %v290
    %v2335 = vunpack.c.l.b16 %v291
    %v2336 = vunpack.c.h.b16 %v291
    %v2337 = vunpack.c.l.b16 %v292
    %v2338 = vunpack.c.h.b16 %v292
    %v2339 = vunpack.c.l.b16 %v293
    %v2340 = vunpack.c.h.b16 %v293
    %v2341 = vunpack.c.l.b16 %v294
    %v2342 = vunpack.c.h.b16 %v294
    %v2343 = vunpack.c.l.b16 %v295
    %v2344 = vunpack.c.h.b16 %v295
    %v2345 = vunpack.c.l.b16 %v296
    %v2346 = vunpack.c.h.b16 %v296
    %v2347 = vunpack.c.l.b16 %v297
    %v2348 = vunpack.c.h.b16 %v297
    %v2349 = vunpack.c.l.b16 %v298
    %v2350 = vunpack.c.h.b16 %v298
    %v2351 = vunpack.c.l.b16 %v299
    %v2352 = vunpack.c.h.b16 %v299
    %v2353 = vunpack.c.l.b16 %v300
    %v2354 = vunpack.c.h.b16 %v300
    %v2355 = vunpack.c.l.b16 %v301
    %v2356 = vunpack.c.h.b16 %v301
    %v2357 = vunpack.c.l.b16 %v302
    %v2358 = vunpack.c.h.b16 %v302
    %v2359 = vunpack.c.l.b16 %v303
    %v2360 = vunpack.c.h.b16 %v303
    %v2361 = vunpack.c.l.b16 %v304
    %v2362 = vunpack.c.h.b16 %v304
    %v2363 = vunpack.c.l.b16 %v305
    %v2364 = vunpack.c.h.b16 %v305
    %v2365 = vunpack.c.l.b16 %v306
    %v2366 = vunpack.c.h.b16 %v306
    %v2367 = vunpack.c.l.b16 %v307
    %v2368 = vunpack.c.h.b16 %v307
    %v2369 = vunpack.c.l.b16 %v308
    %v2370 = vunpack.c.h.b16 %v308
    %v2371 = vunpack.c.l.b16 %v309
    %v2372 = vunpack.c.h.b16 %v309
    %v2373 = vunpack.c.l.b16 %v310
    %v2374 = vunpack.c.h.b16 %v310
    %v2375 = vunpack.c.l.b16 %v311
    %v2376 = vunpack.c.h.b16 %v311
    %v2377 = vunpack.c.l.b16 %v312
    %v2378 = vunpack.c.h.b16 %v312
    %v2379 = vunpack.c.l.b16 %v313
    %v2380 = vunpack.c.h.b16 %v313
    %v2381 = vunpack.c.l.b16 %v314
    %v2382 = vunpack.c.h.b16 %v314
    %v2383 = vunpack.c.l.b16 %v315
    %v2384 = vunpack.c.h.b16 %v315
    %v2385 = vunpack.c.l.b16 %v316
    %v2386 = vunpack.c.h.b16 %v316
    %v2387 = vunpack.c.l.b16 %v317
    %v2388 = vunpack.c.h.b16 %v317
    %v2389 = vunpack.c.l.b16 %v318
    %v2390 = vunpack.c.h.b16 %v318
    %v2391 = vunpack.c.l.b16 %v319
    %v2392 = vunpack.c.h.b16 %v319
    %v2393 = vunpack.c.l.b16 %v320
    %v2394 = vunpack.c.h.b16 %v320
    %v2395 = vunpack.c.l.b16 %v321
    %v2396 = vunpack.c.h.b16 %v321
    %v2397 = vunpack.c.l.b16 %v322
    %v2398 = vunpack.c.h.b16 %v322
    %v2399 = vunpack.c.l.b16 %v323
    %v2400 = vunpack.c.h.b16 %v323
    %v2401 = vunpack.c.l.b16 %v324
    %v2402 = vunpack.c.h.b16 %v324
    %v2403 = vunpack.c.l.b16 %v325
    %v2404 = vunpack.c.h.b16 %v325
    %v2405 = vunpack.c.l.b16 %v326
    %v2406 = vunpack.c.h.b16 %v326
    %v2407 = vunpack.c.l.b16 %v327
    %v2408 = vunpack.c.h.b16 %v327
    %v2409 = vunpack.c.l.b16 %v328
    %v2410 = vunpack.c.h.b16 %v328
    %v2411 = vunpack.c.l.b16 %v329
    %v2412 = vunpack.c.h.b16 %v329
    %v2413 = vunpack.c.l.b16 %v330
    %v2414 = vunpack.c.h.b16 %v330
    %v2415 = vunpack.c.l.b16 %v331
    %v2416 = vunpack.c.h.b16 %v331
    %v2417 = vunpack.c.l.b16 %v332
    %v2418 = vunpack.c.h.b16 %v332
    %v2419 = vunpack.c.l.b16 %v333
    %v2420 = vunpack.c.h.b16 %v333
    %v2421 = vunpack.c.l.b16 %v334
    %v2422 = vunpack.c.h.b16 %v334
    %v2423 = vunpack.c.l.b16 %v335
    %v2424 = vunpack.c.h.b16 %v335
    %v2425 = vunpack.c.l.b16 %v336
    %v2426 = vunpack.c.h.b16 %v336
    %v2427 = vunpack.c.l.b16 %v337
    %v2428 = vunpack.c.h.b16 %v337
    %v2429 = vunpack.c.l.b16 %v338
    %v2430 = vunpack.c.h.b16 %v338
    %v2431 = vunpack.c.l.b16 %v339
    %v2432 = vunpack.c.h.b16 %v339
    %v2433 = vunpack.c.l.b16 %v340
    %v2434 = vunpack.c.h.b16 %v340
    %v2435 = vunpack.c.l.b16 %v341
    %v2436 = vunpack.c.h.b16 %v341
    %v2437 = vunpack.c.l.b16 %v342
    %v2438 = vunpack.c.h.b16 %v342
    %v2439 = vunpack.c.l.b16 %v343
    %v2440 = vunpack.c.h.b16 %v343
    %v2441 = vunpack.c.l.b16 %v344
    %v2442 = vunpack.c.h.b16 %v344
    %v2443 = vunpack.c.l.b16 %v345
    %v2444 = vunpack.c.h.b16 %v345
    %v2445 = vunpack.c.l.b16 %v346
    %v2446 = vunpack.c.h.b16 %v346
    %v2447 = vunpack.c.l.b16 %v347
    %v2448 = vunpack.c.h.b16 %v347
    %v2449 = vunpack.c.l.b16 %v348
    %v2450 = vunpack.c.h.b16 %v348
    %v2451 = vunpack.c.l.b16 %v349
    %v2452 = vunpack.c.h.b16 %v349
    %v2453 = vunpack.c.l.b16 %v350
    %v2454 = vunpack.c.h.b16 %v350
    %v2455 = vunpack.c.l.b16 %v351
    %v2456 = vunpack.c.h.b16 %v351
    %v2457 = vunpack.c.l.b16 %v352
    %v2458 = vunpack.c.h.b16 %v352
    %v2459 = vunpack.c.l.b16 %v353
    %v2460 = vunpack.c.h.b16 %v353
    %v2461 = vunpack.c.l.b16 %v354
    %v2462 = vunpack.c.h.b16 %v354
    %v2463 = vunpack.c.l.b16 %v355
    %v2464 = vunpack.c.h.b16 %v355
    %v2465 = vunpack.c.l.b16 %v356
    %v2466 = vunpack.c.h.b16 %v356
    %v2467 = vunpack.c.l.b16 %v357
    %v2468 = vunpack.c.h.b16 %v357
    %v2469 = vunpack.c.l.b16 %v358
    %v2470 = vunpack.c.h.b16 %v358
    %v2471 = vunpack.c.l.b16 %v359
    %v2472 = vunpack.c.h.b16 %v359
    %v2473 = vunpack.c.l.b16 %v360
    %v2474 = vunpack.c.h.b16 %v360
    %v2475 = vunpack.c.l.b16 %v361
    %v2476 = vunpack.c.h.b16 %v361
    %v2477 = vunpack.c.l.b16 %v362
    %v2478 = vunpack.c.h.b16 %v362
    %v2479 = vunpack.c.l.b16 %v363
    %v2480 = vunpack.c.h.b16 %v363
    %v2481 = vunpack.c.l.b16 %v364
    %v2482 = vunpack.c.h.b16 %v364
    %v2483 = vunpack.c.l.b16 %v365
    %v2484 = vunpack.c.h.b16 %v365
    %v2485 = vunpack.c.l.b16 %v366
    %v2486 = vunpack.c.h.b16 %v366
    %v2487 = vunpack.c.l.b16 %v367
    %v2488 = vunpack.c.h.b16 %v367
    %v2489 = vunpack.c.l.b16 %v368
    %v2490 = vunpack.c.h.b16 %v368
    %v2491 = vunpack.c.l.b16 %v369
    %v2492 = vunpack.c.h.b16 %v369
    %v2493 = vunpack.c.l.b16 %v370
    %v2494 = vunpack.c.h.b16 %v370
    %v2495 = vunpack.c.l.b16 %v371
    %v2496 = vunpack.c.h.b16 %v371
    %v2497 = vunpack.c.l.b16 %v372
    %v2498 = vunpack.c.h.b16 %v372
    %v2499 = vunpack.c.l.b16 %v373
    %v2500 = vunpack.c.h.b16 %v373
    %v2501 = vunpack.c.l.b16 %v374
    %v2502 = vunpack.c.h.b16 %v374
    %v2503 = vunpack.c.l.b16 %v375
    %v2504 = vunpack.c.h.b16 %v375
    %v2505 = vunpack.c.l.b16 %v376
    %v2506 = vunpack.c.h.b16 %v376
    %v2507 = vunpack.c.l.b16 %v377
    %v2508 = vunpack.c.h.b16 %v377
    %v2509 = vunpack.c.l.b16 %v378
    %v2510 = vunpack.c.h.b16 %v378
    %v2511 = vunpack.c.l.b16 %v379
    %v2512 = vunpack.c.h.b16 %v379
    %v2513 = vunpack.c.l.b16 %v380
    %v2514 = vunpack.c.h.b16 %v380
    %v2515 = vunpack.c.l.b16 %v381
    %v2516 = vunpack.c.h.b16 %v381
    %v2517 = vunpack.c.l.b16 %v382
    %v2518 = vunpack.c.h.b16 %v382
    %v2519 = vunpack.c.l.b16 %v383
    %v2520 = vunpack.c.h.b16 %v383
    %v2521 = vunpack.c.l.b16 %v384
    %v2522 = vunpack.c.h.b16 %v384
    %v2523 = vunpack.c.l.b16 %v385
    %v2524 = vunpack.c.h.b16 %v385
    %v2525 = vunpack.c.l.b16 %v386
    %v2526 = vunpack.c.h.b16 %v386
    %v2527 = vunpack.c.l.b16 %v387
    %v2528 = vunpack.c.h.b16 %v387
    %v2529 = vunpack.c.l.b16 %v388
    %v2530 = vunpack.c.h.b16 %v388
    %v2531 = vunpack.c.l.b16 %v389
    %v2532 = vunpack.c.h.b16 %v389
    %v2533 = vunpack.c.l.b16 %v390
    %v2534 = vunpack.c.h.b16 %v390
    %v2535 = vunpack.c.l.b16 %v391
    %v2536 = vunpack.c.h.b16 %v391
    %v2537 = vunpack.c.l.b16 %v392
    %v2538 = vunpack.c.h.b16 %v392
    %v2539 = vunpack.c.l.b16 %v393
    %v2540 = vunpack.c.h.b16 %v393
    %v2541 = vunpack.c.l.b16 %v394
    %v2542 = vunpack.c.h.b16 %v394
    %v2543 = vunpack.c.l.b16 %v395
    %v2544 = vunpack.c.h.b16 %v395
    %v2545 = vunpack.c.l.b16 %v396
    %v2546 = vunpack.c.h.b16 %v396
    %v2547 = vunpack.c.l.b16 %v397
    %v2548 = vunpack.c.h.b16 %v397
    %v2549 = vunpack.c.l.b16 %v398
    %v2550 = vunpack.c.h.b16 %v398
    %v2551 = vunpack.c.l.b16 %v399
    %v2552 = vunpack.c.h.b16 %v399
    %v2553 = vunpack.c.l.b16 %v400
    %v2554 = vunpack.c.h.b16 %v400
    %v2555 = vunpack.c.l.b16 %v401
    %v2556 = vunpack.c.h.b16 %v401
    %v2557 = vunpack.c.l.b16 %v402
    %v2558 = vunpack.c.h.b16 %v402
    %v2559 = vunpack.c.l.b16 %v403
    %v2560 = vunpack.c.h.b16 %v403
    %v2561 = vunpack.c.l.b16 %v404
    %v2562 = vunpack.c.h.b16 %v404
    %v2563 = vunpack.c.l.b16 %v405
    %v2564 = vunpack.c.h.b16 %v405
    %v2565 = vunpack.c.l.b16 %v406
    %v2566 = vunpack.c.h.b16 %v406
    %v2567 = vunpack.c.l.b16 %v407
    %v2568 = vunpack.c.h.b16 %v407
    %v2569 = vunpack.c.l.b16 %v408
    %v2570 = vunpack.c.h.b16 %v408
    %v2571 = vunpack.c.l.b16 %v409
    %v2572 = vunpack.c.h.b16 %v409
    %v2573 = vunpack.c.l.b16 %v410
    %v2574 = vunpack.c.h.b16 %v410
    %v2575 = vunpack.c.l.b16 %v411
    %v2576 = vunpack.c.h.b16 %v411
    %v2577 = vunpack.c.l.b16 %v412
    %v2578 = vunpack.c.h.b16 %v412
    %v2579 = vunpack.c.l.b16 %v413
    %v2580 = vunpack.c.h.b16 %v413
    %v2581 = vunpack.c.l.b16 %v414
    %v2582 = vunpack.c.h.b16 %v414
    %v2583 = vunpack.c.l.b16 %v415
    %v2584 = vunpack.c.h.b16 %v415
    %v2585 = vunpack.c.l.b16 %v416
    %v2586 = vunpack.c.h.b16 %v416
    %v2587 = vunpack.c.l.b16 %v417
    %v2588 = vunpack.c.h.b16 %v417
    %v2589 = vunpack.c.l.b16 %v418
    %v2590 = vunpack.c.h.b16 %v418
    %v2591 = vunpack.c.l.b16 %v419
    %v2592 = vunpack.c.h.b16 %v419
    %v2593 = vunpack.c.l.b16 %v420
    %v2594 = vunpack.c.h.b16 %v420
    %v2595 = vunpack.c.l.b16 %v421
    %v2596 = vunpack.c.h.b16 %v421
    %v2597 = vunpack.c.l.b16 %v422
    %v2598 = vunpack.c.h.b16 %v422
    %v2599 = vunpack.c.l.b16 %v423
    %v2600 = vunpack.c.h.b16 %v423
    %v2601 = vunpack.c.l.b16 %v424
    %v2602 = vunpack.c.h.b16 %v424
    %v2603 = vunpack.c.l.b16 %v425
    %v2604 = vunpack.c.h.b16 %v425
    %v2605 = vunpack.c.l.b16 %v426
    %v2606 = vunpack.c.h.b16 %v426
    %v2607 = vunpack.c.l.b16 %v427
    %v2608 = vunpack.c.h.b16 %v427
    %v2609 = vunpack.c.l.b16 %v428
    %v2610 = vunpack.c.h.b16 %v428
    %v2611 = vunpack.c.l.b16 %v429
    %v2612 = vunpack.c.h.b16 %v429
    %v2613 = vunpack.c.l.b16 %v430
    %v2614 = vunpack.c.h.b16 %v430
    %v2615 = vunpack.c.l.b16 %v431
    %v2616 = vunpack.c.h.b16 %v431
    %v2617 = vunpack.c.l.b16 %v432
    %v2618 = vunpack.c.h.b16 %v432
    %v2619 = vunpack.c.l.b16 %v433
    %v2620 = vunpack.c.h.b16 %v433
    %v2621 = vunpack.c.l.b16 %v434
    %v2622 = vunpack.c.h.b16 %v434
    %v2623 = vunpack.c.l.b16 %v435
    %v2624 = vunpack.c.h.b16 %v435
    %v2625 = vunpack.c.l.b16 %v436
    %v2626 = vunpack.c.h.b16 %v436
    %v2627 = vunpack.c.l.b16 %v437
    %v2628 = vunpack.c.h.b16 %v437
    %v2629 = vunpack.c.l.b16 %v438
    %v2630 = vunpack.c.h.b16 %v438
    %v2631 = vunpack.c.l.b16 %v439
    %v2632 = vunpack.c.h.b16 %v439
    %v2633 = vunpack.c.l.b16 %v440
    %v2634 = vunpack.c.h.b16 %v440
    %v2635 = vunpack.c.l.b16 %v441
    %v2636 = vunpack.c.h.b16 %v441
    %v2637 = vunpack.c.l.b16 %v442
    %v2638 = vunpack.c.h.b16 %v442
    %v2639 = vunpack.c.l.b16 %v443
    %v2640 = vunpack.c.h.b16 %v443
    %v2641 = vunpack.c.l.b16 %v444
    %v2642 = vunpack.c.h.b16 %v444
    %v2643 = vunpack.c.l.b16 %v445
    %v2644 = vunpack.c.h.b16 %v445
    %v2645 = vunpack.c.l.b16 %v446
    %v2646 = vunpack.c.h.b16 %v446
    %v2647 = vunpack.c.l.b16 %v447
    %v2648 = vunpack.c.h.b16 %v447
    %v2649 = vunpack.c.l.b16 %v448
    %v2650 = vunpack.c.h.b16 %v448
    %v2651 = vunpack.c.l.b16 %v449
    %v2652 = vunpack.c.h.b16 %v449
    %v2653 = vunpack.c.l.b16 %v450
    %v2654 = vunpack.c.h.b16 %v450
    %v2655 = vunpack.c.l.b16 %v451
    %v2656 = vunpack.c.h.b16 %v451
    %v2657 = vunpack.c.l.b16 %v452
    %v2658 = vunpack.c.h.b16 %v452
    %v2659 = vunpack.c.l.b16 %v453
    %v2660 = vunpack.c.h.b16 %v453
    %v2661 = vunpack.c.l.b16 %v454
    %v2662 = vunpack.c.h.b16 %v454
    %v2663 = vunpack.c.l.b16 %v455
    %v2664 = vunpack.c.h.b16 %v455
    %v2665 = vunpack.c.l.b16 %v456
    %v2666 = vunpack.c.h.b16 %v456
    %v2667 = vunpack.c.l.b16 %v457
    %v2668 = vunpack.c.h.b16 %v457
    %v2669 = vunpack.c.l.b16 %v458
    %v2670 = vunpack.c.h.b16 %v458
    %v2671 = vunpack.c.l.b16 %v459
    %v2672 = vunpack.c.h.b16 %v459
    %v2673 = vunpack.c.l.b16 %v460
    %v2674 = vunpack.c.h.b16 %v460
    %v2675 = vunpack.c.l.b16 %v461
    %v2676 = vunpack.c.h.b16 %v461
    %v2677 = vunpack.c.l.b16 %v462
    %v2678 = vunpack.c.h.b16 %v462
    %v2679 = vunpack.c.l.b16 %v463
    %v2680 = vunpack.c.h.b16 %v463
    %v2681 = vunpack.c.l.b16 %v464
    %v2682 = vunpack.c.h.b16 %v464
    %v2683 = vunpack.c.l.b16 %v465
    %v2684 = vunpack.c.h.b16 %v465
    %v2685 = vunpack.c.l.b16 %v466
    %v2686 = vunpack.c.h.b16 %v466
    %v2687 = vunpack.c.l.b16 %v467
    %v2688 = vunpack.c.h.b16 %v467
    %v2689 = vunpack.c.l.b16 %v468
    %v2690 = vunpack.c.h.b16 %v468
    %v2691 = vunpack.c.l.b16 %v469
    %v2692 = vunpack.c.h.b16 %v469
    %v2693 = vunpack.c.l.b16 %v470
    %v2694 = vunpack.c.h.b16 %v470
    %v2695 = vunpack.c.l.b16 %v471
    %v2696 = vunpack.c.h.b16 %v471
    %v2697 = vunpack.c.l.b16 %v472
    %v2698 = vunpack.c.h.b16 %v472
    %v2699 = vunpack.c.l.b16 %v473
    %v2700 = vunpack.c.h.b16 %v473
    %v2701 = vunpack.c.l.b16 %v474
    %v2702 = vunpack.c.h.b16 %v474
    %v2703 = vunpack.c.l.b16 %v475
    %v2704 = vunpack.c.h.b16 %v475
    %v2705 = vunpack.c.l.b16 %v476
    %v2706 = vunpack.c.h.b16 %v476
    %v2707 = vunpack.c.l.b16 %v477
    %v2708 = vunpack.c.h.b16 %v477
    %v2709 = vunpack.c.l.b16 %v478
    %v2710 = vunpack.c.h.b16 %v478
    %v2711 = vunpack.c.l.b16 %v479
    %v2712 = vunpack.c.h.b16 %v479
    %v2713 = vunpack.c.l.b16 %v480
    %v2714 = vunpack.c.h.b16 %v480
    %v2715 = vunpack.c.l.b16 %v481
    %v2716 = vunpack.c.h.b16 %v481
    %v2717 = vunpack.c.l.b16 %v482
    %v2718 = vunpack.c.h.b16 %v482
    %v2719 = vunpack.c.l.b16 %v483
    %v2720 = vunpack.c.h.b16 %v483
    %v2721 = vunpack.c.l.b16 %v484
    %v2722 = vunpack.c.h.b16 %v484
    %v2723 = vunpack.c.l.b16 %v485
    %v2724 = vunpack.c.h.b16 %v485
    %v2725 = vunpack.c.l.b16 %v486
    %v2726 = vunpack.c.h.b16 %v486
    %v2727 = vunpack.c.l.b16 %v487
    %v2728 = vunpack.c.h.b16 %v487
    %v2729 = vunpack.c.l.b16 %v488
    %v2730 = vunpack.c.h.b16 %v488
    %v2731 = vunpack.c.l.b16 %v489
    %v2732 = vunpack.c.h.b16 %v489
    %v2733 = vunpack.c.l.b16 %v490
    %v2734 = vunpack.c.h.b16 %v490
    %v2735 = vunpack.c.l.b16 %v491
    %v2736 = vunpack.c.h.b16 %v491
    %v2737 = vunpack.c.l.b16 %v492
    %v2738 = vunpack.c.h.b16 %v492
    %v2739 = vunpack.c.l.b16 %v493
    %v2740 = vunpack.c.h.b16 %v493
    %v2741 = vunpack.c.l.b16 %v494
    %v2742 = vunpack.c.h.b16 %v494
    %v2743 = vunpack.c.l.b16 %v495
    %v2744 = vunpack.c.h.b16 %v495
    %v2745 = vunpack.c.l.b16 %v496
    %v2746 = vunpack.c.h.b16 %v496
    %v2747 = vunpack.c.l.b16 %v497
    %v2748 = vunpack.c.h.b16 %v497
    %v2749 = vunpack.c.l.b16 %v498
    %v2750 = vunpack.c.h.b16 %v498
    %v2751 = vunpack.c.l.b16 %v499
    %v2752 = vunpack.c.h.b16 %v499
    %v2753 = vunpack.c.l.b16 %v500
    %v2754 = vunpack.c.h.b16 %v500
    %v2755 = vunpack.c.l.b16 %v501
    %v2756 = vunpack.c.h.b16 %v501
    %v2757 = vunpack.c.l.b16 %v502
    %v2758 = vunpack.c.h.b16 %v502
    %v2759 = vunpack.c.l.b16 %v503
    %v2760 = vunpack.c.h.b16 %v503
    %v2761 = vunpack.c.l.b16 %v504
    %v2762 = vunpack.c.h.b16 %v504
    %v2763 = vunpack.c.l.b16 %v505
    %v2764 = vunpack.c.h.b16 %v505
    %v2765 = vunpack.c.l.b16 %v506
    %v2766 = vunpack.c.h.b16 %v506
    %v2767 = vunpack.c.l.b16 %v507
    %v2768 = vunpack.c.h.b16 %v507
    %v2769 = vunpack.c.l.b16 %v508
    %v2770 = vunpack.c.h.b16 %v508
    %v2771 = vunpack.c.l.b16 %v509
    %v2772 = vunpack.c.h.b16 %v509
    %v2773 = vunpack.c.l.b16 %v510
    %v2774 = vunpack.c.h.b16 %v510
    %v2775 = vunpack.c.l.b16 %v511
    %v2776 = vunpack.c.h.b16 %v511
    %v2777 = vunpack.c.l.b16 %v512
    %v2778 = vunpack.c.h.b16 %v512
    %v2779 = vunpack.c.l.b16 %v513
    %v2780 = vunpack.c.h.b16 %v513
    %v2781 = vunpack.c.l.b16 %v514
    %v2782 = vunpack.c.h.b16 %v514
    %v2783 = vunpack.c.l.b16 %v515
    %v2784 = vunpack.c.h.b16 %v515
    %v2785 = vunpack.c.l.b16 %v516
    %v2786 = vunpack.c.h.b16 %v516
    %v2787 = vunpack.c.l.b16 %v517
    %v2788 = vunpack.c.h.b16 %v517
    %v2789 = vunpack.c.l.b16 %v518
    %v2790 = vunpack.c.h.b16 %v518
    %v2791 = vunpack.c.l.b16 %v519
    %v2792 = vunpack.c.h.b16 %v519
    %v2793 = vunpack.c.l.b16 %v520
    %v2794 = vunpack.c.h.b16 %v520
    %v2795 = vunpack.c.l.b16 %v521
    %v2796 = vunpack.c.h.b16 %v521
    %v2797 = vunpack.c.l.b16 %v522
    %v2798 = vunpack.c.h.b16 %v522
    %v2799 = vunpack.c.l.b16 %v523
    %v2800 = vunpack.c.h.b16 %v523
    %v2801 = vunpack.c.l.b16 %v524
    %v2802 = vunpack.c.h.b16 %v524
    %v2803 = vunpack.c.l.b16 %v525
    %v2804 = vunpack.c.h.b16 %v525
    %v2805 = vunpack.c.l.b16 %v526
    %v2806 = vunpack.c.h.b16 %v526
    %v2807 = vunpack.c.l.b16 %v527
    %v2808 = vunpack.c.h.b16 %v527
    %v2809 = vunpack.c.l.b16 %v528
    %v2810 = vunpack.c.h.b16 %v528
    %v2811 = vunpack.c.l.b16 %v529
    %v2812 = vunpack.c.h.b16 %v529
    %v2813 = vunpack.c.l.b16 %v530
    %v2814 = vunpack.c.h.b16 %v530
    %v2815 = vunpack.c.l.b16 %v531
    %v2816 = vunpack.c.h.b16 %v531
    %v2817 = vunpack.c.l.b16 %v532
    %v2818 = vunpack.c.h.b16 %v532
    %v2819 = vunpack.c.l.b16 %v533
    %v2820 = vunpack.c.h.b16 %v533
    %v2821 = vunpack.c.l.b16 %v534
    %v2822 = vunpack.c.h.b16 %v534
    %v2823 = vunpack.c.l.b16 %v535
    %v2824 = vunpack.c.h.b16 %v535
    %v2825 = vunpack.c.l.b16 %v536
    %v2826 = vunpack.c.h.b16 %v536
    %v2827 = vunpack.c.l.b16 %v537
    %v2828 = vunpack.c.h.b16 %v537
    %v2829 = vunpack.c.l.b16 %v538
    %v2830 = vunpack.c.h.b16 %v538
    %v2831 = vunpack.c.l.b16 %v539
    %v2832 = vunpack.c.h.b16 %v539
    %v2833 = vunpack.c.l.b16 %v540
    %v2834 = vunpack.c.h.b16 %v540
    %v2835 = vunpack.c.l.b16 %v541
    %v2836 = vunpack.c.h.b16 %v541
    %v2837 = vunpack.c.l.b16 %v542
    %v2838 = vunpack.c.h.b16 %v542
    %v2839 = vunpack.c.l.b16 %v543
    %v2840 = vunpack.c.h.b16 %v543
    %v2841 = vunpack.c.l.b16 %v544
    %v2842 = vunpack.c.h.b16 %v544
    %v2843 = vunpack.c.l.b16 %v545
    %v2844 = vunpack.c.h.b16 %v545
    %v2845 = vunpack.c.l.b16 %v546
    %v2846 = vunpack.c.h.b16 %v546
    %v2847 = vunpack.c.l.b16 %v547
    %v2848 = vunpack.c.h.b16 %v547
    %v2849 = vunpack.c.l.b16 %v548
    %v2850 = vunpack.c.h.b16 %v548
    %v2851 = vunpack.c.l.b16 %v549
    %v2852 = vunpack.c.h.b16 %v549
    %v2853 = vunpack.c.l.b16 %v550
    %v2854 = vunpack.c.h.b16 %v550
    %v2855 = vunpack.c.l.b16 %v551
    %v2856 = vunpack.c.h.b16 %v551
    %v2857 = vunpack.c.l.b16 %v552
    %v2858 = vunpack.c.h.b16 %v552
    %v2859 = vunpack.c.l.b16 %v553
    %v2860 = vunpack.c.h.b16 %v553
    %v2861 = vunpack.c.l.b16 %v554
    %v2862 = vunpack.c.h.b16 %v554
    %v2863 = vunpack.c.l.b16 %v555
    %v2864 = vunpack.c.h.b16 %v555
    %v2865 = vunpack.c.l.b16 %v556
    %v2866 = vunpack.c.h.b16 %v556
    %v2867 = vunpack.c.l.b16 %v557
    %v2868 = vunpack.c.h.b16 %v557
    %v2869 = vunpack.c.l.b16 %v558
    %v2870 = vunpack.c.h.b16 %v558
    %v2871 = vunpack.c.l.b16 %v559
    %v2872 = vunpack.c.h.b16 %v559
    %v2873 = vunpack.c.l.b16 %v560
    %v2874 = vunpack.c.h.b16 %v560
    %v2875 = vunpack.c.l.b16 %v561
    %v2876 = vunpack.c.h.b16 %v561
    %v2877 = vunpack.c.l.b16 %v562
    %v2878 = vunpack.c.h.b16 %v562
    %v2879 = vunpack.c.l.b16 %v563
    %v2880 = vunpack.c.h.b16 %v563
    %v2881 = vunpack.c.l.b16 %v564
    %v2882 = vunpack.c.h.b16 %v564
    %v2883 = vunpack.c.l.b16 %v565
    %v2884 = vunpack.c.h.b16 %v565
    %v2885 = vunpack.c.l.b16 %v566
    %v2886 = vunpack.c.h.b16 %v566
    %v2887 = vunpack.c.l.b16 %v567
    %v2888 = vunpack.c.h.b16 %v567
    %v2889 = vunpack.c.l.b16 %v568
    %v2890 = vunpack.c.h.b16 %v568
    %v2891 = vunpack.c.l.b16 %v569
    %v2892 = vunpack.c.h.b16 %v569
    %v2893 = vunpack.c.l.b16 %v570
    %v2894 = vunpack.c.h.b16 %v570
    %v2895 = vunpack.c.l.b16 %v571
    %v2896 = vunpack.c.h.b16 %v571
    %v2897 = vunpack.c.l.b16 %v572
    %v2898 = vunpack.c.h.b16 %v572
    %v2899 = vunpack.c.l.b16 %v573
    %v2900 = vunpack.c.h.b16 %v573
    %v2901 = vunpack.c.l.b16 %v574
    %v2902 = vunpack.c.h.b16 %v574
    %v2903 = vunpack.c.l.b16 %v575
    %v2904 = vunpack.c.h.b16 %v575
    %v2905 = vunpack.c.l.b16 %v576
    %v2906 = vunpack.c.h.b16 %v576
    %v2907 = vunpack.c.l.b16 %v577
    %v2908 = vunpack.c.h.b16 %v577
    %v2909 = vunpack.c.l.b16 %v578
    %v2910 = vunpack.c.h.b16 %v578
    %v2911 = vunpack.c.l.b16 %v579
    %v2912 = vunpack.c.h.b16 %v579
    %v2913 = vunpack.c.l.b16 %v580
    %v2914 = vunpack.c.h.b16 %v580
    %v2915 = vunpack.c.l.b16 %v581
    %v2916 = vunpack.c.h.b16 %v581
    %v2917 = vunpack.c.l.b16 %v582
    %v2918 = vunpack.c.h.b16 %v582
    %v2919 = vunpack.c.l.b16 %v583
    %v2920 = vunpack.c.h.b16 %v583
    %v2921 = vunpack.c.l.b16 %v584
    %v2922 = vunpack.c.h.b16 %v584
    %v2923 = vunpack.c.l.b16 %v585
    %v2924 = vunpack.c.h.b16 %v585
    %v2925 = vunpack.c.l.b16 %v586
    %v2926 = vunpack.c.h.b16 %v586
    %v2927 = vunpack.c.l.b16 %v587
    %v2928 = vunpack.c.h.b16 %v587
    %v2929 = vunpack.c.l.b16 %v588
    %v2930 = vunpack.c.h.b16 %v588
    %v2931 = vunpack.c.l.b16 %v589
    %v2932 = vunpack.c.h.b16 %v589
    %v2933 = vunpack.c.l.b16 %v590
    %v2934 = vunpack.c.h.b16 %v590
    %v2935 = vunpack.c.l.b16 %v591
    %v2936 = vunpack.c.h.b16 %v591
    %v2937 = vunpack.c.l.b16 %v592
    %v2938 = vunpack.c.h.b16 %v592
    %v2939 = vunpack.c.l.b16 %v593
    %v2940 = vunpack.c.h.b16 %v593
    %v2941 = vunpack.c.l.b16 %v594
    %v2942 = vunpack.c.h.b16 %v594
    %v2943 = vunpack.c.l.b16 %v595
    %v2944 = vunpack.c.h.b16 %v595
    %v2945 = vunpack.c.l.b16 %v596
    %v2946 = vunpack.c.h.b16 %v596
    %v2947 = vunpack.c.l.b16 %v597
    %v2948 = vunpack.c.h.b16 %v597
    %v2949 = vunpack.c.l.b16 %v598
    %v2950 = vunpack.c.h.b16 %v598
    %v2951 = vunpack.c.l.b16 %v599
    %v2952 = vunpack.c.h.b16 %v599
    %v2953 = vunpack.c.l.b16 %v600
    %v2954 = vunpack.c.h.b16 %v600
    %v2955 = vunpack.c.l.b16 %v601
    %v2956 = vunpack.c.h.b16 %v601
    %v2957 = vunpack.c.l.b16 %v602
    %v2958 = vunpack.c.h.b16 %v602
    %v2959 = vunpack.c.l.b16 %v603
    %v2960 = vunpack.c.h.b16 %v603
    %v2961 = vunpack.c.l.b16 %v604
    %v2962 = vunpack.c.h.b16 %v604
    %v2963 = vunpack.c.l.b16 %v605
    %v2964 = vunpack.c.h.b16 %v605
    %v2965 = vunpack.c.l.b16 %v606
    %v2966 = vunpack.c.h.b16 %v606
    %v2967 = vunpack.c.l.b16 %v607
    %v2968 = vunpack.c.h.b16 %v607
    %v2969 = vunpack.c.l.b16 %v608
    %v2970 = vunpack.c.h.b16 %v608
    %v2971 = vunpack.c.l.b16 %v609
    %v2972 = vunpack.c.h.b16 %v609
    %v2973 = vunpack.c.l.b16 %v610
    %v2974 = vunpack.c.h.b16 %v610
    %v2975 = vunpack.c.l.b16 %v611
    %v2976 = vunpack.c.h.b16 %v611
    %v2977 = vunpack.c.l.b16 %v612
    %v2978 = vunpack.c.h.b16 %v612
    %v2979 = vunpack.c.l.b16 %v613
    %v2980 = vunpack.c.h.b16 %v613
    %v2981 = vunpack.c.l.b16 %v614
    %v2982 = vunpack.c.h.b16 %v614
    %v2983 = vunpack.c.l.b16 %v615
    %v2984 = vunpack.c.h.b16 %v615
    %v2985 = vunpack.c.l.b16 %v616
    %v2986 = vunpack.c.h.b16 %v616
    %v2987 = vunpack.c.l.b16 %v617
    %v2988 = vunpack.c.h.b16 %v617
    %v2989 = vunpack.c.l.b16 %v618
    %v2990 = vunpack.c.h.b16 %v618
    %v2991 = vunpack.c.l.b16 %v619
    %v2992 = vunpack.c.h.b16 %v619
    %v2993 = vunpack.c.l.b16 %v620
    %v2994 = vunpack.c.h.b16 %v620
    %v2995 = vunpack.c.l.b16 %v621
    %v2996 = vunpack.c.h.b16 %v621
    %v2997 = vunpack.c.l.b16 %v622
    %v2998 = vunpack.c.h.b16 %v622
    %v2999 = vunpack.c.l.b16 %v623
    %v3000 = vunpack.c.h.b16 %v623
    %v3001 = vunpack.c.l.b16 %v624
    %v3002 = vunpack.c.h.b16 %v624
    %v3003 = vunpack.c.l.b16 %v625
    %v3004 = vunpack.c.h.b16 %v625
    %v3005 = vunpack.c.l.b16 %v626
    %v3006 = vunpack.c.h.b16 %v626
    %v3007 = vunpack.c.l.b16 %v627
    %v3008 = vunpack.c.h.b16 %v627
    %v3009 = vunpack.c.l.b16 %v628
    %v3010 = vunpack.c.h.b16 %v628
    %v3011 = vunpack.c.l.b16 %v629
    %v3012 = vunpack.c.h.b16 %v629
    %v3013 = vunpack.c.l.b16 %v630
    %v3014 = vunpack.c.h.b16 %v630
    %v3015 = vunpack.c.l.b16 %v631
    %v3016 = vunpack.c.h.b16 %v631
    %v3017 = vunpack.c.l.b16 %v632
    %v3018 = vunpack.c.h.b16 %v632
    %v3019 = vunpack.c.l.b16 %v633
    %v3020 = vunpack.c.h.b16 %v633
    %v3021 = vunpack.c.l.b16 %v634
    %v3022 = vunpack.c.h.b16 %v634
    %v3023 = vunpack.c.l.b16 %v635
    %v3024 = vunpack.c.h.b16 %v635
    %v3025 = vunpack.c.l.b16 %v636
    %v3026 = vunpack.c.h.b16 %v636
    %v3027 = vunpack.c.l.b16 %v637
    %v3028 = vunpack.c.h.b16 %v637
    %v3029 = vunpack.c.l.b16 %v638
    %v3030 = vunpack.c.h.b16 %v638
    %v3031 = vunpack.c.l.b16 %v639
    %v3032 = vunpack.c.h.b16 %v639
    %v3033 = vunpack.c.l.b16 %v640
    %v3034 = vunpack.c.h.b16 %v640
    %v3035 = vunpack.c.l.b16 %v641
    %v3036 = vunpack.c.h.b16 %v641
    %v3037 = vunpack.c.l.b16 %v642
    %v3038 = vunpack.c.h.b16 %v642
    %v3039 = vunpack.c.l.b16 %v643
    %v3040 = vunpack.c.h.b16 %v643
    %v3041 = vunpack.c.l.b16 %v644
    %v3042 = vunpack.c.h.b16 %v644
    %v3043 = vunpack.c.l.b16 %v645
    %v3044 = vunpack.c.h.b16 %v645
    %v3045 = vunpack.c.l.b16 %v646
    %v3046 = vunpack.c.h.b16 %v646
    %v3047 = vunpack.c.l.b16 %v647
    %v3048 = vunpack.c.h.b16 %v647
    %v3049 = vunpack.c.l.b16 %v648
    %v3050 = vunpack.c.h.b16 %v648
    %v3051 = vunpack.c.l.b16 %v649
    %v3052 = vunpack.c.h.b16 %v649
    %v3053 = vunpack.c.l.b16 %v650
    %v3054 = vunpack.c.h.b16 %v650
    %v3055 = vunpack.c.l.b16 %v651
    %v3056 = vunpack.c.h.b16 %v651
    %v3057 = vunpack.c.l.b16 %v652
    %v3058 = vunpack.c.h.b16 %v652
    %v3059 = vunpack.c.l.b16 %v653
    %v3060 = vunpack.c.h.b16 %v653
    %v3061 = vunpack.c.l.b16 %v654
    %v3062 = vunpack.c.h.b16 %v654
    %v3063 = vunpack.c.l.b16 %v655
    %v3064 = vunpack.c.h.b16 %v655
    %v3065 = vunpack.c.l.b16 %v656
    %v3066 = vunpack.c.h.b16 %v656
    %v3067 = vunpack.c.l.b16 %v657
    %v3068 = vunpack.c.h.b16 %v657
    %v3069 = vunpack.c.l.b16 %v658
    %v3070 = vunpack.c.h.b16 %v658
    %v3071 = vunpack.c.l.b16 %v659
    %v3072 = vunpack.c.h.b16 %v659
    %v3073 = vunpack.c.l.b16 %v660
    %v3074 = vunpack.c.h.b16 %v660
    %v3075 = vunpack.c.l.b16 %v661
    %v3076 = vunpack.c.h.b16 %v661
    %v3077 = vunpack.c.l.b16 %v662
    %v3078 = vunpack.c.h.b16 %v662
    %v3079 = vunpack.c.l.b16 %v663
    %v3080 = vunpack.c.h.b16 %v663
    %v3081 = vunpack.c.l.b16 %v664
    %v3082 = vunpack.c.h.b16 %v664
    %v3083 = vunpack.c.l.b16 %v665
    %v3084 = vunpack.c.h.b16 %v665
    %v3085 = vunpack.c.l.b16 %v666
    %v3086 = vunpack.c.h.b16 %v666
    %v3087 = vunpack.c.l.b16 %v667
    %v3088 = vunpack.c.h.b16 %v667
    %v3089 = vunpack.c.l.b16 %v668
    %v3090 = vunpack.c.h.b16 %v668
    %v3091 = vunpack.c.l.b16 %v669
    %v3092 = vunpack.c.h.b16 %v669
    %v3093 = vunpack.c.l.b16 %v670
    %v3094 = vunpack.c.h.b16 %v670
    %v3095 = vunpack.c.l.b16 %v671
    %v3096 = vunpack.c.h.b16 %v671
    %v3097 = vunpack.c.l.b16 %v672
    %v3098 = vunpack.c.h.b16 %v672
    %v3099 = vunpack.c.l.b16 %v673
    %v3100 = vunpack.c.h.b16 %v673
    %v3101 = vunpack.c.l.b16 %v674
    %v3102 = vunpack.c.h.b16 %v674
    %v3103 = vunpack.c.l.b16 %v675
    %v3104 = vunpack.c.h.b16 %v675
    %v3105 = vunpack.c.l.b16 %v676
    %v3106 = vunpack.c.h.b16 %v676
    %v3107 = vunpack.c.l.b16 %v677
    %v3108 = vunpack.c.h.b16 %v677
    %v3109 = vunpack.c.l.b16 %v678
    %v3110 = vunpack.c.h.b16 %v678
    %v3111 = vunpack.c.l.b16 %v679
    %v3112 = vunpack.c.h.b16 %v679
    %v3113 = vunpack.c.l.b16 %v680
    %v3114 = vunpack.c.h.b16 %v680
    %v3115 = vunpack.c.l.b16 %v681
    %v3116 = vunpack.c.h.b16 %v681
    %v3117 = vunpack.c.l.b16 %v682
    %v3118 = vunpack.c.h.b16 %v682
    %v3119 = vunpack.c.l.b16 %v683
    %v3120 = vunpack.c.h.b16 %v683
    %v3121 = vunpack.c.l.b16 %v684
    %v3122 = vunpack.c.h.b16 %v684
    %v3123 = vunpack.c.l.b16 %v685
    %v3124 = vunpack.c.h.b16 %v685
    %v3125 = vunpack.c.l.b16 %v686
    %v3126 = vunpack.c.h.b16 %v686
    %v3127 = vunpack.c.l.b16 %v687
    %v3128 = vunpack.c.h.b16 %v687
    %v3129 = vunpack.c.l.b16 %v688
    %v3130 = vunpack.c.h.b16 %v688
    %v3131 = vunpack.c.l.b16 %v689
    %v3132 = vunpack.c.h.b16 %v689
    %v3133 = vunpack.c.l.b16 %v690
    %v3134 = vunpack.c.h.b16 %v690
    %v3135 = vunpack.c.l.b16 %v691
    %v3136 = vunpack.c.h.b16 %v691
    %v3137 = vunpack.c.l.b16 %v692
    %v3138 = vunpack.c.h.b16 %v692
    %v3139 = vunpack.c.l.b16 %v693
    %v3140 = vunpack.c.h.b16 %v693
    %v3141 = vunpack.c.l.b16 %v694
    %v3142 = vunpack.c.h.b16 %v694
    %v3143 = vunpack.c.l.b16 %v695
    %v3144 = vunpack.c.h.b16 %v695
    %v3145 = vunpack.c.l.b16 %v696
    %v3146 = vunpack.c.h.b16 %v696
    %v3147 = vunpack.c.l.b16 %v697
    %v3148 = vunpack.c.h.b16 %v697
    %v3149 = vunpack.c.l.b16 %v698
    %v3150 = vunpack.c.h.b16 %v698
    %v3151 = vunpack.c.l.b16 %v699
    %v3152 = vunpack.c.h.b16 %v699
    %v3153 = vunpack.c.l.b16 %v700
    %v3154 = vunpack.c.h.b16 %v700
    %v3155 = vunpack.c.l.b16 %v701
    %v3156 = vunpack.c.h.b16 %v701
    %v3157 = vunpack.c.l.b16 %v702
    %v3158 = vunpack.c.h.b16 %v702
    %v3159 = vunpack.c.l.b16 %v703
    %v3160 = vunpack.c.h.b16 %v703
    %v3161 = vunpack.c.l.b16 %v704
    %v3162 = vunpack.c.h.b16 %v704
    %v3163 = vunpack.c.l.b16 %v705
    %v3164 = vunpack.c.h.b16 %v705
    %v3165 = vunpack.c.l.b16 %v706
    %v3166 = vunpack.c.h.b16 %v706
    %v3167 = vunpack.c.l.b16 %v707
    %v3168 = vunpack.c.h.b16 %v707
    %v3169 = vunpack.c.l.b16 %v708
    %v3170 = vunpack.c.h.b16 %v708
    %v3171 = vunpack.c.l.b16 %v709
    %v3172 = vunpack.c.h.b16 %v709
    %v3173 = vunpack.c.l.b16 %v710
    %v3174 = vunpack.c.h.b16 %v710
    %v3175 = vunpack.c.l.b16 %v711
    %v3176 = vunpack.c.h.b16 %v711
    %v3177 = vunpack.c.l.b16 %v712
    %v3178 = vunpack.c.h.b16 %v712
    %v3179 = vunpack.c.l.b16 %v713
    %v3180 = vunpack.c.h.b16 %v713
    %v3181 = vunpack.c.l.b16 %v714
    %v3182 = vunpack.c.h.b16 %v714
    %v3183 = vunpack.c.l.b16 %v715
    %v3184 = vunpack.c.h.b16 %v715
    %v3185 = vunpack.c.l.b16 %v716
    %v3186 = vunpack.c.h.b16 %v716
    %v3187 = vunpack.c.l.b16 %v717
    %v3188 = vunpack.c.h.b16 %v717
    %v3189 = vunpack.c.l.b16 %v718
    %v3190 = vunpack.c.h.b16 %v718
    %v3191 = vunpack.c.l.b16 %v719
    %v3192 = vunpack.c.h.b16 %v719
    %v3193 = vunpack.c.l.b16 %v720
    %v3194 = vunpack.c.h.b16 %v720
    %v3195 = vunpack.c.l.b16 %v721
    %v3196 = vunpack.c.h.b16 %v721
    %v3197 = vunpack.c.l.b16 %v722
    %v3198 = vunpack.c.h.b16 %v722
    %v3199 = vunpack.c.l.b16 %v723
    %v3200 = vunpack.c.h.b16 %v723
    %v3201 = vunpack.c.l.b16 %v724
    %v3202 = vunpack.c.h.b16 %v724
    %v3203 = vunpack.c.l.b16 %v725
    %v3204 = vunpack.c.h.b16 %v725
    %v3205 = vunpack.c.l.b16 %v726
    %v3206 = vunpack.c.h.b16 %v726
    %v3207 = vunpack.c.l.b16 %v727
    %v3208 = vunpack.c.h.b16 %v727
    %v3209 = vunpack.c.l.b16 %v728
    %v3210 = vunpack.c.h.b16 %v728
    %v3211 = vunpack.c.l.b16 %v729
    %v3212 = vunpack.c.h.b16 %v729
    %v3213 = vunpack.c.l.b16 %v730
    %v3214 = vunpack.c.h.b16 %v730
    %v3215 = vunpack.c.l.b16 %v731
    %v3216 = vunpack.c.h.b16 %v731
    %v3217 = vunpack.c.l.b16 %v732
    %v3218 = vunpack.c.h.b16 %v732
    %v3219 = vunpack.c.l.b16 %v733
    %v3220 = vunpack.c.h.b16 %v733
    %v3221 = vunpack.c.l.b16 %v734
    %v3222 = vunpack.c.h.b16 %v734
    %v3223 = vunpack.c.l.b16 %v735
    %v3224 = vunpack.c.h.b16 %v735
    %v3225 = vunpack.c.l.b16 %v736
    %v3226 = vunpack.c.h.b16 %v736
    %v3227 = vunpack.c.l.b16 %v737
    %v3228 = vunpack.c.h.b16 %v737
    %v3229 = vunpack.c.l.b16 %v738
    %v3230 = vunpack.c.h.b16 %v738
    %v3231 = vunpack.c.l.b16 %v739
    %v3232 = vunpack.c.h.b16 %v739
    %v3233 = vunpack.c.l.b16 %v740
    %v3234 = vunpack.c.h.b16 %v740
    %v3235 = vunpack.c.l.b16 %v741
    %v3236 = vunpack.c.h.b16 %v741
    %v3237 = vunpack.c.l.b16 %v742
    %v3238 = vunpack.c.h.b16 %v742
    %v3239 = vunpack.c.l.b16 %v743
    %v3240 = vunpack.c.h.b16 %v743
    %v3241 = vunpack.c.l.b16 %v744
    %v3242 = vunpack.c.h.b16 %v744
    %v3243 = vunpack.c.l.b16 %v745
    %v3244 = vunpack.c.h.b16 %v745
    %v3245 = vunpack.c.l.b16 %v746
    %v3246 = vunpack.c.h.b16 %v746
    %v3247 = vunpack.c.l.b16 %v747
    %v3248 = vunpack.c.h.b16 %v747
    %v3249 = vunpack.c.l.b16 %v748
    %v3250 = vunpack.c.h.b16 %v748
    %v3251 = vunpack.c.l.b16 %v749
    %v3252 = vunpack.c.h.b16 %v749
    %v3253 = vunpack.c.l.b16 %v750
    %v3254 = vunpack.c.h.b16 %v750
    %v3255 = vunpack.c.l.b16 %v751
    %v3256 = vunpack.c.h.b16 %v751
    %v3257 = vunpack.c.l.b16 %v752
    %v3258 = vunpack.c.h.b16 %v752
    %v3259 = vunpack.c.l.b16 %v753
    %v3260 = vunpack.c.h.b16 %v753
    %v3261 = vunpack.c.l.b16 %v754
    %v3262 = vunpack.c.h.b16 %v754
    %v3263 = vunpack.c.l.b16 %v755
    %v3264 = vunpack.c.h.b16 %v755
    %v3265 = vunpack.c.l.b16 %v756
    %v3266 = vunpack.c.h.b16 %v756
    %v3267 = vunpack.c.l.b16 %v757
    %v3268 = vunpack.c.h.b16 %v757
    %v3269 = vunpack.c.l.b16 %v758
    %v3270 = vunpack.c.h.b16 %v758
    %v3271 = vunpack.c.l.b16 %v759
    %v3272 = vunpack.c.h.b16 %v759
    %v3273 = vunpack.c.l.b16 %v760
    %v3274 = vunpack.c.h.b16 %v760
    %v3275 = vunpack.c.l.b16 %v761
    %v3276 = vunpack.c.h.b16 %v761
    %v3277 = vunpack.c.l.b16 %v762
    %v3278 = vunpack.c.h.b16 %v762
    %v3279 = vunpack.c.l.b16 %v763
    %v3280 = vunpack.c.h.b16 %v763
    %v3281 = vunpack.c.l.b16 %v764
    %v3282 = vunpack.c.h.b16 %v764
    %v3283 = vunpack.c.l.b16 %v765
    %v3284 = vunpack.c.h.b16 %v765
    %v3285 = vunpack.c.l.b16 %v766
    %v3286 = vunpack.c.h.b16 %v766
    %v3287 = vunpack.c.l.b16 %v767
    %v3288 = vunpack.c.h.b16 %v767
    %v3289 = vunpack.c.l.b16 %v768
    %v3290 = vunpack.c.h.b16 %v768
    %v3291 = vunpack.c.l.b16 %v769
    %v3292 = vunpack.c.h.b16 %v769
    %v3293 = vunpack.c.l.b16 %v770
    %v3294 = vunpack.c.h.b16 %v770
    %v3295 = vunpack.c.l.b16 %v771
    %v3296 = vunpack.c.h.b16 %v771
    %v3297 = vunpack.c.l.b16 %v772
    %v3298 = vunpack.c.h.b16 %v772
    %v3299 = vunpack.c.l.b16 %v773
    %v3300 = vunpack.c.h.b16 %v773
    %v3301 = vunpack.c.l.b16 %v774
    %v3302 = vunpack.c.h.b16 %v774
    %v3303 = vunpack.c.l.b16 %v775
    %v3304 = vunpack.c.h.b16 %v775
    %v3305 = vunpack.c.l.b16 %v776
    %v3306 = vunpack.c.h.b16 %v776
    %v3307 = vunpack.c.l.b16 %v777
    %v3308 = vunpack.c.h.b16 %v777
    %v3309 = vunpack.c.l.b16 %v778
    %v3310 = vunpack.c.h.b16 %v778
    %v3311 = vunpack.c.l.b16 %v779
    %v3312 = vunpack.c.h.b16 %v779
    %v3313 = vunpack.c.l.b16 %v780
    %v3314 = vunpack.c.h.b16 %v780
    %v3315 = vunpack.c.l.b16 %v781
    %v3316 = vunpack.c.h.b16 %v781
    %v3317 = vunpack.c.l.b16 %v782
    %v3318 = vunpack.c.h.b16 %v782
    %v3319 = vunpack.c.l.b16 %v783
    %v3320 = vunpack.c.h.b16 %v783
    %v3321 = vunpack.c.l.b16 %v784
    %v3322 = vunpack.c.h.b16 %v784
    %v3323 = vunpack.c.l.b16 %v785
    %v3324 = vunpack.c.h.b16 %v785
    %v3325 = vunpack.c.l.b16 %v786
    %v3326 = vunpack.c.h.b16 %v786
    %v3327 = vunpack.c.l.b16 %v787
    %v3328 = vunpack.c.h.b16 %v787
    %v3329 = vunpack.c.l.b16 %v788
    %v3330 = vunpack.c.h.b16 %v788
    %v3331 = vunpack.c.l.b16 %v789
    %v3332 = vunpack.c.h.b16 %v789
    %v3333 = vunpack.c.l.b16 %v790
    %v3334 = vunpack.c.h.b16 %v790
    %v3335 = vunpack.c.l.b16 %v791
    %v3336 = vunpack.c.h.b16 %v791
    %v3337 = vunpack.c.l.b16 %v792
    %v3338 = vunpack.c.h.b16 %v792
    %v3339 = vunpack.c.l.b16 %v793
    %v3340 = vunpack.c.h.b16 %v793
    %v3341 = vunpack.c.l.b16 %v794
    %v3342 = vunpack.c.h.b16 %v794
    %v3343 = vunpack.c.l.b16 %v795
    %v3344 = vunpack.c.h.b16 %v795
    %v3345 = vunpack.c.l.b16 %v796
    %v3346 = vunpack.c.h.b16 %v796
    %v3347 = vunpack.c.l.b16 %v797
    %v3348 = vunpack.c.h.b16 %v797
    %v3349 = vunpack.c.l.b16 %v798
    %v3350 = vunpack.c.h.b16 %v798
    %v3351 = vunpack.c.l.b16 %v799
    %v3352 = vunpack.c.h.b16 %v799
    %v3353 = vunpack.c.l.b16 %v800
    %v3354 = vunpack.c.h.b16 %v800
    %v3355 = vunpack.c.l.b16 %v801
    %v3356 = vunpack.c.h.b16 %v801
    %v3357 = vunpack.c.l.b16 %v802
    %v3358 = vunpack.c.h.b16 %v802
    %v3359 = vunpack.c.l.b16 %v803
    %v3360 = vunpack.c.h.b16 %v803
    %v3361 = vunpack.c.l.b16 %v804
    %v3362 = vunpack.c.h.b16 %v804
    %v3363 = vunpack.c.l.b16 %v805
    %v3364 = vunpack.c.h.b16 %v805
    %v3365 = vunpack.c.l.b16 %v806
    %v3366 = vunpack.c.h.b16 %v806
    %v3367 = vunpack.c.l.b16 %v807
    %v3368 = vunpack.c.h.b16 %v807
    %v3369 = vunpack.c.l.b16 %v808
    %v3370 = vunpack.c.h.b16 %v808
    %v3371 = vunpack.c.l.b16 %v809
    %v3372 = vunpack.c.h.b16 %v809
    %v3373 = vpack.c.b16 %v1809, %v1805
    %v3374 = vpack.c.b16 %v1810, %v1806
    %v3375 = vpack.c.b16 %v1811, %v1807
    %v3376 = vpack.c.b16 %v1812, %v1808
    %v3377 = vpack.c.b16 %v1817, %v1813
    %v3378 = vpack.c.b16 %v1818, %v1814
    %v3379 = vpack.c.b16 %v1819, %v1815
    %v3380 = vpack.c.b16 %v1820, %v1816
    %v3381 = vpack.c.b16 %v1825, %v1821
    %v3382 = vpack.c.b16 %v1826, %v1822
    %v3383 = vpack.c.b16 %v1827, %v1823
    %v3384 = vpack.c.b16 %v1828, %v1824
    %v3385 = vpack.c.b16 %v1833, %v1829
    %v3386 = vpack.c.b16 %v1834, %v1830
    %v3387 = vpack.c.b16 %v1835, %v1831
    %v3388 = vpack.c.b16 %v1836, %v1832
    %v3389 = vpack.c.b16 %v1841, %v1837
    %v3390 = vpack.c.b16 %v1842, %v1838
    %v3391 = vpack.c.b16 %v1843, %v1839
    %v3392 = vpack.c.b16 %v1844, %v1840
    %v3393 = vpack.c.b16 %v1849, %v1845
    %v3394 = vpack.c.b16 %v1850, %v1846
    %v3395 = vpack.c.b16 %v1851, %v1847
    %v3396 = vpack.c.b16 %v1852, %v1848
    %v3397 = vpack.c.b16 %v1857, %v1853
    %v3398 = vpack.c.b16 %v1858, %v1854
    %v3399 = vpack.c.b16 %v1859, %v1855
    %v3400 = vpack.c.b16 %v1860, %v1856
    %v3401 = vpack.c.b16 %v1865, %v1861
    %v3402 = vpack.c.b16 %v1866, %v1862
    %v3403 = vpack.c.b16 %v1867, %v1863
    %v3404 = vpack.c.b16 %v1868, %v1864
    %v3405 = vpack.c.b16 %v1873, %v1869
    %v3406 = vpack.c.b16 %v1874, %v1870
    %v3407 = vpack.c.b16 %v1875, %v1871
    %v3408 = vpack.c.b16 %v1876, %v1872
    %v3409 = vpack.c.b16 %v1881, %v1877
    %v3410 = vpack.c.b16 %v1882, %v1878
    %v3411 = vpack.c.b16 %v1883, %v1879
    %v3412 = vpack.c.b16 %v1884, %v1880
    %v3413 = vpack.c.b16 %v1889, %v1885
    %v3414 = vpack.c.b16 %v1890, %v1886
    %v3415 = vpack.c.b16 %v1891, %v1887
    %v3416 = vpack.c.b16 %v1892, %v1888
    %v3417 = vpack.c.b16 %v1897, %v1893
    %v3418 = vpack.c.b16 %v1898, %v1894
    %v3419 = vpack.c.b16 %v1899, %v1895
    %v3420 = vpack.c.b16 %v1900, %v1896
    %v3421 = vpack.c.b16 %v1905, %v1901
    %v3422 = vpack.c.b16 %v1906, %v1902
    %v3423 = vpack.c.b16 %v1907, %v1903
    %v3424 = vpack.c.b16 %v1908, %v1904
    %v3425 = vpack.c.b16 %v1913, %v1909
    %v3426 = vpack.c.b16 %v1914, %v1910
    %v3427 = vpack.c.b16 %v1915, %v1911
    %v3428 = vpack.c.b16 %v1916, %v1912
    %v3429 = vpack.c.b16 %v1921, %v1917
    %v3430 = vpack.c.b16 %v1922, %v1918
    %v3431 = vpack.c.b16 %v1923, %v1919
    %v3432 = vpack.c.b16 %v1924, %v1920
    %v3433 = vpack.c.b16 %v1929, %v1925
    %v3434 = vpack.c.b16 %v1930, %v1926
    %v3435 = vpack.c.b16 %v1931, %v1927
    %v3436 = vpack.c.b16 %v1932, %v1928
    %v3437 = vpack.c.b16 %v1937, %v1933
    %v3438 = vpack.c.b16 %v1938, %v1934
    %v3439 = vpack.c.b16 %v1939, %v1935
    %v3440 = vpack.c.b16 %v1940, %v1936
    %v3441 = vpack.c.b16 %v1945, %v1941
    %v3442 = vpack.c.b16 %v1946, %v1942
    %v3443 = vpack.c.b16 %v1947, %v1943
    %v3444 = vpack.c.b16 %v1948, %v1944
    %v3445 = vpack.c.b16 %v1953, %v1949
    %v3446 = vpack.c.b16 %v1954, %v1950
    %v3447 = vpack.c.b16 %v1955, %v1951
    %v3448 = vpack.c.b16 %v1956, %v1952
    %v3449 = vpack.c.b16 %v1961, %v1957
    %v3450 = vpack.c.b16 %v1962, %v1958
    %v3451 = vpack.c.b16 %v1963, %v1959
    %v3452 = vpack.c.b16 %v1964, %v1960
    %v3453 = vpack.c.b16 %v1969, %v1965
    %v3454 = vpack.c.b16 %v1970, %v1966
    %v3455 = vpack.c.b16 %v1971, %v1967
    %v3456 = vpack.c.b16 %v1972, %v1968
    %v3457 = vpack.c.b16 %v1977, %v1973
    %v3458 = vpack.c.b16 %v1978, %v1974
    %v3459 = vpack.c.b16 %v1979, %v1975
    %v3460 = vpack.c.b16 %v1980, %v1976
    %v3461 = vpack.c.b16 %v1985, %v1981
    %v3462 = vpack.c.b16 %v1986, %v1982
    %v3463 = vpack.c.b16 %v1987, %v1983
    %v3464 = vpack.c.b16 %v1988, %v1984
    %v3465 = vpack.c.b16 %v1993, %v1989
    %v3466 = vpack.c.b16 %v1994, %v1990
    %v3467 = vpack.c.b16 %v1995, %v1991
    %v3468 = vpack.c.b16 %v1996, %v1992
    %v3469 = vpack.c.b16 %v2001, %v1997
    %v3470 = vpack.c.b16 %v2002, %v1998
    %v3471 = vpack.c.b16 %v2003, %v1999
    %v3472 = vpack.c.b16 %v2004, %v2000
    %v3473 = vpack.c.b16 %v2009, %v2005
    %v3474 = vpack.c.b16 %v2010, %v2006
    %v3475 = vpack.c.b16 %v2011, %v2007
    %v3476 = vpack.c.b16 %v2012, %v2008
    %v3477 = vpack.c.b16 %v2017, %v2013
    %v3478 = vpack.c.b16 %v2018, %v2014
    %v3479 = vpack.c.b16 %v2019, %v2015
    %v3480 = vpack.c.b16 %v2020, %v2016
    %v3481 = vpack.c.b16 %v2025, %v2021
    %v3482 = vpack.c.b16 %v2026, %v2022
    %v3483 = vpack.c.b16 %v2027, %v2023
    %v3484 = vpack.c.b16 %v2028, %v2024
    %v3485 = vpack.c.b16 %v2033, %v2029
    %v3486 = vpack.c.b16 %v2034, %v2030
    %v3487 = vpack.c.b16 %v2035, %v2031
    %v3488 = vpack.c.b16 %v2036, %v2032
    %v3489 = vpack.c.b16 %v2041, %v2037
    %v3490 = vpack.c.b16 %v2042, %v2038
    %v3491 = vpack.c.b16 %v2043, %v2039
    %v3492 = vpack.c.b16 %v2044, %v2040
    %v3493 = vpack.c.b16 %v2049, %v2045
    %v3494 = vpack.c.b16 %v2050, %v2046
    %v3495 = vpack.c.b16 %v2051, %v2047
    %v3496 = vpack.c.b16 %v2052, %v2048
    %v3497 = vpack.c.b16 %v2057, %v2053
    %v3498 = vpack.c.b16 %v2058, %v2054
    %v3499 = vpack.c.b16 %v2059, %v2055
    %v3500 = vpack.c.b16 %v2060, %v2056
    %v3501 = vpack.c.b16 %v2065, %v2061
    %v3502 = vpack.c.b16 %v2066, %v2062
    %v3503 = vpack.c.b16 %v2067, %v2063
    %v3504 = vpack.c.b16 %v2068, %v2064
    %v3505 = vpack.c.b16 %v2073, %v2069
    %v3506 = vpack.c.b16 %v2074, %v2070
    %v3507 = vpack.c.b16 %v2075, %v2071
    %v3508 = vpack.c.b16 %v2076, %v2072
    %v3509 = vpack.c.b16 %v2081, %v2077
    %v3510 = vpack.c.b16 %v2082, %v2078
    %v3511 = vpack.c.b16 %v2083, %v2079
    %v3512 = vpack.c.b16 %v2084, %v2080
    %v3513 = vpack.c.b16 %v2089, %v2085
    %v3514 = vpack.c.b16 %v2090, %v2086
    %v3515 = vpack.c.b16 %v2091, %v2087
    %v3516 = vpack.c.b16 %v2092, %v2088
    %v3517 = vpack.c.b16 %v2097, %v2093
    %v3518 = vpack.c.b16 %v2098, %v2094
    %v3519 = vpack.c.b16 %v2099, %v2095
    %v3520 = vpack.c.b16 %v2100, %v2096
    %v3521 = vpack.c.b16 %v2105, %v2101
    %v3522 = vpack.c.b16 %v2106, %v2102
    %v3523 = vpack.c.b16 %v2107, %v2103
    %v3524 = vpack.c.b16 %v2108, %v2104
    %v3525 = vpack.c.b16 %v2113, %v2109
    %v3526 = vpack.c.b16 %v2114, %v2110
    %v3527 = vpack.c.b16 %v2115, %v2111
    %v3528 = vpack.c.b16 %v2116, %v2112
    %v3529 = vpack.c.b16 %v2121, %v2117
    %v3530 = vpack.c.b16 %v2122, %v2118
    %v3531 = vpack.c.b16 %v2123, %v2119
    %v3532 = vpack.c.b16 %v2124, %v2120
    %v3533 = vpack.c.b16 %v2129, %v2125
    %v3534 = vpack.c.b16 %v2130, %v2126
    %v3535 = vpack.c.b16 %v2131, %v2127
    %v3536 = vpack.c.b16 %v2132, %v2128
    %v3537 = vpack.c.b16 %v2137, %v2133
    %v3538 = vpack.c.b16 %v2138, %v2134
    %v3539 = vpack.c.b16 %v2139, %v2135
    %v3540 = vpack.c.b16 %v2140, %v2136
    %v3541 = vpack.c.b16 %v2145, %v2141
    %v3542 = vpack.c.b16 %v2146, %v2142
    %v3543 = vpack.c.b16 %v2147, %v2143
    %v3544 = vpack.c.b16 %v2148, %v2144
    %v3545 = vpack.c.b16 %v2153, %v2149
    %v3546 = vpack.c.b16 %v2154, %v2150
    %v3547 = vpack.c.b16 %v2155, %v2151
    %v3548 = vpack.c.b16 %v2156, %v2152
    %v3549 = vpack.c.b16 %v2161, %v2157
    %v3550 = vpack.c.b16 %v2162, %v2158
    %v3551 = vpack.c.b16 %v2163, %v2159
    %v3552 = vpack.c.b16 %v2164, %v2160
    %v3553 = vpack.c.b16 %v2169, %v2165
    %v3554 = vpack.c.b16 %v2170, %v2166
    %v3555 = vpack.c.b16 %v2171, %v2167
    %v3556 = vpack.c.b16 %v2172, %v2168
    %v3557 = vpack.c.b16 %v2177, %v2173
    %v3558 = vpack.c.b16 %v2178, %v2174
    %v3559 = vpack.c.b16 %v2179, %v2175
    %v3560 = vpack.c.b16 %v2180, %v2176
    %v3561 = vpack.c.b16 %v2185, %v2181
    %v3562 = vpack.c.b16 %v2186, %v2182
    %v3563 = vpack.c.b16 %v2187, %v2183
    %v3564 = vpack.c.b16 %v2188, %v2184
    %v3565 = vpack.c.b16 %v2193, %v2189
    %v3566 = vpack.c.b16 %v2194, %v2190
    %v3567 = vpack.c.b16 %v2195, %v2191
    %v3568 = vpack.c.b16 %v2196, %v2192
    %v3569 = vpack.c.b16 %v2201, %v2197
    %v3570 = vpack.c.b16 %v2202, %v2198
    %v3571 = vpack.c.b16 %v2203, %v2199
    %v3572 = vpack.c.b16 %v2204, %v2200
    %v3573 = vpack.c.b16 %v2209, %v2205
    %v3574 = vpack.c.b16 %v2210, %v2206
    %v3575 = vpack.c.b16 %v2211, %v2207
    %v3576 = vpack.c.b16 %v2212, %v2208
    %v3577 = vpack.c.b16 %v2217, %v2213
    %v3578 = vpack.c.b16 %v2218, %v2214
    %v3579 = vpack.c.b16 %v2219, %v2215
    %v3580 = vpack.c.b16 %v2220, %v2216
    %v3581 = vpack.c.b16 %v2225, %v2221
    %v3582 = vpack.c.b16 %v2226, %v2222
    %v3583 = vpack.c.b16 %v2227, %v2223
    %v3584 = vpack.c.b16 %v2228, %v2224
    %v3585 = vpack.c.b16 %v2233, %v2229
    %v3586 = vpack.c.b16 %v2234, %v2230
    %v3587 = vpack.c.b16 %v2235, %v2231
    %v3588 = vpack.c.b16 %v2236, %v2232
    %v3589 = vpack.c.b16 %v2241, %v2237
    %v3590 = vpack.c.b16 %v2242, %v2238
    %v3591 = vpack.c.b16 %v2243, %v2239
    %v3592 = vpack.c.b16 %v2244, %v2240
    %v3593 = vpack.c.b16 %v2249, %v2245
    %v3594 = vpack.c.b16 %v2250, %v2246
    %v3595 = vpack.c.b16 %v2251, %v2247
    %v3596 = vpack.c.b16 %v2252, %v2248
    %v3597 = vpack.c.b16 %v2257, %v2253
    %v3598 = vpack.c.b16 %v2258, %v2254
    %v3599 = vpack.c.b16 %v2259, %v2255
    %v3600 = vpack.c.b16 %v2260, %v2256
    %v3601 = vpack.c.b16 %v2265, %v2261
    %v3602 = vpack.c.b16 %v2266, %v2262
    %v3603 = vpack.c.b16 %v2267, %v2263
    %v3604 = vpack.c.b16 %v2268, %v2264
    %v3605 = vpack.c.b16 %v2273, %v2269
    %v3606 = vpack.c.b16 %v2274, %v2270
    %v3607 = vpack.c.b16 %v2275, %v2271
    %v3608 = vpack.c.b16 %v2276, %v2272
    %v3609 = vpack.c.b16 %v2281, %v2277
    %v3610 = vpack.c.b16 %v2282, %v2278
    %v3611 = vpack.c.b16 %v2283, %v2279
    %v3612 = vpack.c.b16 %v2284, %v2280
    %v3613 = vpack.c.b16 %v2289, %v2285
    %v3614 = vpack.c.b16 %v2290, %v2286
    %v3615 = vpack.c.b16 %v2291, %v2287
    %v3616 = vpack.c.b16 %v2292, %v2288
    %v3617 = vpack.c.b16 %v2297, %v2293
    %v3618 = vpack.c.b16 %v2298, %v2294
    %v3619 = vpack.c.b16 %v2299, %v2295
    %v3620 = vpack.c.b16 %v2300, %v2296
    %v3621 = vpack.c.b16 %v2305, %v2301
    %v3622 = vpack.c.b16 %v2306, %v2302
    %v3623 = vpack.c.b16 %v2307, %v2303
    %v3624 = vpack.c.b16 %v2308, %v2304
    %v3625 = vpack.c.b16 %v2313, %v2309
    %v3626 = vpack.c.b16 %v2314, %v2310
    %v3627 = vpack.c.b16 %v2315, %v2311
    %v3628 = vpack.c.b16 %v2316, %v2312
    %v3629 = vpack.c.b16 %v2321, %v2317
    %v3630 = vpack.c.b16 %v2322, %v2318
    %v3631 = vpack.c.b16 %v2323, %v2319
    %v3632 = vpack.c.b16 %v2324, %v2320
    %v3633 = vpack.c.b16 %v2329, %v2325
    %v3634 = vpack.c.b16 %v2330, %v2326
    %v3635 = vpack.c.b16 %v2331, %v2327
    %v3636 = vpack.c.b16 %v2332, %v2328
    %v3637 = vpack.c.b16 %v2337, %v2333
    %v3638 = vpack.c.b16 %v2338, %v2334
    %v3639 = vpack.c.b16 %v2339, %v2335
    %v3640 = vpack.c.b16 %v2340, %v2336
    %v3641 = vpack.c.b16 %v2345, %v2341
    %v3642 = vpack.c.b16 %v2346, %v2342
    %v3643 = vpack.c.b16 %v2347, %v2343
    %v3644 = vpack.c.b16 %v2348, %v2344
    %v3645 = vpack.c.b16 %v2353, %v2349
    %v3646 = vpack.c.b16 %v2354, %v2350
    %v3647 = vpack.c.b16 %v2355, %v2351
    %v3648 = vpack.c.b16 %v2356, %v2352
    %v3649 = vpack.c.b16 %v2361, %v2357
    %v3650 = vpack.c.b16 %v2362, %v2358
    %v3651 = vpack.c.b16 %v2363, %v2359
    %v3652 = vpack.c.b16 %v2364, %v2360
    %v3653 = vpack.c.b16 %v2369, %v2365
    %v3654 = vpack.c.b16 %v2370, %v2366
    %v3655 = vpack.c.b16 %v2371, %v2367
    %v3656 = vpack.c.b16 %v2372, %v2368
    %v3657 = vpack.c.b16 %v2377, %v2373
    %v3658 = vpack.c.b16 %v2378, %v2374
    %v3659 = vpack.c.b16 %v2379, %v2375
    %v3660 = vpack.c.b16 %v2380, %v2376
    %v3661 = vpack.c.b16 %v2385, %v2381
    %v3662 = vpack.c.b16 %v2386, %v2382
    %v3663 = vpack.c.b16 %v2387, %v2383
    %v3664 = vpack.c.b16 %v2388, %v2384
    %v3665 = vpack.c.b16 %v2393, %v2389
    %v3666 = vpack.c.b16 %v2394, %v2390
    %v3667 = vpack.c.b16 %v2395, %v2391
    %v3668 = vpack.c.b16 %v2396, %v2392
    %v3669 = vpack.c.b16 %v2401, %v2397
    %v3670 = vpack.c.b16 %v2402, %v2398
    %v3671 = vpack.c.b16 %v2403, %v2399
    %v3672 = vpack.c.b16 %v2404, %v2400
    %v3673 = vpack.c.b16 %v2409, %v2405
    %v3674 = vpack.c.b16 %v2410, %v2406
    %v3675 = vpack.c.b16 %v2411, %v2407
    %v3676 = vpack.c.b16 %v2412, %v2408
    %v3677 = vpack.c.b16 %v2417, %v2413
    %v3678 = vpack.c.b16 %v2418, %v2414
    %v3679 = vpack.c.b16 %v2419, %v2415
    %v3680 = vpack.c.b16 %v2420, %v2416
    %v3681 = vpack.c.b16 %v2425, %v2421
    %v3682 = vpack.c.b16 %v2426, %v2422
    %v3683 = vpack.c.b16 %v2427, %v2423
    %v3684 = vpack.c.b16 %v2428, %v2424
    %v3685 = vpack.c.b16 %v2433, %v2429
    %v3686 = vpack.c.b16 %v2434, %v2430
    %v3687 = vpack.c.b16 %v2435, %v2431
    %v3688 = vpack.c.b16 %v2436, %v2432
    %v3689 = vpack.c.b16 %v2441, %v2437
    %v3690 = vpack.c.b16 %v2442, %v2438
    %v3691 = vpack.c.b16 %v2443, %v2439
    %v3692 = vpack.c.b16 %v2444, %v2440
    %v3693 = vpack.c.b16 %v2449, %v2445
    %v3694 = vpack.c.b16 %v2450, %v2446
    %v3695 = vpack.c.b16 %v2451, %v2447
    %v3696 = vpack.c.b16 %v2452, %v2448
    %v3697 = vpack.c.b16 %v2457, %v2453
    %v3698 = vpack.c.b16 %v2458, %v2454
    %v3699 = vpack.c.b16 %v2459, %v2455
    %v3700 = vpack.c.b16 %v2460, %v2456
    %v3701 = vpack.c.b16 %v2465, %v2461
    %v3702 = vpack.c.b16 %v2466, %v2462
    %v3703 = vpack.c.b16 %v2467, %v2463
    %v3704 = vpack.c.b16 %v2468, %v2464
    %v3705 = vpack.c.b16 %v2473, %v2469
    %v3706 = vpack.c.b16 %v2474, %v2470
    %v3707 = vpack.c.b16 %v2475, %v2471
    %v3708 = vpack.c.b16 %v2476, %v2472
    %v3709 = vpack.c.b16 %v2481, %v2477
    %v3710 = vpack.c.b16 %v2482, %v2478
    %v3711 = vpack.c.b16 %v2483, %v2479
    %v3712 = vpack.c.b16 %v2484, %v2480
    %v3713 = vpack.c.b16 %v2489, %v2485
    %v3714 = vpack.c.b16 %v2490, %v2486
    %v3715 = vpack.c.b16 %v2491, %v2487
    %v3716 = vpack.c.b16 %v2492, %v2488
    %v3717 = vpack.c.b16 %v2497, %v2493
    %v3718 = vpack.c.b16 %v2498, %v2494
    %v3719 = vpack.c.b16 %v2499, %v2495
    %v3720 = vpack.c.b16 %v2500, %v2496
    %v3721 = vpack.c.b16 %v2505, %v2501
    %v3722 = vpack.c.b16 %v2506, %v2502
    %v3723 = vpack.c.b16 %v2507, %v2503
    %v3724 = vpack.c.b16 %v2508, %v2504
    %v3725 = vpack.c.b16 %v2513, %v2509
    %v3726 = vpack.c.b16 %v2514, %v2510
    %v3727 = vpack.c.b16 %v2515, %v2511
    %v3728 = vpack.c.b16 %v2516, %v2512
    %v3729 = vpack.c.b16 %v2521, %v2517
    %v3730 = vpack.c.b16 %v2522, %v2518
    %v3731 = vpack.c.b16 %v2523, %v2519
    %v3732 = vpack.c.b16 %v2524, %v2520
    %v3733 = vpack.c.b16 %v2529, %v2525
    %v3734 = vpack.c.b16 %v2530, %v2526
    %v3735 = vpack.c.b16 %v2531, %v2527
    %v3736 = vpack.c.b16 %v2532, %v2528
    %v3737 = vpack.c.b16 %v2537, %v2533
    %v3738 = vpack.c.b16 %v2538, %v2534
    %v3739 = vpack.c.b16 %v2539, %v2535
    %v3740 = vpack.c.b16 %v2540, %v2536
    %v3741 = vpack.c.b16 %v2545, %v2541
    %v3742 = vpack.c.b16 %v2546, %v2542
    %v3743 = vpack.c.b16 %v2547, %v2543
    %v3744 = vpack.c.b16 %v2548, %v2544
    %v3745 = vpack.c.b16 %v2553, %v2549
    %v3746 = vpack.c.b16 %v2554, %v2550
    %v3747 = vpack.c.b16 %v2555, %v2551
    %v3748 = vpack.c.b16 %v2556, %v2552
    %v3749 = vpack.c.b16 %v2561, %v2557
    %v3750 = vpack.c.b16 %v2562, %v2558
    %v3751 = vpack.c.b16 %v2563, %v2559
    %v3752 = vpack.c.b16 %v2564, %v2560
    %v3753 = vpack.c.b16 %v2569, %v2565
    %v3754 = vpack.c.b16 %v2570, %v2566
    %v3755 = vpack.c.b16 %v2571, %v2567
    %v3756 = vpack.c.b16 %v2572, %v2568
    %v3757 = vpack.c.b16 %v2577, %v2573
    %v3758 = vpack.c.b16 %v2578, %v2574
    %v3759 = vpack.c.b16 %v2579, %v2575
    %v3760 = vpack.c.b16 %v2580, %v2576
    %v3761 = vpack.c.b16 %v2585, %v2581
    %v3762 = vpack.c.b16 %v2586, %v2582
    %v3763 = vpack.c.b16 %v2587, %v2583
    %v3764 = vpack.c.b16 %v2588, %v2584
    %v3765 = vpack.c.b16 %v2593, %v2589
    %v3766 = vpack.c.b16 %v2594, %v2590
    %v3767 = vpack.c.b16 %v2595, %v2591
    %v3768 = vpack.c.b16 %v2596, %v2592
    %v3769 = vpack.c.b16 %v2601, %v2597
    %v3770 = vpack.c.b16 %v2602, %v2598
    %v3771 = vpack.c.b16 %v2603, %v2599
    %v3772 = vpack.c.b16 %v2604, %v2600
    %v3773 = vpack.c.b16 %v2609, %v2605
    %v3774 = vpack.c.b16 %v2610, %v2606
    %v3775 = vpack.c.b16 %v2611, %v2607
    %v3776 = vpack.c.b16 %v2612, %v2608
    %v3777 = vpack.c.b16 %v2617, %v2613
    %v3778 = vpack.c.b16 %v2618, %v2614
    %v3779 = vpack.c.b16 %v2619, %v2615
    %v3780 = vpack.c.b16 %v2620, %v2616
    %v3781 = vpack.c.b16 %v2625, %v2621
    %v3782 = vpack.c.b16 %v2626, %v2622
    %v3783 = vpack.c.b16 %v2627, %v2623
    %v3784 = vpack.c.b16 %v2628, %v2624
    %v3785 = vpack.c.b16 %v2633, %v2629
    %v3786 = vpack.c.b16 %v2634, %v2630
    %v3787 = vpack.c.b16 %v2635, %v2631
    %v3788 = vpack.c.b16 %v2636, %v2632
    %v3789 = vpack.c.b16 %v2641, %v2637
    %v3790 = vpack.c.b16 %v2642, %v2638
    %v3791 = vpack.c.b16 %v2643, %v2639
    %v3792 = vpack.c.b16 %v2644, %v2640
    %v3793 = vpack.c.b16 %v2649, %v2645
    %v3794 = vpack.c.b16 %v2650, %v2646
    %v3795 = vpack.c.b16 %v2651, %v2647
    %v3796 = vpack.c.b16 %v2652, %v2648
    %v3797 = vpack.c.b16 %v2657, %v2653
    %v3798 = vpack.c.b16 %v2658, %v2654
    %v3799 = vpack.c.b16 %v2659, %v2655
    %v3800 = vpack.c.b16 %v2660, %v2656
    %v3801 = vpack.c.b16 %v2665, %v2661
    %v3802 = vpack.c.b16 %v2666, %v2662
    %v3803 = vpack.c.b16 %v2667, %v2663
    %v3804 = vpack.c.b16 %v2668, %v2664
    %v3805 = vpack.c.b16 %v2673, %v2669
    %v3806 = vpack.c.b16 %v2674, %v2670
    %v3807 = vpack.c.b16 %v2675, %v2671
    %v3808 = vpack.c.b16 %v2676, %v2672
    %v3809 = vpack.c.b16 %v2681, %v2677
    %v3810 = vpack.c.b16 %v2682, %v2678
    %v3811 = vpack.c.b16 %v2683, %v2679
    %v3812 = vpack.c.b16 %v2684, %v2680
    %v3813 = vpack.c.b16 %v2689, %v2685
    %v3814 = vpack.c.b16 %v2690, %v2686
    %v3815 = vpack.c.b16 %v2691, %v2687
    %v3816 = vpack.c.b16 %v2692, %v2688
    %v3817 = vpack.c.b16 %v2697, %v2693
    %v3818 = vpack.c.b16 %v2698, %v2694
    %v3819 = vpack.c.b16 %v2699, %v2695
    %v3820 = vpack.c.b16 %v2700, %v2696
    %v3821 = vpack.c.b16 %v2705, %v2701
    %v3822 = vpack.c.b16 %v2706, %v2702
    %v3823 = vpack.c.b16 %v2707, %v2703
    %v3824 = vpack.c.b16 %v2708, %v2704
    %v3825 = vpack.c.b16 %v2713, %v2709
    %v3826 = vpack.c.b16 %v2714, %v2710
    %v3827 = vpack.c.b16 %v2715, %v2711
    %v3828 = vpack.c.b16 %v2716, %v2712
    %v3829 = vpack.c.b16 %v2721, %v2717
    %v3830 = vpack.c.b16 %v2722, %v2718
    %v3831 = vpack.c.b16 %v2723, %v2719
    %v3832 = vpack.c.b16 %v2724, %v2720
    %v3833 = vpack.c.b16 %v2729, %v2725
    %v3834 = vpack.c.b16 %v2730, %v2726
    %v3835 = vpack.c.b16 %v2731, %v2727
    %v3836 = vpack.c.b16 %v2732, %v2728
    %v3837 = vpack.c.b16 %v2737, %v2733
    %v3838 = vpack.c.b16 %v2738, %v2734
    %v3839 = vpack.c.b16 %v2739, %v2735
    %v3840 = vpack.c.b16 %v2740, %v2736
    %v3841 = vpack.c.b16 %v2745, %v2741
    %v3842 = vpack.c.b16 %v2746, %v2742
    %v3843 = vpack.c.b16 %v2747, %v2743
    %v3844 = vpack.c.b16 %v2748, %v2744
    %v3845 = vpack.c.b16 %v2753, %v2749
    %v3846 = vpack.c.b16 %v2754, %v2750
    %v3847 = vpack.c.b16 %v2755, %v2751
    %v3848 = vpack.c.b16 %v2756, %v2752
    %v3849 = vpack.c.b16 %v2761, %v2757
    %v3850 = vpack.c.b16 %v2762, %v2758
    %v3851 = vpack.c.b16 %v2763, %v2759
    %v3852 = vpack.c.b16 %v2764, %v2760
    %v3853 = vpack.c.b16 %v2769, %v2765
    %v3854 = vpack.c.b16 %v2770, %v2766
    %v3855 = vpack.c.b16 %v2771, %v2767
    %v3856 = vpack.c.b16 %v2772, %v2768
    %v3857 = vpack.c.b16 %v2777, %v2773
    %v3858 = vpack.c.b16 %v2778, %v2774
    %v3859 = vpack.c.b16 %v2779, %v2775
    %v3860 = vpack.c.b16 %v2780, %v2776
    %v3861 = vpack.c.b16 %v2785, %v2781
    %v3862 = vpack.c.b16 %v2786, %v2782
    %v3863 = vpack.c.b16 %v2787, %v2783
    %v3864 = vpack.c.b16 %v2788, %v2784
    %v3865 = vpack.c.b16 %v2793, %v2789
    %v3866 = vpack.c.b16 %v2794, %v2790
    %v3867 = vpack.c.b16 %v2795, %v2791
    %v3868 = vpack.c.b16 %v2796, %v2792
    %v3869 = vpack.c.b16 %v2801, %v2797
    %v3870 = vpack.c.b16 %v2802, %v2798
    %v3871 = vpack.c.b16 %v2803, %v2799
    %v3872 = vpack.c.b16 %v2804, %v2800
    %v3873 = vpack.c.b16 %v2809, %v2805
    %v3874 = vpack.c.b16 %v2810, %v2806
    %v3875 = vpack.c.b16 %v2811, %v2807
    %v3876 = vpack.c.b16 %v2812, %v2808
    %v3877 = vpack.c.b16 %v2817, %v2813
    %v3878 = vpack.c.b16 %v2818, %v2814
    %v3879 = vpack.c.b16 %v2819, %v2815
    %v3880 = vpack.c.b16 %v2820, %v2816
    %v3881 = vpack.c.b16 %v2825, %v2821
    %v3882 = vpack.c.b16 %v2826, %v2822
    %v3883 = vpack.c.b16 %v2827, %v2823
    %v3884 = vpack.c.b16 %v2828, %v2824
    %v3885 = vpack.c.b16 %v2833, %v2829
    %v3886 = vpack.c.b16 %v2834, %v2830
    %v3887 = vpack.c.b16 %v2835, %v2831
    %v3888 = vpack.c.b16 %v2836, %v2832
    %v3889 = vpack.c.b16 %v2841, %v2837
    %v3890 = vpack.c.b16 %v2842, %v2838
    %v3891 = vpack.c.b16 %v2843, %v2839
    %v3892 = vpack.c.b16 %v2844, %v2840
    %v3893 = vpack.c.b16 %v2849, %v2845
    %v3894 = vpack.c.b16 %v2850, %v2846
    %v3895 = vpack.c.b16 %v2851, %v2847
    %v3896 = vpack.c.b16 %v2852, %v2848
    %v3897 = vpack.c.b16 %v2857, %v2853
    %v3898 = vpack.c.b16 %v2858, %v2854
    %v3899 = vpack.c.b16 %v2859, %v2855
    %v3900 = vpack.c.b16 %v2860, %v2856
    %v3901 = vpack.c.b16 %v2865, %v2861
    %v3902 = vpack.c.b16 %v2866, %v2862
    %v3903 = vpack.c.b16 %v2867, %v2863
    %v3904 = vpack.c.b16 %v2868, %v2864
    %v3905 = vpack.c.b16 %v2873, %v2869
    %v3906 = vpack.c.b16 %v2874, %v2870
    %v3907 = vpack.c.b16 %v2875, %v2871
    %v3908 = vpack.c.b16 %v2876, %v2872
    %v3909 = vpack.c.b16 %v2881, %v2877
    %v3910 = vpack.c.b16 %v2882, %v2878
    %v3911 = vpack.c.b16 %v2883, %v2879
    %v3912 = vpack.c.b16 %v2884, %v2880
    %v3913 = vpack.c.b16 %v2889, %v2885
    %v3914 = vpack.c.b16 %v2890, %v2886
    %v3915 = vpack.c.b16 %v2891, %v2887
    %v3916 = vpack.c.b16 %v2892, %v2888
    %v3917 = vpack.c.b16 %v2897, %v2893
    %v3918 = vpack.c.b16 %v2898, %v2894
    %v3919 = vpack.c.b16 %v2899, %v2895
    %v3920 = vpack.c.b16 %v2900, %v2896
    %v3921 = vpack.c.b16 %v2905, %v2901
    %v3922 = vpack.c.b16 %v2906, %v2902
    %v3923 = vpack.c.b16 %v2907, %v2903
    %v3924 = vpack.c.b16 %v2908, %v2904
    %v3925 = vpack.c.b16 %v2913, %v2909
    %v3926 = vpack.c.b16 %v2914, %v2910
    %v3927 = vpack.c.b16 %v2915, %v2911
    %v3928 = vpack.c.b16 %v2916, %v2912
    %v3929 = vpack.c.b16 %v2921, %v2917
    %v3930 = vpack.c.b16 %v2922, %v2918
    %v3931 = vpack.c.b16 %v2923, %v2919
    %v3932 = vpack.c.b16 %v2924, %v2920
    %v3933 = vpack.c.b16 %v2929, %v2925
    %v3934 = vpack.c.b16 %v2930, %v2926
    %v3935 = vpack.c.b16 %v2931, %v2927
    %v3936 = vpack.c.b16 %v2932, %v2928
    %v3937 = vpack.c.b16 %v2937, %v2933
    %v3938 = vpack.c.b16 %v2938, %v2934
    %v3939 = vpack.c.b16 %v2939, %v2935
    %v3940 = vpack.c.b16 %v2940, %v2936
    %v3941 = vpack.c.b16 %v2945, %v2941
    %v3942 = vpack.c.b16 %v2946, %v2942
    %v3943 = vpack.c.b16 %v2947, %v2943
    %v3944 = vpack.c.b16 %v2948, %v2944
    %v3945 = vpack.c.b16 %v2953, %v2949
    %v3946 = vpack.c.b16 %v2954, %v2950
    %v3947 = vpack.c.b16 %v2955, %v2951
    %v3948 = vpack.c.b16 %v2956, %v2952
    %v3949 = vpack.c.b16 %v2961, %v2957
    %v3950 = vpack.c.b16 %v2962, %v2958
    %v3951 = vpack.c.b16 %v2963, %v2959
    %v3952 = vpack.c.b16 %v2964, %v2960
    %v3953 = vpack.c.b16 %v2969, %v2965
    %v3954 = vpack.c.b16 %v2970, %v2966
    %v3955 = vpack.c.b16 %v2971, %v2967
    %v3956 = vpack.c.b16 %v2972, %v2968
    %v3957 = vpack.c.b16 %v2977, %v2973
    %v3958 = vpack.c.b16 %v2978, %v2974
    %v3959 = vpack.c.b16 %v2979, %v2975
    %v3960 = vpack.c.b16 %v2980, %v2976
    %v3961 = vpack.c.b16 %v2985, %v2981
    %v3962 = vpack.c.b16 %v2986, %v2982
    %v3963 = vpack.c.b16 %v2987, %v2983
    %v3964 = vpack.c.b16 %v2988, %v2984
    %v3965 = vpack.c.b16 %v2993, %v2989
    %v3966 = vpack.c.b16 %v2994, %v2990
    %v3967 = vpack.c.b16 %v2995, %v2991
    %v3968 = vpack.c.b16 %v2996, %v2992
    %v3969 = vpack.c.b16 %v3001, %v2997
    %v3970 = vpack.c.b16 %v3002, %v2998
    %v3971 = vpack.c.b16 %v3003, %v2999
    %v3972 = vpack.c.b16 %v3004, %v3000
    %v3973 = vpack.c.b16 %v3009, %v3005
    %v3974 = vpack.c.b16 %v3010, %v3006
    %v3975 = vpack.c.b16 %v3011, %v3007
    %v3976 = vpack.c.b16 %v3012, %v3008
    %v3977 = vpack.c.b16 %v3017, %v3013
    %v3978 = vpack.c.b16 %v3018, %v3014
    %v3979 = vpack.c.b16 %v3019, %v3015
    %v3980 = vpack.c.b16 %v3020, %v3016
    %v3981 = vpack.c.b16 %v3025, %v3021
    %v3982 = vpack.c.b16 %v3026, %v3022
    %v3983 = vpack.c.b16 %v3027, %v3023
    %v3984 = vpack.c.b16 %v3028, %v3024
    %v3985 = vpack.c.b16 %v3033, %v3029
    %v3986 = vpack.c.b16 %v3034, %v3030
    %v3987 = vpack.c.b16 %v3035, %v3031
    %v3988 = vpack.c.b16 %v3036, %v3032
    %v3989 = vpack.c.b16 %v3041, %v3037
    %v3990 = vpack.c.b16 %v3042, %v3038
    %v3991 = vpack.c.b16 %v3043, %v3039
    %v3992 = vpack.c.b16 %v3044, %v3040
    %v3993 = vpack.c.b16 %v3049, %v3045
    %v3994 = vpack.c.b16 %v3050, %v3046
    %v3995 = vpack.c.b16 %v3051, %v3047
    %v3996 = vpack.c.b16 %v3052, %v3048
    %v3997 = vpack.c.b16 %v3057, %v3053
    %v3998 = vpack.c.b16 %v3058, %v3054
    %v3999 = vpack.c.b16 %v3059, %v3055
    %v4000 = vpack.c.b16 %v3060, %v3056
    %v4001 = vpack.c.b16 %v3065, %v3061
    %v4002 = vpack.c.b16 %v3066, %v3062
    %v4003 = vpack.c.b16 %v3067, %v3063
    %v4004 = vpack.c.b16 %v3068, %v3064
    %v4005 = vpack.c.b16 %v3073, %v3069
    %v4006 = vpack.c.b16 %v3074, %v3070
    %v4007 = vpack.c.b16 %v3075, %v3071
    %v4008 = vpack.c.b16 %v3076, %v3072
    %v4009 = vpack.c.b16 %v3081, %v3077
    %v4010 = vpack.c.b16 %v3082, %v3078
    %v4011 = vpack.c.b16 %v3083, %v3079
    %v4012 = vpack.c.b16 %v3084, %v3080
    %v4013 = vpack.c.b16 %v3089, %v3085
    %v4014 = vpack.c.b16 %v3090, %v3086
    %v4015 = vpack.c.b16 %v3091, %v3087
    %v4016 = vpack.c.b16 %v3092, %v3088
    %v4017 = vpack.c.b16 %v3097, %v3093
    %v4018 = vpack.c.b16 %v3098, %v3094
    %v4019 = vpack.c.b16 %v3099, %v3095
    %v4020 = vpack.c.b16 %v3100, %v3096
    %v4021 = vpack.c.b16 %v3105, %v3101
    %v4022 = vpack.c.b16 %v3106, %v3102
    %v4023 = vpack.c.b16 %v3107, %v3103
    %v4024 = vpack.c.b16 %v3108, %v3104
    %v4025 = vpack.c.b16 %v3113, %v3109
    %v4026 = vpack.c.b16 %v3114, %v3110
    %v4027 = vpack.c.b16 %v3115, %v3111
    %v4028 = vpack.c.b16 %v3116, %v3112
    %v4029 = vpack.c.b16 %v3121, %v3117
    %v4030 = vpack.c.b16 %v3122, %v3118
    %v4031 = vpack.c.b16 %v3123, %v3119
    %v4032 = vpack.c.b16 %v3124, %v3120
    %v4033 = vpack.c.b16 %v3129, %v3125
    %v4034 = vpack.c.b16 %v3130, %v3126
    %v4035 = vpack.c.b16 %v3131, %v3127
    %v4036 = vpack.c.b16 %v3132, %v3128
    %v4037 = vpack.c.b16 %v3137, %v3133
    %v4038 = vpack.c.b16 %v3138, %v3134
    %v4039 = vpack.c.b16 %v3139, %v3135
    %v4040 = vpack.c.b16 %v3140, %v3136
    %v4041 = vpack.c.b16 %v3145, %v3141
    %v4042 = vpack.c.b16 %v3146, %v3142
    %v4043 = vpack.c.b16 %v3147, %v3143
    %v4044 = vpack.c.b16 %v3148, %v3144
    %v4045 = vpack.c.b16 %v3153, %v3149
    %v4046 = vpack.c.b16 %v3154, %v3150
    %v4047 = vpack.c.b16 %v3155, %v3151
    %v4048 = vpack.c.b16 %v3156, %v3152
    %v4049 = vpack.c.b16 %v3161, %v3157
    %v4050 = vpack.c.b16 %v3162, %v3158
    %v4051 = vpack.c.b16 %v3163, %v3159
    %v4052 = vpack.c.b16 %v3164, %v3160
    %v4053 = vpack.c.b16 %v3169, %v3165
    %v4054 = vpack.c.b16 %v3170, %v3166
    %v4055 = vpack.c.b16 %v3171, %v3167
    %v4056 = vpack.c.b16 %v3172, %v3168
    %v4057 = vpack.c.b16 %v3177, %v3173
    %v4058 = vpack.c.b16 %v3178, %v3174
    %v4059 = vpack.c.b16 %v3179, %v3175
    %v4060 = vpack.c.b16 %v3180, %v3176
    %v4061 = vpack.c.b16 %v3185, %v3181
    %v4062 = vpack.c.b16 %v3186, %v3182
    %v4063 = vpack.c.b16 %v3187, %v3183
    %v4064 = vpack.c.b16 %v3188, %v3184
    %v4065 = vpack.c.b16 %v3193, %v3189
    %v4066 = vpack.c.b16 %v3194, %v3190
    %v4067 = vpack.c.b16 %v3195, %v3191
    %v4068 = vpack.c.b16 %v3196, %v3192
    %v4069 = vpack.c.b16 %v3201, %v3197
    %v4070 = vpack.c.b16 %v3202, %v3198
    %v4071 = vpack.c.b16 %v3203, %v3199
    %v4072 = vpack.c.b16 %v3204, %v3200
    %v4073 = vpack.c.b16 %v3209, %v3205
    %v4074 = vpack.c.b16 %v3210, %v3206
    %v4075 = vpack.c.b16 %v3211, %v3207
    %v4076 = vpack.c.b16 %v3212, %v3208
    %v4077 = vpack.c.b16 %v3217, %v3213
    %v4078 = vpack.c.b16 %v3218, %v3214
    %v4079 = vpack.c.b16 %v3219, %v3215
    %v4080 = vpack.c.b16 %v3220, %v3216
    %v4081 = vpack.c.b16 %v3225, %v3221
    %v4082 = vpack.c.b16 %v3226, %v3222
    %v4083 = vpack.c.b16 %v3227, %v3223
    %v4084 = vpack.c.b16 %v3228, %v3224
    %v4085 = vpack.c.b16 %v3233, %v3229
    %v4086 = vpack.c.b16 %v3234, %v3230
    %v4087 = vpack.c.b16 %v3235, %v3231
    %v4088 = vpack.c.b16 %v3236, %v3232
    %v4089 = vpack.c.b16 %v3241, %v3237
    %v4090 = vpack.c.b16 %v3242, %v3238
    %v4091 = vpack.c.b16 %v3243, %v3239
    %v4092 = vpack.c.b16 %v3244, %v3240
    %v4093 = vpack.c.b16 %v3249, %v3245
    %v4094 = vpack.c.b16 %v3250, %v3246
    %v4095 = vpack.c.b16 %v3251, %v3247
    %v4096 = vpack.c.b16 %v3252, %v3248
    %v4097 = vpack.c.b16 %v3257, %v3253
    %v4098 = vpack.c.b16 %v3258, %v3254
    %v4099 = vpack.c.b16 %v3259, %v3255
    %v4100 = vpack.c.b16 %v3260, %v3256
    %v4101 = vpack.c.b16 %v3265, %v3261
    %v4102 = vpack.c.b16 %v3266, %v3262
    %v4103 = vpack.c.b16 %v3267, %v3263
    %v4104 = vpack.c.b16 %v3268, %v3264
    %v4105 = vpack.c.b16 %v3273, %v3269
    %v4106 = vpack.c.b16 %v3274, %v3270
    %v4107 = vpack.c.b16 %v3275, %v3271
    %v4108 = vpack.c.b16 %v3276, %v3272
    %v4109 = vpack.c.b16 %v3281, %v3277
    %v4110 = vpack.c.b16 %v3282, %v3278
    %v4111 = vpack.c.b16 %v3283, %v3279
    %v4112 = vpack.c.b16 %v3284, %v3280
    %v4113 = vpack.c.b16 %v3289, %v3285
    %v4114 = vpack.c.b16 %v3290, %v3286
    %v4115 = vpack.c.b16 %v3291, %v3287
    %v4116 = vpack.c.b16 %v3292, %v3288
    %v4117 = vpack.c.b16 %v3297, %v3293
    %v4118 = vpack.c.b16 %v3298, %v3294
    %v4119 = vpack.c.b16 %v3299, %v3295
    %v4120 = vpack.c.b16 %v3300, %v3296
    %v4121 = vpack.c.b16 %v3305, %v3301
    %v4122 = vpack.c.b16 %v3306, %v3302
    %v4123 = vpack.c.b16 %v3307, %v3303
    %v4124 = vpack.c.b16 %v3308, %v3304
    %v4125 = vpack.c.b16 %v3313, %v3309
    %v4126 = vpack.c.b16 %v3314, %v3310
    %v4127 = vpack.c.b16 %v3315, %v3311
    %v4128 = vpack.c.b16 %v3316, %v3312
    %v4129 = vpack.c.b16 %v3321, %v3317
    %v4130 = vpack.c.b16 %v3322, %v3318
    %v4131 = vpack.c.b16 %v3323, %v3319
    %v4132 = vpack.c.b16 %v3324, %v3320
    %v4133 = vpack.c.b16 %v3329, %v3325
    %v4134 = vpack.c.b16 %v3330, %v3326
    %v4135 = vpack.c.b16 %v3331, %v3327
    %v4136 = vpack.c.b16 %v3332, %v3328
    %v4137 = vpack.c.b16 %v3337, %v3333
    %v4138 = vpack.c.b16 %v3338, %v3334
    %v4139 = vpack.c.b16 %v3339, %v3335
    %v4140 = vpack.c.b16 %v3340, %v3336
    %v4141 = vpack.c.b16 %v3345, %v3341
    %v4142 = vpack.c.b16 %v3346, %v3342
    %v4143 = vpack.c.b16 %v3347, %v3343
    %v4144 = vpack.c.b16 %v3348, %v3344
    %v4145 = vpack.c.b16 %v3353, %v3349
    %v4146 = vpack.c.b16 %v3354, %v3350
    %v4147 = vpack.c.b16 %v3355, %v3351
    %v4148 = vpack.c.b16 %v3356, %v3352
    %v4149 = vpack.c.b16 %v3361, %v3357
    %v4150 = vpack.c.b16 %v3362, %v3358
    %v4151 = vpack.c.b16 %v3363, %v3359
    %v4152 = vpack.c.b16 %v3364, %v3360
    %v4153 = vpack.c.b16 %v3369, %v3365
    %v4154 = vpack.c.b16 %v3370, %v3366
    %v4155 = vpack.c.b16 %v3371, %v3367
    %v4156 = vpack.c.b16 %v3372, %v3368
    %vm4941 = vcmask 523264
    %v4943 = vsel %vm4941, %v996, 0
    %4945 = vmatprep.subr.bf16.mxu0 %v3374
    %4946 = vmatpush1.bf16.msra.mxu0 %v3373
    %4947 = vmatprep.subr.bf16.mxu0 %v3378
    %4948 = vmatpush1.bf16.msra.mxu0 %v3377
    %4949 = vmatprep.subr.bf16.mxu0 %v3382
    %4950 = vmatpush1.bf16.msra.mxu0 %v3381
    %4951 = vmatprep.subr.bf16.mxu0 %v3386
    %4952 = vmatpush1.bf16.msra.mxu0 %v3385
    %4953 = vmatprep.subr.bf16.mxu0 %v3390
    %4954 = vmatpush1.bf16.msra.mxu0 %v3389
    %4955 = vmatprep.subr.bf16.mxu0 %v3394
    %4956 = vmatpush1.bf16.msra.mxu0 %v3393
    %4957 = vmatprep.subr.bf16.mxu0 %v3398
    %4958 = vmatpush1.bf16.msra.mxu0 %v3397
    %4959 = vmatprep.subr.bf16.mxu0 %v3402
    %4960 = vmatpush1.bf16.msra.mxu0 %v3401
    %4961 = vmatprep.subr.bf16.mxu0 %v3406
    %4962 = vmatpush1.bf16.msra.mxu0 %v3405
    %4963 = vmatprep.subr.bf16.mxu0 %v3410
    %4964 = vmatpush1.bf16.msra.mxu0 %v3409
    %4965 = vmatprep.subr.bf16.mxu0 %v3414
    %4966 = vmatpush1.bf16.msra.mxu0 %v3413
    %4967 = vmatprep.subr.bf16.mxu0 %v3418
    %4968 = vmatpush1.bf16.msra.mxu0 %v3417
    %4969 = vmatprep.subr.bf16.mxu0 %v3422
    %4970 = vmatpush1.bf16.msra.mxu0 %v3421
    %4971 = vmatprep.subr.bf16.mxu0 %v3426
    %4972 = vmatpush1.bf16.msra.mxu0 %v3425
    %4973 = vmatprep.subr.bf16.mxu0 %v3430
    %4974 = vmatpush1.bf16.msra.mxu0 %v3429
    %4975 = vmatprep.subr.bf16.mxu0 %v3434
    %4976 = vmatpush1.bf16.msra.mxu0 %v3433
    %4977 = vmatprep.mubr.bf16.mxu0 %v873
    %4978 = vmatmul.mubr.bf16.gmra.mrb[0].mxu0 %v859
    %v4979 = vpop.f32.mrb[0].mxu0
    %v4980 = vadd.f32 %v815, %v4979
    %v4981 = vpop.f32.mrb[0].mxu0
    %v4982 = vadd.f32 %v819, %v4981
    %v4983 = vpop.f32.mrb[0].mxu0
    %v4984 = vpop.f32.mrb[0].mxu0
    %4985 = vdwg.mxu0
    %4986 = vmatprep.subr.bf16.mxu0 %v3438
    %4987 = vmatpush1.bf16.msra.mxu0 %v3437
    %4988 = vmatprep.subr.bf16.mxu0 %v3442
    %4989 = vmatpush1.bf16.msra.mxu0 %v3441
    %4990 = vmatprep.subr.bf16.mxu0 %v3446
    %4991 = vmatpush1.bf16.msra.mxu0 %v3445
    %4992 = vmatprep.subr.bf16.mxu0 %v3450
    %4993 = vmatpush1.bf16.msra.mxu0 %v3449
    %4994 = vmatprep.subr.bf16.mxu0 %v3454
    %4995 = vmatpush1.bf16.msra.mxu0 %v3453
    %4996 = vmatprep.subr.bf16.mxu0 %v3458
    %4997 = vmatpush1.bf16.msra.mxu0 %v3457
    %4998 = vmatprep.subr.bf16.mxu0 %v3462
    %4999 = vmatpush1.bf16.msra.mxu0 %v3461
    %5000 = vmatprep.subr.bf16.mxu0 %v3466
    %5001 = vmatpush1.bf16.msra.mxu0 %v3465
    %5002 = vmatprep.subr.bf16.mxu0 %v3470
    %5003 = vmatpush1.bf16.msra.mxu0 %v3469
    %5004 = vmatprep.subr.bf16.mxu0 %v3474
    %5005 = vmatpush1.bf16.msra.mxu0 %v3473
    %5006 = vmatprep.subr.bf16.mxu0 %v3478
    %5007 = vmatpush1.bf16.msra.mxu0 %v3477
    %5008 = vmatprep.subr.bf16.mxu0 %v3482
    %5009 = vmatpush1.bf16.msra.mxu0 %v3481
    %5010 = vmatprep.subr.bf16.mxu0 %v3486
    %5011 = vmatpush1.bf16.msra.mxu0 %v3485
    %5012 = vmatprep.subr.bf16.mxu0 %v3490
    %5013 = vmatpush1.bf16.msra.mxu0 %v3489
    %5014 = vmatprep.subr.bf16.mxu0 %v3494
    %5015 = vmatpush1.bf16.msra.mxu0 %v3493
    %5016 = vmatprep.subr.bf16.mxu0 %v3498
    %5017 = vmatpush1.bf16.msra.mxu0 %v3497
    %5018 = vmatprep.mubr.bf16.mxu0 %v883
    %5019 = vmatmul.mubr.bf16.gmra.mrb[0].mxu0 %v881
    %v5020 = vpop.f32.mrb[0].mxu0
    %v5021 = vadd.f32 %v4980, %v5020
    %v5022 = vpop.f32.mrb[0].mxu0
    %v5023 = vadd.f32 %v4982, %v5022
    %v5024 = vpop.f32.mrb[0].mxu0
    %v5025 = vpop.f32.mrb[0].mxu0
    %5026 = vdwg.mxu0
    %5027 = vmatprep.subr.bf16.mxu0 %v3502
    %5028 = vmatpush1.bf16.msra.mxu0 %v3501
    %5029 = vmatprep.subr.bf16.mxu0 %v3506
    %5030 = vmatpush1.bf16.msra.mxu0 %v3505
    %5031 = vmatprep.subr.bf16.mxu0 %v3510
    %5032 = vmatpush1.bf16.msra.mxu0 %v3509
    %5033 = vmatprep.subr.bf16.mxu0 %v3514
    %5034 = vmatpush1.bf16.msra.mxu0 %v3513
    %5035 = vmatprep.subr.bf16.mxu0 %v3518
    %5036 = vmatpush1.bf16.msra.mxu0 %v3517
    %5037 = vmatprep.subr.bf16.mxu0 %v3522
    %5038 = vmatpush1.bf16.msra.mxu0 %v3521
    %5039 = vmatprep.subr.bf16.mxu0 %v3526
    %5040 = vmatpush1.bf16.msra.mxu0 %v3525
    %5041 = vmatprep.subr.bf16.mxu0 %v3530
    %5042 = vmatpush1.bf16.msra.mxu0 %v3529
    %5043 = vmatprep.subr.bf16.mxu0 %v3534
    %5044 = vmatpush1.bf16.msra.mxu0 %v3533
    %5045 = vmatprep.subr.bf16.mxu0 %v3538
    %5046 = vmatpush1.bf16.msra.mxu0 %v3537
    %5047 = vmatprep.subr.bf16.mxu0 %v3542
    %5048 = vmatpush1.bf16.msra.mxu0 %v3541
    %5049 = vmatprep.subr.bf16.mxu0 %v3546
    %5050 = vmatpush1.bf16.msra.mxu0 %v3545
    %5051 = vmatprep.subr.bf16.mxu0 %v3550
    %5052 = vmatpush1.bf16.msra.mxu0 %v3549
    %5053 = vmatprep.subr.bf16.mxu0 %v3554
    %5054 = vmatpush1.bf16.msra.mxu0 %v3553
    %5055 = vmatprep.subr.bf16.mxu0 %v3558
    %5056 = vmatpush1.bf16.msra.mxu0 %v3557
    %5057 = vmatprep.subr.bf16.mxu0 %v3562
    %5058 = vmatpush1.bf16.msra.mxu0 %v3561
    %5059 = vmatprep.mubr.bf16.mxu0 %v880
    %5060 = vmatmul.mubr.bf16.gmra.mrb[0].mxu0 %v866
    %v5061 = vpop.f32.mrb[0].mxu0
    %v5062 = vadd.f32 %v5021, %v5061
    %v5063 = vpop.f32.mrb[0].mxu0
    %v5064 = vadd.f32 %v5023, %v5063
    %v5065 = vpop.f32.mrb[0].mxu0
    %v5066 = vpop.f32.mrb[0].mxu0
    %5067 = vdwg.mxu0
    %5068 = vmatprep.subr.bf16.mxu0 %v3566
    %5069 = vmatpush1.bf16.msra.mxu0 %v3565
    %5070 = vmatprep.subr.bf16.mxu0 %v3570
    %5071 = vmatpush1.bf16.msra.mxu0 %v3569
    %5072 = vmatprep.subr.bf16.mxu0 %v3574
    %5073 = vmatpush1.bf16.msra.mxu0 %v3573
    %5074 = vmatprep.subr.bf16.mxu0 %v3578
    %5075 = vmatpush1.bf16.msra.mxu0 %v3577
    %5076 = vmatprep.subr.bf16.mxu0 %v3582
    %5077 = vmatpush1.bf16.msra.mxu0 %v3581
    %5078 = vmatprep.subr.bf16.mxu0 %v3586
    %5079 = vmatpush1.bf16.msra.mxu0 %v3585
    %5080 = vmatprep.subr.bf16.mxu0 %v3590
    %5081 = vmatpush1.bf16.msra.mxu0 %v3589
    %5082 = vmatprep.subr.bf16.mxu0 %v3594
    %5083 = vmatpush1.bf16.msra.mxu0 %v3593
    %5084 = vmatprep.subr.bf16.mxu0 %v3598
    %5085 = vmatpush1.bf16.msra.mxu0 %v3597
    %5086 = vmatprep.subr.bf16.mxu0 %v3602
    %5087 = vmatpush1.bf16.msra.mxu0 %v3601
    %5088 = vmatprep.subr.bf16.mxu0 %v3606
    %5089 = vmatpush1.bf16.msra.mxu0 %v3605
    %5090 = vmatprep.subr.bf16.mxu0 %v3610
    %5091 = vmatpush1.bf16.msra.mxu0 %v3609
    %5092 = vmatprep.subr.bf16.mxu0 %v3614
    %5093 = vmatpush1.bf16.msra.mxu0 %v3613
    %5094 = vmatprep.subr.bf16.mxu0 %v3618
    %5095 = vmatpush1.bf16.msra.mxu0 %v3617
    %5096 = vmatprep.subr.bf16.mxu0 %v3622
    %5097 = vmatpush1.bf16.msra.mxu0 %v3621
    %5098 = vmatprep.subr.bf16.mxu0 %v3626
    %5099 = vmatpush1.bf16.msra.mxu0 %v3625
    %5100 = vmatprep.mubr.bf16.mxu0 %v884
    %5101 = vmatmul.mubr.bf16.gmra.mrb[0].mxu0 %v882
    %v5102 = vpop.f32.mrb[0].mxu0
    %v5103 = vadd.f32 %v5062, %v5102
    %v5104 = vpop.f32.mrb[0].mxu0
    %v5105 = vadd.f32 %v5064, %v5104
    %v5106 = vpop.f32.mrb[0].mxu0
    %v5107 = vpop.f32.mrb[0].mxu0
    %5108 = vdwg.mxu0
    %5109 = vmatprep.subr.bf16.mxu0 %v3630
    %5110 = vmatpush1.bf16.msra.mxu0 %v3629
    %5111 = vmatprep.subr.bf16.mxu0 %v3634
    %5112 = vmatpush1.bf16.msra.mxu0 %v3633
    %5113 = vmatprep.subr.bf16.mxu0 %v3638
    %5114 = vmatpush1.bf16.msra.mxu0 %v3637
    %5115 = vmatprep.subr.bf16.mxu0 %v3642
    %5116 = vmatpush1.bf16.msra.mxu0 %v3641
    %5117 = vmatprep.subr.bf16.mxu0 %v3646
    %5118 = vmatpush1.bf16.msra.mxu0 %v3645
    %5119 = vmatprep.subr.bf16.mxu0 %v3650
    %5120 = vmatpush1.bf16.msra.mxu0 %v3649
    %5121 = vmatprep.subr.bf16.mxu0 %v3654
    %5122 = vmatpush1.bf16.msra.mxu0 %v3653
    %5123 = vmatprep.subr.bf16.mxu0 %v3658
    %5124 = vmatpush1.bf16.msra.mxu0 %v3657
    %5125 = vmatprep.subr.bf16.mxu0 %v3662
    %5126 = vmatpush1.bf16.msra.mxu0 %v3661
    %5127 = vmatprep.subr.bf16.mxu0 %v3666
    %5128 = vmatpush1.bf16.msra.mxu0 %v3665
    %5129 = vmatprep.subr.bf16.mxu0 %v3670
    %5130 = vmatpush1.bf16.msra.mxu0 %v3669
    %5131 = vmatprep.subr.bf16.mxu0 %v3674
    %5132 = vmatpush1.bf16.msra.mxu0 %v3673
    %5133 = vmatprep.subr.bf16.mxu0 %v3678
    %5134 = vmatpush1.bf16.msra.mxu0 %v3677
    %5135 = vmatprep.subr.bf16.mxu0 %v3682
    %5136 = vmatpush1.bf16.msra.mxu0 %v3681
    %5137 = vmatprep.subr.bf16.mxu0 %v3686
    %5138 = vmatpush1.bf16.msra.mxu0 %v3685
    %5139 = vmatprep.subr.bf16.mxu0 %v3690
    %5140 = vmatpush1.bf16.msra.mxu0 %v3689
    %5141 = vmatprep.mubr.bf16.mxu0 %v922
    %5142 = vmatmul.mubr.bf16.gmra.mrb[0].mxu0 %v908
    %v5143 = vpop.f32.mrb[0].mxu0
    %v5144 = vadd.f32 %v5103, %v5143
    %v5145 = vpop.f32.mrb[0].mxu0
    %v5146 = vadd.f32 %v5105, %v5145
    %v5147 = vpop.f32.mrb[0].mxu0
    %v5148 = vpop.f32.mrb[0].mxu0
    %5149 = vdwg.mxu0
    %5150 = vmatprep.subr.bf16.mxu0 %v3694
    %5151 = vmatpush1.bf16.msra.mxu0 %v3693
    %5152 = vmatprep.subr.bf16.mxu0 %v3698
    %5153 = vmatpush1.bf16.msra.mxu0 %v3697
    %5154 = vmatprep.subr.bf16.mxu0 %v3702
    %5155 = vmatpush1.bf16.msra.mxu0 %v3701
    %5156 = vmatprep.subr.bf16.mxu0 %v3706
    %5157 = vmatpush1.bf16.msra.mxu0 %v3705
    %5158 = vmatprep.subr.bf16.mxu0 %v3710
    %5159 = vmatpush1.bf16.msra.mxu0 %v3709
    %5160 = vmatprep.subr.bf16.mxu0 %v3714
    %5161 = vmatpush1.bf16.msra.mxu0 %v3713
    %5162 = vmatprep.subr.bf16.mxu0 %v3718
    %5163 = vmatpush1.bf16.msra.mxu0 %v3717
    %5164 = vmatprep.subr.bf16.mxu0 %v3722
    %5165 = vmatpush1.bf16.msra.mxu0 %v3721
    %5166 = vmatprep.subr.bf16.mxu0 %v3726
    %5167 = vmatpush1.bf16.msra.mxu0 %v3725
    %5168 = vmatprep.subr.bf16.mxu0 %v3730
    %5169 = vmatpush1.bf16.msra.mxu0 %v3729
    %5170 = vmatprep.subr.bf16.mxu0 %v3734
    %5171 = vmatpush1.bf16.msra.mxu0 %v3733
    %5172 = vmatprep.subr.bf16.mxu0 %v3738
    %5173 = vmatpush1.bf16.msra.mxu0 %v3737
    %5174 = vmatprep.subr.bf16.mxu0 %v3742
    %5175 = vmatpush1.bf16.msra.mxu0 %v3741
    %5176 = vmatprep.subr.bf16.mxu0 %v3746
    %5177 = vmatpush1.bf16.msra.mxu0 %v3745
    %5178 = vmatprep.subr.bf16.mxu0 %v3750
    %5179 = vmatpush1.bf16.msra.mxu0 %v3749
    %5180 = vmatprep.subr.bf16.mxu0 %v3754
    %5181 = vmatpush1.bf16.msra.mxu0 %v3753
    %5182 = vmatprep.mubr.bf16.mxu0 %v932
    %5183 = vmatmul.mubr.bf16.gmra.mrb[0].mxu0 %v930
    %v5184 = vpop.f32.mrb[0].mxu0
    %v5185 = vadd.f32 %v5144, %v5184
    %v5186 = vpop.f32.mrb[0].mxu0
    %v5187 = vadd.f32 %v5146, %v5186
    %v5188 = vpop.f32.mrb[0].mxu0
    %v5189 = vpop.f32.mrb[0].mxu0
    %5190 = vdwg.mxu0
    %5191 = vmatprep.subr.bf16.mxu0 %v3758
    %5192 = vmatpush1.bf16.msra.mxu0 %v3757
    %5193 = vmatprep.subr.bf16.mxu0 %v3762
    %5194 = vmatpush1.bf16.msra.mxu0 %v3761
    %5195 = vmatprep.subr.bf16.mxu0 %v3766
    %5196 = vmatpush1.bf16.msra.mxu0 %v3765
    %5197 = vmatprep.subr.bf16.mxu0 %v3770
    %5198 = vmatpush1.bf16.msra.mxu0 %v3769
    %5199 = vmatprep.subr.bf16.mxu0 %v3774
    %5200 = vmatpush1.bf16.msra.mxu0 %v3773
    %5201 = vmatprep.subr.bf16.mxu0 %v3778
    %5202 = vmatpush1.bf16.msra.mxu0 %v3777
    %5203 = vmatprep.subr.bf16.mxu0 %v3782
    %5204 = vmatpush1.bf16.msra.mxu0 %v3781
    %5205 = vmatprep.subr.bf16.mxu0 %v3786
    %5206 = vmatpush1.bf16.msra.mxu0 %v3785
    %5207 = vmatprep.subr.bf16.mxu0 %v3790
    %5208 = vmatpush1.bf16.msra.mxu0 %v3789
    %5209 = vmatprep.subr.bf16.mxu0 %v3794
    %5210 = vmatpush1.bf16.msra.mxu0 %v3793
    %5211 = vmatprep.subr.bf16.mxu0 %v3798
    %5212 = vmatpush1.bf16.msra.mxu0 %v3797
    %5213 = vmatprep.subr.bf16.mxu0 %v3802
    %5214 = vmatpush1.bf16.msra.mxu0 %v3801
    %5215 = vmatprep.subr.bf16.mxu0 %v3806
    %5216 = vmatpush1.bf16.msra.mxu0 %v3805
    %5217 = vmatprep.subr.bf16.mxu0 %v3810
    %5218 = vmatpush1.bf16.msra.mxu0 %v3809
    %5219 = vmatprep.subr.bf16.mxu0 %v3814
    %5220 = vmatpush1.bf16.msra.mxu0 %v3813
    %5221 = vmatprep.subr.bf16.mxu0 %v3818
    %5222 = vmatpush1.bf16.msra.mxu0 %v3817
    %5223 = vmatprep.mubr.bf16.mxu0 %v929
    %5224 = vmatmul.mubr.bf16.gmra.mrb[0].mxu0 %v915
    %v5225 = vpop.f32.mrb[0].mxu0
    %v5226 = vadd.f32 %v5185, %v5225
    %v5227 = vpop.f32.mrb[0].mxu0
    %v5228 = vadd.f32 %v5187, %v5227
    %v5229 = vpop.f32.mrb[0].mxu0
    %v5230 = vpop.f32.mrb[0].mxu0
    %5231 = vdwg.mxu0
    %5232 = vmatprep.subr.bf16.mxu0 %v3822
    %5233 = vmatpush1.bf16.msra.mxu0 %v3821
    %5234 = vmatprep.subr.bf16.mxu0 %v3826
    %5235 = vmatpush1.bf16.msra.mxu0 %v3825
    %5236 = vmatprep.subr.bf16.mxu0 %v3830
    %5237 = vmatpush1.bf16.msra.mxu0 %v3829
    %5238 = vmatprep.subr.bf16.mxu0 %v3834
    %5239 = vmatpush1.bf16.msra.mxu0 %v3833
    %5240 = vmatprep.subr.bf16.mxu0 %v3838
    %5241 = vmatpush1.bf16.msra.mxu0 %v3837
    %5242 = vmatprep.subr.bf16.mxu0 %v3842
    %5243 = vmatpush1.bf16.msra.mxu0 %v3841
    %5244 = vmatprep.subr.bf16.mxu0 %v3846
    %5245 = vmatpush1.bf16.msra.mxu0 %v3845
    %5246 = vmatprep.subr.bf16.mxu0 %v3850
    %5247 = vmatpush1.bf16.msra.mxu0 %v3849
    %5248 = vmatprep.subr.bf16.mxu0 %v3854
    %5249 = vmatpush1.bf16.msra.mxu0 %v3853
    %5250 = vmatprep.subr.bf16.mxu0 %v3858
    %5251 = vmatpush1.bf16.msra.mxu0 %v3857
    %5252 = vmatprep.subr.bf16.mxu0 %v3862
    %5253 = vmatpush1.bf16.msra.mxu0 %v3861
    %5254 = vmatprep.subr.bf16.mxu0 %v3866
    %5255 = vmatpush1.bf16.msra.mxu0 %v3865
    %5256 = vmatprep.subr.bf16.mxu0 %v3870
    %5257 = vmatpush1.bf16.msra.mxu0 %v3869
    %5258 = vmatprep.subr.bf16.mxu0 %v3874
    %5259 = vmatpush1.bf16.msra.mxu0 %v3873
    %5260 = vmatprep.subr.bf16.mxu0 %v3878
    %5261 = vmatpush1.bf16.msra.mxu0 %v3877
    %5262 = vmatprep.subr.bf16.mxu0 %v3882
    %5263 = vmatpush1.bf16.msra.mxu0 %v3881
    %5264 = vmatprep.mubr.bf16.mxu0 %v933
    %5265 = vmatmul.mubr.bf16.gmra.mrb[0].mxu0 %v931
    %v5266 = vpop.f32.mrb[0].mxu0
    %v5267 = vadd.f32 %v5226, %v5266
    %v5268 = vpop.f32.mrb[0].mxu0
    %v5269 = vadd.f32 %v5228, %v5268
    %v5270 = vpop.f32.mrb[0].mxu0
    %v5271 = vpop.f32.mrb[0].mxu0
    %5272 = vdwg.mxu0
    %5273 = vmatprep.subr.bf16.mxu0 %v3886
    %5274 = vmatpush1.bf16.msra.mxu0 %v3885
    %5275 = vmatprep.subr.bf16.mxu0 %v3890
    %5276 = vmatpush1.bf16.msra.mxu0 %v3889
    %5277 = vmatprep.subr.bf16.mxu0 %v3894
    %5278 = vmatpush1.bf16.msra.mxu0 %v3893
    %5279 = vmatprep.subr.bf16.mxu0 %v3898
    %5280 = vmatpush1.bf16.msra.mxu0 %v3897
    %5281 = vmatprep.subr.bf16.mxu0 %v3902
    %5282 = vmatpush1.bf16.msra.mxu0 %v3901
    %5283 = vmatprep.subr.bf16.mxu0 %v3906
    %5284 = vmatpush1.bf16.msra.mxu0 %v3905
    %5285 = vmatprep.subr.bf16.mxu0 %v3910
    %5286 = vmatpush1.bf16.msra.mxu0 %v3909
    %5287 = vmatprep.subr.bf16.mxu0 %v3914
    %5288 = vmatpush1.bf16.msra.mxu0 %v3913
    %5289 = vmatprep.subr.bf16.mxu0 %v3918
    %5290 = vmatpush1.bf16.msra.mxu0 %v3917
    %5291 = vmatprep.subr.bf16.mxu0 %v3922
    %5292 = vmatpush1.bf16.msra.mxu0 %v3921
    %5293 = vmatprep.subr.bf16.mxu0 %v3926
    %5294 = vmatpush1.bf16.msra.mxu0 %v3925
    %5295 = vmatprep.subr.bf16.mxu0 %v3930
    %5296 = vmatpush1.bf16.msra.mxu0 %v3929
    %5297 = vmatprep.subr.bf16.mxu0 %v3934
    %5298 = vmatpush1.bf16.msra.mxu0 %v3933
    %5299 = vmatprep.subr.bf16.mxu0 %v3938
    %5300 = vmatpush1.bf16.msra.mxu0 %v3937
    %5301 = vmatprep.subr.bf16.mxu0 %v3942
    %5302 = vmatpush1.bf16.msra.mxu0 %v3941
    %5303 = vmatprep.subr.bf16.mxu0 %v3946
    %5304 = vmatpush1.bf16.msra.mxu0 %v3945
    %5305 = vmatprep.mubr.bf16.mxu0 %v971
    %5306 = vmatmul.mubr.bf16.gmra.mrb[0].mxu0 %v957
    %v5307 = vpop.f32.mrb[0].mxu0
    %v5308 = vadd.f32 %v5267, %v5307
    %v5309 = vpop.f32.mrb[0].mxu0
    %v5310 = vadd.f32 %v5269, %v5309
    %v5311 = vpop.f32.mrb[0].mxu0
    %v5312 = vpop.f32.mrb[0].mxu0
    %5313 = vdwg.mxu0
    %5314 = vmatprep.subr.bf16.mxu0 %v3950
    %5315 = vmatpush1.bf16.msra.mxu0 %v3949
    %5316 = vmatprep.subr.bf16.mxu0 %v3954
    %5317 = vmatpush1.bf16.msra.mxu0 %v3953
    %5318 = vmatprep.subr.bf16.mxu0 %v3958
    %5319 = vmatpush1.bf16.msra.mxu0 %v3957
    %5320 = vmatprep.subr.bf16.mxu0 %v3962
    %5321 = vmatpush1.bf16.msra.mxu0 %v3961
    %5322 = vmatprep.subr.bf16.mxu0 %v3966
    %5323 = vmatpush1.bf16.msra.mxu0 %v3965
    %5324 = vmatprep.subr.bf16.mxu0 %v3970
    %5325 = vmatpush1.bf16.msra.mxu0 %v3969
    %5326 = vmatprep.subr.bf16.mxu0 %v3974
    %5327 = vmatpush1.bf16.msra.mxu0 %v3973
    %5328 = vmatprep.subr.bf16.mxu0 %v3978
    %5329 = vmatpush1.bf16.msra.mxu0 %v3977
    %5330 = vmatprep.subr.bf16.mxu0 %v3982
    %5331 = vmatpush1.bf16.msra.mxu0 %v3981
    %5332 = vmatprep.subr.bf16.mxu0 %v3986
    %5333 = vmatpush1.bf16.msra.mxu0 %v3985
    %5334 = vmatprep.subr.bf16.mxu0 %v3990
    %5335 = vmatpush1.bf16.msra.mxu0 %v3989
    %5336 = vmatprep.subr.bf16.mxu0 %v3994
    %5337 = vmatpush1.bf16.msra.mxu0 %v3993
    %5338 = vmatprep.subr.bf16.mxu0 %v3998
    %5339 = vmatpush1.bf16.msra.mxu0 %v3997
    %5340 = vmatprep.subr.bf16.mxu0 %v4002
    %5341 = vmatpush1.bf16.msra.mxu0 %v4001
    %5342 = vmatprep.subr.bf16.mxu0 %v4006
    %5343 = vmatpush1.bf16.msra.mxu0 %v4005
    %5344 = vmatprep.subr.bf16.mxu0 %v4010
    %5345 = vmatpush1.bf16.msra.mxu0 %v4009
    %5346 = vmatprep.mubr.bf16.mxu0 %v981
    %5347 = vmatmul.mubr.bf16.gmra.mrb[0].mxu0 %v979
    %v5348 = vpop.f32.mrb[0].mxu0
    %v5349 = vadd.f32 %v5308, %v5348
    %v5350 = vpop.f32.mrb[0].mxu0
    %v5351 = vadd.f32 %v5310, %v5350
    %v5352 = vpop.f32.mrb[0].mxu0
    %v5353 = vpop.f32.mrb[0].mxu0
    %5354 = vdwg.mxu0
    %5355 = vmatprep.subr.bf16.mxu0 %v4014
    %5356 = vmatpush1.bf16.msra.mxu0 %v4013
    %5357 = vmatprep.subr.bf16.mxu0 %v4018
    %5358 = vmatpush1.bf16.msra.mxu0 %v4017
    %5359 = vmatprep.subr.bf16.mxu0 %v4022
    %5360 = vmatpush1.bf16.msra.mxu0 %v4021
    %5361 = vmatprep.subr.bf16.mxu0 %v4026
    %5362 = vmatpush1.bf16.msra.mxu0 %v4025
    %5363 = vmatprep.subr.bf16.mxu0 %v4030
    %5364 = vmatpush1.bf16.msra.mxu0 %v4029
    %5365 = vmatprep.subr.bf16.mxu0 %v4034
    %5366 = vmatpush1.bf16.msra.mxu0 %v4033
    %5367 = vmatprep.subr.bf16.mxu0 %v4038
    %5368 = vmatpush1.bf16.msra.mxu0 %v4037
    %5369 = vmatprep.subr.bf16.mxu0 %v4042
    %5370 = vmatpush1.bf16.msra.mxu0 %v4041
    %5371 = vmatprep.subr.bf16.mxu0 %v4046
    %5372 = vmatpush1.bf16.msra.mxu0 %v4045
    %5373 = vmatprep.subr.bf16.mxu0 %v4050
    %5374 = vmatpush1.bf16.msra.mxu0 %v4049
    %5375 = vmatprep.subr.bf16.mxu0 %v4054
    %5376 = vmatpush1.bf16.msra.mxu0 %v4053
    %5377 = vmatprep.subr.bf16.mxu0 %v4058
    %5378 = vmatpush1.bf16.msra.mxu0 %v4057
    %5379 = vmatprep.subr.bf16.mxu0 %v4062
    %5380 = vmatpush1.bf16.msra.mxu0 %v4061
    %5381 = vmatprep.subr.bf16.mxu0 %v4066
    %5382 = vmatpush1.bf16.msra.mxu0 %v4065
    %5383 = vmatprep.subr.bf16.mxu0 %v4070
    %5384 = vmatpush1.bf16.msra.mxu0 %v4069
    %5385 = vmatprep.subr.bf16.mxu0 %v4074
    %5386 = vmatpush1.bf16.msra.mxu0 %v4073
    %5387 = vmatprep.mubr.bf16.mxu0 %v978
    %5388 = vmatmul.mubr.bf16.gmra.mrb[0].mxu0 %v964
    %v5389 = vpop.f32.mrb[0].mxu0
    %v5390 = vadd.f32 %v5349, %v5389
    %v5391 = vpop.f32.mrb[0].mxu0
    %v5392 = vadd.f32 %v5351, %v5391
    %v5393 = vpop.f32.mrb[0].mxu0
    %v5394 = vpop.f32.mrb[0].mxu0
    %5395 = vdwg.mxu0
    %5396 = vmatprep.subr.bf16.mxu0 %v4078
    %5397 = vmatpush1.bf16.msra.mxu0 %v4077
    %5398 = vmatprep.subr.bf16.mxu0 %v4082
    %5399 = vmatpush1.bf16.msra.mxu0 %v4081
    %5400 = vmatprep.subr.bf16.mxu0 %v4086
    %5401 = vmatpush1.bf16.msra.mxu0 %v4085
    %5402 = vmatprep.subr.bf16.mxu0 %v4090
    %5403 = vmatpush1.bf16.msra.mxu0 %v4089
    %5404 = vmatprep.subr.bf16.mxu0 %v4094
    %5405 = vmatpush1.bf16.msra.mxu0 %v4093
    %5406 = vmatprep.subr.bf16.mxu0 %v4098
    %5407 = vmatpush1.bf16.msra.mxu0 %v4097
    %5408 = vmatprep.subr.bf16.mxu0 %v4102
    %5409 = vmatpush1.bf16.msra.mxu0 %v4101
    %5410 = vmatprep.subr.bf16.mxu0 %v4106
    %5411 = vmatpush1.bf16.msra.mxu0 %v4105
    %5412 = vmatprep.subr.bf16.mxu0 %v4110
    %5413 = vmatpush1.bf16.msra.mxu0 %v4109
    %5414 = vmatprep.subr.bf16.mxu0 %v4114
    %5415 = vmatpush1.bf16.msra.mxu0 %v4113
    %5416 = vmatprep.subr.bf16.mxu0 %v4118
    %5417 = vmatpush1.bf16.msra.mxu0 %v4117
    %5418 = vmatprep.subr.bf16.mxu0 %v4122
    %5419 = vmatpush1.bf16.msra.mxu0 %v4121
    %5420 = vmatprep.subr.bf16.mxu0 %v4126
    %5421 = vmatpush1.bf16.msra.mxu0 %v4125
    %5422 = vmatprep.subr.bf16.mxu0 %v4130
    %5423 = vmatpush1.bf16.msra.mxu0 %v4129
    %5424 = vmatprep.subr.bf16.mxu0 %v4134
    %5425 = vmatpush1.bf16.msra.mxu0 %v4133
    %5426 = vmatprep.subr.bf16.mxu0 %v4138
    %5427 = vmatpush1.bf16.msra.mxu0 %v4137
    %5428 = vmatprep.mubr.bf16.mxu0 %v982
    %5429 = vmatmul.mubr.bf16.gmra.mrb[0].mxu0 %v980
    %v5430 = vpop.f32.mrb[0].mxu0
    %v5431 = vadd.f32 %v5390, %v5430
    %v5432 = vpop.f32.mrb[0].mxu0
    %v5433 = vadd.f32 %v5392, %v5432
    %v5434 = vpop.f32.mrb[0].mxu0
    %v5435 = vpop.f32.mrb[0].mxu0
    %5436 = vdwg.mxu0
    %5437 = vmatprep.subr.bf16.mxu0 %v4142
    %5438 = vmatpush1.bf16.msra.mxu0 %v4141
    %5439 = vmatprep.subr.bf16.mxu0 %v4146
    %5440 = vmatpush1.bf16.msra.mxu0 %v4145
    %5441 = vmatprep.subr.bf16.mxu0 %v4150
    %5442 = vmatpush1.bf16.msra.mxu0 %v4149
    %5443 = vmatprep.subr.bf16.mxu0 %v4154
    %5444 = vmatpush1.bf16.msra.mxu0 %v4153
    %5445 = vmatprep.subr.bf16.mxu0 0
    %5446 = vmatpush1.bf16.msra.mxu0 0
    %5447 = vmatprep.subr.bf16.mxu0 0
    %5448 = vmatpush1.bf16.msra.mxu0 0
    %5449 = vmatprep.subr.bf16.mxu0 0
    %5450 = vmatpush1.bf16.msra.mxu0 0
    %5451 = vmatprep.subr.bf16.mxu0 0
    %5452 = vmatpush1.bf16.msra.mxu0 0
    %5453 = vmatprep.subr.bf16.mxu0 0
    %5454 = vmatpush1.bf16.msra.mxu0 0
    %5455 = vmatprep.subr.bf16.mxu0 0
    %5456 = vmatpush1.bf16.msra.mxu0 0
    %5457 = vmatprep.subr.bf16.mxu0 0
    %5458 = vmatpush1.bf16.msra.mxu0 0
    %5459 = vmatprep.subr.bf16.mxu0 0
    %5460 = vmatpush1.bf16.msra.mxu0 0
    %5461 = vmatprep.subr.bf16.mxu0 0
    %5462 = vmatpush1.bf16.msra.mxu0 0
    %5463 = vmatprep.subr.bf16.mxu0 0
    %5464 = vmatpush1.bf16.msra.mxu0 0
    %5465 = vmatprep.subr.bf16.mxu0 0
    %5466 = vmatpush1.bf16.msra.mxu0 0
    %5467 = vmatprep.subr.bf16.mxu0 0
    %5468 = vmatpush1.bf16.msra.mxu0 0
    %5469 = vmatprep.mubr.bf16.mxu0 0
    %5470 = vmatmul.mubr.bf16.gmra.mrb[0].mxu0 %v4943
    %v5471 = vpop.f32.mrb[0].mxu0
    %v5472 = vadd.f32 %v5431, %v5471
    %v5473 = vpop.f32.mrb[0].mxu0
    %v5474 = vadd.f32 %v5433, %v5473
    %v5475 = vpop.f32.mrb[0].mxu0
    %v5476 = vpop.f32.mrb[0].mxu0
    %5477 = vdwg.mxu0
    %5478 = vmatprep.subr.bf16.mxu0 %v3376
    %5479 = vmatpush1.bf16.msra.mxu0 %v3375
    %5480 = vmatprep.subr.bf16.mxu0 %v3380
    %5481 = vmatpush1.bf16.msra.mxu0 %v3379
    %5482 = vmatprep.subr.bf16.mxu0 %v3384
    %5483 = vmatpush1.bf16.msra.mxu0 %v3383
    %5484 = vmatprep.subr.bf16.mxu0 %v3388
    %5485 = vmatpush1.bf16.msra.mxu0 %v3387
    %5486 = vmatprep.subr.bf16.mxu0 %v3392
    %5487 = vmatpush1.bf16.msra.mxu0 %v3391
    %5488 = vmatprep.subr.bf16.mxu0 %v3396
    %5489 = vmatpush1.bf16.msra.mxu0 %v3395
    %5490 = vmatprep.subr.bf16.mxu0 %v3400
    %5491 = vmatpush1.bf16.msra.mxu0 %v3399
    %5492 = vmatprep.subr.bf16.mxu0 %v3404
    %5493 = vmatpush1.bf16.msra.mxu0 %v3403
    %5494 = vmatprep.subr.bf16.mxu0 %v3408
    %5495 = vmatpush1.bf16.msra.mxu0 %v3407
    %5496 = vmatprep.subr.bf16.mxu0 %v3412
    %5497 = vmatpush1.bf16.msra.mxu0 %v3411
    %5498 = vmatprep.subr.bf16.mxu0 %v3416
    %5499 = vmatpush1.bf16.msra.mxu0 %v3415
    %5500 = vmatprep.subr.bf16.mxu0 %v3420
    %5501 = vmatpush1.bf16.msra.mxu0 %v3419
    %5502 = vmatprep.subr.bf16.mxu0 %v3424
    %5503 = vmatpush1.bf16.msra.mxu0 %v3423
    %5504 = vmatprep.subr.bf16.mxu0 %v3428
    %5505 = vmatpush1.bf16.msra.mxu0 %v3427
    %5506 = vmatprep.subr.bf16.mxu0 %v3432
    %5507 = vmatpush1.bf16.msra.mxu0 %v3431
    %5508 = vmatprep.subr.bf16.mxu0 %v3436
    %5509 = vmatpush1.bf16.msra.mxu0 %v3435
    %5510 = vmatprep.mubr.bf16.mxu0 %v873
    %5511 = vmatmul.mubr.bf16.gmra.mrb[0].mxu0 %v859
    %v5512 = vpop.f32.mrb[0].mxu0
    %v5513 = vadd.f32 %v823, %v5512
    %v5514 = vpop.f32.mrb[0].mxu0
    %v5515 = vadd.f32 %v827, %v5514
    %v5516 = vpop.f32.mrb[0].mxu0
    %v5517 = vpop.f32.mrb[0].mxu0
    %5518 = vdwg.mxu0
    %5519 = vmatprep.subr.bf16.mxu0 %v3440
    %5520 = vmatpush1.bf16.msra.mxu0 %v3439
    %5521 = vmatprep.subr.bf16.mxu0 %v3444
    %5522 = vmatpush1.bf16.msra.mxu0 %v3443
    %5523 = vmatprep.subr.bf16.mxu0 %v3448
    %5524 = vmatpush1.bf16.msra.mxu0 %v3447
    %5525 = vmatprep.subr.bf16.mxu0 %v3452
    %5526 = vmatpush1.bf16.msra.mxu0 %v3451
    %5527 = vmatprep.subr.bf16.mxu0 %v3456
    %5528 = vmatpush1.bf16.msra.mxu0 %v3455
    %5529 = vmatprep.subr.bf16.mxu0 %v3460
    %5530 = vmatpush1.bf16.msra.mxu0 %v3459
    %5531 = vmatprep.subr.bf16.mxu0 %v3464
    %5532 = vmatpush1.bf16.msra.mxu0 %v3463
    %5533 = vmatprep.subr.bf16.mxu0 %v3468
    %5534 = vmatpush1.bf16.msra.mxu0 %v3467
    %5535 = vmatprep.subr.bf16.mxu0 %v3472
    %5536 = vmatpush1.bf16.msra.mxu0 %v3471
    %5537 = vmatprep.subr.bf16.mxu0 %v3476
    %5538 = vmatpush1.bf16.msra.mxu0 %v3475
    %5539 = vmatprep.subr.bf16.mxu0 %v3480
    %5540 = vmatpush1.bf16.msra.mxu0 %v3479
    %5541 = vmatprep.subr.bf16.mxu0 %v3484
    %5542 = vmatpush1.bf16.msra.mxu0 %v3483
    %5543 = vmatprep.subr.bf16.mxu0 %v3488
    %5544 = vmatpush1.bf16.msra.mxu0 %v3487
    %5545 = vmatprep.subr.bf16.mxu0 %v3492
    %5546 = vmatpush1.bf16.msra.mxu0 %v3491
    %5547 = vmatprep.subr.bf16.mxu0 %v3496
    %5548 = vmatpush1.bf16.msra.mxu0 %v3495
    %5549 = vmatprep.subr.bf16.mxu0 %v3500
    %5550 = vmatpush1.bf16.msra.mxu0 %v3499
    %5551 = vmatprep.mubr.bf16.mxu0 %v883
    %5552 = vmatmul.mubr.bf16.gmra.mrb[0].mxu0 %v881
    %v5553 = vpop.f32.mrb[0].mxu0
    %v5554 = vadd.f32 %v5513, %v5553
    %v5555 = vpop.f32.mrb[0].mxu0
    %v5556 = vadd.f32 %v5515, %v5555
    %v5557 = vpop.f32.mrb[0].mxu0
    %v5558 = vpop.f32.mrb[0].mxu0
    %5559 = vdwg.mxu0
    %5560 = vmatprep.subr.bf16.mxu0 %v3504
    %5561 = vmatpush1.bf16.msra.mxu0 %v3503
    %5562 = vmatprep.subr.bf16.mxu0 %v3508
    %5563 = vmatpush1.bf16.msra.mxu0 %v3507
    %5564 = vmatprep.subr.bf16.mxu0 %v3512
    %5565 = vmatpush1.bf16.msra.mxu0 %v3511
    %5566 = vmatprep.subr.bf16.mxu0 %v3516
    %5567 = vmatpush1.bf16.msra.mxu0 %v3515
    %5568 = vmatprep.subr.bf16.mxu0 %v3520
    %5569 = vmatpush1.bf16.msra.mxu0 %v3519
    %5570 = vmatprep.subr.bf16.mxu0 %v3524
    %5571 = vmatpush1.bf16.msra.mxu0 %v3523
    %5572 = vmatprep.subr.bf16.mxu0 %v3528
    %5573 = vmatpush1.bf16.msra.mxu0 %v3527
    %5574 = vmatprep.subr.bf16.mxu0 %v3532
    %5575 = vmatpush1.bf16.msra.mxu0 %v3531
    %5576 = vmatprep.subr.bf16.mxu0 %v3536
    %5577 = vmatpush1.bf16.msra.mxu0 %v3535
    %5578 = vmatprep.subr.bf16.mxu0 %v3540
    %5579 = vmatpush1.bf16.msra.mxu0 %v3539
    %5580 = vmatprep.subr.bf16.mxu0 %v3544
    %5581 = vmatpush1.bf16.msra.mxu0 %v3543
    %5582 = vmatprep.subr.bf16.mxu0 %v3548
    %5583 = vmatpush1.bf16.msra.mxu0 %v3547
    %5584 = vmatprep.subr.bf16.mxu0 %v3552
    %5585 = vmatpush1.bf16.msra.mxu0 %v3551
    %5586 = vmatprep.subr.bf16.mxu0 %v3556
    %5587 = vmatpush1.bf16.msra.mxu0 %v3555
    %5588 = vmatprep.subr.bf16.mxu0 %v3560
    %5589 = vmatpush1.bf16.msra.mxu0 %v3559
    %5590 = vmatprep.subr.bf16.mxu0 %v3564
    %5591 = vmatpush1.bf16.msra.mxu0 %v3563
    %5592 = vmatprep.mubr.bf16.mxu0 %v880
    %5593 = vmatmul.mubr.bf16.gmra.mrb[0].mxu0 %v866
    %v5594 = vpop.f32.mrb[0].mxu0
    %v5595 = vadd.f32 %v5554, %v5594
    %v5596 = vpop.f32.mrb[0].mxu0
    %v5597 = vadd.f32 %v5556, %v5596
    %v5598 = vpop.f32.mrb[0].mxu0
    %v5599 = vpop.f32.mrb[0].mxu0
    %5600 = vdwg.mxu0
    %5601 = vmatprep.subr.bf16.mxu0 %v3568
    %5602 = vmatpush1.bf16.msra.mxu0 %v3567
    %5603 = vmatprep.subr.bf16.mxu0 %v3572
    %5604 = vmatpush1.bf16.msra.mxu0 %v3571
    %5605 = vmatprep.subr.bf16.mxu0 %v3576
    %5606 = vmatpush1.bf16.msra.mxu0 %v3575
    %5607 = vmatprep.subr.bf16.mxu0 %v3580
    %5608 = vmatpush1.bf16.msra.mxu0 %v3579
    %5609 = vmatprep.subr.bf16.mxu0 %v3584
    %5610 = vmatpush1.bf16.msra.mxu0 %v3583
    %5611 = vmatprep.subr.bf16.mxu0 %v3588
    %5612 = vmatpush1.bf16.msra.mxu0 %v3587
    %5613 = vmatprep.subr.bf16.mxu0 %v3592
    %5614 = vmatpush1.bf16.msra.mxu0 %v3591
    %5615 = vmatprep.subr.bf16.mxu0 %v3596
    %5616 = vmatpush1.bf16.msra.mxu0 %v3595
    %5617 = vmatprep.subr.bf16.mxu0 %v3600
    %5618 = vmatpush1.bf16.msra.mxu0 %v3599
    %5619 = vmatprep.subr.bf16.mxu0 %v3604
    %5620 = vmatpush1.bf16.msra.mxu0 %v3603
    %5621 = vmatprep.subr.bf16.mxu0 %v3608
    %5622 = vmatpush1.bf16.msra.mxu0 %v3607
    %5623 = vmatprep.subr.bf16.mxu0 %v3612
    %5624 = vmatpush1.bf16.msra.mxu0 %v3611
    %5625 = vmatprep.subr.bf16.mxu0 %v3616
    %5626 = vmatpush1.bf16.msra.mxu0 %v3615
    %5627 = vmatprep.subr.bf16.mxu0 %v3620
    %5628 = vmatpush1.bf16.msra.mxu0 %v3619
    %5629 = vmatprep.subr.bf16.mxu0 %v3624
    %5630 = vmatpush1.bf16.msra.mxu0 %v3623
    %5631 = vmatprep.subr.bf16.mxu0 %v3628
    %5632 = vmatpush1.bf16.msra.mxu0 %v3627
    %5633 = vmatprep.mubr.bf16.mxu0 %v884
    %5634 = vmatmul.mubr.bf16.gmra.mrb[0].mxu0 %v882
    %v5635 = vpop.f32.mrb[0].mxu0
    %v5636 = vadd.f32 %v5595, %v5635
    %v5637 = vpop.f32.mrb[0].mxu0
    %v5638 = vadd.f32 %v5597, %v5637
    %v5639 = vpop.f32.mrb[0].mxu0
    %v5640 = vpop.f32.mrb[0].mxu0
    %5641 = vdwg.mxu0
    %5642 = vmatprep.subr.bf16.mxu0 %v3632
    %5643 = vmatpush1.bf16.msra.mxu0 %v3631
    %5644 = vmatprep.subr.bf16.mxu0 %v3636
    %5645 = vmatpush1.bf16.msra.mxu0 %v3635
    %5646 = vmatprep.subr.bf16.mxu0 %v3640
    %5647 = vmatpush1.bf16.msra.mxu0 %v3639
    %5648 = vmatprep.subr.bf16.mxu0 %v3644
    %5649 = vmatpush1.bf16.msra.mxu0 %v3643
    %5650 = vmatprep.subr.bf16.mxu0 %v3648
    %5651 = vmatpush1.bf16.msra.mxu0 %v3647
    %5652 = vmatprep.subr.bf16.mxu0 %v3652
    %5653 = vmatpush1.bf16.msra.mxu0 %v3651
    %5654 = vmatprep.subr.bf16.mxu0 %v3656
    %5655 = vmatpush1.bf16.msra.mxu0 %v3655
    %5656 = vmatprep.subr.bf16.mxu0 %v3660
    %5657 = vmatpush1.bf16.msra.mxu0 %v3659
    %5658 = vmatprep.subr.bf16.mxu0 %v3664
    %5659 = vmatpush1.bf16.msra.mxu0 %v3663
    %5660 = vmatprep.subr.bf16.mxu0 %v3668
    %5661 = vmatpush1.bf16.msra.mxu0 %v3667
    %5662 = vmatprep.subr.bf16.mxu0 %v3672
    %5663 = vmatpush1.bf16.msra.mxu0 %v3671
    %5664 = vmatprep.subr.bf16.mxu0 %v3676
    %5665 = vmatpush1.bf16.msra.mxu0 %v3675
    %5666 = vmatprep.subr.bf16.mxu0 %v3680
    %5667 = vmatpush1.bf16.msra.mxu0 %v3679
    %5668 = vmatprep.subr.bf16.mxu0 %v3684
    %5669 = vmatpush1.bf16.msra.mxu0 %v3683
    %5670 = vmatprep.subr.bf16.mxu0 %v3688
    %5671 = vmatpush1.bf16.msra.mxu0 %v3687
    %5672 = vmatprep.subr.bf16.mxu0 %v3692
    %5673 = vmatpush1.bf16.msra.mxu0 %v3691
    %5674 = vmatprep.mubr.bf16.mxu0 %v922
    %5675 = vmatmul.mubr.bf16.gmra.mrb[0].mxu0 %v908
    %v5676 = vpop.f32.mrb[0].mxu0
    %v5677 = vadd.f32 %v5636, %v5676
    %v5678 = vpop.f32.mrb[0].mxu0
    %v5679 = vadd.f32 %v5638, %v5678
    %v5680 = vpop.f32.mrb[0].mxu0
    %v5681 = vpop.f32.mrb[0].mxu0
    %5682 = vdwg.mxu0
    %5683 = vmatprep.subr.bf16.mxu0 %v3696
    %5684 = vmatpush1.bf16.msra.mxu0 %v3695
    %5685 = vmatprep.subr.bf16.mxu0 %v3700
    %5686 = vmatpush1.bf16.msra.mxu0 %v3699
    %5687 = vmatprep.subr.bf16.mxu0 %v3704
    %5688 = vmatpush1.bf16.msra.mxu0 %v3703
    %5689 = vmatprep.subr.bf16.mxu0 %v3708
    %5690 = vmatpush1.bf16.msra.mxu0 %v3707
    %5691 = vmatprep.subr.bf16.mxu0 %v3712
    %5692 = vmatpush1.bf16.msra.mxu0 %v3711
    %5693 = vmatprep.subr.bf16.mxu0 %v3716
    %5694 = vmatpush1.bf16.msra.mxu0 %v3715
    %5695 = vmatprep.subr.bf16.mxu0 %v3720
    %5696 = vmatpush1.bf16.msra.mxu0 %v3719
    %5697 = vmatprep.subr.bf16.mxu0 %v3724
    %5698 = vmatpush1.bf16.msra.mxu0 %v3723
    %5699 = vmatprep.subr.bf16.mxu0 %v3728
    %5700 = vmatpush1.bf16.msra.mxu0 %v3727
    %5701 = vmatprep.subr.bf16.mxu0 %v3732
    %5702 = vmatpush1.bf16.msra.mxu0 %v3731
    %5703 = vmatprep.subr.bf16.mxu0 %v3736
    %5704 = vmatpush1.bf16.msra.mxu0 %v3735
    %5705 = vmatprep.subr.bf16.mxu0 %v3740
    %5706 = vmatpush1.bf16.msra.mxu0 %v3739
    %5707 = vmatprep.subr.bf16.mxu0 %v3744
    %5708 = vmatpush1.bf16.msra.mxu0 %v3743
    %5709 = vmatprep.subr.bf16.mxu0 %v3748
    %5710 = vmatpush1.bf16.msra.mxu0 %v3747
    %5711 = vmatprep.subr.bf16.mxu0 %v3752
    %5712 = vmatpush1.bf16.msra.mxu0 %v3751
    %5713 = vmatprep.subr.bf16.mxu0 %v3756
    %5714 = vmatpush1.bf16.msra.mxu0 %v3755
    %5715 = vmatprep.mubr.bf16.mxu0 %v932
    %5716 = vmatmul.mubr.bf16.gmra.mrb[0].mxu0 %v930
    %v5717 = vpop.f32.mrb[0].mxu0
    %v5718 = vadd.f32 %v5677, %v5717
    %v5719 = vpop.f32.mrb[0].mxu0
    %v5720 = vadd.f32 %v5679, %v5719
    %v5721 = vpop.f32.mrb[0].mxu0
    %v5722 = vpop.f32.mrb[0].mxu0
    %5723 = vdwg.mxu0
    %5724 = vmatprep.subr.bf16.mxu0 %v3760
    %5725 = vmatpush1.bf16.msra.mxu0 %v3759
    %5726 = vmatprep.subr.bf16.mxu0 %v3764
    %5727 = vmatpush1.bf16.msra.mxu0 %v3763
    %5728 = vmatprep.subr.bf16.mxu0 %v3768
    %5729 = vmatpush1.bf16.msra.mxu0 %v3767
    %5730 = vmatprep.subr.bf16.mxu0 %v3772
    %5731 = vmatpush1.bf16.msra.mxu0 %v3771
    %5732 = vmatprep.subr.bf16.mxu0 %v3776
    %5733 = vmatpush1.bf16.msra.mxu0 %v3775
    %5734 = vmatprep.subr.bf16.mxu0 %v3780
    %5735 = vmatpush1.bf16.msra.mxu0 %v3779
    %5736 = vmatprep.subr.bf16.mxu0 %v3784
    %5737 = vmatpush1.bf16.msra.mxu0 %v3783
    %5738 = vmatprep.subr.bf16.mxu0 %v3788
    %5739 = vmatpush1.bf16.msra.mxu0 %v3787
    %5740 = vmatprep.subr.bf16.mxu0 %v3792
    %5741 = vmatpush1.bf16.msra.mxu0 %v3791
    %5742 = vmatprep.subr.bf16.mxu0 %v3796
    %5743 = vmatpush1.bf16.msra.mxu0 %v3795
    %5744 = vmatprep.subr.bf16.mxu0 %v3800
    %5745 = vmatpush1.bf16.msra.mxu0 %v3799
    %5746 = vmatprep.subr.bf16.mxu0 %v3804
    %5747 = vmatpush1.bf16.msra.mxu0 %v3803
    %5748 = vmatprep.subr.bf16.mxu0 %v3808
    %5749 = vmatpush1.bf16.msra.mxu0 %v3807
    %5750 = vmatprep.subr.bf16.mxu0 %v3812
    %5751 = vmatpush1.bf16.msra.mxu0 %v3811
    %5752 = vmatprep.subr.bf16.mxu0 %v3816
    %5753 = vmatpush1.bf16.msra.mxu0 %v3815
    %5754 = vmatprep.subr.bf16.mxu0 %v3820
    %5755 = vmatpush1.bf16.msra.mxu0 %v3819
    %5756 = vmatprep.mubr.bf16.mxu0 %v929
    %5757 = vmatmul.mubr.bf16.gmra.mrb[0].mxu0 %v915
    %v5758 = vpop.f32.mrb[0].mxu0
    %v5759 = vadd.f32 %v5718, %v5758
    %v5760 = vpop.f32.mrb[0].mxu0
    %v5761 = vadd.f32 %v5720, %v5760
    %v5762 = vpop.f32.mrb[0].mxu0
    %v5763 = vpop.f32.mrb[0].mxu0
    %5764 = vdwg.mxu0
    %5765 = vmatprep.subr.bf16.mxu0 %v3824
    %5766 = vmatpush1.bf16.msra.mxu0 %v3823
    %5767 = vmatprep.subr.bf16.mxu0 %v3828
    %5768 = vmatpush1.bf16.msra.mxu0 %v3827
    %5769 = vmatprep.subr.bf16.mxu0 %v3832
    %5770 = vmatpush1.bf16.msra.mxu0 %v3831
    %5771 = vmatprep.subr.bf16.mxu0 %v3836
    %5772 = vmatpush1.bf16.msra.mxu0 %v3835
    %5773 = vmatprep.subr.bf16.mxu0 %v3840
    %5774 = vmatpush1.bf16.msra.mxu0 %v3839
    %5775 = vmatprep.subr.bf16.mxu0 %v3844
    %5776 = vmatpush1.bf16.msra.mxu0 %v3843
    %5777 = vmatprep.subr.bf16.mxu0 %v3848
    %5778 = vmatpush1.bf16.msra.mxu0 %v3847
    %5779 = vmatprep.subr.bf16.mxu0 %v3852
    %5780 = vmatpush1.bf16.msra.mxu0 %v3851
    %5781 = vmatprep.subr.bf16.mxu0 %v3856
    %5782 = vmatpush1.bf16.msra.mxu0 %v3855
    %5783 = vmatprep.subr.bf16.mxu0 %v3860
    %5784 = vmatpush1.bf16.msra.mxu0 %v3859
    %5785 = vmatprep.subr.bf16.mxu0 %v3864
    %5786 = vmatpush1.bf16.msra.mxu0 %v3863
    %5787 = vmatprep.subr.bf16.mxu0 %v3868
    %5788 = vmatpush1.bf16.msra.mxu0 %v3867
    %5789 = vmatprep.subr.bf16.mxu0 %v3872
    %5790 = vmatpush1.bf16.msra.mxu0 %v3871
    %5791 = vmatprep.subr.bf16.mxu0 %v3876
    %5792 = vmatpush1.bf16.msra.mxu0 %v3875
    %5793 = vmatprep.subr.bf16.mxu0 %v3880
    %5794 = vmatpush1.bf16.msra.mxu0 %v3879
    %5795 = vmatprep.subr.bf16.mxu0 %v3884
    %5796 = vmatpush1.bf16.msra.mxu0 %v3883
    %5797 = vmatprep.mubr.bf16.mxu0 %v933
    %5798 = vmatmul.mubr.bf16.gmra.mrb[0].mxu0 %v931
    %v5799 = vpop.f32.mrb[0].mxu0
    %v5800 = vadd.f32 %v5759, %v5799
    %v5801 = vpop.f32.mrb[0].mxu0
    %v5802 = vadd.f32 %v5761, %v5801
    %v5803 = vpop.f32.mrb[0].mxu0
    %v5804 = vpop.f32.mrb[0].mxu0
    %5805 = vdwg.mxu0
    %5806 = vmatprep.subr.bf16.mxu0 %v3888
    %5807 = vmatpush1.bf16.msra.mxu0 %v3887
    %5808 = vmatprep.subr.bf16.mxu0 %v3892
    %5809 = vmatpush1.bf16.msra.mxu0 %v3891
    %5810 = vmatprep.subr.bf16.mxu0 %v3896
    %5811 = vmatpush1.bf16.msra.mxu0 %v3895
    %5812 = vmatprep.subr.bf16.mxu0 %v3900
    %5813 = vmatpush1.bf16.msra.mxu0 %v3899
    %5814 = vmatprep.subr.bf16.mxu0 %v3904
    %5815 = vmatpush1.bf16.msra.mxu0 %v3903
    %5816 = vmatprep.subr.bf16.mxu0 %v3908
    %5817 = vmatpush1.bf16.msra.mxu0 %v3907
    %5818 = vmatprep.subr.bf16.mxu0 %v3912
    %5819 = vmatpush1.bf16.msra.mxu0 %v3911
    %5820 = vmatprep.subr.bf16.mxu0 %v3916
    %5821 = vmatpush1.bf16.msra.mxu0 %v3915
    %5822 = vmatprep.subr.bf16.mxu0 %v3920
    %5823 = vmatpush1.bf16.msra.mxu0 %v3919
    %5824 = vmatprep.subr.bf16.mxu0 %v3924
    %5825 = vmatpush1.bf16.msra.mxu0 %v3923
    %5826 = vmatprep.subr.bf16.mxu0 %v3928
    %5827 = vmatpush1.bf16.msra.mxu0 %v3927
    %5828 = vmatprep.subr.bf16.mxu0 %v3932
    %5829 = vmatpush1.bf16.msra.mxu0 %v3931
    %5830 = vmatprep.subr.bf16.mxu0 %v3936
    %5831 = vmatpush1.bf16.msra.mxu0 %v3935
    %5832 = vmatprep.subr.bf16.mxu0 %v3940
    %5833 = vmatpush1.bf16.msra.mxu0 %v3939
    %5834 = vmatprep.subr.bf16.mxu0 %v3944
    %5835 = vmatpush1.bf16.msra.mxu0 %v3943
    %5836 = vmatprep.subr.bf16.mxu0 %v3948
    %5837 = vmatpush1.bf16.msra.mxu0 %v3947
    %5838 = vmatprep.mubr.bf16.mxu0 %v971
    %5839 = vmatmul.mubr.bf16.gmra.mrb[0].mxu0 %v957
    %v5840 = vpop.f32.mrb[0].mxu0
    %v5841 = vadd.f32 %v5800, %v5840
    %v5842 = vpop.f32.mrb[0].mxu0
    %v5843 = vadd.f32 %v5802, %v5842
    %v5844 = vpop.f32.mrb[0].mxu0
    %v5845 = vpop.f32.mrb[0].mxu0
    %5846 = vdwg.mxu0
    %5847 = vmatprep.subr.bf16.mxu0 %v3952
    %5848 = vmatpush1.bf16.msra.mxu0 %v3951
    %5849 = vmatprep.subr.bf16.mxu0 %v3956
    %5850 = vmatpush1.bf16.msra.mxu0 %v3955
    %5851 = vmatprep.subr.bf16.mxu0 %v3960
    %5852 = vmatpush1.bf16.msra.mxu0 %v3959
    %5853 = vmatprep.subr.bf16.mxu0 %v3964
    %5854 = vmatpush1.bf16.msra.mxu0 %v3963
    %5855 = vmatprep.subr.bf16.mxu0 %v3968
    %5856 = vmatpush1.bf16.msra.mxu0 %v3967
    %5857 = vmatprep.subr.bf16.mxu0 %v3972
    %5858 = vmatpush1.bf16.msra.mxu0 %v3971
    %5859 = vmatprep.subr.bf16.mxu0 %v3976
    %5860 = vmatpush1.bf16.msra.mxu0 %v3975
    %5861 = vmatprep.subr.bf16.mxu0 %v3980
    %5862 = vmatpush1.bf16.msra.mxu0 %v3979
    %5863 = vmatprep.subr.bf16.mxu0 %v3984
    %5864 = vmatpush1.bf16.msra.mxu0 %v3983
    %5865 = vmatprep.subr.bf16.mxu0 %v3988
    %5866 = vmatpush1.bf16.msra.mxu0 %v3987
    %5867 = vmatprep.subr.bf16.mxu0 %v3992
    %5868 = vmatpush1.bf16.msra.mxu0 %v3991
    %5869 = vmatprep.subr.bf16.mxu0 %v3996
    %5870 = vmatpush1.bf16.msra.mxu0 %v3995
    %5871 = vmatprep.subr.bf16.mxu0 %v4000
    %5872 = vmatpush1.bf16.msra.mxu0 %v3999
    %5873 = vmatprep.subr.bf16.mxu0 %v4004
    %5874 = vmatpush1.bf16.msra.mxu0 %v4003
    %5875 = vmatprep.subr.bf16.mxu0 %v4008
    %5876 = vmatpush1.bf16.msra.mxu0 %v4007
    %5877 = vmatprep.subr.bf16.mxu0 %v4012
    %5878 = vmatpush1.bf16.msra.mxu0 %v4011
    %5879 = vmatprep.mubr.bf16.mxu0 %v981
    %5880 = vmatmul.mubr.bf16.gmra.mrb[0].mxu0 %v979
    %v5881 = vpop.f32.mrb[0].mxu0
    %v5882 = vadd.f32 %v5841, %v5881
    %v5883 = vpop.f32.mrb[0].mxu0
    %v5884 = vadd.f32 %v5843, %v5883
    %v5885 = vpop.f32.mrb[0].mxu0
    %v5886 = vpop.f32.mrb[0].mxu0
    %5887 = vdwg.mxu0
    %5888 = vmatprep.subr.bf16.mxu0 %v4016
    %5889 = vmatpush1.bf16.msra.mxu0 %v4015
    %5890 = vmatprep.subr.bf16.mxu0 %v4020
    %5891 = vmatpush1.bf16.msra.mxu0 %v4019
    %5892 = vmatprep.subr.bf16.mxu0 %v4024
    %5893 = vmatpush1.bf16.msra.mxu0 %v4023
    %5894 = vmatprep.subr.bf16.mxu0 %v4028
    %5895 = vmatpush1.bf16.msra.mxu0 %v4027
    %5896 = vmatprep.subr.bf16.mxu0 %v4032
    %5897 = vmatpush1.bf16.msra.mxu0 %v4031
    %5898 = vmatprep.subr.bf16.mxu0 %v4036
    %5899 = vmatpush1.bf16.msra.mxu0 %v4035
    %5900 = vmatprep.subr.bf16.mxu0 %v4040
    %5901 = vmatpush1.bf16.msra.mxu0 %v4039
    %5902 = vmatprep.subr.bf16.mxu0 %v4044
    %5903 = vmatpush1.bf16.msra.mxu0 %v4043
    %5904 = vmatprep.subr.bf16.mxu0 %v4048
    %5905 = vmatpush1.bf16.msra.mxu0 %v4047
    %5906 = vmatprep.subr.bf16.mxu0 %v4052
    %5907 = vmatpush1.bf16.msra.mxu0 %v4051
    %5908 = vmatprep.subr.bf16.mxu0 %v4056
    %5909 = vmatpush1.bf16.msra.mxu0 %v4055
    %5910 = vmatprep.subr.bf16.mxu0 %v4060
    %5911 = vmatpush1.bf16.msra.mxu0 %v4059
    %5912 = vmatprep.subr.bf16.mxu0 %v4064
    %5913 = vmatpush1.bf16.msra.mxu0 %v4063
    %5914 = vmatprep.subr.bf16.mxu0 %v4068
    %5915 = vmatpush1.bf16.msra.mxu0 %v4067
    %5916 = vmatprep.subr.bf16.mxu0 %v4072
    %5917 = vmatpush1.bf16.msra.mxu0 %v4071
    %5918 = vmatprep.subr.bf16.mxu0 %v4076
    %5919 = vmatpush1.bf16.msra.mxu0 %v4075
    %5920 = vmatprep.mubr.bf16.mxu0 %v978
    %5921 = vmatmul.mubr.bf16.gmra.mrb[0].mxu0 %v964
    %v5922 = vpop.f32.mrb[0].mxu0
    %v5923 = vadd.f32 %v5882, %v5922
    %v5924 = vpop.f32.mrb[0].mxu0
    %v5925 = vadd.f32 %v5884, %v5924
    %v5926 = vpop.f32.mrb[0].mxu0
    %v5927 = vpop.f32.mrb[0].mxu0
    %5928 = vdwg.mxu0
    %5929 = vmatprep.subr.bf16.mxu0 %v4080
    %5930 = vmatpush1.bf16.msra.mxu0 %v4079
    %5931 = vmatprep.subr.bf16.mxu0 %v4084
    %5932 = vmatpush1.bf16.msra.mxu0 %v4083
    %5933 = vmatprep.subr.bf16.mxu0 %v4088
    %5934 = vmatpush1.bf16.msra.mxu0 %v4087
    %5935 = vmatprep.subr.bf16.mxu0 %v4092
    %5936 = vmatpush1.bf16.msra.mxu0 %v4091
    %5937 = vmatprep.subr.bf16.mxu0 %v4096
    %5938 = vmatpush1.bf16.msra.mxu0 %v4095
    %5939 = vmatprep.subr.bf16.mxu0 %v4100
    %5940 = vmatpush1.bf16.msra.mxu0 %v4099
    %5941 = vmatprep.subr.bf16.mxu0 %v4104
    %5942 = vmatpush1.bf16.msra.mxu0 %v4103
    %5943 = vmatprep.subr.bf16.mxu0 %v4108
    %5944 = vmatpush1.bf16.msra.mxu0 %v4107
    %5945 = vmatprep.subr.bf16.mxu0 %v4112
    %5946 = vmatpush1.bf16.msra.mxu0 %v4111
    %5947 = vmatprep.subr.bf16.mxu0 %v4116
    %5948 = vmatpush1.bf16.msra.mxu0 %v4115
    %5949 = vmatprep.subr.bf16.mxu0 %v4120
    %5950 = vmatpush1.bf16.msra.mxu0 %v4119
    %5951 = vmatprep.subr.bf16.mxu0 %v4124
    %5952 = vmatpush1.bf16.msra.mxu0 %v4123
    %5953 = vmatprep.subr.bf16.mxu0 %v4128
    %5954 = vmatpush1.bf16.msra.mxu0 %v4127
    %5955 = vmatprep.subr.bf16.mxu0 %v4132
    %5956 = vmatpush1.bf16.msra.mxu0 %v4131
    %5957 = vmatprep.subr.bf16.mxu0 %v4136
    %5958 = vmatpush1.bf16.msra.mxu0 %v4135
    %5959 = vmatprep.subr.bf16.mxu0 %v4140
    %5960 = vmatpush1.bf16.msra.mxu0 %v4139
    %5961 = vmatprep.mubr.bf16.mxu0 %v982
    %5962 = vmatmul.mubr.bf16.gmra.mrb[0].mxu0 %v980
    %v5963 = vpop.f32.mrb[0].mxu0
    %v5964 = vadd.f32 %v5923, %v5963
    %v5965 = vpop.f32.mrb[0].mxu0
    %v5966 = vadd.f32 %v5925, %v5965
    %v5967 = vpop.f32.mrb[0].mxu0
    %v5968 = vpop.f32.mrb[0].mxu0
    %5969 = vdwg.mxu0
    %5970 = vmatprep.subr.bf16.mxu0 %v4144
    %5971 = vmatpush1.bf16.msra.mxu0 %v4143
    %5972 = vmatprep.subr.bf16.mxu0 %v4148
    %5973 = vmatpush1.bf16.msra.mxu0 %v4147
    %5974 = vmatprep.subr.bf16.mxu0 %v4152
    %5975 = vmatpush1.bf16.msra.mxu0 %v4151
    %5976 = vmatprep.subr.bf16.mxu0 %v4156
    %5977 = vmatpush1.bf16.msra.mxu0 %v4155
    %5978 = vmatprep.subr.bf16.mxu0 0
    %5979 = vmatpush1.bf16.msra.mxu0 0
    %5980 = vmatprep.subr.bf16.mxu0 0
    %5981 = vmatpush1.bf16.msra.mxu0 0
    %5982 = vmatprep.subr.bf16.mxu0 0
    %5983 = vmatpush1.bf16.msra.mxu0 0
    %5984 = vmatprep.subr.bf16.mxu0 0
    %5985 = vmatpush1.bf16.msra.mxu0 0
    %5986 = vmatprep.subr.bf16.mxu0 0
    %5987 = vmatpush1.bf16.msra.mxu0 0
    %5988 = vmatprep.subr.bf16.mxu0 0
    %5989 = vmatpush1.bf16.msra.mxu0 0
    %5990 = vmatprep.subr.bf16.mxu0 0
    %5991 = vmatpush1.bf16.msra.mxu0 0
    %5992 = vmatprep.subr.bf16.mxu0 0
    %5993 = vmatpush1.bf16.msra.mxu0 0
    %5994 = vmatprep.subr.bf16.mxu0 0
    %5995 = vmatpush1.bf16.msra.mxu0 0
    %5996 = vmatprep.subr.bf16.mxu0 0
    %5997 = vmatpush1.bf16.msra.mxu0 0
    %5998 = vmatprep.subr.bf16.mxu0 0
    %5999 = vmatpush1.bf16.msra.mxu0 0
    %6000 = vmatprep.subr.bf16.mxu0 0
    %6001 = vmatpush1.bf16.msra.mxu0 0
    %6002 = vmatprep.mubr.bf16.mxu0 0
    %6003 = vmatmul.mubr.bf16.gmra.mrb[0].mxu0 %v4943
    %v6004 = vpop.f32.mrb[0].mxu0
    %v6005 = vadd.f32 %v5964, %v6004
    %v6006 = vpop.f32.mrb[0].mxu0
    %v6007 = vadd.f32 %v5966, %v6006
    %v6008 = vpop.f32.mrb[0].mxu0
    %v6009 = vpop.f32.mrb[0].mxu0
    %6010 = vdwg.mxu0
    %v6011 = vmax.f32 %v5472, 0.0
    %v6012 = vmax.f32 %v5474, 0.0
    %v6013 = vmax.f32 %v6005, 0.0
    %v6014 = vmax.f32 %v6007, 0.0
    %v6015 = vpack.c.bf16 %v6011, %v6011
    %v6016 = vpack.c.bf16 %v6012, %v6012
    %v6017 = vpack.c.bf16 %v6013, %v6013
    %v6018 = vpack.c.bf16 %v6014, %v6014
    %v6019 = vld [vmem:[%s3] sm:$0xf]
    %v6020 = vld [vmem:[%s3 + $0x4] sm:$0xf]
    %v6021 = vld [vmem:[%s3 + $0x8] sm:$0xf]
    %v6022 = vld [vmem:[%s3 + $0xc] sm:$0xf]
    %v6023 = vld [vmem:[%s3 + $0x10] sm:$0xf]
    %v6024 = vld [vmem:[%s3 + $0x14] sm:$0xf]
    %v6025 = vld [vmem:[%s3 + $0x18] sm:$0xf]
    %v6026 = vld [vmem:[%s3 + $0x1c] sm:$0xf]
    %v6027 = vld [vmem:[%s3 + $0x20] sm:$0xf]
    %v6028 = vld [vmem:[%s3 + $0x24] sm:$0xf]
    %v6029 = vld [vmem:[%s3 + $0x28] sm:$0xf]
    %v6030 = vld [vmem:[%s3 + $0x2c] sm:$0xf]
    %v6031 = vld [vmem:[%s3 + $0x30] sm:$0xf]
    %v6032 = vld [vmem:[%s3 + $0x34] sm:$0xf]
    %v6033 = vld [vmem:[%s3 + $0x38] sm:$0xf]
    %v6034 = vld [vmem:[%s3 + $0x3c] sm:$0xf]
    %v6035 = vld [vmem:[%s3 + $0x40] sm:$0xf]
    %v6036 = vld [vmem:[%s3 + $0x44] sm:$0xf]
    %v6037 = vld [vmem:[%s3 + $0x48] sm:$0xf]
    %v6038 = vld [vmem:[%s3 + $0x4c] sm:$0xf]
    %v6039 = vld [vmem:[%s3 + $0x50] sm:$0xf]
    %v6040 = vld [vmem:[%s3 + $0x54] sm:$0xf]
    %v6041 = vld [vmem:[%s3 + $0x58] sm:$0xf]
    %v6042 = vld [vmem:[%s3 + $0x5c] sm:$0xf]
    %v6043 = vld [vmem:[%s3 + $0x60] sm:$0xf]
    %v6044 = vld [vmem:[%s3 + $0x64] sm:$0xf]
    %v6045 = vld [vmem:[%s3 + $0x68] sm:$0xf]
    %v6046 = vld [vmem:[%s3 + $0x6c] sm:$0xf]
    %v6047 = vld [vmem:[%s3 + $0x70] sm:$0xf]
    %v6048 = vld [vmem:[%s3 + $0x74] sm:$0xf]
    %v6049 = vld [vmem:[%s3 + $0x78] sm:$0xf]
    %v6050 = vld [vmem:[%s3 + $0x7c] sm:$0xf]
    %v6051 = vld [vmem:[%s3 + $0x80] sm:$0xf]
    %v6052 = vld [vmem:[%s3 + $0x84] sm:$0xf]
    %v6053 = vld [vmem:[%s3 + $0x88] sm:$0xf]
    %v6054 = vld [vmem:[%s3 + $0x8c] sm:$0xf]
    %v6055 = vld [vmem:[%s3 + $0x90] sm:$0xf]
    %v6056 = vld [vmem:[%s3 + $0x94] sm:$0xf]
    %v6057 = vld [vmem:[%s3 + $0x98] sm:$0xf]
    %v6058 = vld [vmem:[%s3 + $0x9c] sm:$0xf]
    %v6059 = vld [vmem:[%s3 + $0xa0] sm:$0xf]
    %v6060 = vld [vmem:[%s3 + $0xa4] sm:$0xf]
    %v6061 = vld [vmem:[%s3 + $0xa8] sm:$0xf]
    %v6062 = vld [vmem:[%s3 + $0xac] sm:$0xf]
    %v6063 = vld [vmem:[%s3 + $0xb0] sm:$0xf]
    %v6064 = vld [vmem:[%s3 + $0xb4] sm:$0xf]
    %v6065 = vld [vmem:[%s3 + $0xb8] sm:$0xf]
    %v6066 = vld [vmem:[%s3 + $0xbc] sm:$0xf]
    %v6067 = vld [vmem:[%s3 + $0xc0] sm:$0xf]
    %v6068 = vld [vmem:[%s3 + $0xc4] sm:$0xf]
    %v6069 = vld [vmem:[%s3 + $0xc8] sm:$0xf]
    %v6070 = vld [vmem:[%s3 + $0xcc] sm:$0xf]
    %v6071 = vld [vmem:[%s3 + $0xd0] sm:$0xf]
    %v6072 = vld [vmem:[%s3 + $0xd4] sm:$0xf]
    %v6073 = vld [vmem:[%s3 + $0xd8] sm:$0xf]
    %v6074 = vld [vmem:[%s3 + $0xdc] sm:$0xf]
    %v6075 = vld [vmem:[%s3 + $0xe0] sm:$0xf]
    %v6076 = vld [vmem:[%s3 + $0xe4] sm:$0xf]
    %v6077 = vld [vmem:[%s3 + $0xe8] sm:$0xf]
    %v6078 = vld [vmem:[%s3 + $0xec] sm:$0xf]
    %v6079 = vld [vmem:[%s3 + $0xf0] sm:$0xf]
    %v6080 = vld [vmem:[%s3 + $0xf4] sm:$0xf]
    %v6081 = vld [vmem:[%s3 + $0xf8] sm:$0xf]
    %v6082 = vld [vmem:[%s3 + $0xfc] sm:$0xf]
    %v6083 = vld [vmem:[%s4] sm:$0x1]
    %v6085 = vlaneseq
    %v6086 = vshrl.u32 %v6085, 7
    %v6087 = vsub.s32 0, %v6086
    %v6088 = vrot.slane %v6083, %v6087
    %v6154 = vunpack.c.l.b16 %v6019
    %v6155 = vunpack.c.l.b16 %v6020
    %v6156 = vunpack.c.l.b16 %v6021
    %v6157 = vunpack.c.l.b16 %v6022
    %v6158 = vunpack.c.l.b16 %v6023
    %v6159 = vunpack.c.l.b16 %v6024
    %v6160 = vunpack.c.l.b16 %v6025
    %v6161 = vunpack.c.l.b16 %v6026
    %v6162 = vunpack.c.l.b16 %v6027
    %v6163 = vunpack.c.l.b16 %v6028
    %v6164 = vunpack.c.l.b16 %v6029
    %v6165 = vunpack.c.l.b16 %v6030
    %v6166 = vunpack.c.l.b16 %v6031
    %v6167 = vunpack.c.l.b16 %v6032
    %v6168 = vunpack.c.l.b16 %v6033
    %v6169 = vunpack.c.l.b16 %v6034
    %v6170 = vunpack.c.l.b16 %v6035
    %v6171 = vunpack.c.l.b16 %v6036
    %v6172 = vunpack.c.l.b16 %v6037
    %v6173 = vunpack.c.l.b16 %v6038
    %v6174 = vunpack.c.l.b16 %v6039
    %v6175 = vunpack.c.l.b16 %v6040
    %v6176 = vunpack.c.l.b16 %v6041
    %v6177 = vunpack.c.l.b16 %v6042
    %v6178 = vunpack.c.l.b16 %v6043
    %v6179 = vunpack.c.l.b16 %v6044
    %v6180 = vunpack.c.l.b16 %v6045
    %v6181 = vunpack.c.l.b16 %v6046
    %v6182 = vunpack.c.l.b16 %v6047
    %v6183 = vunpack.c.l.b16 %v6048
    %v6184 = vunpack.c.l.b16 %v6049
    %v6185 = vunpack.c.l.b16 %v6050
    %v6186 = vunpack.c.l.b16 %v6051
    %v6187 = vunpack.c.l.b16 %v6052
    %v6188 = vunpack.c.l.b16 %v6053
    %v6189 = vunpack.c.l.b16 %v6054
    %v6190 = vunpack.c.l.b16 %v6055
    %v6191 = vunpack.c.l.b16 %v6056
    %v6192 = vunpack.c.l.b16 %v6057
    %v6193 = vunpack.c.l.b16 %v6058
    %v6194 = vunpack.c.l.b16 %v6059
    %v6195 = vunpack.c.l.b16 %v6060
    %v6196 = vunpack.c.l.b16 %v6061
    %v6197 = vunpack.c.l.b16 %v6062
    %v6198 = vunpack.c.l.b16 %v6063
    %v6199 = vunpack.c.l.b16 %v6064
    %v6200 = vunpack.c.l.b16 %v6065
    %v6201 = vunpack.c.l.b16 %v6066
    %v6202 = vunpack.c.l.b16 %v6067
    %v6203 = vunpack.c.l.b16 %v6068
    %v6204 = vunpack.c.l.b16 %v6069
    %v6205 = vunpack.c.l.b16 %v6070
    %v6206 = vunpack.c.l.b16 %v6071
    %v6207 = vunpack.c.l.b16 %v6072
    %v6208 = vunpack.c.l.b16 %v6073
    %v6209 = vunpack.c.l.b16 %v6074
    %v6210 = vunpack.c.l.b16 %v6075
    %v6211 = vunpack.c.l.b16 %v6076
    %v6212 = vunpack.c.l.b16 %v6077
    %v6213 = vunpack.c.l.b16 %v6078
    %v6214 = vunpack.c.l.b16 %v6079
    %v6215 = vunpack.c.l.b16 %v6080
    %v6216 = vunpack.c.l.b16 %v6081
    %v6217 = vunpack.c.l.b16 %v6082
    %v6218 = vpack.c.b16 %v6155, %v6154
    %v6219 = vpack.c.b16 %v6157, %v6156
    %v6220 = vpack.c.b16 %v6159, %v6158
    %v6221 = vpack.c.b16 %v6161, %v6160
    %v6222 = vpack.c.b16 %v6163, %v6162
    %v6223 = vpack.c.b16 %v6165, %v6164
    %v6224 = vpack.c.b16 %v6167, %v6166
    %v6225 = vpack.c.b16 %v6169, %v6168
    %v6226 = vpack.c.b16 %v6171, %v6170
    %v6227 = vpack.c.b16 %v6173, %v6172
    %v6228 = vpack.c.b16 %v6175, %v6174
    %v6229 = vpack.c.b16 %v6177, %v6176
    %v6230 = vpack.c.b16 %v6179, %v6178
    %v6231 = vpack.c.b16 %v6181, %v6180
    %v6232 = vpack.c.b16 %v6183, %v6182
    %v6233 = vpack.c.b16 %v6185, %v6184
    %v6234 = vpack.c.b16 %v6187, %v6186
    %v6235 = vpack.c.b16 %v6189, %v6188
    %v6236 = vpack.c.b16 %v6191, %v6190
    %v6237 = vpack.c.b16 %v6193, %v6192
    %v6238 = vpack.c.b16 %v6195, %v6194
    %v6239 = vpack.c.b16 %v6197, %v6196
    %v6240 = vpack.c.b16 %v6199, %v6198
    %v6241 = vpack.c.b16 %v6201, %v6200
    %v6242 = vpack.c.b16 %v6203, %v6202
    %v6243 = vpack.c.b16 %v6205, %v6204
    %v6244 = vpack.c.b16 %v6207, %v6206
    %v6245 = vpack.c.b16 %v6209, %v6208
    %v6246 = vpack.c.b16 %v6211, %v6210
    %v6247 = vpack.c.b16 %v6213, %v6212
    %v6248 = vpack.c.b16 %v6215, %v6214
    %v6249 = vpack.c.b16 %v6217, %v6216
    %6282 = vmatprep.subr.bf16.mxu0 0
    %6283 = vmatpush1.bf16.msra.mxu0 %v6218
    %6284 = vmatprep.subr.bf16.mxu0 0
    %6285 = vmatpush1.bf16.msra.mxu0 %v6219
    %6286 = vmatprep.subr.bf16.mxu0 0
    %6287 = vmatpush1.bf16.msra.mxu0 %v6220
    %6288 = vmatprep.subr.bf16.mxu0 0
    %6289 = vmatpush1.bf16.msra.mxu0 %v6221
    %6290 = vmatprep.subr.bf16.mxu0 0
    %6291 = vmatpush1.bf16.msra.mxu0 %v6222
    %6292 = vmatprep.subr.bf16.mxu0 0
    %6293 = vmatpush1.bf16.msra.mxu0 %v6223
    %6294 = vmatprep.subr.bf16.mxu0 0
    %6295 = vmatpush1.bf16.msra.mxu0 %v6224
    %6296 = vmatprep.subr.bf16.mxu0 0
    %6297 = vmatpush1.bf16.msra.mxu0 %v6225
    %6298 = vmatprep.subr.bf16.mxu0 0
    %6299 = vmatpush1.bf16.msra.mxu0 %v6226
    %6300 = vmatprep.subr.bf16.mxu0 0
    %6301 = vmatpush1.bf16.msra.mxu0 %v6227
    %6302 = vmatprep.subr.bf16.mxu0 0
    %6303 = vmatpush1.bf16.msra.mxu0 %v6228
    %6304 = vmatprep.subr.bf16.mxu0 0
    %6305 = vmatpush1.bf16.msra.mxu0 %v6229
    %6306 = vmatprep.subr.bf16.mxu0 0
    %6307 = vmatpush1.bf16.msra.mxu0 %v6230
    %6308 = vmatprep.subr.bf16.mxu0 0
    %6309 = vmatpush1.bf16.msra.mxu0 %v6231
    %6310 = vmatprep.subr.bf16.mxu0 0
    %6311 = vmatpush1.bf16.msra.mxu0 %v6232
    %6312 = vmatprep.subr.bf16.mxu0 0
    %6313 = vmatpush1.bf16.msra.mxu0 %v6233
    %6314 = vmatprep.mubr.bf16.mxu0 %v6016
    %6315 = vmatmul.mubr.bf16.gmra.mrb[0].mxu0 %v6015
    %v6316 = vpop.f32.mrb[0].mxu0
    %v6317 = vadd.f32 %v6088, %v6316
    %v6318 = vpop.f32.mrb[0].mxu0
    %v6319 = vpop.f32.mrb[0].mxu0
    %v6320 = vpop.f32.mrb[0].mxu0
    %6321 = vdwg.mxu0
    %6322 = vmatprep.subr.bf16.mxu0 0
    %6323 = vmatpush1.bf16.msra.mxu0 %v6234
    %6324 = vmatprep.subr.bf16.mxu0 0
    %6325 = vmatpush1.bf16.msra.mxu0 %v6235
    %6326 = vmatprep.subr.bf16.mxu0 0
    %6327 = vmatpush1.bf16.msra.mxu0 %v6236
    %6328 = vmatprep.subr.bf16.mxu0 0
    %6329 = vmatpush1.bf16.msra.mxu0 %v6237
    %6330 = vmatprep.subr.bf16.mxu0 0
    %6331 = vmatpush1.bf16.msra.mxu0 %v6238
    %6332 = vmatprep.subr.bf16.mxu0 0
    %6333 = vmatpush1.bf16.msra.mxu0 %v6239
    %6334 = vmatprep.subr.bf16.mxu0 0
    %6335 = vmatpush1.bf16.msra.mxu0 %v6240
    %6336 = vmatprep.subr.bf16.mxu0 0
    %6337 = vmatpush1.bf16.msra.mxu0 %v6241
    %6338 = vmatprep.subr.bf16.mxu0 0
    %6339 = vmatpush1.bf16.msra.mxu0 %v6242
    %6340 = vmatprep.subr.bf16.mxu0 0
    %6341 = vmatpush1.bf16.msra.mxu0 %v6243
    %6342 = vmatprep.subr.bf16.mxu0 0
    %6343 = vmatpush1.bf16.msra.mxu0 %v6244
    %6344 = vmatprep.subr.bf16.mxu0 0
    %6345 = vmatpush1.bf16.msra.mxu0 %v6245
    %6346 = vmatprep.subr.bf16.mxu0 0
    %6347 = vmatpush1.bf16.msra.mxu0 %v6246
    %6348 = vmatprep.subr.bf16.mxu0 0
    %6349 = vmatpush1.bf16.msra.mxu0 %v6247
    %6350 = vmatprep.subr.bf16.mxu0 0
    %6351 = vmatpush1.bf16.msra.mxu0 %v6248
    %6352 = vmatprep.subr.bf16.mxu0 0
    %6353 = vmatpush1.bf16.msra.mxu0 %v6249
    %6354 = vmatprep.mubr.bf16.mxu0 %v6018
    %6355 = vmatmul.mubr.bf16.gmra.mrb[0].mxu0 %v6017
    %v6356 = vpop.f32.mrb[0].mxu0
    %v6357 = vadd.f32 %v6317, %v6356
    %v6358 = vpop.f32.mrb[0].mxu0
    %v6359 = vpop.f32.mrb[0].mxu0
    %v6360 = vpop.f32.mrb[0].mxu0
    %6361 = vdwg.mxu0
    %vm6362 = vcmask 1041408
    %v6363 = vsel %vm6362, %v6357, -inf
    %6364 = vmax.xlane.f32.xlu0 %v6363
    %v6365 = vpop.xlane.xlu0 %6364
    %v6366 = vsub.f32 %v6357, %v6365
    %v6367 = vmul.f32 %v6366, 1.442695
    %v6368 = vpow.pop %v6367
    %v6369 = vsel %vm6362, %v6368, 0.0
    %6370 = vadd.xlane.f32.xlu0 %v6369
    %v6371 = vpop.xlane.xlu0 %6370
    %v6372 = vlog2.pop %v6371
    %v6373 = vmul.f32 %v6372, 0.6931472
    %v6374 = vadd.f32 %v6365, %v6373
    %v6375 = vsub.f32 %v6357, %v6374
    %6376 = vst [vmem:[#allocation2] sm:$0x3] %v6375
    // Predicated region
    $region22: #{cnn_forward.5} parent=1 // pred_check
      _
    $region23: #{cnn_forward.5} parent=1 // pred_check_branch
      %6378 = sbr.rel (0) target = $region25
    $region24: #{cnn_forward.5} parent=1 // pred_region
      %s6380 = ssub.s32 32, 32
      %6381 = vsyncadd [#allocation3], %s6380
      %s6383 = sshll.u32 [#allocation2], 4
      %s6384 = int_to_ptr.vmem [resolvable:$true] %s6383
      %6386 = dma.vmem_to_hbm [thread:$0]  %s6384, 32, %s5, [#allocation3]
    $region25: #{cnn_forward.5} parent=1 // pred_fallthru
      _
    // Predicated region
    $region26: #{cnn_forward.5} parent=1 // pred_check
      _
    $region27: #{cnn_forward.5} parent=1 // pred_check_branch
      %6388 = sbr.rel (0) target = $region29
    $region28: #{cnn_forward.5} parent=1 // pred_region
      %6389 = dma.done [#allocation3], 32
    $region29: #{cnn_forward.5} parent=1 // pred_fallthru
      _
    %6390 = vsyncpa [#allocation3], 1

</llo_original>
